<compile_context>
chip_gen: v7x
topology: tpu7x:2x2x1
jax: 0.10.0
libtpu: 0.0.40
codegen_flags: <defaults>
</compile_context>

<pallas_src>
from functools import partial

import jax
import jax.numpy as jnp
from jax.experimental import pallas as pl
from jax.experimental.pallas import tpu as pltpu

_EPS = 1e-5


# ------------------------------------------------------------------
# Kernel 1: fc1 + ConvTranspose2d(384,192,4,1,0) + BatchNorm + ReLU
#   Layout: samples on sublanes, channels on lanes.
#   x:(N,nz)  w1:(nz,384)  b1:(1,384)  wp:(16,384,192)  b2/g/beta:(1,192)
#   out:(16, N, 192)  with phase p = oh*4 + ow.
# ------------------------------------------------------------------
def _fc_conv1_bn_relu_kernel(x_ref, w1_ref, b1_ref, wp_ref, b2_ref,
                             g_ref, beta_ref, o_ref, *, eps):
    # fc1
    h = jnp.dot(x_ref[...], w1_ref[...],
                preferred_element_type=jnp.float32) + b1_ref[...]
    # conv1: with a 1x1 input, out[n, :, oh, ow] = h @ W[:, :, oh, ow] + b
    b2 = b2_ref[...]
    for p in range(o_ref.shape[0]):                 # 16 positions, unrolled
        o_ref[p] = jnp.dot(h, wp_ref[p],
                           preferred_element_type=jnp.float32) + b2
    # BatchNorm (training-mode batch stats, biased var) + ReLU, fused.
    y = o_ref[...]                                  # (16, N, 192)
    inv_cnt = 1.0 / (y.shape[0] * y.shape[1])       # exact count: 16 * N
    mean = jnp.sum(jnp.sum(y, axis=1, keepdims=True),
                   axis=0, keepdims=True) * inv_cnt
    d = y - mean
    var = jnp.sum(jnp.sum(d * d, axis=1, keepdims=True),
                  axis=0, keepdims=True) * inv_cnt
    scale = g_ref[...] * jax.lax.rsqrt(var + eps)
    o_ref[...] = jnp.maximum(d * scale + beta_ref[...], 0.0)


def fused_fc_conv1(x, w1, b1, wc, bc, gamma, beta):
    n = x.shape[0]
    cin, cout, k, _ = wc.shape                      # (384, 192, 4, 4)
    wp = wc.transpose(2, 3, 0, 1).reshape(k * k, cin, cout)
    out = pl.pallas_call(
        partial(_fc_conv1_bn_relu_kernel, eps=_EPS),
        out_shape=jax.ShapeDtypeStruct((k * k, n, cout), jnp.float32),
        compiler_params=pltpu.CompilerParams(
            vmem_limit_bytes=32 * 1024 * 1024),
    )(x, w1.T, b1.reshape(1, -1), wp, bc.reshape(1, -1),
      gamma.reshape(1, -1), beta.reshape(1, -1))
    # (p=(oh,ow), n, co) -> NHWC (n, 4, 4, 192)
    return out.reshape(k, k, n, cout).transpose(2, 0, 1, 3)


# ------------------------------------------------------------------
# Kernels 2-4: stride-2 ConvTranspose2d via exact 4-phase decomposition.
#   Layout: channels on sublanes, pixels (n, oh, ow) on lanes (lane-dense).
#   a:(4, cout, 4*cin)  b:(4, 4*cin, N*H*W)  bias/g/beta:(cout, 1)
#   out:(4, cout, N*H*W)  with phase p = ph*2 + pw  and
#   out[p, co, n*H*W + i*W + j] = output[n, 2i+ph, 2j+pw, co].
# ------------------------------------------------------------------
def _phased_deconv_bn_relu_kernel(a_ref, b_ref, bias_ref, g_ref, beta_ref,
                                  o_ref, *, eps):
    bias = bias_ref[...]
    for p in range(a_ref.shape[0]):                 # 4 phases, unrolled
        o_ref[p] = jnp.dot(a_ref[p], b_ref[p],
                           preferred_element_type=jnp.float32) + bias
    y = o_ref[...]                                  # (4, cout, M)
    inv_cnt = 1.0 / (y.shape[0] * y.shape[2])       # exact count: 4 * N*H*W
    mean = jnp.sum(jnp.sum(y, axis=2, keepdims=True),
                   axis=0, keepdims=True) * inv_cnt
    d = y - mean
    var = jnp.sum(jnp.sum(d * d, axis=2, keepdims=True),
                  axis=0, keepdims=True) * inv_cnt
    scale = g_ref[...] * jax.lax.rsqrt(var + eps)
    o_ref[...] = jnp.maximum(d * scale + beta_ref[...], 0.0)


def _phased_deconv_tanh_kernel(a_ref, b_ref, bias_ref, o_ref):
    bias = bias_ref[...]
    for p in range(a_ref.shape[0]):
        y = jnp.dot(a_ref[p], b_ref[p],
                    preferred_element_type=jnp.float32) + bias
        o_ref[p] = jnp.tanh(y)


def _deconv_phase_operands(x_nhwc, w):
    """Build per-phase weight / patch operands for ConvTranspose2d(k=4,s=2,p=1).

    out[n, co, 2i+ph, 2j+pw] =
        b[co] + sum_{a,b,ci} xpad[n, i+ph+a, j+pw+b, ci] * W[ci, co, 3-2a-ph, 3-2b-pw]
    """
    n, h, wd, cin = x_nhwc.shape
    cin2, cout, k, _ = w.shape
    assert cin == cin2 and k == 4
    wf = jnp.flip(w, (2, 3)).transpose(2, 3, 0, 1)          # (4,4,cin,cout)
    xpad = jnp.pad(x_nhwc, ((0, 0), (1, 1), (1, 1), (0, 0)))
    xc = xpad.transpose(3, 0, 1, 2)                         # (cin, n, h+2, w+2)
    m = n * h * wd
    a_list, b_list = [], []
    for ph in range(2):
        for pw in range(2):
            sub = wf[ph::2, pw::2]                          # (2,2,cin,cout) [a,b,ci,co]
            a_list.append(sub.transpose(3, 0, 1, 2).reshape(cout, 4 * cin))
            taps = [xc[:, :, ph + a:ph + a + h, pw + b:pw + b + wd].reshape(cin, m)
                    for a in range(2) for b in range(2)]
            b_list.append(jnp.concatenate(taps, axis=0))    # (4*cin, m)
    return jnp.stack(a_list), jnp.stack(b_list), (n, h, wd, cout)


def fused_deconv_bn_relu(x_nhwc, w, bias, gamma, beta):
    a, b, (n, h, wd, cout) = _deconv_phase_operands(x_nhwc, w)
    out = pl.pallas_call(
        partial(_phased_deconv_bn_relu_kernel, eps=_EPS),
        out_shape=jax.ShapeDtypeStruct((4, cout, n * h * wd), jnp.float32),
    )(a, b, bias.reshape(-1, 1), gamma.reshape(-1, 1), beta.reshape(-1, 1))
    # (ph, pw, co, n, i, j) -> NHWC (n, 2h, 2w, cout)
    y = out.reshape(2, 2, cout, n, h, wd).transpose(3, 4, 0, 5, 1, 2)
    return y.reshape(n, 2 * h, 2 * wd, cout)


def fused_deconv_tanh_nchw(x_nhwc, w, bias):
    a, b, (n, h, wd, cout) = _deconv_phase_operands(x_nhwc, w)
    out = pl.pallas_call(
        _phased_deconv_tanh_kernel,
        out_shape=jax.ShapeDtypeStruct((4, cout, n * h * wd), jnp.float32),
    )(a, b, bias.reshape(-1, 1))
    # (ph, pw, co, n, i, j) -> NCHW (n, cout, 2h, 2w)
    y = out.reshape(2, 2, cout, n, h, wd).transpose(3, 2, 4, 0, 5, 1)
    return y.reshape(n, cout, 2 * h, 2 * wd)


# ------------------------------------------------------------------
# Generator forward (matches the PyTorch module, BatchNorm in train mode)
# ------------------------------------------------------------------
def generator_forward(params, x, nz):
    x = x.reshape(-1, nz)
    h = fused_fc_conv1(x, params["fc1_w"], params["fc1_b"],
                       params["c1_w"], params["c1_b"],
                       params["bn1_g"], params["bn1_b"])            # (N,4,4,192)
    h = fused_deconv_bn_relu(h, params["c2_w"], params["c2_b"],
                             params["bn2_g"], params["bn2_b"])      # (N,8,8,96)
    h = fused_deconv_bn_relu(h, params["c3_w"], params["c3_b"],
                             params["bn3_g"], params["bn3_b"])      # (N,16,16,48)
    return fused_deconv_tanh_nchw(h, params["c4_w"], params["c4_b"])  # (N,3,32,32)


def init_params(key, nz):
    ks = jax.random.split(key, 10)
    s = 0.05
    return {
        "fc1_w": s * jax.random.normal(ks[0], (384, nz), jnp.float32),
        "fc1_b": s * jax.random.normal(ks[1], (384,), jnp.float32),
        "c1_w": s * jax.random.normal(ks[2], (384, 192, 4, 4), jnp.float32),
        "c1_b": s * jax.random.normal(ks[3], (192,), jnp.float32),
        "c2_w": s * jax.random.normal(ks[4], (192, 96, 4, 4), jnp.float32),
        "c2_b": s * jax.random.normal(ks[5], (96,), jnp.float32),
        "c3_w": s * jax.random.normal(ks[6], (96, 48, 4, 4), jnp.float32),
        "c3_b": s * jax.random.normal(ks[7], (48,), jnp.float32),
        "c4_w": s * jax.random.normal(ks[8], (48, 3, 4, 4), jnp.float32),
        "c4_b": s * jax.random.normal(ks[9], (3,), jnp.float32),
        # BatchNorm2d defaults: weight = 1, bias = 0
        "bn1_g": jnp.ones((192,), jnp.float32), "bn1_b": jnp.zeros((192,), jnp.float32),
        "bn2_g": jnp.ones((96,), jnp.float32), "bn2_b": jnp.zeros((96,), jnp.float32),
        "bn3_g": jnp.ones((48,), jnp.float32), "bn3_b": jnp.zeros((48,), jnp.float32),
    }


# ------------------------------------------------------------------
# Pure-JAX reference (zero-insertion + im2col lowering) for validation.
# ------------------------------------------------------------------
def _ref_deconv(x_nhwc, w, b, stride, padding):
    n, h, ww, cin = x_nhwc.shape
    _, cout, k, _ = w.shape
    if stride > 1:
        up = jnp.zeros((n, (h - 1) * stride + 1, (ww - 1) * stride + 1, cin),
                       x_nhwc.dtype)
        up = up.at[:, ::stride, ::stride, :].set(x_nhwc)
    else:
        up = x_nhwc
    pad = k - 1 - padding
    xp = jnp.pad(up, ((0, 0), (pad, pad), (pad, pad), (0, 0)))
    oh, ow = xp.shape[1] - k + 1, xp.shape[2] - k + 1
    cols = [xp[:, kh:kh + oh, kw:kw + ow, :] for kh in range(k) for kw in range(k)]
    patches = jnp.concatenate(cols, axis=-1).reshape(n * oh * ow, k * k * cin)
    wc = jnp.flip(w, (2, 3)).transpose(2, 3, 0, 1).reshape(k * k * cin, cout)
    y = jnp.dot(patches, wc, precision=jax.lax.Precision.HIGHEST) + b
    return y, (n, oh, ow, cout)


def _ref_bn_relu(y, gamma, beta, eps=_EPS):
    mean = y.mean(axis=0)
    var = y.var(axis=0)
    return jnp.maximum((y - mean) / jnp.sqrt(var + eps) * gamma + beta, 0.0)


def generator_reference(params, x, nz):
    n = x.shape[0]
    x = x.reshape(n, nz)
    h = jnp.dot(x, params["fc1_w"].T,
                precision=jax.lax.Precision.HIGHEST) + params["fc1_b"]
    h = h.reshape(n, 1, 1, 384)
    y, shp = _ref_deconv(h, params["c1_w"], params["c1_b"], 1, 0)
    h = _ref_bn_relu(y, params["bn1_g"], params["bn1_b"]).reshape(shp)
    y, shp = _ref_deconv(h, params["c2_w"], params["c2_b"], 2, 1)
    h = _ref_bn_relu(y, params["bn2_g"], params["bn2_b"]).reshape(shp)
    y, shp = _ref_deconv(h, params["c3_w"], params["c3_b"], 2, 1)
    h = _ref_bn_relu(y, params["bn3_g"], params["bn3_b"]).reshape(shp)
    y, shp = _ref_deconv(h, params["c4_w"], params["c4_b"], 2, 1)
    return jnp.tanh(y).reshape(shp).transpose(0, 3, 1, 2)


if __name__ == "__main__":
    nz = 110          # ACGAN-style latent size
    batch = 2

    key = jax.random.PRNGKey(0)
    pkey, xkey = jax.random.split(key)
    params = init_params(pkey, nz)
    x = jax.random.normal(xkey, (batch, nz), jnp.float32)

    fwd = jax.jit(partial(generator_forward, nz=nz))
    out = jax.block_until_ready(fwd(params, x))

    assert out.shape == (batch, 3, 32, 32), out.shape
    assert out.dtype == jnp.float32
    assert bool(jnp.all(jnp.isfinite(out)))
    assert bool(jnp.all(jnp.abs(out) <= 1.0 + 1e-6))       # tanh range

    ref = jax.block_until_ready(jax.jit(partial(generator_reference, nz=nz))(params, x))
    max_err = float(jnp.max(jnp.abs(out - ref)))
    assert max_err < 3e-2, f"mismatch vs reference: {max_err}"

    print("KERNEL_OK")
</pallas_src>

<mosaic_0001>
module attributes {stable_mosaic.version = 11 : i64} {
  func.func @_fc_conv1_bn_relu_kernel(%arg0: memref<2x110xf32, #tpu.memory_space<vmem>>, %arg1: memref<110x384xf32, #tpu.memory_space<vmem>>, %arg2: memref<1x384xf32, #tpu.memory_space<vmem>>, %arg3: memref<16x384x192xf32, #tpu.memory_space<vmem>>, %arg4: memref<1x192xf32, #tpu.memory_space<vmem>>, %arg5: memref<1x192xf32, #tpu.memory_space<vmem>>, %arg6: memref<1x192xf32, #tpu.memory_space<vmem>>, %arg7: memref<16x2x192xf32, #tpu.memory_space<vmem>>) attributes {dimension_semantics = [], scalar_prefetch = 0 : i64, scratch_operands = 0 : i64, tpu.core_type = #tpu.core_type<tc>} {
    %c0 = arith.constant 0 : index
    %c0_0 = arith.constant 0 : index
    %0 = vector.load %arg0[%c0, %c0_0] : memref<2x110xf32, #tpu.memory_space<vmem>>, vector<2x110xf32>
    %c0_1 = arith.constant 0 : index
    %c0_2 = arith.constant 0 : index
    %1 = vector.load %arg1[%c0_1, %c0_2] : memref<110x384xf32, #tpu.memory_space<vmem>>, vector<110x384xf32>
    %cst = arith.constant dense<0.000000e+00> : vector<2x384xf32>
    %2 = tpu.matmul %0, %1, %cst {dimension_numbers = #tpu.dot_dimension_numbers<[1], [0], [0], [1], [0, 0, 1, 1], [], []>} : vector<2x110xf32>, vector<110x384xf32>, vector<2x384xf32> -> vector<2x384xf32>
    %c0_3 = arith.constant 0 : index
    %c0_4 = arith.constant 0 : index
    %3 = vector.load %arg2[%c0_3, %c0_4] : memref<1x384xf32, #tpu.memory_space<vmem>>, vector<1x384xf32>
    %4 = vector.broadcast %3 : vector<1x384xf32> to vector<2x384xf32>
    %5 = arith.addf %2, %4 : vector<2x384xf32>
    %c0_5 = arith.constant 0 : index
    %c0_6 = arith.constant 0 : index
    %6 = vector.load %arg4[%c0_5, %c0_6] : memref<1x192xf32, #tpu.memory_space<vmem>>, vector<1x192xf32>
    %c0_7 = arith.constant 0 : index
    %c0_8 = arith.constant 0 : index
    %c0_9 = arith.constant 0 : index
    %7 = vector.load %arg3[%c0_7, %c0_8, %c0_9] : memref<16x384x192xf32, #tpu.memory_space<vmem>>, vector<1x384x192xf32>
    %8 = vector.shape_cast %7 : vector<1x384x192xf32> to vector<384x192xf32>
    %cst_10 = arith.constant dense<0.000000e+00> : vector<2x192xf32>
    %9 = tpu.matmul %5, %8, %cst_10 {dimension_numbers = #tpu.dot_dimension_numbers<[1], [0], [0], [1], [0, 0, 1, 1], [], []>} : vector<2x384xf32>, vector<384x192xf32>, vector<2x192xf32> -> vector<2x192xf32>
    %10 = vector.broadcast %6 : vector<1x192xf32> to vector<2x192xf32>
    %11 = arith.addf %9, %10 : vector<2x192xf32>
    %c0_11 = arith.constant 0 : index
    %c0_12 = arith.constant 0 : index
    %c0_13 = arith.constant 0 : index
    %12 = vector.load %arg7[%c0_11, %c0_12, %c0_13] : memref<16x2x192xf32, #tpu.memory_space<vmem>>, vector<1x2x192xf32>
    %13 = vector.shape_cast %12 : vector<1x2x192xf32> to vector<2x192xf32>
    %14 = vector.shape_cast %11 : vector<2x192xf32> to vector<1x2x192xf32>
    tpu.vector_store %arg7[%c0_11, %c0_12, %c0_13], %14 {strides = array<i32>} : memref<16x2x192xf32, #tpu.memory_space<vmem>>, vector<1x2x192xf32>,
    %c1 = arith.constant 1 : index
    %c0_14 = arith.constant 0 : index
    %c0_15 = arith.constant 0 : index
    %15 = vector.load %arg3[%c1, %c0_14, %c0_15] : memref<16x384x192xf32, #tpu.memory_space<vmem>>, vector<1x384x192xf32>
    %16 = vector.shape_cast %15 : vector<1x384x192xf32> to vector<384x192xf32>
    %cst_16 = arith.constant dense<0.000000e+00> : vector<2x192xf32>
    %17 = tpu.matmul %5, %16, %cst_16 {dimension_numbers = #tpu.dot_dimension_numbers<[1], [0], [0], [1], [0, 0, 1, 1], [], []>} : vector<2x384xf32>, vector<384x192xf32>, vector<2x192xf32> -> vector<2x192xf32>
    %18 = vector.broadcast %6 : vector<1x192xf32> to vector<2x192xf32>
    %19 = arith.addf %17, %18 : vector<2x192xf32>
    %c1_17 = arith.constant 1 : index
    %c0_18 = arith.constant 0 : index
    %c0_19 = arith.constant 0 : index
    %20 = vector.load %arg7[%c1_17, %c0_18, %c0_19] : memref<16x2x192xf32, #tpu.memory_space<vmem>>, vector<1x2x192xf32>
    %21 = vector.shape_cast %20 : vector<1x2x192xf32> to vector<2x192xf32>
    %22 = vector.shape_cast %19 : vector<2x192xf32> to vector<1x2x192xf32>
    tpu.vector_store %arg7[%c1_17, %c0_18, %c0_19], %22 {strides = array<i32>} : memref<16x2x192xf32, #tpu.memory_space<vmem>>, vector<1x2x192xf32>,
    %c2 = arith.constant 2 : index
    %c0_20 = arith.constant 0 : index
    %c0_21 = arith.constant 0 : index
    %23 = vector.load %arg3[%c2, %c0_20, %c0_21] : memref<16x384x192xf32, #tpu.memory_space<vmem>>, vector<1x384x192xf32>
    %24 = vector.shape_cast %23 : vector<1x384x192xf32> to vector<384x192xf32>
    %cst_22 = arith.constant dense<0.000000e+00> : vector<2x192xf32>
    %25 = tpu.matmul %5, %24, %cst_22 {dimension_numbers = #tpu.dot_dimension_numbers<[1], [0], [0], [1], [0, 0, 1, 1], [], []>} : vector<2x384xf32>, vector<384x192xf32>, vector<2x192xf32> -> vector<2x192xf32>
    %26 = vector.broadcast %6 : vector<1x192xf32> to vector<2x192xf32>
    %27 = arith.addf %25, %26 : vector<2x192xf32>
    %c2_23 = arith.constant 2 : index
    %c0_24 = arith.constant 0 : index
    %c0_25 = arith.constant 0 : index
    %28 = vector.load %arg7[%c2_23, %c0_24, %c0_25] : memref<16x2x192xf32, #tpu.memory_space<vmem>>, vector<1x2x192xf32>
    %29 = vector.shape_cast %28 : vector<1x2x192xf32> to vector<2x192xf32>
    %30 = vector.shape_cast %27 : vector<2x192xf32> to vector<1x2x192xf32>
    tpu.vector_store %arg7[%c2_23, %c0_24, %c0_25], %30 {strides = array<i32>} : memref<16x2x192xf32, #tpu.memory_space<vmem>>, vector<1x2x192xf32>,
    %c3 = arith.constant 3 : index
    %c0_26 = arith.constant 0 : index
    %c0_27 = arith.constant 0 : index
    %31 = vector.load %arg3[%c3, %c0_26, %c0_27] : memref<16x384x192xf32, #tpu.memory_space<vmem>>, vector<1x384x192xf32>
    %32 = vector.shape_cast %31 : vector<1x384x192xf32> to vector<384x192xf32>
    %cst_28 = arith.constant dense<0.000000e+00> : vector<2x192xf32>
    %33 = tpu.matmul %5, %32, %cst_28 {dimension_numbers = #tpu.dot_dimension_numbers<[1], [0], [0], [1], [0, 0, 1, 1], [], []>} : vector<2x384xf32>, vector<384x192xf32>, vector<2x192xf32> -> vector<2x192xf32>
    %34 = vector.broadcast %6 : vector<1x192xf32> to vector<2x192xf32>
    %35 = arith.addf %33, %34 : vector<2x192xf32>
    %c3_29 = arith.constant 3 : index
    %c0_30 = arith.constant 0 : index
    %c0_31 = arith.constant 0 : index
    %36 = vector.load %arg7[%c3_29, %c0_30, %c0_31] : memref<16x2x192xf32, #tpu.memory_space<vmem>>, vector<1x2x192xf32>
    %37 = vector.shape_cast %36 : vector<1x2x192xf32> to vector<2x192xf32>
    %38 = vector.shape_cast %35 : vector<2x192xf32> to vector<1x2x192xf32>
    tpu.vector_store %arg7[%c3_29, %c0_30, %c0_31], %38 {strides = array<i32>} : memref<16x2x192xf32, #tpu.memory_space<vmem>>, vector<1x2x192xf32>,
    %c4 = arith.constant 4 : index
    %c0_32 = arith.constant 0 : index
    %c0_33 = arith.constant 0 : index
    %39 = vector.load %arg3[%c4, %c0_32, %c0_33] : memref<16x384x192xf32, #tpu.memory_space<vmem>>, vector<1x384x192xf32>
    %40 = vector.shape_cast %39 : vector<1x384x192xf32> to vector<384x192xf32>
    %cst_34 = arith.constant dense<0.000000e+00> : vector<2x192xf32>
    %41 = tpu.matmul %5, %40, %cst_34 {dimension_numbers = #tpu.dot_dimension_numbers<[1], [0], [0], [1], [0, 0, 1, 1], [], []>} : vector<2x384xf32>, vector<384x192xf32>, vector<2x192xf32> -> vector<2x192xf32>
    %42 = vector.broadcast %6 : vector<1x192xf32> to vector<2x192xf32>
    %43 = arith.addf %41, %42 : vector<2x192xf32>
    %c4_35 = arith.constant 4 : index
    %c0_36 = arith.constant 0 : index
    %c0_37 = arith.constant 0 : index
    %44 = vector.load %arg7[%c4_35, %c0_36, %c0_37] : memref<16x2x192xf32, #tpu.memory_space<vmem>>, vector<1x2x192xf32>
    %45 = vector.shape_cast %44 : vector<1x2x192xf32> to vector<2x192xf32>
    %46 = vector.shape_cast %43 : vector<2x192xf32> to vector<1x2x192xf32>
    tpu.vector_store %arg7[%c4_35, %c0_36, %c0_37], %46 {strides = array<i32>} : memref<16x2x192xf32, #tpu.memory_space<vmem>>, vector<1x2x192xf32>,
    %c5 = arith.constant 5 : index
    %c0_38 = arith.constant 0 : index
    %c0_39 = arith.constant 0 : index
    %47 = vector.load %arg3[%c5, %c0_38, %c0_39] : memref<16x384x192xf32, #tpu.memory_space<vmem>>, vector<1x384x192xf32>
    %48 = vector.shape_cast %47 : vector<1x384x192xf32> to vector<384x192xf32>
    %cst_40 = arith.constant dense<0.000000e+00> : vector<2x192xf32>
    %49 = tpu.matmul %5, %48, %cst_40 {dimension_numbers = #tpu.dot_dimension_numbers<[1], [0], [0], [1], [0, 0, 1, 1], [], []>} : vector<2x384xf32>, vector<384x192xf32>, vector<2x192xf32> -> vector<2x192xf32>
    %50 = vector.broadcast %6 : vector<1x192xf32> to vector<2x192xf32>
    %51 = arith.addf %49, %50 : vector<2x192xf32>
    %c5_41 = arith.constant 5 : index
    %c0_42 = arith.constant 0 : index
    %c0_43 = arith.constant 0 : index
    %52 = vector.load %arg7[%c5_41, %c0_42, %c0_43] : memref<16x2x192xf32, #tpu.memory_space<vmem>>, vector<1x2x192xf32>
    %53 = vector.shape_cast %52 : vector<1x2x192xf32> to vector<2x192xf32>
    %54 = vector.shape_cast %51 : vector<2x192xf32> to vector<1x2x192xf32>
    tpu.vector_store %arg7[%c5_41, %c0_42, %c0_43], %54 {strides = array<i32>} : memref<16x2x192xf32, #tpu.memory_space<vmem>>, vector<1x2x192xf32>,
    %c6 = arith.constant 6 : index
    %c0_44 = arith.constant 0 : index
    %c0_45 = arith.constant 0 : index
    %55 = vector.load %arg3[%c6, %c0_44, %c0_45] : memref<16x384x192xf32, #tpu.memory_space<vmem>>, vector<1x384x192xf32>
    %56 = vector.shape_cast %55 : vector<1x384x192xf32> to vector<384x192xf32>
    %cst_46 = arith.constant dense<0.000000e+00> : vector<2x192xf32>
    %57 = tpu.matmul %5, %56, %cst_46 {dimension_numbers = #tpu.dot_dimension_numbers<[1], [0], [0], [1], [0, 0, 1, 1], [], []>} : vector<2x384xf32>, vector<384x192xf32>, vector<2x192xf32> -> vector<2x192xf32>
    %58 = vector.broadcast %6 : vector<1x192xf32> to vector<2x192xf32>
    %59 = arith.addf %57, %58 : vector<2x192xf32>
    %c6_47 = arith.constant 6 : index
    %c0_48 = arith.constant 0 : index
    %c0_49 = arith.constant 0 : index
    %60 = vector.load %arg7[%c6_47, %c0_48, %c0_49] : memref<16x2x192xf32, #tpu.memory_space<vmem>>, vector<1x2x192xf32>
    %61 = vector.shape_cast %60 : vector<1x2x192xf32> to vector<2x192xf32>
    %62 = vector.shape_cast %59 : vector<2x192xf32> to vector<1x2x192xf32>
    tpu.vector_store %arg7[%c6_47, %c0_48, %c0_49], %62 {strides = array<i32>} : memref<16x2x192xf32, #tpu.memory_space<vmem>>, vector<1x2x192xf32>,
    %c7 = arith.constant 7 : index
    %c0_50 = arith.constant 0 : index
    %c0_51 = arith.constant 0 : index
    %63 = vector.load %arg3[%c7, %c0_50, %c0_51] : memref<16x384x192xf32, #tpu.memory_space<vmem>>, vector<1x384x192xf32>
    %64 = vector.shape_cast %63 : vector<1x384x192xf32> to vector<384x192xf32>
    %cst_52 = arith.constant dense<0.000000e+00> : vector<2x192xf32>
    %65 = tpu.matmul %5, %64, %cst_52 {dimension_numbers = #tpu.dot_dimension_numbers<[1], [0], [0], [1], [0, 0, 1, 1], [], []>} : vector<2x384xf32>, vector<384x192xf32>, vector<2x192xf32> -> vector<2x192xf32>
    %66 = vector.broadcast %6 : vector<1x192xf32> to vector<2x192xf32>
    %67 = arith.addf %65, %66 : vector<2x192xf32>
    %c7_53 = arith.constant 7 : index
    %c0_54 = arith.constant 0 : index
    %c0_55 = arith.constant 0 : index
    %68 = vector.load %arg7[%c7_53, %c0_54, %c0_55] : memref<16x2x192xf32, #tpu.memory_space<vmem>>, vector<1x2x192xf32>
    %69 = vector.shape_cast %68 : vector<1x2x192xf32> to vector<2x192xf32>
    %70 = vector.shape_cast %67 : vector<2x192xf32> to vector<1x2x192xf32>
    tpu.vector_store %arg7[%c7_53, %c0_54, %c0_55], %70 {strides = array<i32>} : memref<16x2x192xf32, #tpu.memory_space<vmem>>, vector<1x2x192xf32>,
    %c8 = arith.constant 8 : index
    %c0_56 = arith.constant 0 : index
    %c0_57 = arith.constant 0 : index
    %71 = vector.load %arg3[%c8, %c0_56, %c0_57] : memref<16x384x192xf32, #tpu.memory_space<vmem>>, vector<1x384x192xf32>
    %72 = vector.shape_cast %71 : vector<1x384x192xf32> to vector<384x192xf32>
    %cst_58 = arith.constant dense<0.000000e+00> : vector<2x192xf32>
    %73 = tpu.matmul %5, %72, %cst_58 {dimension_numbers = #tpu.dot_dimension_numbers<[1], [0], [0], [1], [0, 0, 1, 1], [], []>} : vector<2x384xf32>, vector<384x192xf32>, vector<2x192xf32> -> vector<2x192xf32>
    %74 = vector.broadcast %6 : vector<1x192xf32> to vector<2x192xf32>
    %75 = arith.addf %73, %74 : vector<2x192xf32>
    %c8_59 = arith.constant 8 : index
    %c0_60 = arith.constant 0 : index
    %c0_61 = arith.constant 0 : index
    %76 = vector.load %arg7[%c8_59, %c0_60, %c0_61] : memref<16x2x192xf32, #tpu.memory_space<vmem>>, vector<1x2x192xf32>
    %77 = vector.shape_cast %76 : vector<1x2x192xf32> to vector<2x192xf32>
    %78 = vector.shape_cast %75 : vector<2x192xf32> to vector<1x2x192xf32>
    tpu.vector_store %arg7[%c8_59, %c0_60, %c0_61], %78 {strides = array<i32>} : memref<16x2x192xf32, #tpu.memory_space<vmem>>, vector<1x2x192xf32>,
    %c9 = arith.constant 9 : index
    %c0_62 = arith.constant 0 : index
    %c0_63 = arith.constant 0 : index
    %79 = vector.load %arg3[%c9, %c0_62, %c0_63] : memref<16x384x192xf32, #tpu.memory_space<vmem>>, vector<1x384x192xf32>
    %80 = vector.shape_cast %79 : vector<1x384x192xf32> to vector<384x192xf32>
    %cst_64 = arith.constant dense<0.000000e+00> : vector<2x192xf32>
    %81 = tpu.matmul %5, %80, %cst_64 {dimension_numbers = #tpu.dot_dimension_numbers<[1], [0], [0], [1], [0, 0, 1, 1], [], []>} : vector<2x384xf32>, vector<384x192xf32>, vector<2x192xf32> -> vector<2x192xf32>
    %82 = vector.broadcast %6 : vector<1x192xf32> to vector<2x192xf32>
    %83 = arith.addf %81, %82 : vector<2x192xf32>
    %c9_65 = arith.constant 9 : index
    %c0_66 = arith.constant 0 : index
    %c0_67 = arith.constant 0 : index
    %84 = vector.load %arg7[%c9_65, %c0_66, %c0_67] : memref<16x2x192xf32, #tpu.memory_space<vmem>>, vector<1x2x192xf32>
    %85 = vector.shape_cast %84 : vector<1x2x192xf32> to vector<2x192xf32>
    %86 = vector.shape_cast %83 : vector<2x192xf32> to vector<1x2x192xf32>
    tpu.vector_store %arg7[%c9_65, %c0_66, %c0_67], %86 {strides = array<i32>} : memref<16x2x192xf32, #tpu.memory_space<vmem>>, vector<1x2x192xf32>,
    %c10 = arith.constant 10 : index
    %c0_68 = arith.constant 0 : index
    %c0_69 = arith.constant 0 : index
    %87 = vector.load %arg3[%c10, %c0_68, %c0_69] : memref<16x384x192xf32, #tpu.memory_space<vmem>>, vector<1x384x192xf32>
    %88 = vector.shape_cast %87 : vector<1x384x192xf32> to vector<384x192xf32>
    %cst_70 = arith.constant dense<0.000000e+00> : vector<2x192xf32>
    %89 = tpu.matmul %5, %88, %cst_70 {dimension_numbers = #tpu.dot_dimension_numbers<[1], [0], [0], [1], [0, 0, 1, 1], [], []>} : vector<2x384xf32>, vector<384x192xf32>, vector<2x192xf32> -> vector<2x192xf32>
    %90 = vector.broadcast %6 : vector<1x192xf32> to vector<2x192xf32>
    %91 = arith.addf %89, %90 : vector<2x192xf32>
    %c10_71 = arith.constant 10 : index
    %c0_72 = arith.constant 0 : index
    %c0_73 = arith.constant 0 : index
    %92 = vector.load %arg7[%c10_71, %c0_72, %c0_73] : memref<16x2x192xf32, #tpu.memory_space<vmem>>, vector<1x2x192xf32>
    %93 = vector.shape_cast %92 : vector<1x2x192xf32> to vector<2x192xf32>
    %94 = vector.shape_cast %91 : vector<2x192xf32> to vector<1x2x192xf32>
    tpu.vector_store %arg7[%c10_71, %c0_72, %c0_73], %94 {strides = array<i32>} : memref<16x2x192xf32, #tpu.memory_space<vmem>>, vector<1x2x192xf32>,
    %c11 = arith.constant 11 : index
    %c0_74 = arith.constant 0 : index
    %c0_75 = arith.constant 0 : index
    %95 = vector.load %arg3[%c11, %c0_74, %c0_75] : memref<16x384x192xf32, #tpu.memory_space<vmem>>, vector<1x384x192xf32>
    %96 = vector.shape_cast %95 : vector<1x384x192xf32> to vector<384x192xf32>
    %cst_76 = arith.constant dense<0.000000e+00> : vector<2x192xf32>
    %97 = tpu.matmul %5, %96, %cst_76 {dimension_numbers = #tpu.dot_dimension_numbers<[1], [0], [0], [1], [0, 0, 1, 1], [], []>} : vector<2x384xf32>, vector<384x192xf32>, vector<2x192xf32> -> vector<2x192xf32>
    %98 = vector.broadcast %6 : vector<1x192xf32> to vector<2x192xf32>
    %99 = arith.addf %97, %98 : vector<2x192xf32>
    %c11_77 = arith.constant 11 : index
    %c0_78 = arith.constant 0 : index
    %c0_79 = arith.constant 0 : index
    %100 = vector.load %arg7[%c11_77, %c0_78, %c0_79] : memref<16x2x192xf32, #tpu.memory_space<vmem>>, vector<1x2x192xf32>
    %101 = vector.shape_cast %100 : vector<1x2x192xf32> to vector<2x192xf32>
    %102 = vector.shape_cast %99 : vector<2x192xf32> to vector<1x2x192xf32>
    tpu.vector_store %arg7[%c11_77, %c0_78, %c0_79], %102 {strides = array<i32>} : memref<16x2x192xf32, #tpu.memory_space<vmem>>, vector<1x2x192xf32>,
    %c12 = arith.constant 12 : index
    %c0_80 = arith.constant 0 : index
    %c0_81 = arith.constant 0 : index
    %103 = vector.load %arg3[%c12, %c0_80, %c0_81] : memref<16x384x192xf32, #tpu.memory_space<vmem>>, vector<1x384x192xf32>
    %104 = vector.shape_cast %103 : vector<1x384x192xf32> to vector<384x192xf32>
    %cst_82 = arith.constant dense<0.000000e+00> : vector<2x192xf32>
    %105 = tpu.matmul %5, %104, %cst_82 {dimension_numbers = #tpu.dot_dimension_numbers<[1], [0], [0], [1], [0, 0, 1, 1], [], []>} : vector<2x384xf32>, vector<384x192xf32>, vector<2x192xf32> -> vector<2x192xf32>
    %106 = vector.broadcast %6 : vector<1x192xf32> to vector<2x192xf32>
    %107 = arith.addf %105, %106 : vector<2x192xf32>
    %c12_83 = arith.constant 12 : index
    %c0_84 = arith.constant 0 : index
    %c0_85 = arith.constant 0 : index
    %108 = vector.load %arg7[%c12_83, %c0_84, %c0_85] : memref<16x2x192xf32, #tpu.memory_space<vmem>>, vector<1x2x192xf32>
    %109 = vector.shape_cast %108 : vector<1x2x192xf32> to vector<2x192xf32>
    %110 = vector.shape_cast %107 : vector<2x192xf32> to vector<1x2x192xf32>
    tpu.vector_store %arg7[%c12_83, %c0_84, %c0_85], %110 {strides = array<i32>} : memref<16x2x192xf32, #tpu.memory_space<vmem>>, vector<1x2x192xf32>,
    %c13 = arith.constant 13 : index
    %c0_86 = arith.constant 0 : index
    %c0_87 = arith.constant 0 : index
    %111 = vector.load %arg3[%c13, %c0_86, %c0_87] : memref<16x384x192xf32, #tpu.memory_space<vmem>>, vector<1x384x192xf32>
    %112 = vector.shape_cast %111 : vector<1x384x192xf32> to vector<384x192xf32>
    %cst_88 = arith.constant dense<0.000000e+00> : vector<2x192xf32>
    %113 = tpu.matmul %5, %112, %cst_88 {dimension_numbers = #tpu.dot_dimension_numbers<[1], [0], [0], [1], [0, 0, 1, 1], [], []>} : vector<2x384xf32>, vector<384x192xf32>, vector<2x192xf32> -> vector<2x192xf32>
    %114 = vector.broadcast %6 : vector<1x192xf32> to vector<2x192xf32>
    %115 = arith.addf %113, %114 : vector<2x192xf32>
    %c13_89 = arith.constant 13 : index
    %c0_90 = arith.constant 0 : index
    %c0_91 = arith.constant 0 : index
    %116 = vector.load %arg7[%c13_89, %c0_90, %c0_91] : memref<16x2x192xf32, #tpu.memory_space<vmem>>, vector<1x2x192xf32>
    %117 = vector.shape_cast %116 : vector<1x2x192xf32> to vector<2x192xf32>
    %118 = vector.shape_cast %115 : vector<2x192xf32> to vector<1x2x192xf32>
    tpu.vector_store %arg7[%c13_89, %c0_90, %c0_91], %118 {strides = array<i32>} : memref<16x2x192xf32, #tpu.memory_space<vmem>>, vector<1x2x192xf32>,
    %c14 = arith.constant 14 : index
    %c0_92 = arith.constant 0 : index
    %c0_93 = arith.constant 0 : index
    %119 = vector.load %arg3[%c14, %c0_92, %c0_93] : memref<16x384x192xf32, #tpu.memory_space<vmem>>, vector<1x384x192xf32>
    %120 = vector.shape_cast %119 : vector<1x384x192xf32> to vector<384x192xf32>
    %cst_94 = arith.constant dense<0.000000e+00> : vector<2x192xf32>
    %121 = tpu.matmul %5, %120, %cst_94 {dimension_numbers = #tpu.dot_dimension_numbers<[1], [0], [0], [1], [0, 0, 1, 1], [], []>} : vector<2x384xf32>, vector<384x192xf32>, vector<2x192xf32> -> vector<2x192xf32>
    %122 = vector.broadcast %6 : vector<1x192xf32> to vector<2x192xf32>
    %123 = arith.addf %121, %122 : vector<2x192xf32>
    %c14_95 = arith.constant 14 : index
    %c0_96 = arith.constant 0 : index
    %c0_97 = arith.constant 0 : index
    %124 = vector.load %arg7[%c14_95, %c0_96, %c0_97] : memref<16x2x192xf32, #tpu.memory_space<vmem>>, vector<1x2x192xf32>
    %125 = vector.shape_cast %124 : vector<1x2x192xf32> to vector<2x192xf32>
    %126 = vector.shape_cast %123 : vector<2x192xf32> to vector<1x2x192xf32>
    tpu.vector_store %arg7[%c14_95, %c0_96, %c0_97], %126 {strides = array<i32>} : memref<16x2x192xf32, #tpu.memory_space<vmem>>, vector<1x2x192xf32>,
    %c15 = arith.constant 15 : index
    %c0_98 = arith.constant 0 : index
    %c0_99 = arith.constant 0 : index
    %127 = vector.load %arg3[%c15, %c0_98, %c0_99] : memref<16x384x192xf32, #tpu.memory_space<vmem>>, vector<1x384x192xf32>
    %128 = vector.shape_cast %127 : vector<1x384x192xf32> to vector<384x192xf32>
    %cst_100 = arith.constant dense<0.000000e+00> : vector<2x192xf32>
    %129 = tpu.matmul %5, %128, %cst_100 {dimension_numbers = #tpu.dot_dimension_numbers<[1], [0], [0], [1], [0, 0, 1, 1], [], []>} : vector<2x384xf32>, vector<384x192xf32>, vector<2x192xf32> -> vector<2x192xf32>
    %130 = vector.broadcast %6 : vector<1x192xf32> to vector<2x192xf32>
    %131 = arith.addf %129, %130 : vector<2x192xf32>
    %c15_101 = arith.constant 15 : index
    %c0_102 = arith.constant 0 : index
    %c0_103 = arith.constant 0 : index
    %132 = vector.load %arg7[%c15_101, %c0_102, %c0_103] : memref<16x2x192xf32, #tpu.memory_space<vmem>>, vector<1x2x192xf32>
    %133 = vector.shape_cast %132 : vector<1x2x192xf32> to vector<2x192xf32>
    %134 = vector.shape_cast %131 : vector<2x192xf32> to vector<1x2x192xf32>
    tpu.vector_store %arg7[%c15_101, %c0_102, %c0_103], %134 {strides = array<i32>} : memref<16x2x192xf32, #tpu.memory_space<vmem>>, vector<1x2x192xf32>,
    %c0_104 = arith.constant 0 : index
    %c0_105 = arith.constant 0 : index
    %c0_106 = arith.constant 0 : index
    %135 = vector.load %arg7[%c0_104, %c0_105, %c0_106] : memref<16x2x192xf32, #tpu.memory_space<vmem>>, vector<16x2x192xf32>
    %cst_107 = arith.constant dense<0.000000e+00> : vector<16x192xf32>
    %136 = vector.multi_reduction <add>, %135, %cst_107 [1] : vector<16x2x192xf32> to vector<16x192xf32>
    %137 = vector.shape_cast %136 : vector<16x192xf32> to vector<16x1x192xf32>
    %cst_108 = arith.constant dense<0.000000e+00> : vector<1x192xf32>
    %138 = vector.multi_reduction <add>, %137, %cst_108 [0] : vector<16x1x192xf32> to vector<1x192xf32>
    %139 = vector.shape_cast %138 : vector<1x192xf32> to vector<1x1x192xf32>
    %cst_109 = arith.constant 3.125000e-02 : f32
    %140 = vector.broadcast %cst_109 : f32 to vector<1x1x192xf32>
    %141 = arith.mulf %139, %140 : vector<1x1x192xf32>
    %142 = vector.broadcast %141 : vector<1x1x192xf32> to vector<16x2x192xf32>
    %143 = arith.subf %135, %142 : vector<16x2x192xf32>
    %144 = arith.mulf %143, %143 : vector<16x2x192xf32>
    %cst_110 = arith.constant dense<0.000000e+00> : vector<16x192xf32>
    %145 = vector.multi_reduction <add>, %144, %cst_110 [1] : vector<16x2x192xf32> to vector<16x192xf32>
    %146 = vector.shape_cast %145 : vector<16x192xf32> to vector<16x1x192xf32>
    %cst_111 = arith.constant dense<0.000000e+00> : vector<1x192xf32>
    %147 = vector.multi_reduction <add>, %146, %cst_111 [0] : vector<16x1x192xf32> to vector<1x192xf32>
    %148 = vector.shape_cast %147 : vector<1x192xf32> to vector<1x1x192xf32>
    %cst_112 = arith.constant 3.125000e-02 : f32
    %149 = vector.broadcast %cst_112 : f32 to vector<1x1x192xf32>
    %150 = arith.mulf %148, %149 : vector<1x1x192xf32>
    %c0_113 = arith.constant 0 : index
    %c0_114 = arith.constant 0 : index
    %151 = vector.load %arg5[%c0_113, %c0_114] : memref<1x192xf32, #tpu.memory_space<vmem>>, vector<1x192xf32>
    %cst_115 = arith.constant 9.99999974E-6 : f32
    %152 = vector.broadcast %cst_115 : f32 to vector<1x1x192xf32>
    %153 = arith.addf %150, %152 : vector<1x1x192xf32>
    %154 = math.rsqrt %153 : vector<1x1x192xf32>
    %155 = vector.shape_cast %151 : vector<1x192xf32> to vector<1x1x192xf32>
    %156 = arith.mulf %155, %154 : vector<1x1x192xf32>
    %157 = vector.broadcast %156 : vector<1x1x192xf32> to vector<16x2x192xf32>
    %158 = arith.mulf %143, %157 : vector<16x2x192xf32>
    %c0_116 = arith.constant 0 : index
    %c0_117 = arith.constant 0 : index
    %159 = vector.load %arg6[%c0_116, %c0_117] : memref<1x192xf32, #tpu.memory_space<vmem>>, vector<1x192xf32>
    %160 = vector.shape_cast %159 : vector<1x192xf32> to vector<1x1x192xf32>
    %161 = vector.broadcast %160 : vector<1x1x192xf32> to vector<16x2x192xf32>
    %162 = arith.addf %158, %161 : vector<16x2x192xf32>
    %cst_118 = arith.constant 0.000000e+00 : f32
    %163 = vector.broadcast %cst_118 : f32 to vector<16x2x192xf32>
    %164 = arith.maximumf %162, %163 : vector<16x2x192xf32>
    %c0_119 = arith.constant 0 : index
    %c0_120 = arith.constant 0 : index
    %c0_121 = arith.constant 0 : index
    %165 = vector.load %arg7[%c0_119, %c0_120, %c0_121] : memref<16x2x192xf32, #tpu.memory_space<vmem>>, vector<16x2x192xf32>
    tpu.vector_store %arg7[%c0_119, %c0_120, %c0_121], %164 {strides = array<i32>} : memref<16x2x192xf32, #tpu.memory_space<vmem>>, vector<16x2x192xf32>,
    return
  }
}

module attributes {stable_mosaic.version = 11 : i64} {
  func.func @_phased_deconv_bn_relu_kernel(%arg0: memref<4x96x768xf32, #tpu.memory_space<vmem>>, %arg1: memref<4x768x32xf32, #tpu.memory_space<vmem>>, %arg2: memref<96x1xf32, #tpu.memory_space<vmem>>, %arg3: memref<96x1xf32, #tpu.memory_space<vmem>>, %arg4: memref<96x1xf32, #tpu.memory_space<vmem>>, %arg5: memref<4x96x32xf32, #tpu.memory_space<vmem>>) attributes {dimension_semantics = [], scalar_prefetch = 0 : i64, scratch_operands = 0 : i64, tpu.core_type = #tpu.core_type<tc>} {
    %c0 = arith.constant 0 : index
    %c0_0 = arith.constant 0 : index
    %0 = vector.load %arg2[%c0, %c0_0] : memref<96x1xf32, #tpu.memory_space<vmem>>, vector<96x1xf32>
    %c0_1 = arith.constant 0 : index
    %c0_2 = arith.constant 0 : index
    %c0_3 = arith.constant 0 : index
    %1 = vector.load %arg0[%c0_1, %c0_2, %c0_3] : memref<4x96x768xf32, #tpu.memory_space<vmem>>, vector<1x96x768xf32>
    %2 = vector.shape_cast %1 : vector<1x96x768xf32> to vector<96x768xf32>
    %c0_4 = arith.constant 0 : index
    %c0_5 = arith.constant 0 : index
    %c0_6 = arith.constant 0 : index
    %3 = vector.load %arg1[%c0_4, %c0_5, %c0_6] : memref<4x768x32xf32, #tpu.memory_space<vmem>>, vector<1x768x32xf32>
    %4 = vector.shape_cast %3 : vector<1x768x32xf32> to vector<768x32xf32>
    %cst = arith.constant dense<0.000000e+00> : vector<96x32xf32>
    %5 = tpu.matmul %2, %4, %cst {dimension_numbers = #tpu.dot_dimension_numbers<[1], [0], [0], [1], [0, 0, 1, 1], [], []>} : vector<96x768xf32>, vector<768x32xf32>, vector<96x32xf32> -> vector<96x32xf32>
    %6 = vector.broadcast %0 : vector<96x1xf32> to vector<96x32xf32>
    %7 = arith.addf %5, %6 : vector<96x32xf32>
    %c0_7 = arith.constant 0 : index
    %c0_8 = arith.constant 0 : index
    %c0_9 = arith.constant 0 : index
    %8 = vector.load %arg5[%c0_7, %c0_8, %c0_9] : memref<4x96x32xf32, #tpu.memory_space<vmem>>, vector<1x96x32xf32>
    %9 = vector.shape_cast %8 : vector<1x96x32xf32> to vector<96x32xf32>
    %10 = vector.shape_cast %7 : vector<96x32xf32> to vector<1x96x32xf32>
    tpu.vector_store %arg5[%c0_7, %c0_8, %c0_9], %10 {strides = array<i32>} : memref<4x96x32xf32, #tpu.memory_space<vmem>>, vector<1x96x32xf32>,
    %c1 = arith.constant 1 : index
    %c0_10 = arith.constant 0 : index
    %c0_11 = arith.constant 0 : index
    %11 = vector.load %arg0[%c1, %c0_10, %c0_11] : memref<4x96x768xf32, #tpu.memory_space<vmem>>, vector<1x96x768xf32>
    %12 = vector.shape_cast %11 : vector<1x96x768xf32> to vector<96x768xf32>
    %c1_12 = arith.constant 1 : index
    %c0_13 = arith.constant 0 : index
    %c0_14 = arith.constant 0 : index
    %13 = vector.load %arg1[%c1_12, %c0_13, %c0_14] : memref<4x768x32xf32, #tpu.memory_space<vmem>>, vector<1x768x32xf32>
    %14 = vector.shape_cast %13 : vector<1x768x32xf32> to vector<768x32xf32>
    %cst_15 = arith.constant dense<0.000000e+00> : vector<96x32xf32>
    %15 = tpu.matmul %12, %14, %cst_15 {dimension_numbers = #tpu.dot_dimension_numbers<[1], [0], [0], [1], [0, 0, 1, 1], [], []>} : vector<96x768xf32>, vector<768x32xf32>, vector<96x32xf32> -> vector<96x32xf32>
    %16 = vector.broadcast %0 : vector<96x1xf32> to vector<96x32xf32>
    %17 = arith.addf %15, %16 : vector<96x32xf32>
    %c1_16 = arith.constant 1 : index
    %c0_17 = arith.constant 0 : index
    %c0_18 = arith.constant 0 : index
    %18 = vector.load %arg5[%c1_16, %c0_17, %c0_18] : memref<4x96x32xf32, #tpu.memory_space<vmem>>, vector<1x96x32xf32>
    %19 = vector.shape_cast %18 : vector<1x96x32xf32> to vector<96x32xf32>
    %20 = vector.shape_cast %17 : vector<96x32xf32> to vector<1x96x32xf32>
    tpu.vector_store %arg5[%c1_16, %c0_17, %c0_18], %20 {strides = array<i32>} : memref<4x96x32xf32, #tpu.memory_space<vmem>>, vector<1x96x32xf32>,
    %c2 = arith.constant 2 : index
    %c0_19 = arith.constant 0 : index
    %c0_20 = arith.constant 0 : index
    %21 = vector.load %arg0[%c2, %c0_19, %c0_20] : memref<4x96x768xf32, #tpu.memory_space<vmem>>, vector<1x96x768xf32>
    %22 = vector.shape_cast %21 : vector<1x96x768xf32> to vector<96x768xf32>
    %c2_21 = arith.constant 2 : index
    %c0_22 = arith.constant 0 : index
    %c0_23 = arith.constant 0 : index
    %23 = vector.load %arg1[%c2_21, %c0_22, %c0_23] : memref<4x768x32xf32, #tpu.memory_space<vmem>>, vector<1x768x32xf32>
    %24 = vector.shape_cast %23 : vector<1x768x32xf32> to vector<768x32xf32>
    %cst_24 = arith.constant dense<0.000000e+00> : vector<96x32xf32>
    %25 = tpu.matmul %22, %24, %cst_24 {dimension_numbers = #tpu.dot_dimension_numbers<[1], [0], [0], [1], [0, 0, 1, 1], [], []>} : vector<96x768xf32>, vector<768x32xf32>, vector<96x32xf32> -> vector<96x32xf32>
    %26 = vector.broadcast %0 : vector<96x1xf32> to vector<96x32xf32>
    %27 = arith.addf %25, %26 : vector<96x32xf32>
    %c2_25 = arith.constant 2 : index
    %c0_26 = arith.constant 0 : index
    %c0_27 = arith.constant 0 : index
    %28 = vector.load %arg5[%c2_25, %c0_26, %c0_27] : memref<4x96x32xf32, #tpu.memory_space<vmem>>, vector<1x96x32xf32>
    %29 = vector.shape_cast %28 : vector<1x96x32xf32> to vector<96x32xf32>
    %30 = vector.shape_cast %27 : vector<96x32xf32> to vector<1x96x32xf32>
    tpu.vector_store %arg5[%c2_25, %c0_26, %c0_27], %30 {strides = array<i32>} : memref<4x96x32xf32, #tpu.memory_space<vmem>>, vector<1x96x32xf32>,
    %c3 = arith.constant 3 : index
    %c0_28 = arith.constant 0 : index
    %c0_29 = arith.constant 0 : index
    %31 = vector.load %arg0[%c3, %c0_28, %c0_29] : memref<4x96x768xf32, #tpu.memory_space<vmem>>, vector<1x96x768xf32>
    %32 = vector.shape_cast %31 : vector<1x96x768xf32> to vector<96x768xf32>
    %c3_30 = arith.constant 3 : index
    %c0_31 = arith.constant 0 : index
    %c0_32 = arith.constant 0 : index
    %33 = vector.load %arg1[%c3_30, %c0_31, %c0_32] : memref<4x768x32xf32, #tpu.memory_space<vmem>>, vector<1x768x32xf32>
    %34 = vector.shape_cast %33 : vector<1x768x32xf32> to vector<768x32xf32>
    %cst_33 = arith.constant dense<0.000000e+00> : vector<96x32xf32>
    %35 = tpu.matmul %32, %34, %cst_33 {dimension_numbers = #tpu.dot_dimension_numbers<[1], [0], [0], [1], [0, 0, 1, 1], [], []>} : vector<96x768xf32>, vector<768x32xf32>, vector<96x32xf32> -> vector<96x32xf32>
    %36 = vector.broadcast %0 : vector<96x1xf32> to vector<96x32xf32>
    %37 = arith.addf %35, %36 : vector<96x32xf32>
    %c3_34 = arith.constant 3 : index
    %c0_35 = arith.constant 0 : index
    %c0_36 = arith.constant 0 : index
    %38 = vector.load %arg5[%c3_34, %c0_35, %c0_36] : memref<4x96x32xf32, #tpu.memory_space<vmem>>, vector<1x96x32xf32>
    %39 = vector.shape_cast %38 : vector<1x96x32xf32> to vector<96x32xf32>
    %40 = vector.shape_cast %37 : vector<96x32xf32> to vector<1x96x32xf32>
    tpu.vector_store %arg5[%c3_34, %c0_35, %c0_36], %40 {strides = array<i32>} : memref<4x96x32xf32, #tpu.memory_space<vmem>>, vector<1x96x32xf32>,
    %c0_37 = arith.constant 0 : index
    %c0_38 = arith.constant 0 : index
    %c0_39 = arith.constant 0 : index
    %41 = vector.load %arg5[%c0_37, %c0_38, %c0_39] : memref<4x96x32xf32, #tpu.memory_space<vmem>>, vector<4x96x32xf32>
    %cst_40 = arith.constant dense<0.000000e+00> : vector<4x96xf32>
    %42 = vector.multi_reduction <add>, %41, %cst_40 [2] : vector<4x96x32xf32> to vector<4x96xf32>
    %43 = vector.shape_cast %42 : vector<4x96xf32> to vector<4x96x1xf32>
    %cst_41 = arith.constant dense<0.000000e+00> : vector<96x1xf32>
    %44 = vector.multi_reduction <add>, %43, %cst_41 [0] : vector<4x96x1xf32> to vector<96x1xf32>
    %45 = vector.shape_cast %44 : vector<96x1xf32> to vector<1x96x1xf32>
    %cst_42 = arith.constant 7.812500e-03 : f32
    %46 = vector.broadcast %cst_42 : f32 to vector<1x96x1xf32>
    %47 = arith.mulf %45, %46 : vector<1x96x1xf32>
    %48 = vector.broadcast %47 : vector<1x96x1xf32> to vector<4x96x32xf32>
    %49 = arith.subf %41, %48 : vector<4x96x32xf32>
    %50 = arith.mulf %49, %49 : vector<4x96x32xf32>
    %cst_43 = arith.constant dense<0.000000e+00> : vector<4x96xf32>
    %51 = vector.multi_reduction <add>, %50, %cst_43 [2] : vector<4x96x32xf32> to vector<4x96xf32>
    %52 = vector.shape_cast %51 : vector<4x96xf32> to vector<4x96x1xf32>
    %cst_44 = arith.constant dense<0.000000e+00> : vector<96x1xf32>
    %53 = vector.multi_reduction <add>, %52, %cst_44 [0] : vector<4x96x1xf32> to vector<96x1xf32>
    %54 = vector.shape_cast %53 : vector<96x1xf32> to vector<1x96x1xf32>
    %cst_45 = arith.constant 7.812500e-03 : f32
    %55 = vector.broadcast %cst_45 : f32 to vector<1x96x1xf32>
    %56 = arith.mulf %54, %55 : vector<1x96x1xf32>
    %c0_46 = arith.constant 0 : index
    %c0_47 = arith.constant 0 : index
    %57 = vector.load %arg3[%c0_46, %c0_47] : memref<96x1xf32, #tpu.memory_space<vmem>>, vector<96x1xf32>
    %cst_48 = arith.constant 9.99999974E-6 : f32
    %58 = vector.broadcast %cst_48 : f32 to vector<1x96x1xf32>
    %59 = arith.addf %56, %58 : vector<1x96x1xf32>
    %60 = math.rsqrt %59 : vector<1x96x1xf32>
    %61 = vector.shape_cast %57 : vector<96x1xf32> to vector<1x96x1xf32>
    %62 = arith.mulf %61, %60 : vector<1x96x1xf32>
    %63 = vector.broadcast %62 : vector<1x96x1xf32> to vector<4x96x32xf32>
    %64 = arith.mulf %49, %63 : vector<4x96x32xf32>
    %c0_49 = arith.constant 0 : index
    %c0_50 = arith.constant 0 : index
    %65 = vector.load %arg4[%c0_49, %c0_50] : memref<96x1xf32, #tpu.memory_space<vmem>>, vector<96x1xf32>
    %66 = vector.shape_cast %65 : vector<96x1xf32> to vector<1x96x1xf32>
    %67 = vector.broadcast %66 : vector<1x96x1xf32> to vector<4x96x32xf32>
    %68 = arith.addf %64, %67 : vector<4x96x32xf32>
    %cst_51 = arith.constant 0.000000e+00 : f32
    %69 = vector.broadcast %cst_51 : f32 to vector<4x96x32xf32>
    %70 = arith.maximumf %68, %69 : vector<4x96x32xf32>
    %c0_52 = arith.constant 0 : index
    %c0_53 = arith.constant 0 : index
    %c0_54 = arith.constant 0 : index
    %71 = vector.load %arg5[%c0_52, %c0_53, %c0_54] : memref<4x96x32xf32, #tpu.memory_space<vmem>>, vector<4x96x32xf32>
    tpu.vector_store %arg5[%c0_52, %c0_53, %c0_54], %70 {strides = array<i32>} : memref<4x96x32xf32, #tpu.memory_space<vmem>>, vector<4x96x32xf32>,
    return
  }
}

module attributes {stable_mosaic.version = 11 : i64} {
  func.func @_phased_deconv_bn_relu_kernel(%arg0: memref<4x48x384xf32, #tpu.memory_space<vmem>>, %arg1: memref<4x384x128xf32, #tpu.memory_space<vmem>>, %arg2: memref<48x1xf32, #tpu.memory_space<vmem>>, %arg3: memref<48x1xf32, #tpu.memory_space<vmem>>, %arg4: memref<48x1xf32, #tpu.memory_space<vmem>>, %arg5: memref<4x48x128xf32, #tpu.memory_space<vmem>>) attributes {dimension_semantics = [], scalar_prefetch = 0 : i64, scratch_operands = 0 : i64, tpu.core_type = #tpu.core_type<tc>} {
    %c0 = arith.constant 0 : index
    %c0_0 = arith.constant 0 : index
    %0 = vector.load %arg2[%c0, %c0_0] : memref<48x1xf32, #tpu.memory_space<vmem>>, vector<48x1xf32>
    %c0_1 = arith.constant 0 : index
    %c0_2 = arith.constant 0 : index
    %c0_3 = arith.constant 0 : index
    %1 = vector.load %arg0[%c0_1, %c0_2, %c0_3] : memref<4x48x384xf32, #tpu.memory_space<vmem>>, vector<1x48x384xf32>
    %2 = vector.shape_cast %1 : vector<1x48x384xf32> to vector<48x384xf32>
    %c0_4 = arith.constant 0 : index
    %c0_5 = arith.constant 0 : index
    %c0_6 = arith.constant 0 : index
    %3 = vector.load %arg1[%c0_4, %c0_5, %c0_6] : memref<4x384x128xf32, #tpu.memory_space<vmem>>, vector<1x384x128xf32>
    %4 = vector.shape_cast %3 : vector<1x384x128xf32> to vector<384x128xf32>
    %cst = arith.constant dense<0.000000e+00> : vector<48x128xf32>
    %5 = tpu.matmul %2, %4, %cst {dimension_numbers = #tpu.dot_dimension_numbers<[1], [0], [0], [1], [0, 0, 1, 1], [], []>} : vector<48x384xf32>, vector<384x128xf32>, vector<48x128xf32> -> vector<48x128xf32>
    %6 = vector.broadcast %0 : vector<48x1xf32> to vector<48x128xf32>
    %7 = arith.addf %5, %6 : vector<48x128xf32>
    %c0_7 = arith.constant 0 : index
    %c0_8 = arith.constant 0 : index
    %c0_9 = arith.constant 0 : index
    %8 = vector.load %arg5[%c0_7, %c0_8, %c0_9] : memref<4x48x128xf32, #tpu.memory_space<vmem>>, vector<1x48x128xf32>
    %9 = vector.shape_cast %8 : vector<1x48x128xf32> to vector<48x128xf32>
    %10 = vector.shape_cast %7 : vector<48x128xf32> to vector<1x48x128xf32>
    tpu.vector_store %arg5[%c0_7, %c0_8, %c0_9], %10 {strides = array<i32>} : memref<4x48x128xf32, #tpu.memory_space<vmem>>, vector<1x48x128xf32>,
    %c1 = arith.constant 1 : index
    %c0_10 = arith.constant 0 : index
    %c0_11 = arith.constant 0 : index
    %11 = vector.load %arg0[%c1, %c0_10, %c0_11] : memref<4x48x384xf32, #tpu.memory_space<vmem>>, vector<1x48x384xf32>
    %12 = vector.shape_cast %11 : vector<1x48x384xf32> to vector<48x384xf32>
    %c1_12 = arith.constant 1 : index
    %c0_13 = arith.constant 0 : index
    %c0_14 = arith.constant 0 : index
    %13 = vector.load %arg1[%c1_12, %c0_13, %c0_14] : memref<4x384x128xf32, #tpu.memory_space<vmem>>, vector<1x384x128xf32>
    %14 = vector.shape_cast %13 : vector<1x384x128xf32> to vector<384x128xf32>
    %cst_15 = arith.constant dense<0.000000e+00> : vector<48x128xf32>
    %15 = tpu.matmul %12, %14, %cst_15 {dimension_numbers = #tpu.dot_dimension_numbers<[1], [0], [0], [1], [0, 0, 1, 1], [], []>} : vector<48x384xf32>, vector<384x128xf32>, vector<48x128xf32> -> vector<48x128xf32>
    %16 = vector.broadcast %0 : vector<48x1xf32> to vector<48x128xf32>
    %17 = arith.addf %15, %16 : vector<48x128xf32>
    %c1_16 = arith.constant 1 : index
    %c0_17 = arith.constant 0 : index
    %c0_18 = arith.constant 0 : index
    %18 = vector.load %arg5[%c1_16, %c0_17, %c0_18] : memref<4x48x128xf32, #tpu.memory_space<vmem>>, vector<1x48x128xf32>
    %19 = vector.shape_cast %18 : vector<1x48x128xf32> to vector<48x128xf32>
    %20 = vector.shape_cast %17 : vector<48x128xf32> to vector<1x48x128xf32>
    tpu.vector_store %arg5[%c1_16, %c0_17, %c0_18], %20 {strides = array<i32>} : memref<4x48x128xf32, #tpu.memory_space<vmem>>, vector<1x48x128xf32>,
    %c2 = arith.constant 2 : index
    %c0_19 = arith.constant 0 : index
    %c0_20 = arith.constant 0 : index
    %21 = vector.load %arg0[%c2, %c0_19, %c0_20] : memref<4x48x384xf32, #tpu.memory_space<vmem>>, vector<1x48x384xf32>
    %22 = vector.shape_cast %21 : vector<1x48x384xf32> to vector<48x384xf32>
    %c2_21 = arith.constant 2 : index
    %c0_22 = arith.constant 0 : index
    %c0_23 = arith.constant 0 : index
    %23 = vector.load %arg1[%c2_21, %c0_22, %c0_23] : memref<4x384x128xf32, #tpu.memory_space<vmem>>, vector<1x384x128xf32>
    %24 = vector.shape_cast %23 : vector<1x384x128xf32> to vector<384x128xf32>
    %cst_24 = arith.constant dense<0.000000e+00> : vector<48x128xf32>
    %25 = tpu.matmul %22, %24, %cst_24 {dimension_numbers = #tpu.dot_dimension_numbers<[1], [0], [0], [1], [0, 0, 1, 1], [], []>} : vector<48x384xf32>, vector<384x128xf32>, vector<48x128xf32> -> vector<48x128xf32>
    %26 = vector.broadcast %0 : vector<48x1xf32> to vector<48x128xf32>
    %27 = arith.addf %25, %26 : vector<48x128xf32>
    %c2_25 = arith.constant 2 : index
    %c0_26 = arith.constant 0 : index
    %c0_27 = arith.constant 0 : index
    %28 = vector.load %arg5[%c2_25, %c0_26, %c0_27] : memref<4x48x128xf32, #tpu.memory_space<vmem>>, vector<1x48x128xf32>
    %29 = vector.shape_cast %28 : vector<1x48x128xf32> to vector<48x128xf32>
    %30 = vector.shape_cast %27 : vector<48x128xf32> to vector<1x48x128xf32>
    tpu.vector_store %arg5[%c2_25, %c0_26, %c0_27], %30 {strides = array<i32>} : memref<4x48x128xf32, #tpu.memory_space<vmem>>, vector<1x48x128xf32>,
    %c3 = arith.constant 3 : index
    %c0_28 = arith.constant 0 : index
    %c0_29 = arith.constant 0 : index
    %31 = vector.load %arg0[%c3, %c0_28, %c0_29] : memref<4x48x384xf32, #tpu.memory_space<vmem>>, vector<1x48x384xf32>
    %32 = vector.shape_cast %31 : vector<1x48x384xf32> to vector<48x384xf32>
    %c3_30 = arith.constant 3 : index
    %c0_31 = arith.constant 0 : index
    %c0_32 = arith.constant 0 : index
    %33 = vector.load %arg1[%c3_30, %c0_31, %c0_32] : memref<4x384x128xf32, #tpu.memory_space<vmem>>, vector<1x384x128xf32>
    %34 = vector.shape_cast %33 : vector<1x384x128xf32> to vector<384x128xf32>
    %cst_33 = arith.constant dense<0.000000e+00> : vector<48x128xf32>
    %35 = tpu.matmul %32, %34, %cst_33 {dimension_numbers = #tpu.dot_dimension_numbers<[1], [0], [0], [1], [0, 0, 1, 1], [], []>} : vector<48x384xf32>, vector<384x128xf32>, vector<48x128xf32> -> vector<48x128xf32>
    %36 = vector.broadcast %0 : vector<48x1xf32> to vector<48x128xf32>
    %37 = arith.addf %35, %36 : vector<48x128xf32>
    %c3_34 = arith.constant 3 : index
    %c0_35 = arith.constant 0 : index
    %c0_36 = arith.constant 0 : index
    %38 = vector.load %arg5[%c3_34, %c0_35, %c0_36] : memref<4x48x128xf32, #tpu.memory_space<vmem>>, vector<1x48x128xf32>
    %39 = vector.shape_cast %38 : vector<1x48x128xf32> to vector<48x128xf32>
    %40 = vector.shape_cast %37 : vector<48x128xf32> to vector<1x48x128xf32>
    tpu.vector_store %arg5[%c3_34, %c0_35, %c0_36], %40 {strides = array<i32>} : memref<4x48x128xf32, #tpu.memory_space<vmem>>, vector<1x48x128xf32>,
    %c0_37 = arith.constant 0 : index
    %c0_38 = arith.constant 0 : index
    %c0_39 = arith.constant 0 : index
    %41 = vector.load %arg5[%c0_37, %c0_38, %c0_39] : memref<4x48x128xf32, #tpu.memory_space<vmem>>, vector<4x48x128xf32>
    %cst_40 = arith.constant dense<0.000000e+00> : vector<4x48xf32>
    %42 = vector.multi_reduction <add>, %41, %cst_40 [2] : vector<4x48x128xf32> to vector<4x48xf32>
    %43 = vector.shape_cast %42 : vector<4x48xf32> to vector<4x48x1xf32>
    %cst_41 = arith.constant dense<0.000000e+00> : vector<48x1xf32>
    %44 = vector.multi_reduction <add>, %43, %cst_41 [0] : vector<4x48x1xf32> to vector<48x1xf32>
    %45 = vector.shape_cast %44 : vector<48x1xf32> to vector<1x48x1xf32>
    %cst_42 = arith.constant 0.001953125 : f32
    %46 = vector.broadcast %cst_42 : f32 to vector<1x48x1xf32>
    %47 = arith.mulf %45, %46 : vector<1x48x1xf32>
    %48 = vector.broadcast %47 : vector<1x48x1xf32> to vector<4x48x128xf32>
    %49 = arith.subf %41, %48 : vector<4x48x128xf32>
    %50 = arith.mulf %49, %49 : vector<4x48x128xf32>
    %cst_43 = arith.constant dense<0.000000e+00> : vector<4x48xf32>
    %51 = vector.multi_reduction <add>, %50, %cst_43 [2] : vector<4x48x128xf32> to vector<4x48xf32>
    %52 = vector.shape_cast %51 : vector<4x48xf32> to vector<4x48x1xf32>
    %cst_44 = arith.constant dense<0.000000e+00> : vector<48x1xf32>
    %53 = vector.multi_reduction <add>, %52, %cst_44 [0] : vector<4x48x1xf32> to vector<48x1xf32>
    %54 = vector.shape_cast %53 : vector<48x1xf32> to vector<1x48x1xf32>
    %cst_45 = arith.constant 0.001953125 : f32
    %55 = vector.broadcast %cst_45 : f32 to vector<1x48x1xf32>
    %56 = arith.mulf %54, %55 : vector<1x48x1xf32>
    %c0_46 = arith.constant 0 : index
    %c0_47 = arith.constant 0 : index
    %57 = vector.load %arg3[%c0_46, %c0_47] : memref<48x1xf32, #tpu.memory_space<vmem>>, vector<48x1xf32>
    %cst_48 = arith.constant 9.99999974E-6 : f32
    %58 = vector.broadcast %cst_48 : f32 to vector<1x48x1xf32>
    %59 = arith.addf %56, %58 : vector<1x48x1xf32>
    %60 = math.rsqrt %59 : vector<1x48x1xf32>
    %61 = vector.shape_cast %57 : vector<48x1xf32> to vector<1x48x1xf32>
    %62 = arith.mulf %61, %60 : vector<1x48x1xf32>
    %63 = vector.broadcast %62 : vector<1x48x1xf32> to vector<4x48x128xf32>
    %64 = arith.mulf %49, %63 : vector<4x48x128xf32>
    %c0_49 = arith.constant 0 : index
    %c0_50 = arith.constant 0 : index
    %65 = vector.load %arg4[%c0_49, %c0_50] : memref<48x1xf32, #tpu.memory_space<vmem>>, vector<48x1xf32>
    %66 = vector.shape_cast %65 : vector<48x1xf32> to vector<1x48x1xf32>
    %67 = vector.broadcast %66 : vector<1x48x1xf32> to vector<4x48x128xf32>
    %68 = arith.addf %64, %67 : vector<4x48x128xf32>
    %cst_51 = arith.constant 0.000000e+00 : f32
    %69 = vector.broadcast %cst_51 : f32 to vector<4x48x128xf32>
    %70 = arith.maximumf %68, %69 : vector<4x48x128xf32>
    %c0_52 = arith.constant 0 : index
    %c0_53 = arith.constant 0 : index
    %c0_54 = arith.constant 0 : index
    %71 = vector.load %arg5[%c0_52, %c0_53, %c0_54] : memref<4x48x128xf32, #tpu.memory_space<vmem>>, vector<4x48x128xf32>
    tpu.vector_store %arg5[%c0_52, %c0_53, %c0_54], %70 {strides = array<i32>} : memref<4x48x128xf32, #tpu.memory_space<vmem>>, vector<4x48x128xf32>,
    return
  }
}

module attributes {stable_mosaic.version = 11 : i64} {
  func.func @_phased_deconv_tanh_kernel(%arg0: memref<4x3x192xf32, #tpu.memory_space<vmem>>, %arg1: memref<4x192x512xf32, #tpu.memory_space<vmem>>, %arg2: memref<3x1xf32, #tpu.memory_space<vmem>>, %arg3: memref<4x3x512xf32, #tpu.memory_space<vmem>>) attributes {dimension_semantics = [], scalar_prefetch = 0 : i64, scratch_operands = 0 : i64, tpu.core_type = #tpu.core_type<tc>} {
    %c0 = arith.constant 0 : index
    %c0_0 = arith.constant 0 : index
    %0 = vector.load %arg2[%c0, %c0_0] : memref<3x1xf32, #tpu.memory_space<vmem>>, vector<3x1xf32>
    %c0_1 = arith.constant 0 : index
    %c0_2 = arith.constant 0 : index
    %c0_3 = arith.constant 0 : index
    %1 = vector.load %arg0[%c0_1, %c0_2, %c0_3] : memref<4x3x192xf32, #tpu.memory_space<vmem>>, vector<1x3x192xf32>
    %2 = vector.shape_cast %1 : vector<1x3x192xf32> to vector<3x192xf32>
    %c0_4 = arith.constant 0 : index
    %c0_5 = arith.constant 0 : index
    %c0_6 = arith.constant 0 : index
    %3 = vector.load %arg1[%c0_4, %c0_5, %c0_6] : memref<4x192x512xf32, #tpu.memory_space<vmem>>, vector<1x192x512xf32>
    %4 = vector.shape_cast %3 : vector<1x192x512xf32> to vector<192x512xf32>
    %cst = arith.constant dense<0.000000e+00> : vector<3x512xf32>
    %5 = tpu.matmul %2, %4, %cst {dimension_numbers = #tpu.dot_dimension_numbers<[1], [0], [0], [1], [0, 0, 1, 1], [], []>} : vector<3x192xf32>, vector<192x512xf32>, vector<3x512xf32> -> vector<3x512xf32>
    %6 = vector.broadcast %0 : vector<3x1xf32> to vector<3x512xf32>
    %7 = arith.addf %5, %6 : vector<3x512xf32>
    %8 = math.tanh %7 : vector<3x512xf32>
    %c0_7 = arith.constant 0 : index
    %c0_8 = arith.constant 0 : index
    %c0_9 = arith.constant 0 : index
    %9 = vector.load %arg3[%c0_7, %c0_8, %c0_9] : memref<4x3x512xf32, #tpu.memory_space<vmem>>, vector<1x3x512xf32>
    %10 = vector.shape_cast %9 : vector<1x3x512xf32> to vector<3x512xf32>
    %11 = vector.shape_cast %8 : vector<3x512xf32> to vector<1x3x512xf32>
    tpu.vector_store %arg3[%c0_7, %c0_8, %c0_9], %11 {strides = array<i32>} : memref<4x3x512xf32, #tpu.memory_space<vmem>>, vector<1x3x512xf32>,
    %c1 = arith.constant 1 : index
    %c0_10 = arith.constant 0 : index
    %c0_11 = arith.constant 0 : index
    %12 = vector.load %arg0[%c1, %c0_10, %c0_11] : memref<4x3x192xf32, #tpu.memory_space<vmem>>, vector<1x3x192xf32>
    %13 = vector.shape_cast %12 : vector<1x3x192xf32> to vector<3x192xf32>
    %c1_12 = arith.constant 1 : index
    %c0_13 = arith.constant 0 : index
    %c0_14 = arith.constant 0 : index
    %14 = vector.load %arg1[%c1_12, %c0_13, %c0_14] : memref<4x192x512xf32, #tpu.memory_space<vmem>>, vector<1x192x512xf32>
    %15 = vector.shape_cast %14 : vector<1x192x512xf32> to vector<192x512xf32>
    %cst_15 = arith.constant dense<0.000000e+00> : vector<3x512xf32>
    %16 = tpu.matmul %13, %15, %cst_15 {dimension_numbers = #tpu.dot_dimension_numbers<[1], [0], [0], [1], [0, 0, 1, 1], [], []>} : vector<3x192xf32>, vector<192x512xf32>, vector<3x512xf32> -> vector<3x512xf32>
    %17 = vector.broadcast %0 : vector<3x1xf32> to vector<3x512xf32>
    %18 = arith.addf %16, %17 : vector<3x512xf32>
    %19 = math.tanh %18 : vector<3x512xf32>
    %c1_16 = arith.constant 1 : index
    %c0_17 = arith.constant 0 : index
    %c0_18 = arith.constant 0 : index
    %20 = vector.load %arg3[%c1_16, %c0_17, %c0_18] : memref<4x3x512xf32, #tpu.memory_space<vmem>>, vector<1x3x512xf32>
    %21 = vector.shape_cast %20 : vector<1x3x512xf32> to vector<3x512xf32>
    %22 = vector.shape_cast %19 : vector<3x512xf32> to vector<1x3x512xf32>
    tpu.vector_store %arg3[%c1_16, %c0_17, %c0_18], %22 {strides = array<i32>} : memref<4x3x512xf32, #tpu.memory_space<vmem>>, vector<1x3x512xf32>,
    %c2 = arith.constant 2 : index
    %c0_19 = arith.constant 0 : index
    %c0_20 = arith.constant 0 : index
    %23 = vector.load %arg0[%c2, %c0_19, %c0_20] : memref<4x3x192xf32, #tpu.memory_space<vmem>>, vector<1x3x192xf32>
    %24 = vector.shape_cast %23 : vector<1x3x192xf32> to vector<3x192xf32>
    %c2_21 = arith.constant 2 : index
    %c0_22 = arith.constant 0 : index
    %c0_23 = arith.constant 0 : index
    %25 = vector.load %arg1[%c2_21, %c0_22, %c0_23] : memref<4x192x512xf32, #tpu.memory_space<vmem>>, vector<1x192x512xf32>
    %26 = vector.shape_cast %25 : vector<1x192x512xf32> to vector<192x512xf32>
    %cst_24 = arith.constant dense<0.000000e+00> : vector<3x512xf32>
    %27 = tpu.matmul %24, %26, %cst_24 {dimension_numbers = #tpu.dot_dimension_numbers<[1], [0], [0], [1], [0, 0, 1, 1], [], []>} : vector<3x192xf32>, vector<192x512xf32>, vector<3x512xf32> -> vector<3x512xf32>
    %28 = vector.broadcast %0 : vector<3x1xf32> to vector<3x512xf32>
    %29 = arith.addf %27, %28 : vector<3x512xf32>
    %30 = math.tanh %29 : vector<3x512xf32>
    %c2_25 = arith.constant 2 : index
    %c0_26 = arith.constant 0 : index
    %c0_27 = arith.constant 0 : index
    %31 = vector.load %arg3[%c2_25, %c0_26, %c0_27] : memref<4x3x512xf32, #tpu.memory_space<vmem>>, vector<1x3x512xf32>
    %32 = vector.shape_cast %31 : vector<1x3x512xf32> to vector<3x512xf32>
    %33 = vector.shape_cast %30 : vector<3x512xf32> to vector<1x3x512xf32>
    tpu.vector_store %arg3[%c2_25, %c0_26, %c0_27], %33 {strides = array<i32>} : memref<4x3x512xf32, #tpu.memory_space<vmem>>, vector<1x3x512xf32>,
    %c3 = arith.constant 3 : index
    %c0_28 = arith.constant 0 : index
    %c0_29 = arith.constant 0 : index
    %34 = vector.load %arg0[%c3, %c0_28, %c0_29] : memref<4x3x192xf32, #tpu.memory_space<vmem>>, vector<1x3x192xf32>
    %35 = vector.shape_cast %34 : vector<1x3x192xf32> to vector<3x192xf32>
    %c3_30 = arith.constant 3 : index
    %c0_31 = arith.constant 0 : index
    %c0_32 = arith.constant 0 : index
    %36 = vector.load %arg1[%c3_30, %c0_31, %c0_32] : memref<4x192x512xf32, #tpu.memory_space<vmem>>, vector<1x192x512xf32>
    %37 = vector.shape_cast %36 : vector<1x192x512xf32> to vector<192x512xf32>
    %cst_33 = arith.constant dense<0.000000e+00> : vector<3x512xf32>
    %38 = tpu.matmul %35, %37, %cst_33 {dimension_numbers = #tpu.dot_dimension_numbers<[1], [0], [0], [1], [0, 0, 1, 1], [], []>} : vector<3x192xf32>, vector<192x512xf32>, vector<3x512xf32> -> vector<3x512xf32>
    %39 = vector.broadcast %0 : vector<3x1xf32> to vector<3x512xf32>
    %40 = arith.addf %38, %39 : vector<3x512xf32>
    %41 = math.tanh %40 : vector<3x512xf32>
    %c3_34 = arith.constant 3 : index
    %c0_35 = arith.constant 0 : index
    %c0_36 = arith.constant 0 : index
    %42 = vector.load %arg3[%c3_34, %c0_35, %c0_36] : memref<4x3x512xf32, #tpu.memory_space<vmem>>, vector<1x3x512xf32>
    %43 = vector.shape_cast %42 : vector<1x3x512xf32> to vector<3x512xf32>
    %44 = vector.shape_cast %41 : vector<3x512xf32> to vector<1x3x512xf32>
    tpu.vector_store %arg3[%c3_34, %c0_35, %c0_36], %44 {strides = array<i32>} : memref<4x3x512xf32, #tpu.memory_space<vmem>>, vector<1x3x512xf32>,
    return
  }
}

</mosaic_0001>

<llo_original>
// kernel: generator_forward.4
$region0: #{generator_forward.4}
  #allocation0 [shape = 'u32[]', space=smem, size = 0x4, offset = 0x4, fixed_abs, tag = 'smem constant byte address 0x4 - core index']
  #allocation1 [shape = 'u32[144,128]{1,0:T(1,128)}', space=vmem, size = 0x12000, scoped, tag = 'internal scratch']
  %s0 = inlined_call_operand.vmem [shape: f32[2,110], index: 0, kind: input, shape index: {}]
  %s1 = inlined_call_operand.vmem [shape: f32[110,384], index: 1, kind: input, shape index: {}]
  %s2 = inlined_call_operand.vmem [shape: f32[1,384], index: 2, kind: input, shape index: {}]
  %s3 = inlined_call_operand.vmem [shape: f32[16,384,192], index: 3, kind: input, shape index: {}]
  %s4 = inlined_call_operand.vmem [shape: f32[1,192], index: 4, kind: input, shape index: {}]
  %s5 = inlined_call_operand.vmem [shape: f32[1,192], index: 5, kind: input, shape index: {}]
  %s6 = inlined_call_operand.vmem [shape: f32[1,192], index: 6, kind: input, shape index: {}]
  %s7 = inlined_call_operand.vmem [shape: f32[16,2,192], index: 7, kind: output, shape index: {}]
  %s8 = sld [smem:[#allocation0]]
  $region38: #{generator_forward.4} parent=0
    _
  %s10 = ssub.s32 1, %s8
  %s11 = scalar_select 0, %s10, %s8
  // Predicated region
  $region2: #{generator_forward.4} parent=0 // pred_check
    _
  $region3: #{generator_forward.4} parent=0 // pred_check_branch
    %13 = sbr.rel (0) target = $region5
  $region4: #{generator_forward.4} parent=0 // pred_region
    _
  $region5: #{generator_forward.4} parent=0 // pred_fallthru
    _
  // Predicated region
  $region6: #{generator_forward.4} parent=0 // pred_check
    _
  $region7: #{generator_forward.4} parent=0 // pred_check_branch
    %15 = sbr.rel (0) target = $region9
  $region8: #{generator_forward.4} parent=0 // pred_region
    _
  $region9: #{generator_forward.4} parent=0 // pred_fallthru
    _
  // Predicated region
  $region10: #{generator_forward.4} parent=0 // pred_check
    _
  $region11: #{generator_forward.4} parent=0 // pred_check_branch
    %17 = sbr.rel (0) target = $region13
  $region12: #{generator_forward.4} parent=0 // pred_region
    _
  $region13: #{generator_forward.4} parent=0 // pred_fallthru
    _
  // Predicated region
  $region14: #{generator_forward.4} parent=0 // pred_check
    _
  $region15: #{generator_forward.4} parent=0 // pred_check_branch
    %19 = sbr.rel (0) target = $region17
  $region16: #{generator_forward.4} parent=0 // pred_region
    _
  $region17: #{generator_forward.4} parent=0 // pred_fallthru
    _
  // Predicated region
  $region18: #{generator_forward.4} parent=0 // pred_check
    _
  $region19: #{generator_forward.4} parent=0 // pred_check_branch
    %21 = sbr.rel (0) target = $region21
  $region20: #{generator_forward.4} parent=0 // pred_region
    _
  $region21: #{generator_forward.4} parent=0 // pred_fallthru
    _
  // Predicated region
  $region22: #{generator_forward.4} parent=0 // pred_check
    _
  $region23: #{generator_forward.4} parent=0 // pred_check_branch
    %23 = sbr.rel (0) target = $region25
  $region24: #{generator_forward.4} parent=0 // pred_region
    _
  $region25: #{generator_forward.4} parent=0 // pred_fallthru
    _
  // Predicated region
  $region26: #{generator_forward.4} parent=0 // pred_check
    _
  $region27: #{generator_forward.4} parent=0 // pred_check_branch
    %25 = sbr.rel (0) target = $region29
  $region28: #{generator_forward.4} parent=0 // pred_region
    _
  $region29: #{generator_forward.4} parent=0 // pred_fallthru
    _
  %v26 = vld [vmem:[%s0] sm:$0x3]
  %v27 = vld [vmem:[%s1] sm:$0xff]
  %v28 = vld [vmem:[%s1 + $0x8] sm:$0xff]
  %v29 = vld [vmem:[%s1 + $0x10] sm:$0xff]
  %v30 = vld [vmem:[%s1 + $0x18] sm:$0xff]
  %v31 = vld [vmem:[%s1 + $0x20] sm:$0xff]
  %v32 = vld [vmem:[%s1 + $0x28] sm:$0xff]
  %v33 = vld [vmem:[%s1 + $0x30] sm:$0xff]
  %v34 = vld [vmem:[%s1 + $0x38] sm:$0xff]
  %v35 = vld [vmem:[%s1 + $0x40] sm:$0xff]
  %v36 = vld [vmem:[%s1 + $0x48] sm:$0xff]
  %v37 = vld [vmem:[%s1 + $0x50] sm:$0xff]
  %v38 = vld [vmem:[%s1 + $0x58] sm:$0xff]
  %v39 = vld [vmem:[%s1 + $0x60] sm:$0xff]
  %v40 = vld [vmem:[%s1 + $0x68] sm:$0xff]
  %v41 = vld [vmem:[%s1 + $0x70] sm:$0xff]
  %v42 = vld [vmem:[%s1 + $0x78] sm:$0xff]
  %v43 = vld [vmem:[%s1 + $0x80] sm:$0xff]
  %v44 = vld [vmem:[%s1 + $0x88] sm:$0xff]
  %v45 = vld [vmem:[%s1 + $0x90] sm:$0xff]
  %v46 = vld [vmem:[%s1 + $0x98] sm:$0xff]
  %v47 = vld [vmem:[%s1 + $0xa0] sm:$0xff]
  %v48 = vld [vmem:[%s1 + $0xa8] sm:$0xff]
  %v49 = vld [vmem:[%s1 + $0xb0] sm:$0xff]
  %v50 = vld [vmem:[%s1 + $0xb8] sm:$0xff]
  %v51 = vld [vmem:[%s1 + $0xc0] sm:$0xff]
  %v52 = vld [vmem:[%s1 + $0xc8] sm:$0xff]
  %v53 = vld [vmem:[%s1 + $0xd0] sm:$0xff]
  %v54 = vld [vmem:[%s1 + $0xd8] sm:$0xff]
  %v55 = vld [vmem:[%s1 + $0xe0] sm:$0xff]
  %v56 = vld [vmem:[%s1 + $0xe8] sm:$0xff]
  %v57 = vld [vmem:[%s1 + $0xf0] sm:$0xff]
  %v58 = vld [vmem:[%s1 + $0xf8] sm:$0xff]
  %v59 = vld [vmem:[%s1 + $0x100] sm:$0xff]
  %v60 = vld [vmem:[%s1 + $0x108] sm:$0xff]
  %v61 = vld [vmem:[%s1 + $0x110] sm:$0xff]
  %v62 = vld [vmem:[%s1 + $0x118] sm:$0xff]
  %v63 = vld [vmem:[%s1 + $0x120] sm:$0xff]
  %v64 = vld [vmem:[%s1 + $0x128] sm:$0xff]
  %v65 = vld [vmem:[%s1 + $0x130] sm:$0xff]
  %v66 = vld [vmem:[%s1 + $0x138] sm:$0x3f]
  %v67 = vld [vmem:[%s1 + $0x140] sm:$0x3f]
  %v68 = vld [vmem:[%s1 + $0x148] sm:$0x3f]
  %v69 = vld [vmem:[%s2] sm:$0x7]
  %v71 = vlaneseq
  %v72 = vshrl.u32 %v71, 7
  %v73 = vsub.s32 0, %v72
  %v74 = vrot.slane %v69, %v73
  %v75 = vlaneseq
  %v76 = vshrl.u32 %v75, 7
  %v77 = vsub.s32 1, %v76
  %v78 = vrot.slane %v69, %v77
  %v79 = vlaneseq
  %v80 = vshrl.u32 %v79, 7
  %v81 = vsub.s32 2, %v80
  %v82 = vrot.slane %v69, %v81
  %vm86 = vcmask 900096
  %v88 = vsel %vm86, %v26, 0
  %vm90 = vcmask 1045504
  %v92 = vsel %vm90, %v66, 0
  %v95 = vsel %vm90, %v67, 0
  %v98 = vsel %vm90, %v68, 0
  %100 = vmatprep.subr.mxu0 %v28
  %101 = vmatpush1.msra.mxu0 %v27
  %102 = vmatprep.subr.mxu0 %v31
  %103 = vmatpush1.msra.mxu0 %v30
  %104 = vmatprep.subr.mxu0 %v34
  %105 = vmatpush1.msra.mxu0 %v33
  %106 = vmatprep.subr.mxu0 %v37
  %107 = vmatpush1.msra.mxu0 %v36
  %108 = vmatprep.subr.mxu0 %v40
  %109 = vmatpush1.msra.mxu0 %v39
  %110 = vmatprep.subr.mxu0 %v43
  %111 = vmatpush1.msra.mxu0 %v42
  %112 = vmatprep.subr.mxu0 %v46
  %113 = vmatpush1.msra.mxu0 %v45
  %114 = vmatprep.subr.mxu0 %v49
  %115 = vmatpush1.msra.mxu0 %v48
  %116 = vmatprep.subr.mxu0 %v52
  %117 = vmatpush1.msra.mxu0 %v51
  %118 = vmatprep.subr.mxu0 %v55
  %119 = vmatpush1.msra.mxu0 %v54
  %120 = vmatprep.subr.mxu0 %v58
  %121 = vmatpush1.msra.mxu0 %v57
  %122 = vmatprep.subr.mxu0 %v61
  %123 = vmatpush1.msra.mxu0 %v60
  %124 = vmatprep.subr.mxu0 %v64
  %125 = vmatpush1.msra.mxu0 %v63
  %126 = vmatprep.subr.mxu0 %v95
  %127 = vmatpush1.msra.mxu0 %v92
  %128 = vmatprep.subr.mxu0 0.0
  %129 = vmatpush1.msra.mxu0 0.0
  %130 = vmatprep.subr.mxu0 0.0
  %131 = vmatpush1.msra.mxu0 0.0
  %132 = vmatprep.subr.mxu0 0.0
  %133 = vmatpush1.msra.mxu0 0.0
  %134 = vmatprep.subr.mxu0 0.0
  %135 = vmatpush1.msra.mxu0 0.0
  %136 = vmatprep.subr.mxu0 0.0
  %137 = vmatpush1.msra.mxu0 0.0
  %138 = vmatprep.subr.mxu0 0.0
  %139 = vmatpush1.msra.mxu0 0.0
  %140 = vmatprep.subr.mxu0 0.0
  %141 = vmatpush1.msra.mxu0 0.0
  %142 = vmatprep.subr.mxu0 0.0
  %143 = vmatpush1.msra.mxu0 0.0
  %144 = vmatprep.subr.mxu0 0.0
  %145 = vmatpush1.msra.mxu0 0.0
  %146 = vmatprep.subr.mxu0 0.0
  %147 = vmatpush1.msra.mxu0 0.0
  %148 = vmatprep.subr.mxu0 0.0
  %149 = vmatpush1.msra.mxu0 0.0
  %150 = vmatprep.subr.mxu0 0.0
  %151 = vmatpush1.msra.mxu0 0.0
  %152 = vmatprep.subr.mxu0 0.0
  %153 = vmatpush1.msra.mxu0 0.0
  %154 = vmatprep.subr.mxu0 0.0
  %155 = vmatpush1.msra.mxu0 0.0
  %156 = vmatprep.subr.mxu0 0.0
  %157 = vmatpush1.msra.mxu0 0.0
  %158 = vmatprep.subr.mxu0 0.0
  %159 = vmatpush1.msra.mxu0 0.0
  %160 = vmatprep.subr.mxu0 0.0
  %161 = vmatpush1.msra.mxu0 0.0
  %162 = vmatprep.subr.mxu0 0.0
  %163 = vmatpush1.msra.mxu0 0.0
  %164 = vmatprep.mubr.f32.mxu0 0.0
  %165 = vmatmul.mubr.f32.gmra.mrb[0].mxu0 %v88
  %v166 = vpop.f32.mrb[0].mxu0
  %v167 = vadd.f32 %v74, %v166
  %v168 = vpop.f32.mrb[0].mxu0
  %v169 = vadd.f32 %v78, %v168
  %170 = vdwg.mxu0
  %171 = vmatprep.subr.mxu0 0.0
  %172 = vmatpush1.msra.mxu0 %v29
  %173 = vmatprep.subr.mxu0 0.0
  %174 = vmatpush1.msra.mxu0 %v32
  %175 = vmatprep.subr.mxu0 0.0
  %176 = vmatpush1.msra.mxu0 %v35
  %177 = vmatprep.subr.mxu0 0.0
  %178 = vmatpush1.msra.mxu0 %v38
  %179 = vmatprep.subr.mxu0 0.0
  %180 = vmatpush1.msra.mxu0 %v41
  %181 = vmatprep.subr.mxu0 0.0
  %182 = vmatpush1.msra.mxu0 %v44
  %183 = vmatprep.subr.mxu0 0.0
  %184 = vmatpush1.msra.mxu0 %v47
  %185 = vmatprep.subr.mxu0 0.0
  %186 = vmatpush1.msra.mxu0 %v50
  %187 = vmatprep.subr.mxu0 0.0
  %188 = vmatpush1.msra.mxu0 %v53
  %189 = vmatprep.subr.mxu0 0.0
  %190 = vmatpush1.msra.mxu0 %v56
  %191 = vmatprep.subr.mxu0 0.0
  %192 = vmatpush1.msra.mxu0 %v59
  %193 = vmatprep.subr.mxu0 0.0
  %194 = vmatpush1.msra.mxu0 %v62
  %195 = vmatprep.subr.mxu0 0.0
  %196 = vmatpush1.msra.mxu0 %v65
  %197 = vmatprep.subr.mxu0 0.0
  %198 = vmatpush1.msra.mxu0 %v98
  %199 = vmatprep.subr.mxu0 0.0
  %200 = vmatpush1.msra.mxu0 0.0
  %201 = vmatprep.subr.mxu0 0.0
  %202 = vmatpush1.msra.mxu0 0.0
  %203 = vmatprep.subr.mxu0 0.0
  %204 = vmatpush1.msra.mxu0 0.0
  %205 = vmatprep.subr.mxu0 0.0
  %206 = vmatpush1.msra.mxu0 0.0
  %207 = vmatprep.subr.mxu0 0.0
  %208 = vmatpush1.msra.mxu0 0.0
  %209 = vmatprep.subr.mxu0 0.0
  %210 = vmatpush1.msra.mxu0 0.0
  %211 = vmatprep.subr.mxu0 0.0
  %212 = vmatpush1.msra.mxu0 0.0
  %213 = vmatprep.subr.mxu0 0.0
  %214 = vmatpush1.msra.mxu0 0.0
  %215 = vmatprep.subr.mxu0 0.0
  %216 = vmatpush1.msra.mxu0 0.0
  %217 = vmatprep.subr.mxu0 0.0
  %218 = vmatpush1.msra.mxu0 0.0
  %219 = vmatprep.subr.mxu0 0.0
  %220 = vmatpush1.msra.mxu0 0.0
  %221 = vmatprep.subr.mxu0 0.0
  %222 = vmatpush1.msra.mxu0 0.0
  %223 = vmatprep.subr.mxu0 0.0
  %224 = vmatpush1.msra.mxu0 0.0
  %225 = vmatprep.subr.mxu0 0.0
  %226 = vmatpush1.msra.mxu0 0.0
  %227 = vmatprep.subr.mxu0 0.0
  %228 = vmatpush1.msra.mxu0 0.0
  %229 = vmatprep.subr.mxu0 0.0
  %230 = vmatpush1.msra.mxu0 0.0
  %231 = vmatprep.subr.mxu0 0.0
  %232 = vmatpush1.msra.mxu0 0.0
  %233 = vmatprep.subr.mxu0 0.0
  %234 = vmatpush1.msra.mxu0 0.0
  %235 = vmatprep.mubr.f32.mxu0 0.0
  %236 = vmatmul.mubr.f32.gmra.mrb[0].mxu0 %v88
  %v237 = vpop.f32.mrb[0].mxu0
  %v238 = vadd.f32 %v82, %v237
  %v239 = vpop.f32.mrb[0].mxu0
  %240 = vdwg.mxu0
  %v241 = vld [vmem:[%s4] sm:$0x3]
  %v242 = vld [vmem:[%s3] sm:$0xff]
  %v243 = vld [vmem:[%s3 + $0x8] sm:$0xff]
  %v244 = vld [vmem:[%s3 + $0x10] sm:$0xff]
  %v245 = vld [vmem:[%s3 + $0x18] sm:$0xff]
  %v246 = vld [vmem:[%s3 + $0x20] sm:$0xff]
  %v247 = vld [vmem:[%s3 + $0x28] sm:$0xff]
  %v248 = vld [vmem:[%s3 + $0x30] sm:$0xff]
  %v249 = vld [vmem:[%s3 + $0x38] sm:$0xff]
  %v250 = vld [vmem:[%s3 + $0x40] sm:$0xff]
  %v251 = vld [vmem:[%s3 + $0x48] sm:$0xff]
  %v252 = vld [vmem:[%s3 + $0x50] sm:$0xff]
  %v253 = vld [vmem:[%s3 + $0x58] sm:$0xff]
  %v254 = vld [vmem:[%s3 + $0x60] sm:$0xff]
  %v255 = vld [vmem:[%s3 + $0x68] sm:$0xff]
  %v256 = vld [vmem:[%s3 + $0x70] sm:$0xff]
  %v257 = vld [vmem:[%s3 + $0x78] sm:$0xff]
  %v258 = vld [vmem:[%s3 + $0x80] sm:$0xff]
  %v259 = vld [vmem:[%s3 + $0x88] sm:$0xff]
  %v260 = vld [vmem:[%s3 + $0x90] sm:$0xff]
  %v261 = vld [vmem:[%s3 + $0x98] sm:$0xff]
  %v262 = vld [vmem:[%s3 + $0xa0] sm:$0xff]
  %v263 = vld [vmem:[%s3 + $0xa8] sm:$0xff]
  %v264 = vld [vmem:[%s3 + $0xb0] sm:$0xff]
  %v265 = vld [vmem:[%s3 + $0xb8] sm:$0xff]
  %v266 = vld [vmem:[%s3 + $0xc0] sm:$0xff]
  %v267 = vld [vmem:[%s3 + $0xc8] sm:$0xff]
  %v268 = vld [vmem:[%s3 + $0xd0] sm:$0xff]
  %v269 = vld [vmem:[%s3 + $0xd8] sm:$0xff]
  %v270 = vld [vmem:[%s3 + $0xe0] sm:$0xff]
  %v271 = vld [vmem:[%s3 + $0xe8] sm:$0xff]
  %v272 = vld [vmem:[%s3 + $0xf0] sm:$0xff]
  %v273 = vld [vmem:[%s3 + $0xf8] sm:$0xff]
  %v274 = vld [vmem:[%s3 + $0x100] sm:$0xff]
  %v275 = vld [vmem:[%s3 + $0x108] sm:$0xff]
  %v276 = vld [vmem:[%s3 + $0x110] sm:$0xff]
  %v277 = vld [vmem:[%s3 + $0x118] sm:$0xff]
  %v278 = vld [vmem:[%s3 + $0x120] sm:$0xff]
  %v279 = vld [vmem:[%s3 + $0x128] sm:$0xff]
  %v280 = vld [vmem:[%s3 + $0x130] sm:$0xff]
  %v281 = vld [vmem:[%s3 + $0x138] sm:$0xff]
  %v282 = vld [vmem:[%s3 + $0x140] sm:$0xff]
  %v283 = vld [vmem:[%s3 + $0x148] sm:$0xff]
  %v284 = vld [vmem:[%s3 + $0x150] sm:$0xff]
  %v285 = vld [vmem:[%s3 + $0x158] sm:$0xff]
  %v286 = vld [vmem:[%s3 + $0x160] sm:$0xff]
  %v287 = vld [vmem:[%s3 + $0x168] sm:$0xff]
  %v288 = vld [vmem:[%s3 + $0x170] sm:$0xff]
  %v289 = vld [vmem:[%s3 + $0x178] sm:$0xff]
  %v290 = vld [vmem:[%s3 + $0x180] sm:$0xff]
  %v291 = vld [vmem:[%s3 + $0x188] sm:$0xff]
  %v292 = vld [vmem:[%s3 + $0x190] sm:$0xff]
  %v293 = vld [vmem:[%s3 + $0x198] sm:$0xff]
  %v294 = vld [vmem:[%s3 + $0x1a0] sm:$0xff]
  %v295 = vld [vmem:[%s3 + $0x1a8] sm:$0xff]
  %v296 = vld [vmem:[%s3 + $0x1b0] sm:$0xff]
  %v297 = vld [vmem:[%s3 + $0x1b8] sm:$0xff]
  %v298 = vld [vmem:[%s3 + $0x1c0] sm:$0xff]
  %v299 = vld [vmem:[%s3 + $0x1c8] sm:$0xff]
  %v300 = vld [vmem:[%s3 + $0x1d0] sm:$0xff]
  %v301 = vld [vmem:[%s3 + $0x1d8] sm:$0xff]
  %v302 = vld [vmem:[%s3 + $0x1e0] sm:$0xff]
  %v303 = vld [vmem:[%s3 + $0x1e8] sm:$0xff]
  %v304 = vld [vmem:[%s3 + $0x1f0] sm:$0xff]
  %v305 = vld [vmem:[%s3 + $0x1f8] sm:$0xff]
  %v306 = vld [vmem:[%s3 + $0x200] sm:$0xff]
  %v307 = vld [vmem:[%s3 + $0x208] sm:$0xff]
  %v308 = vld [vmem:[%s3 + $0x210] sm:$0xff]
  %v309 = vld [vmem:[%s3 + $0x218] sm:$0xff]
  %v310 = vld [vmem:[%s3 + $0x220] sm:$0xff]
  %v311 = vld [vmem:[%s3 + $0x228] sm:$0xff]
  %v312 = vld [vmem:[%s3 + $0x230] sm:$0xff]
  %v313 = vld [vmem:[%s3 + $0x238] sm:$0xff]
  %v314 = vld [vmem:[%s3 + $0x240] sm:$0xff]
  %v315 = vld [vmem:[%s3 + $0x248] sm:$0xff]
  %v316 = vld [vmem:[%s3 + $0x250] sm:$0xff]
  %v317 = vld [vmem:[%s3 + $0x258] sm:$0xff]
  %v318 = vld [vmem:[%s3 + $0x260] sm:$0xff]
  %v319 = vld [vmem:[%s3 + $0x268] sm:$0xff]
  %v320 = vld [vmem:[%s3 + $0x270] sm:$0xff]
  %v321 = vld [vmem:[%s3 + $0x278] sm:$0xff]
  %v322 = vld [vmem:[%s3 + $0x280] sm:$0xff]
  %v323 = vld [vmem:[%s3 + $0x288] sm:$0xff]
  %v324 = vld [vmem:[%s3 + $0x290] sm:$0xff]
  %v325 = vld [vmem:[%s3 + $0x298] sm:$0xff]
  %v326 = vld [vmem:[%s3 + $0x2a0] sm:$0xff]
  %v327 = vld [vmem:[%s3 + $0x2a8] sm:$0xff]
  %v328 = vld [vmem:[%s3 + $0x2b0] sm:$0xff]
  %v329 = vld [vmem:[%s3 + $0x2b8] sm:$0xff]
  %v330 = vld [vmem:[%s3 + $0x2c0] sm:$0xff]
  %v331 = vld [vmem:[%s3 + $0x2c8] sm:$0xff]
  %v332 = vld [vmem:[%s3 + $0x2d0] sm:$0xff]
  %v333 = vld [vmem:[%s3 + $0x2d8] sm:$0xff]
  %v334 = vld [vmem:[%s3 + $0x2e0] sm:$0xff]
  %v335 = vld [vmem:[%s3 + $0x2e8] sm:$0xff]
  %v336 = vld [vmem:[%s3 + $0x2f0] sm:$0xff]
  %v337 = vld [vmem:[%s3 + $0x2f8] sm:$0xff]
  %v339 = vlaneseq
  %v340 = vshrl.u32 %v339, 7
  %v341 = vsub.s32 0, %v340
  %v342 = vrot.slane %v241, %v341
  %v343 = vlaneseq
  %v344 = vshrl.u32 %v343, 7
  %v345 = vsub.s32 1, %v344
  %v346 = vrot.slane %v241, %v345
  %349 = vmatprep.subr.mxu0 %v243
  %350 = vmatpush1.msra.mxu0 %v242
  %351 = vmatprep.subr.mxu0 %v245
  %352 = vmatpush1.msra.mxu0 %v244
  %353 = vmatprep.subr.mxu0 %v247
  %354 = vmatpush1.msra.mxu0 %v246
  %355 = vmatprep.subr.mxu0 %v249
  %356 = vmatpush1.msra.mxu0 %v248
  %357 = vmatprep.subr.mxu0 %v251
  %358 = vmatpush1.msra.mxu0 %v250
  %359 = vmatprep.subr.mxu0 %v253
  %360 = vmatpush1.msra.mxu0 %v252
  %361 = vmatprep.subr.mxu0 %v255
  %362 = vmatpush1.msra.mxu0 %v254
  %363 = vmatprep.subr.mxu0 %v257
  %364 = vmatpush1.msra.mxu0 %v256
  %365 = vmatprep.subr.mxu0 %v259
  %366 = vmatpush1.msra.mxu0 %v258
  %367 = vmatprep.subr.mxu0 %v261
  %368 = vmatpush1.msra.mxu0 %v260
  %369 = vmatprep.subr.mxu0 %v263
  %370 = vmatpush1.msra.mxu0 %v262
  %371 = vmatprep.subr.mxu0 %v265
  %372 = vmatpush1.msra.mxu0 %v264
  %373 = vmatprep.subr.mxu0 %v267
  %374 = vmatpush1.msra.mxu0 %v266
  %375 = vmatprep.subr.mxu0 %v269
  %376 = vmatpush1.msra.mxu0 %v268
  %377 = vmatprep.subr.mxu0 %v271
  %378 = vmatpush1.msra.mxu0 %v270
  %379 = vmatprep.subr.mxu0 %v273
  %380 = vmatpush1.msra.mxu0 %v272
  %381 = vmatprep.subr.mxu0 %v275
  %382 = vmatpush1.msra.mxu0 %v274
  %383 = vmatprep.subr.mxu0 %v277
  %384 = vmatpush1.msra.mxu0 %v276
  %385 = vmatprep.subr.mxu0 %v279
  %386 = vmatpush1.msra.mxu0 %v278
  %387 = vmatprep.subr.mxu0 %v281
  %388 = vmatpush1.msra.mxu0 %v280
  %389 = vmatprep.subr.mxu0 %v283
  %390 = vmatpush1.msra.mxu0 %v282
  %391 = vmatprep.subr.mxu0 %v285
  %392 = vmatpush1.msra.mxu0 %v284
  %393 = vmatprep.subr.mxu0 %v287
  %394 = vmatpush1.msra.mxu0 %v286
  %395 = vmatprep.subr.mxu0 %v289
  %396 = vmatpush1.msra.mxu0 %v288
  %397 = vmatprep.subr.mxu0 %v291
  %398 = vmatpush1.msra.mxu0 %v290
  %399 = vmatprep.subr.mxu0 %v293
  %400 = vmatpush1.msra.mxu0 %v292
  %401 = vmatprep.subr.mxu0 %v295
  %402 = vmatpush1.msra.mxu0 %v294
  %403 = vmatprep.subr.mxu0 %v297
  %404 = vmatpush1.msra.mxu0 %v296
  %405 = vmatprep.subr.mxu0 %v299
  %406 = vmatpush1.msra.mxu0 %v298
  %407 = vmatprep.subr.mxu0 %v301
  %408 = vmatpush1.msra.mxu0 %v300
  %409 = vmatprep.subr.mxu0 %v303
  %410 = vmatpush1.msra.mxu0 %v302
  %411 = vmatprep.subr.mxu0 %v305
  %412 = vmatpush1.msra.mxu0 %v304
  %413 = vmatprep.mubr.f32.mxu0 %v169
  %414 = vmatmul.mubr.f32.gmra.mrb[0].mxu0 %v167
  %v415 = vpop.f32.mrb[0].mxu0
  %v416 = vadd.f32 %v342, %v415
  %v417 = vpop.f32.mrb[0].mxu0
  %v418 = vadd.f32 %v346, %v417
  %419 = vdwg.mxu0
  %420 = vmatprep.subr.mxu0 %v307
  %421 = vmatpush1.msra.mxu0 %v306
  %422 = vmatprep.subr.mxu0 %v309
  %423 = vmatpush1.msra.mxu0 %v308
  %424 = vmatprep.subr.mxu0 %v311
  %425 = vmatpush1.msra.mxu0 %v310
  %426 = vmatprep.subr.mxu0 %v313
  %427 = vmatpush1.msra.mxu0 %v312
  %428 = vmatprep.subr.mxu0 %v315
  %429 = vmatpush1.msra.mxu0 %v314
  %430 = vmatprep.subr.mxu0 %v317
  %431 = vmatpush1.msra.mxu0 %v316
  %432 = vmatprep.subr.mxu0 %v319
  %433 = vmatpush1.msra.mxu0 %v318
  %434 = vmatprep.subr.mxu0 %v321
  %435 = vmatpush1.msra.mxu0 %v320
  %436 = vmatprep.subr.mxu0 %v323
  %437 = vmatpush1.msra.mxu0 %v322
  %438 = vmatprep.subr.mxu0 %v325
  %439 = vmatpush1.msra.mxu0 %v324
  %440 = vmatprep.subr.mxu0 %v327
  %441 = vmatpush1.msra.mxu0 %v326
  %442 = vmatprep.subr.mxu0 %v329
  %443 = vmatpush1.msra.mxu0 %v328
  %444 = vmatprep.subr.mxu0 %v331
  %445 = vmatpush1.msra.mxu0 %v330
  %446 = vmatprep.subr.mxu0 %v333
  %447 = vmatpush1.msra.mxu0 %v332
  %448 = vmatprep.subr.mxu0 %v335
  %449 = vmatpush1.msra.mxu0 %v334
  %450 = vmatprep.subr.mxu0 %v337
  %451 = vmatpush1.msra.mxu0 %v336
  %452 = vmatprep.subr.mxu0 0.0
  %453 = vmatpush1.msra.mxu0 0.0
  %454 = vmatprep.subr.mxu0 0.0
  %455 = vmatpush1.msra.mxu0 0.0
  %456 = vmatprep.subr.mxu0 0.0
  %457 = vmatpush1.msra.mxu0 0.0
  %458 = vmatprep.subr.mxu0 0.0
  %459 = vmatpush1.msra.mxu0 0.0
  %460 = vmatprep.subr.mxu0 0.0
  %461 = vmatpush1.msra.mxu0 0.0
  %462 = vmatprep.subr.mxu0 0.0
  %463 = vmatpush1.msra.mxu0 0.0
  %464 = vmatprep.subr.mxu0 0.0
  %465 = vmatpush1.msra.mxu0 0.0
  %466 = vmatprep.subr.mxu0 0.0
  %467 = vmatpush1.msra.mxu0 0.0
  %468 = vmatprep.subr.mxu0 0.0
  %469 = vmatpush1.msra.mxu0 0.0
  %470 = vmatprep.subr.mxu0 0.0
  %471 = vmatpush1.msra.mxu0 0.0
  %472 = vmatprep.subr.mxu0 0.0
  %473 = vmatpush1.msra.mxu0 0.0
  %474 = vmatprep.subr.mxu0 0.0
  %475 = vmatpush1.msra.mxu0 0.0
  %476 = vmatprep.subr.mxu0 0.0
  %477 = vmatpush1.msra.mxu0 0.0
  %478 = vmatprep.subr.mxu0 0.0
  %479 = vmatpush1.msra.mxu0 0.0
  %480 = vmatprep.subr.mxu0 0.0
  %481 = vmatpush1.msra.mxu0 0.0
  %482 = vmatprep.subr.mxu0 0.0
  %483 = vmatpush1.msra.mxu0 0.0
  %484 = vmatprep.mubr.f32.mxu0 0.0
  %485 = vmatmul.mubr.f32.gmra.mrb[0].mxu0 %v238
  %v486 = vpop.f32.mrb[0].mxu0
  %v487 = vadd.f32 %v416, %v486
  %v488 = vpop.f32.mrb[0].mxu0
  %v489 = vadd.f32 %v418, %v488
  %490 = vdwg.mxu0
  %v493 = vcombine.low %v487, %v489
  %v495 = vunpack.c.l.s4 1983009808
  %v496 = vunpack.c.0.s8 %v495
  %v497 = vlaneseq
  %v498 = vshrl.u32 %v497, 7
  %v499 = vsub.s32 %v496, %v498
  %v500 = vrot.slane %v493, %v499
  %vm502 = vcmask 1041408
  %vm503 = vcmask 519170
  %vm504 = vmor %vm503, %vm502
  %505 = vst.msk [vmem:[%s7] sm:$0xf] %vm504, %v500
  %s506 = scalar_lea.vmem %s3, 768
  %v507 = vld [vmem:[%s506] sm:$0xff]
  %v508 = vld [vmem:[%s506 + $0x8] sm:$0xff]
  %v509 = vld [vmem:[%s506 + $0x10] sm:$0xff]
  %v510 = vld [vmem:[%s506 + $0x18] sm:$0xff]
  %v511 = vld [vmem:[%s506 + $0x20] sm:$0xff]
  %v512 = vld [vmem:[%s506 + $0x28] sm:$0xff]
  %v513 = vld [vmem:[%s506 + $0x30] sm:$0xff]
  %v514 = vld [vmem:[%s506 + $0x38] sm:$0xff]
  %v515 = vld [vmem:[%s506 + $0x40] sm:$0xff]
  %v516 = vld [vmem:[%s506 + $0x48] sm:$0xff]
  %v517 = vld [vmem:[%s506 + $0x50] sm:$0xff]
  %v518 = vld [vmem:[%s506 + $0x58] sm:$0xff]
  %v519 = vld [vmem:[%s506 + $0x60] sm:$0xff]
  %v520 = vld [vmem:[%s506 + $0x68] sm:$0xff]
  %v521 = vld [vmem:[%s506 + $0x70] sm:$0xff]
  %v522 = vld [vmem:[%s506 + $0x78] sm:$0xff]
  %v523 = vld [vmem:[%s506 + $0x80] sm:$0xff]
  %v524 = vld [vmem:[%s506 + $0x88] sm:$0xff]
  %v525 = vld [vmem:[%s506 + $0x90] sm:$0xff]
  %v526 = vld [vmem:[%s506 + $0x98] sm:$0xff]
  %v527 = vld [vmem:[%s506 + $0xa0] sm:$0xff]
  %v528 = vld [vmem:[%s506 + $0xa8] sm:$0xff]
  %v529 = vld [vmem:[%s506 + $0xb0] sm:$0xff]
  %v530 = vld [vmem:[%s506 + $0xb8] sm:$0xff]
  %v531 = vld [vmem:[%s506 + $0xc0] sm:$0xff]
  %v532 = vld [vmem:[%s506 + $0xc8] sm:$0xff]
  %v533 = vld [vmem:[%s506 + $0xd0] sm:$0xff]
  %v534 = vld [vmem:[%s506 + $0xd8] sm:$0xff]
  %v535 = vld [vmem:[%s506 + $0xe0] sm:$0xff]
  %v536 = vld [vmem:[%s506 + $0xe8] sm:$0xff]
  %v537 = vld [vmem:[%s506 + $0xf0] sm:$0xff]
  %v538 = vld [vmem:[%s506 + $0xf8] sm:$0xff]
  %v539 = vld [vmem:[%s506 + $0x100] sm:$0xff]
  %v540 = vld [vmem:[%s506 + $0x108] sm:$0xff]
  %v541 = vld [vmem:[%s506 + $0x110] sm:$0xff]
  %v542 = vld [vmem:[%s506 + $0x118] sm:$0xff]
  %v543 = vld [vmem:[%s506 + $0x120] sm:$0xff]
  %v544 = vld [vmem:[%s506 + $0x128] sm:$0xff]
  %v545 = vld [vmem:[%s506 + $0x130] sm:$0xff]
  %v546 = vld [vmem:[%s506 + $0x138] sm:$0xff]
  %v547 = vld [vmem:[%s506 + $0x140] sm:$0xff]
  %v548 = vld [vmem:[%s506 + $0x148] sm:$0xff]
  %v549 = vld [vmem:[%s506 + $0x150] sm:$0xff]
  %v550 = vld [vmem:[%s506 + $0x158] sm:$0xff]
  %v551 = vld [vmem:[%s506 + $0x160] sm:$0xff]
  %v552 = vld [vmem:[%s506 + $0x168] sm:$0xff]
  %v553 = vld [vmem:[%s506 + $0x170] sm:$0xff]
  %v554 = vld [vmem:[%s506 + $0x178] sm:$0xff]
  %v555 = vld [vmem:[%s506 + $0x180] sm:$0xff]
  %v556 = vld [vmem:[%s506 + $0x188] sm:$0xff]
  %v557 = vld [vmem:[%s506 + $0x190] sm:$0xff]
  %v558 = vld [vmem:[%s506 + $0x198] sm:$0xff]
  %v559 = vld [vmem:[%s506 + $0x1a0] sm:$0xff]
  %v560 = vld [vmem:[%s506 + $0x1a8] sm:$0xff]
  %v561 = vld [vmem:[%s506 + $0x1b0] sm:$0xff]
  %v562 = vld [vmem:[%s506 + $0x1b8] sm:$0xff]
  %v563 = vld [vmem:[%s506 + $0x1c0] sm:$0xff]
  %v564 = vld [vmem:[%s506 + $0x1c8] sm:$0xff]
  %v565 = vld [vmem:[%s506 + $0x1d0] sm:$0xff]
  %v566 = vld [vmem:[%s506 + $0x1d8] sm:$0xff]
  %v567 = vld [vmem:[%s506 + $0x1e0] sm:$0xff]
  %v568 = vld [vmem:[%s506 + $0x1e8] sm:$0xff]
  %v569 = vld [vmem:[%s506 + $0x1f0] sm:$0xff]
  %v570 = vld [vmem:[%s506 + $0x1f8] sm:$0xff]
  %v571 = vld [vmem:[%s506 + $0x200] sm:$0xff]
  %v572 = vld [vmem:[%s506 + $0x208] sm:$0xff]
  %v573 = vld [vmem:[%s506 + $0x210] sm:$0xff]
  %v574 = vld [vmem:[%s506 + $0x218] sm:$0xff]
  %v575 = vld [vmem:[%s506 + $0x220] sm:$0xff]
  %v576 = vld [vmem:[%s506 + $0x228] sm:$0xff]
  %v577 = vld [vmem:[%s506 + $0x230] sm:$0xff]
  %v578 = vld [vmem:[%s506 + $0x238] sm:$0xff]
  %v579 = vld [vmem:[%s506 + $0x240] sm:$0xff]
  %v580 = vld [vmem:[%s506 + $0x248] sm:$0xff]
  %v581 = vld [vmem:[%s506 + $0x250] sm:$0xff]
  %v582 = vld [vmem:[%s506 + $0x258] sm:$0xff]
  %v583 = vld [vmem:[%s506 + $0x260] sm:$0xff]
  %v584 = vld [vmem:[%s506 + $0x268] sm:$0xff]
  %v585 = vld [vmem:[%s506 + $0x270] sm:$0xff]
  %v586 = vld [vmem:[%s506 + $0x278] sm:$0xff]
  %v587 = vld [vmem:[%s506 + $0x280] sm:$0xff]
  %v588 = vld [vmem:[%s506 + $0x288] sm:$0xff]
  %v589 = vld [vmem:[%s506 + $0x290] sm:$0xff]
  %v590 = vld [vmem:[%s506 + $0x298] sm:$0xff]
  %v591 = vld [vmem:[%s506 + $0x2a0] sm:$0xff]
  %v592 = vld [vmem:[%s506 + $0x2a8] sm:$0xff]
  %v593 = vld [vmem:[%s506 + $0x2b0] sm:$0xff]
  %v594 = vld [vmem:[%s506 + $0x2b8] sm:$0xff]
  %v595 = vld [vmem:[%s506 + $0x2c0] sm:$0xff]
  %v596 = vld [vmem:[%s506 + $0x2c8] sm:$0xff]
  %v597 = vld [vmem:[%s506 + $0x2d0] sm:$0xff]
  %v598 = vld [vmem:[%s506 + $0x2d8] sm:$0xff]
  %v599 = vld [vmem:[%s506 + $0x2e0] sm:$0xff]
  %v600 = vld [vmem:[%s506 + $0x2e8] sm:$0xff]
  %v601 = vld [vmem:[%s506 + $0x2f0] sm:$0xff]
  %v602 = vld [vmem:[%s506 + $0x2f8] sm:$0xff]
  %603 = vmatprep.subr.mxu0 %v508
  %604 = vmatpush1.msra.mxu0 %v507
  %605 = vmatprep.subr.mxu0 %v510
  %606 = vmatpush1.msra.mxu0 %v509
  %607 = vmatprep.subr.mxu0 %v512
  %608 = vmatpush1.msra.mxu0 %v511
  %609 = vmatprep.subr.mxu0 %v514
  %610 = vmatpush1.msra.mxu0 %v513
  %611 = vmatprep.subr.mxu0 %v516
  %612 = vmatpush1.msra.mxu0 %v515
  %613 = vmatprep.subr.mxu0 %v518
  %614 = vmatpush1.msra.mxu0 %v517
  %615 = vmatprep.subr.mxu0 %v520
  %616 = vmatpush1.msra.mxu0 %v519
  %617 = vmatprep.subr.mxu0 %v522
  %618 = vmatpush1.msra.mxu0 %v521
  %619 = vmatprep.subr.mxu0 %v524
  %620 = vmatpush1.msra.mxu0 %v523
  %621 = vmatprep.subr.mxu0 %v526
  %622 = vmatpush1.msra.mxu0 %v525
  %623 = vmatprep.subr.mxu0 %v528
  %624 = vmatpush1.msra.mxu0 %v527
  %625 = vmatprep.subr.mxu0 %v530
  %626 = vmatpush1.msra.mxu0 %v529
  %627 = vmatprep.subr.mxu0 %v532
  %628 = vmatpush1.msra.mxu0 %v531
  %629 = vmatprep.subr.mxu0 %v534
  %630 = vmatpush1.msra.mxu0 %v533
  %631 = vmatprep.subr.mxu0 %v536
  %632 = vmatpush1.msra.mxu0 %v535
  %633 = vmatprep.subr.mxu0 %v538
  %634 = vmatpush1.msra.mxu0 %v537
  %635 = vmatprep.subr.mxu0 %v540
  %636 = vmatpush1.msra.mxu0 %v539
  %637 = vmatprep.subr.mxu0 %v542
  %638 = vmatpush1.msra.mxu0 %v541
  %639 = vmatprep.subr.mxu0 %v544
  %640 = vmatpush1.msra.mxu0 %v543
  %641 = vmatprep.subr.mxu0 %v546
  %642 = vmatpush1.msra.mxu0 %v545
  %643 = vmatprep.subr.mxu0 %v548
  %644 = vmatpush1.msra.mxu0 %v547
  %645 = vmatprep.subr.mxu0 %v550
  %646 = vmatpush1.msra.mxu0 %v549
  %647 = vmatprep.subr.mxu0 %v552
  %648 = vmatpush1.msra.mxu0 %v551
  %649 = vmatprep.subr.mxu0 %v554
  %650 = vmatpush1.msra.mxu0 %v553
  %651 = vmatprep.subr.mxu0 %v556
  %652 = vmatpush1.msra.mxu0 %v555
  %653 = vmatprep.subr.mxu0 %v558
  %654 = vmatpush1.msra.mxu0 %v557
  %655 = vmatprep.subr.mxu0 %v560
  %656 = vmatpush1.msra.mxu0 %v559
  %657 = vmatprep.subr.mxu0 %v562
  %658 = vmatpush1.msra.mxu0 %v561
  %659 = vmatprep.subr.mxu0 %v564
  %660 = vmatpush1.msra.mxu0 %v563
  %661 = vmatprep.subr.mxu0 %v566
  %662 = vmatpush1.msra.mxu0 %v565
  %663 = vmatprep.subr.mxu0 %v568
  %664 = vmatpush1.msra.mxu0 %v567
  %665 = vmatprep.subr.mxu0 %v570
  %666 = vmatpush1.msra.mxu0 %v569
  %667 = vmatprep.mubr.f32.mxu0 %v169
  %668 = vmatmul.mubr.f32.gmra.mrb[0].mxu0 %v167
  %v669 = vpop.f32.mrb[0].mxu0
  %v670 = vadd.f32 %v342, %v669
  %v671 = vpop.f32.mrb[0].mxu0
  %v672 = vadd.f32 %v346, %v671
  %673 = vdwg.mxu0
  %674 = vmatprep.subr.mxu0 %v572
  %675 = vmatpush1.msra.mxu0 %v571
  %676 = vmatprep.subr.mxu0 %v574
  %677 = vmatpush1.msra.mxu0 %v573
  %678 = vmatprep.subr.mxu0 %v576
  %679 = vmatpush1.msra.mxu0 %v575
  %680 = vmatprep.subr.mxu0 %v578
  %681 = vmatpush1.msra.mxu0 %v577
  %682 = vmatprep.subr.mxu0 %v580
  %683 = vmatpush1.msra.mxu0 %v579
  %684 = vmatprep.subr.mxu0 %v582
  %685 = vmatpush1.msra.mxu0 %v581
  %686 = vmatprep.subr.mxu0 %v584
  %687 = vmatpush1.msra.mxu0 %v583
  %688 = vmatprep.subr.mxu0 %v586
  %689 = vmatpush1.msra.mxu0 %v585
  %690 = vmatprep.subr.mxu0 %v588
  %691 = vmatpush1.msra.mxu0 %v587
  %692 = vmatprep.subr.mxu0 %v590
  %693 = vmatpush1.msra.mxu0 %v589
  %694 = vmatprep.subr.mxu0 %v592
  %695 = vmatpush1.msra.mxu0 %v591
  %696 = vmatprep.subr.mxu0 %v594
  %697 = vmatpush1.msra.mxu0 %v593
  %698 = vmatprep.subr.mxu0 %v596
  %699 = vmatpush1.msra.mxu0 %v595
  %700 = vmatprep.subr.mxu0 %v598
  %701 = vmatpush1.msra.mxu0 %v597
  %702 = vmatprep.subr.mxu0 %v600
  %703 = vmatpush1.msra.mxu0 %v599
  %704 = vmatprep.subr.mxu0 %v602
  %705 = vmatpush1.msra.mxu0 %v601
  %706 = vmatprep.subr.mxu0 0.0
  %707 = vmatpush1.msra.mxu0 0.0
  %708 = vmatprep.subr.mxu0 0.0
  %709 = vmatpush1.msra.mxu0 0.0
  %710 = vmatprep.subr.mxu0 0.0
  %711 = vmatpush1.msra.mxu0 0.0
  %712 = vmatprep.subr.mxu0 0.0
  %713 = vmatpush1.msra.mxu0 0.0
  %714 = vmatprep.subr.mxu0 0.0
  %715 = vmatpush1.msra.mxu0 0.0
  %716 = vmatprep.subr.mxu0 0.0
  %717 = vmatpush1.msra.mxu0 0.0
  %718 = vmatprep.subr.mxu0 0.0
  %719 = vmatpush1.msra.mxu0 0.0
  %720 = vmatprep.subr.mxu0 0.0
  %721 = vmatpush1.msra.mxu0 0.0
  %722 = vmatprep.subr.mxu0 0.0
  %723 = vmatpush1.msra.mxu0 0.0
  %724 = vmatprep.subr.mxu0 0.0
  %725 = vmatpush1.msra.mxu0 0.0
  %726 = vmatprep.subr.mxu0 0.0
  %727 = vmatpush1.msra.mxu0 0.0
  %728 = vmatprep.subr.mxu0 0.0
  %729 = vmatpush1.msra.mxu0 0.0
  %730 = vmatprep.subr.mxu0 0.0
  %731 = vmatpush1.msra.mxu0 0.0
  %732 = vmatprep.subr.mxu0 0.0
  %733 = vmatpush1.msra.mxu0 0.0
  %734 = vmatprep.subr.mxu0 0.0
  %735 = vmatpush1.msra.mxu0 0.0
  %736 = vmatprep.subr.mxu0 0.0
  %737 = vmatpush1.msra.mxu0 0.0
  %738 = vmatprep.mubr.f32.mxu0 0.0
  %739 = vmatmul.mubr.f32.gmra.mrb[0].mxu0 %v238
  %v740 = vpop.f32.mrb[0].mxu0
  %v741 = vadd.f32 %v670, %v740
  %v742 = vpop.f32.mrb[0].mxu0
  %v743 = vadd.f32 %v672, %v742
  %744 = vdwg.mxu0
  %v747 = vcombine.low %v741, %v743
  %v749 = vunpack.c.l.s4 1983009808
  %v750 = vunpack.c.0.s8 %v749
  %v751 = vlaneseq
  %v752 = vshrl.u32 %v751, 7
  %v753 = vsub.s32 %v750, %v752
  %v754 = vrot.slane %v747, %v753
  %s756 = scalar_lea.vmem %s7, 4
  %757 = vst.msk [vmem:[%s756] sm:$0xf] %vm504, %v754
  %s758 = scalar_lea.vmem %s3, 1536
  %v759 = vld [vmem:[%s758] sm:$0xff]
  %v760 = vld [vmem:[%s758 + $0x8] sm:$0xff]
  %v761 = vld [vmem:[%s758 + $0x10] sm:$0xff]
  %v762 = vld [vmem:[%s758 + $0x18] sm:$0xff]
  %v763 = vld [vmem:[%s758 + $0x20] sm:$0xff]
  %v764 = vld [vmem:[%s758 + $0x28] sm:$0xff]
  %v765 = vld [vmem:[%s758 + $0x30] sm:$0xff]
  %v766 = vld [vmem:[%s758 + $0x38] sm:$0xff]
  %v767 = vld [vmem:[%s758 + $0x40] sm:$0xff]
  %v768 = vld [vmem:[%s758 + $0x48] sm:$0xff]
  %v769 = vld [vmem:[%s758 + $0x50] sm:$0xff]
  %v770 = vld [vmem:[%s758 + $0x58] sm:$0xff]
  %v771 = vld [vmem:[%s758 + $0x60] sm:$0xff]
  %v772 = vld [vmem:[%s758 + $0x68] sm:$0xff]
  %v773 = vld [vmem:[%s758 + $0x70] sm:$0xff]
  %v774 = vld [vmem:[%s758 + $0x78] sm:$0xff]
  %v775 = vld [vmem:[%s758 + $0x80] sm:$0xff]
  %v776 = vld [vmem:[%s758 + $0x88] sm:$0xff]
  %v777 = vld [vmem:[%s758 + $0x90] sm:$0xff]
  %v778 = vld [vmem:[%s758 + $0x98] sm:$0xff]
  %v779 = vld [vmem:[%s758 + $0xa0] sm:$0xff]
  %v780 = vld [vmem:[%s758 + $0xa8] sm:$0xff]
  %v781 = vld [vmem:[%s758 + $0xb0] sm:$0xff]
  %v782 = vld [vmem:[%s758 + $0xb8] sm:$0xff]
  %v783 = vld [vmem:[%s758 + $0xc0] sm:$0xff]
  %v784 = vld [vmem:[%s758 + $0xc8] sm:$0xff]
  %v785 = vld [vmem:[%s758 + $0xd0] sm:$0xff]
  %v786 = vld [vmem:[%s758 + $0xd8] sm:$0xff]
  %v787 = vld [vmem:[%s758 + $0xe0] sm:$0xff]
  %v788 = vld [vmem:[%s758 + $0xe8] sm:$0xff]
  %v789 = vld [vmem:[%s758 + $0xf0] sm:$0xff]
  %v790 = vld [vmem:[%s758 + $0xf8] sm:$0xff]
  %v791 = vld [vmem:[%s758 + $0x100] sm:$0xff]
  %v792 = vld [vmem:[%s758 + $0x108] sm:$0xff]
  %v793 = vld [vmem:[%s758 + $0x110] sm:$0xff]
  %v794 = vld [vmem:[%s758 + $0x118] sm:$0xff]
  %v795 = vld [vmem:[%s758 + $0x120] sm:$0xff]
  %v796 = vld [vmem:[%s758 + $0x128] sm:$0xff]
  %v797 = vld [vmem:[%s758 + $0x130] sm:$0xff]
  %v798 = vld [vmem:[%s758 + $0x138] sm:$0xff]
  %v799 = vld [vmem:[%s758 + $0x140] sm:$0xff]
  %v800 = vld [vmem:[%s758 + $0x148] sm:$0xff]
  %v801 = vld [vmem:[%s758 + $0x150] sm:$0xff]
  %v802 = vld [vmem:[%s758 + $0x158] sm:$0xff]
  %v803 = vld [vmem:[%s758 + $0x160] sm:$0xff]
  %v804 = vld [vmem:[%s758 + $0x168] sm:$0xff]
  %v805 = vld [vmem:[%s758 + $0x170] sm:$0xff]
  %v806 = vld [vmem:[%s758 + $0x178] sm:$0xff]
  %v807 = vld [vmem:[%s758 + $0x180] sm:$0xff]
  %v808 = vld [vmem:[%s758 + $0x188] sm:$0xff]
  %v809 = vld [vmem:[%s758 + $0x190] sm:$0xff]
  %v810 = vld [vmem:[%s758 + $0x198] sm:$0xff]
  %v811 = vld [vmem:[%s758 + $0x1a0] sm:$0xff]
  %v812 = vld [vmem:[%s758 + $0x1a8] sm:$0xff]
  %v813 = vld [vmem:[%s758 + $0x1b0] sm:$0xff]
  %v814 = vld [vmem:[%s758 + $0x1b8] sm:$0xff]
  %v815 = vld [vmem:[%s758 + $0x1c0] sm:$0xff]
  %v816 = vld [vmem:[%s758 + $0x1c8] sm:$0xff]
  %v817 = vld [vmem:[%s758 + $0x1d0] sm:$0xff]
  %v818 = vld [vmem:[%s758 + $0x1d8] sm:$0xff]
  %v819 = vld [vmem:[%s758 + $0x1e0] sm:$0xff]
  %v820 = vld [vmem:[%s758 + $0x1e8] sm:$0xff]
  %v821 = vld [vmem:[%s758 + $0x1f0] sm:$0xff]
  %v822 = vld [vmem:[%s758 + $0x1f8] sm:$0xff]
  %v823 = vld [vmem:[%s758 + $0x200] sm:$0xff]
  %v824 = vld [vmem:[%s758 + $0x208] sm:$0xff]
  %v825 = vld [vmem:[%s758 + $0x210] sm:$0xff]
  %v826 = vld [vmem:[%s758 + $0x218] sm:$0xff]
  %v827 = vld [vmem:[%s758 + $0x220] sm:$0xff]
  %v828 = vld [vmem:[%s758 + $0x228] sm:$0xff]
  %v829 = vld [vmem:[%s758 + $0x230] sm:$0xff]
  %v830 = vld [vmem:[%s758 + $0x238] sm:$0xff]
  %v831 = vld [vmem:[%s758 + $0x240] sm:$0xff]
  %v832 = vld [vmem:[%s758 + $0x248] sm:$0xff]
  %v833 = vld [vmem:[%s758 + $0x250] sm:$0xff]
  %v834 = vld [vmem:[%s758 + $0x258] sm:$0xff]
  %v835 = vld [vmem:[%s758 + $0x260] sm:$0xff]
  %v836 = vld [vmem:[%s758 + $0x268] sm:$0xff]
  %v837 = vld [vmem:[%s758 + $0x270] sm:$0xff]
  %v838 = vld [vmem:[%s758 + $0x278] sm:$0xff]
  %v839 = vld [vmem:[%s758 + $0x280] sm:$0xff]
  %v840 = vld [vmem:[%s758 + $0x288] sm:$0xff]
  %v841 = vld [vmem:[%s758 + $0x290] sm:$0xff]
  %v842 = vld [vmem:[%s758 + $0x298] sm:$0xff]
  %v843 = vld [vmem:[%s758 + $0x2a0] sm:$0xff]
  %v844 = vld [vmem:[%s758 + $0x2a8] sm:$0xff]
  %v845 = vld [vmem:[%s758 + $0x2b0] sm:$0xff]
  %v846 = vld [vmem:[%s758 + $0x2b8] sm:$0xff]
  %v847 = vld [vmem:[%s758 + $0x2c0] sm:$0xff]
  %v848 = vld [vmem:[%s758 + $0x2c8] sm:$0xff]
  %v849 = vld [vmem:[%s758 + $0x2d0] sm:$0xff]
  %v850 = vld [vmem:[%s758 + $0x2d8] sm:$0xff]
  %v851 = vld [vmem:[%s758 + $0x2e0] sm:$0xff]
  %v852 = vld [vmem:[%s758 + $0x2e8] sm:$0xff]
  %v853 = vld [vmem:[%s758 + $0x2f0] sm:$0xff]
  %v854 = vld [vmem:[%s758 + $0x2f8] sm:$0xff]
  %855 = vmatprep.subr.mxu0 %v760
  %856 = vmatpush1.msra.mxu0 %v759
  %857 = vmatprep.subr.mxu0 %v762
  %858 = vmatpush1.msra.mxu0 %v761
  %859 = vmatprep.subr.mxu0 %v764
  %860 = vmatpush1.msra.mxu0 %v763
  %861 = vmatprep.subr.mxu0 %v766
  %862 = vmatpush1.msra.mxu0 %v765
  %863 = vmatprep.subr.mxu0 %v768
  %864 = vmatpush1.msra.mxu0 %v767
  %865 = vmatprep.subr.mxu0 %v770
  %866 = vmatpush1.msra.mxu0 %v769
  %867 = vmatprep.subr.mxu0 %v772
  %868 = vmatpush1.msra.mxu0 %v771
  %869 = vmatprep.subr.mxu0 %v774
  %870 = vmatpush1.msra.mxu0 %v773
  %871 = vmatprep.subr.mxu0 %v776
  %872 = vmatpush1.msra.mxu0 %v775
  %873 = vmatprep.subr.mxu0 %v778
  %874 = vmatpush1.msra.mxu0 %v777
  %875 = vmatprep.subr.mxu0 %v780
  %876 = vmatpush1.msra.mxu0 %v779
  %877 = vmatprep.subr.mxu0 %v782
  %878 = vmatpush1.msra.mxu0 %v781
  %879 = vmatprep.subr.mxu0 %v784
  %880 = vmatpush1.msra.mxu0 %v783
  %881 = vmatprep.subr.mxu0 %v786
  %882 = vmatpush1.msra.mxu0 %v785
  %883 = vmatprep.subr.mxu0 %v788
  %884 = vmatpush1.msra.mxu0 %v787
  %885 = vmatprep.subr.mxu0 %v790
  %886 = vmatpush1.msra.mxu0 %v789
  %887 = vmatprep.subr.mxu0 %v792
  %888 = vmatpush1.msra.mxu0 %v791
  %889 = vmatprep.subr.mxu0 %v794
  %890 = vmatpush1.msra.mxu0 %v793
  %891 = vmatprep.subr.mxu0 %v796
  %892 = vmatpush1.msra.mxu0 %v795
  %893 = vmatprep.subr.mxu0 %v798
  %894 = vmatpush1.msra.mxu0 %v797
  %895 = vmatprep.subr.mxu0 %v800
  %896 = vmatpush1.msra.mxu0 %v799
  %897 = vmatprep.subr.mxu0 %v802
  %898 = vmatpush1.msra.mxu0 %v801
  %899 = vmatprep.subr.mxu0 %v804
  %900 = vmatpush1.msra.mxu0 %v803
  %901 = vmatprep.subr.mxu0 %v806
  %902 = vmatpush1.msra.mxu0 %v805
  %903 = vmatprep.subr.mxu0 %v808
  %904 = vmatpush1.msra.mxu0 %v807
  %905 = vmatprep.subr.mxu0 %v810
  %906 = vmatpush1.msra.mxu0 %v809
  %907 = vmatprep.subr.mxu0 %v812
  %908 = vmatpush1.msra.mxu0 %v811
  %909 = vmatprep.subr.mxu0 %v814
  %910 = vmatpush1.msra.mxu0 %v813
  %911 = vmatprep.subr.mxu0 %v816
  %912 = vmatpush1.msra.mxu0 %v815
  %913 = vmatprep.subr.mxu0 %v818
  %914 = vmatpush1.msra.mxu0 %v817
  %915 = vmatprep.subr.mxu0 %v820
  %916 = vmatpush1.msra.mxu0 %v819
  %917 = vmatprep.subr.mxu0 %v822
  %918 = vmatpush1.msra.mxu0 %v821
  %919 = vmatprep.mubr.f32.mxu0 %v169
  %920 = vmatmul.mubr.f32.gmra.mrb[0].mxu0 %v167
  %v921 = vpop.f32.mrb[0].mxu0
  %v922 = vadd.f32 %v342, %v921
  %v923 = vpop.f32.mrb[0].mxu0
  %v924 = vadd.f32 %v346, %v923
  %925 = vdwg.mxu0
  %926 = vmatprep.subr.mxu0 %v824
  %927 = vmatpush1.msra.mxu0 %v823
  %928 = vmatprep.subr.mxu0 %v826
  %929 = vmatpush1.msra.mxu0 %v825
  %930 = vmatprep.subr.mxu0 %v828
  %931 = vmatpush1.msra.mxu0 %v827
  %932 = vmatprep.subr.mxu0 %v830
  %933 = vmatpush1.msra.mxu0 %v829
  %934 = vmatprep.subr.mxu0 %v832
  %935 = vmatpush1.msra.mxu0 %v831
  %936 = vmatprep.subr.mxu0 %v834
  %937 = vmatpush1.msra.mxu0 %v833
  %938 = vmatprep.subr.mxu0 %v836
  %939 = vmatpush1.msra.mxu0 %v835
  %940 = vmatprep.subr.mxu0 %v838
  %941 = vmatpush1.msra.mxu0 %v837
  %942 = vmatprep.subr.mxu0 %v840
  %943 = vmatpush1.msra.mxu0 %v839
  %944 = vmatprep.subr.mxu0 %v842
  %945 = vmatpush1.msra.mxu0 %v841
  %946 = vmatprep.subr.mxu0 %v844
  %947 = vmatpush1.msra.mxu0 %v843
  %948 = vmatprep.subr.mxu0 %v846
  %949 = vmatpush1.msra.mxu0 %v845
  %950 = vmatprep.subr.mxu0 %v848
  %951 = vmatpush1.msra.mxu0 %v847
  %952 = vmatprep.subr.mxu0 %v850
  %953 = vmatpush1.msra.mxu0 %v849
  %954 = vmatprep.subr.mxu0 %v852
  %955 = vmatpush1.msra.mxu0 %v851
  %956 = vmatprep.subr.mxu0 %v854
  %957 = vmatpush1.msra.mxu0 %v853
  %958 = vmatprep.subr.mxu0 0.0
  %959 = vmatpush1.msra.mxu0 0.0
  %960 = vmatprep.subr.mxu0 0.0
  %961 = vmatpush1.msra.mxu0 0.0
  %962 = vmatprep.subr.mxu0 0.0
  %963 = vmatpush1.msra.mxu0 0.0
  %964 = vmatprep.subr.mxu0 0.0
  %965 = vmatpush1.msra.mxu0 0.0
  %966 = vmatprep.subr.mxu0 0.0
  %967 = vmatpush1.msra.mxu0 0.0
  %968 = vmatprep.subr.mxu0 0.0
  %969 = vmatpush1.msra.mxu0 0.0
  %970 = vmatprep.subr.mxu0 0.0
  %971 = vmatpush1.msra.mxu0 0.0
  %972 = vmatprep.subr.mxu0 0.0
  %973 = vmatpush1.msra.mxu0 0.0
  %974 = vmatprep.subr.mxu0 0.0
  %975 = vmatpush1.msra.mxu0 0.0
  %976 = vmatprep.subr.mxu0 0.0
  %977 = vmatpush1.msra.mxu0 0.0
  %978 = vmatprep.subr.mxu0 0.0
  %979 = vmatpush1.msra.mxu0 0.0
  %980 = vmatprep.subr.mxu0 0.0
  %981 = vmatpush1.msra.mxu0 0.0
  %982 = vmatprep.subr.mxu0 0.0
  %983 = vmatpush1.msra.mxu0 0.0
  %984 = vmatprep.subr.mxu0 0.0
  %985 = vmatpush1.msra.mxu0 0.0
  %986 = vmatprep.subr.mxu0 0.0
  %987 = vmatpush1.msra.mxu0 0.0
  %988 = vmatprep.subr.mxu0 0.0
  %989 = vmatpush1.msra.mxu0 0.0
  %990 = vmatprep.mubr.f32.mxu0 0.0
  %991 = vmatmul.mubr.f32.gmra.mrb[0].mxu0 %v238
  %v992 = vpop.f32.mrb[0].mxu0
  %v993 = vadd.f32 %v922, %v992
  %v994 = vpop.f32.mrb[0].mxu0
  %v995 = vadd.f32 %v924, %v994
  %996 = vdwg.mxu0
  %v999 = vcombine.low %v993, %v995
  %v1001 = vunpack.c.l.s4 1983009808
  %v1002 = vunpack.c.0.s8 %v1001
  %v1003 = vlaneseq
  %v1004 = vshrl.u32 %v1003, 7
  %v1005 = vsub.s32 %v1002, %v1004
  %v1006 = vrot.slane %v999, %v1005
  %s1008 = scalar_lea.vmem %s7, 8
  %1009 = vst.msk [vmem:[%s1008] sm:$0xf] %vm504, %v1006
  %s1010 = scalar_lea.vmem %s3, 2304
  %v1011 = vld [vmem:[%s1010] sm:$0xff]
  %v1012 = vld [vmem:[%s1010 + $0x8] sm:$0xff]
  %v1013 = vld [vmem:[%s1010 + $0x10] sm:$0xff]
  %v1014 = vld [vmem:[%s1010 + $0x18] sm:$0xff]
  %v1015 = vld [vmem:[%s1010 + $0x20] sm:$0xff]
  %v1016 = vld [vmem:[%s1010 + $0x28] sm:$0xff]
  %v1017 = vld [vmem:[%s1010 + $0x30] sm:$0xff]
  %v1018 = vld [vmem:[%s1010 + $0x38] sm:$0xff]
  %v1019 = vld [vmem:[%s1010 + $0x40] sm:$0xff]
  %v1020 = vld [vmem:[%s1010 + $0x48] sm:$0xff]
  %v1021 = vld [vmem:[%s1010 + $0x50] sm:$0xff]
  %v1022 = vld [vmem:[%s1010 + $0x58] sm:$0xff]
  %v1023 = vld [vmem:[%s1010 + $0x60] sm:$0xff]
  %v1024 = vld [vmem:[%s1010 + $0x68] sm:$0xff]
  %v1025 = vld [vmem:[%s1010 + $0x70] sm:$0xff]
  %v1026 = vld [vmem:[%s1010 + $0x78] sm:$0xff]
  %v1027 = vld [vmem:[%s1010 + $0x80] sm:$0xff]
  %v1028 = vld [vmem:[%s1010 + $0x88] sm:$0xff]
  %v1029 = vld [vmem:[%s1010 + $0x90] sm:$0xff]
  %v1030 = vld [vmem:[%s1010 + $0x98] sm:$0xff]
  %v1031 = vld [vmem:[%s1010 + $0xa0] sm:$0xff]
  %v1032 = vld [vmem:[%s1010 + $0xa8] sm:$0xff]
  %v1033 = vld [vmem:[%s1010 + $0xb0] sm:$0xff]
  %v1034 = vld [vmem:[%s1010 + $0xb8] sm:$0xff]
  %v1035 = vld [vmem:[%s1010 + $0xc0] sm:$0xff]
  %v1036 = vld [vmem:[%s1010 + $0xc8] sm:$0xff]
  %v1037 = vld [vmem:[%s1010 + $0xd0] sm:$0xff]
  %v1038 = vld [vmem:[%s1010 + $0xd8] sm:$0xff]
  %v1039 = vld [vmem:[%s1010 + $0xe0] sm:$0xff]
  %v1040 = vld [vmem:[%s1010 + $0xe8] sm:$0xff]
  %v1041 = vld [vmem:[%s1010 + $0xf0] sm:$0xff]
  %v1042 = vld [vmem:[%s1010 + $0xf8] sm:$0xff]
  %v1043 = vld [vmem:[%s1010 + $0x100] sm:$0xff]
  %v1044 = vld [vmem:[%s1010 + $0x108] sm:$0xff]
  %v1045 = vld [vmem:[%s1010 + $0x110] sm:$0xff]
  %v1046 = vld [vmem:[%s1010 + $0x118] sm:$0xff]
  %v1047 = vld [vmem:[%s1010 + $0x120] sm:$0xff]
  %v1048 = vld [vmem:[%s1010 + $0x128] sm:$0xff]
  %v1049 = vld [vmem:[%s1010 + $0x130] sm:$0xff]
  %v1050 = vld [vmem:[%s1010 + $0x138] sm:$0xff]
  %v1051 = vld [vmem:[%s1010 + $0x140] sm:$0xff]
  %v1052 = vld [vmem:[%s1010 + $0x148] sm:$0xff]
  %v1053 = vld [vmem:[%s1010 + $0x150] sm:$0xff]
  %v1054 = vld [vmem:[%s1010 + $0x158] sm:$0xff]
  %v1055 = vld [vmem:[%s1010 + $0x160] sm:$0xff]
  %v1056 = vld [vmem:[%s1010 + $0x168] sm:$0xff]
  %v1057 = vld [vmem:[%s1010 + $0x170] sm:$0xff]
  %v1058 = vld [vmem:[%s1010 + $0x178] sm:$0xff]
  %v1059 = vld [vmem:[%s1010 + $0x180] sm:$0xff]
  %v1060 = vld [vmem:[%s1010 + $0x188] sm:$0xff]
  %v1061 = vld [vmem:[%s1010 + $0x190] sm:$0xff]
  %v1062 = vld [vmem:[%s1010 + $0x198] sm:$0xff]
  %v1063 = vld [vmem:[%s1010 + $0x1a0] sm:$0xff]
  %v1064 = vld [vmem:[%s1010 + $0x1a8] sm:$0xff]
  %v1065 = vld [vmem:[%s1010 + $0x1b0] sm:$0xff]
  %v1066 = vld [vmem:[%s1010 + $0x1b8] sm:$0xff]
  %v1067 = vld [vmem:[%s1010 + $0x1c0] sm:$0xff]
  %v1068 = vld [vmem:[%s1010 + $0x1c8] sm:$0xff]
  %v1069 = vld [vmem:[%s1010 + $0x1d0] sm:$0xff]
  %v1070 = vld [vmem:[%s1010 + $0x1d8] sm:$0xff]
  %v1071 = vld [vmem:[%s1010 + $0x1e0] sm:$0xff]
  %v1072 = vld [vmem:[%s1010 + $0x1e8] sm:$0xff]
  %v1073 = vld [vmem:[%s1010 + $0x1f0] sm:$0xff]
  %v1074 = vld [vmem:[%s1010 + $0x1f8] sm:$0xff]
  %v1075 = vld [vmem:[%s1010 + $0x200] sm:$0xff]
  %v1076 = vld [vmem:[%s1010 + $0x208] sm:$0xff]
  %v1077 = vld [vmem:[%s1010 + $0x210] sm:$0xff]
  %v1078 = vld [vmem:[%s1010 + $0x218] sm:$0xff]
  %v1079 = vld [vmem:[%s1010 + $0x220] sm:$0xff]
  %v1080 = vld [vmem:[%s1010 + $0x228] sm:$0xff]
  %v1081 = vld [vmem:[%s1010 + $0x230] sm:$0xff]
  %v1082 = vld [vmem:[%s1010 + $0x238] sm:$0xff]
  %v1083 = vld [vmem:[%s1010 + $0x240] sm:$0xff]
  %v1084 = vld [vmem:[%s1010 + $0x248] sm:$0xff]
  %v1085 = vld [vmem:[%s1010 + $0x250] sm:$0xff]
  %v1086 = vld [vmem:[%s1010 + $0x258] sm:$0xff]
  %v1087 = vld [vmem:[%s1010 + $0x260] sm:$0xff]
  %v1088 = vld [vmem:[%s1010 + $0x268] sm:$0xff]
  %v1089 = vld [vmem:[%s1010 + $0x270] sm:$0xff]
  %v1090 = vld [vmem:[%s1010 + $0x278] sm:$0xff]
  %v1091 = vld [vmem:[%s1010 + $0x280] sm:$0xff]
  %v1092 = vld [vmem:[%s1010 + $0x288] sm:$0xff]
  %v1093 = vld [vmem:[%s1010 + $0x290] sm:$0xff]
  %v1094 = vld [vmem:[%s1010 + $0x298] sm:$0xff]
  %v1095 = vld [vmem:[%s1010 + $0x2a0] sm:$0xff]
  %v1096 = vld [vmem:[%s1010 + $0x2a8] sm:$0xff]
  %v1097 = vld [vmem:[%s1010 + $0x2b0] sm:$0xff]
  %v1098 = vld [vmem:[%s1010 + $0x2b8] sm:$0xff]
  %v1099 = vld [vmem:[%s1010 + $0x2c0] sm:$0xff]
  %v1100 = vld [vmem:[%s1010 + $0x2c8] sm:$0xff]
  %v1101 = vld [vmem:[%s1010 + $0x2d0] sm:$0xff]
  %v1102 = vld [vmem:[%s1010 + $0x2d8] sm:$0xff]
  %v1103 = vld [vmem:[%s1010 + $0x2e0] sm:$0xff]
  %v1104 = vld [vmem:[%s1010 + $0x2e8] sm:$0xff]
  %v1105 = vld [vmem:[%s1010 + $0x2f0] sm:$0xff]
  %v1106 = vld [vmem:[%s1010 + $0x2f8] sm:$0xff]
  %1107 = vmatprep.subr.mxu0 %v1012
  %1108 = vmatpush1.msra.mxu0 %v1011
  %1109 = vmatprep.subr.mxu0 %v1014
  %1110 = vmatpush1.msra.mxu0 %v1013
  %1111 = vmatprep.subr.mxu0 %v1016
  %1112 = vmatpush1.msra.mxu0 %v1015
  %1113 = vmatprep.subr.mxu0 %v1018
  %1114 = vmatpush1.msra.mxu0 %v1017
  %1115 = vmatprep.subr.mxu0 %v1020
  %1116 = vmatpush1.msra.mxu0 %v1019
  %1117 = vmatprep.subr.mxu0 %v1022
  %1118 = vmatpush1.msra.mxu0 %v1021
  %1119 = vmatprep.subr.mxu0 %v1024
  %1120 = vmatpush1.msra.mxu0 %v1023
  %1121 = vmatprep.subr.mxu0 %v1026
  %1122 = vmatpush1.msra.mxu0 %v1025
  %1123 = vmatprep.subr.mxu0 %v1028
  %1124 = vmatpush1.msra.mxu0 %v1027
  %1125 = vmatprep.subr.mxu0 %v1030
  %1126 = vmatpush1.msra.mxu0 %v1029
  %1127 = vmatprep.subr.mxu0 %v1032
  %1128 = vmatpush1.msra.mxu0 %v1031
  %1129 = vmatprep.subr.mxu0 %v1034
  %1130 = vmatpush1.msra.mxu0 %v1033
  %1131 = vmatprep.subr.mxu0 %v1036
  %1132 = vmatpush1.msra.mxu0 %v1035
  %1133 = vmatprep.subr.mxu0 %v1038
  %1134 = vmatpush1.msra.mxu0 %v1037
  %1135 = vmatprep.subr.mxu0 %v1040
  %1136 = vmatpush1.msra.mxu0 %v1039
  %1137 = vmatprep.subr.mxu0 %v1042
  %1138 = vmatpush1.msra.mxu0 %v1041
  %1139 = vmatprep.subr.mxu0 %v1044
  %1140 = vmatpush1.msra.mxu0 %v1043
  %1141 = vmatprep.subr.mxu0 %v1046
  %1142 = vmatpush1.msra.mxu0 %v1045
  %1143 = vmatprep.subr.mxu0 %v1048
  %1144 = vmatpush1.msra.mxu0 %v1047
  %1145 = vmatprep.subr.mxu0 %v1050
  %1146 = vmatpush1.msra.mxu0 %v1049
  %1147 = vmatprep.subr.mxu0 %v1052
  %1148 = vmatpush1.msra.mxu0 %v1051
  %1149 = vmatprep.subr.mxu0 %v1054
  %1150 = vmatpush1.msra.mxu0 %v1053
  %1151 = vmatprep.subr.mxu0 %v1056
  %1152 = vmatpush1.msra.mxu0 %v1055
  %1153 = vmatprep.subr.mxu0 %v1058
  %1154 = vmatpush1.msra.mxu0 %v1057
  %1155 = vmatprep.subr.mxu0 %v1060
  %1156 = vmatpush1.msra.mxu0 %v1059
  %1157 = vmatprep.subr.mxu0 %v1062
  %1158 = vmatpush1.msra.mxu0 %v1061
  %1159 = vmatprep.subr.mxu0 %v1064
  %1160 = vmatpush1.msra.mxu0 %v1063
  %1161 = vmatprep.subr.mxu0 %v1066
  %1162 = vmatpush1.msra.mxu0 %v1065
  %1163 = vmatprep.subr.mxu0 %v1068
  %1164 = vmatpush1.msra.mxu0 %v1067
  %1165 = vmatprep.subr.mxu0 %v1070
  %1166 = vmatpush1.msra.mxu0 %v1069
  %1167 = vmatprep.subr.mxu0 %v1072
  %1168 = vmatpush1.msra.mxu0 %v1071
  %1169 = vmatprep.subr.mxu0 %v1074
  %1170 = vmatpush1.msra.mxu0 %v1073
  %1171 = vmatprep.mubr.f32.mxu0 %v169
  %1172 = vmatmul.mubr.f32.gmra.mrb[0].mxu0 %v167
  %v1173 = vpop.f32.mrb[0].mxu0
  %v1174 = vadd.f32 %v342, %v1173
  %v1175 = vpop.f32.mrb[0].mxu0
  %v1176 = vadd.f32 %v346, %v1175
  %1177 = vdwg.mxu0
  %1178 = vmatprep.subr.mxu0 %v1076
  %1179 = vmatpush1.msra.mxu0 %v1075
  %1180 = vmatprep.subr.mxu0 %v1078
  %1181 = vmatpush1.msra.mxu0 %v1077
  %1182 = vmatprep.subr.mxu0 %v1080
  %1183 = vmatpush1.msra.mxu0 %v1079
  %1184 = vmatprep.subr.mxu0 %v1082
  %1185 = vmatpush1.msra.mxu0 %v1081
  %1186 = vmatprep.subr.mxu0 %v1084
  %1187 = vmatpush1.msra.mxu0 %v1083
  %1188 = vmatprep.subr.mxu0 %v1086
  %1189 = vmatpush1.msra.mxu0 %v1085
  %1190 = vmatprep.subr.mxu0 %v1088
  %1191 = vmatpush1.msra.mxu0 %v1087
  %1192 = vmatprep.subr.mxu0 %v1090
  %1193 = vmatpush1.msra.mxu0 %v1089
  %1194 = vmatprep.subr.mxu0 %v1092
  %1195 = vmatpush1.msra.mxu0 %v1091
  %1196 = vmatprep.subr.mxu0 %v1094
  %1197 = vmatpush1.msra.mxu0 %v1093
  %1198 = vmatprep.subr.mxu0 %v1096
  %1199 = vmatpush1.msra.mxu0 %v1095
  %1200 = vmatprep.subr.mxu0 %v1098
  %1201 = vmatpush1.msra.mxu0 %v1097
  %1202 = vmatprep.subr.mxu0 %v1100
  %1203 = vmatpush1.msra.mxu0 %v1099
  %1204 = vmatprep.subr.mxu0 %v1102
  %1205 = vmatpush1.msra.mxu0 %v1101
  %1206 = vmatprep.subr.mxu0 %v1104
  %1207 = vmatpush1.msra.mxu0 %v1103
  %1208 = vmatprep.subr.mxu0 %v1106
  %1209 = vmatpush1.msra.mxu0 %v1105
  %1210 = vmatprep.subr.mxu0 0.0
  %1211 = vmatpush1.msra.mxu0 0.0
  %1212 = vmatprep.subr.mxu0 0.0
  %1213 = vmatpush1.msra.mxu0 0.0
  %1214 = vmatprep.subr.mxu0 0.0
  %1215 = vmatpush1.msra.mxu0 0.0
  %1216 = vmatprep.subr.mxu0 0.0
  %1217 = vmatpush1.msra.mxu0 0.0
  %1218 = vmatprep.subr.mxu0 0.0
  %1219 = vmatpush1.msra.mxu0 0.0
  %1220 = vmatprep.subr.mxu0 0.0
  %1221 = vmatpush1.msra.mxu0 0.0
  %1222 = vmatprep.subr.mxu0 0.0
  %1223 = vmatpush1.msra.mxu0 0.0
  %1224 = vmatprep.subr.mxu0 0.0
  %1225 = vmatpush1.msra.mxu0 0.0
  %1226 = vmatprep.subr.mxu0 0.0
  %1227 = vmatpush1.msra.mxu0 0.0
  %1228 = vmatprep.subr.mxu0 0.0
  %1229 = vmatpush1.msra.mxu0 0.0
  %1230 = vmatprep.subr.mxu0 0.0
  %1231 = vmatpush1.msra.mxu0 0.0
  %1232 = vmatprep.subr.mxu0 0.0
  %1233 = vmatpush1.msra.mxu0 0.0
  %1234 = vmatprep.subr.mxu0 0.0
  %1235 = vmatpush1.msra.mxu0 0.0
  %1236 = vmatprep.subr.mxu0 0.0
  %1237 = vmatpush1.msra.mxu0 0.0
  %1238 = vmatprep.subr.mxu0 0.0
  %1239 = vmatpush1.msra.mxu0 0.0
  %1240 = vmatprep.subr.mxu0 0.0
  %1241 = vmatpush1.msra.mxu0 0.0
  %1242 = vmatprep.mubr.f32.mxu0 0.0
  %1243 = vmatmul.mubr.f32.gmra.mrb[0].mxu0 %v238
  %v1244 = vpop.f32.mrb[0].mxu0
  %v1245 = vadd.f32 %v1174, %v1244
  %v1246 = vpop.f32.mrb[0].mxu0
  %v1247 = vadd.f32 %v1176, %v1246
  %1248 = vdwg.mxu0
  %v1251 = vcombine.low %v1245, %v1247
  %v1253 = vunpack.c.l.s4 1983009808
  %v1254 = vunpack.c.0.s8 %v1253
  %v1255 = vlaneseq
  %v1256 = vshrl.u32 %v1255, 7
  %v1257 = vsub.s32 %v1254, %v1256
  %v1258 = vrot.slane %v1251, %v1257
  %s1260 = scalar_lea.vmem %s7, 12
  %1261 = vst.msk [vmem:[%s1260] sm:$0xf] %vm504, %v1258
  %s1262 = scalar_lea.vmem %s3, 3072
  %v1263 = vld [vmem:[%s1262] sm:$0xff]
  %v1264 = vld [vmem:[%s1262 + $0x8] sm:$0xff]
  %v1265 = vld [vmem:[%s1262 + $0x10] sm:$0xff]
  %v1266 = vld [vmem:[%s1262 + $0x18] sm:$0xff]
  %v1267 = vld [vmem:[%s1262 + $0x20] sm:$0xff]
  %v1268 = vld [vmem:[%s1262 + $0x28] sm:$0xff]
  %v1269 = vld [vmem:[%s1262 + $0x30] sm:$0xff]
  %v1270 = vld [vmem:[%s1262 + $0x38] sm:$0xff]
  %v1271 = vld [vmem:[%s1262 + $0x40] sm:$0xff]
  %v1272 = vld [vmem:[%s1262 + $0x48] sm:$0xff]
  %v1273 = vld [vmem:[%s1262 + $0x50] sm:$0xff]
  %v1274 = vld [vmem:[%s1262 + $0x58] sm:$0xff]
  %v1275 = vld [vmem:[%s1262 + $0x60] sm:$0xff]
  %v1276 = vld [vmem:[%s1262 + $0x68] sm:$0xff]
  %v1277 = vld [vmem:[%s1262 + $0x70] sm:$0xff]
  %v1278 = vld [vmem:[%s1262 + $0x78] sm:$0xff]
  %v1279 = vld [vmem:[%s1262 + $0x80] sm:$0xff]
  %v1280 = vld [vmem:[%s1262 + $0x88] sm:$0xff]
  %v1281 = vld [vmem:[%s1262 + $0x90] sm:$0xff]
  %v1282 = vld [vmem:[%s1262 + $0x98] sm:$0xff]
  %v1283 = vld [vmem:[%s1262 + $0xa0] sm:$0xff]
  %v1284 = vld [vmem:[%s1262 + $0xa8] sm:$0xff]
  %v1285 = vld [vmem:[%s1262 + $0xb0] sm:$0xff]
  %v1286 = vld [vmem:[%s1262 + $0xb8] sm:$0xff]
  %v1287 = vld [vmem:[%s1262 + $0xc0] sm:$0xff]
  %v1288 = vld [vmem:[%s1262 + $0xc8] sm:$0xff]
  %v1289 = vld [vmem:[%s1262 + $0xd0] sm:$0xff]
  %v1290 = vld [vmem:[%s1262 + $0xd8] sm:$0xff]
  %v1291 = vld [vmem:[%s1262 + $0xe0] sm:$0xff]
  %v1292 = vld [vmem:[%s1262 + $0xe8] sm:$0xff]
  %v1293 = vld [vmem:[%s1262 + $0xf0] sm:$0xff]
  %v1294 = vld [vmem:[%s1262 + $0xf8] sm:$0xff]
  %v1295 = vld [vmem:[%s1262 + $0x100] sm:$0xff]
  %v1296 = vld [vmem:[%s1262 + $0x108] sm:$0xff]
  %v1297 = vld [vmem:[%s1262 + $0x110] sm:$0xff]
  %v1298 = vld [vmem:[%s1262 + $0x118] sm:$0xff]
  %v1299 = vld [vmem:[%s1262 + $0x120] sm:$0xff]
  %v1300 = vld [vmem:[%s1262 + $0x128] sm:$0xff]
  %v1301 = vld [vmem:[%s1262 + $0x130] sm:$0xff]
  %v1302 = vld [vmem:[%s1262 + $0x138] sm:$0xff]
  %v1303 = vld [vmem:[%s1262 + $0x140] sm:$0xff]
  %v1304 = vld [vmem:[%s1262 + $0x148] sm:$0xff]
  %v1305 = vld [vmem:[%s1262 + $0x150] sm:$0xff]
  %v1306 = vld [vmem:[%s1262 + $0x158] sm:$0xff]
  %v1307 = vld [vmem:[%s1262 + $0x160] sm:$0xff]
  %v1308 = vld [vmem:[%s1262 + $0x168] sm:$0xff]
  %v1309 = vld [vmem:[%s1262 + $0x170] sm:$0xff]
  %v1310 = vld [vmem:[%s1262 + $0x178] sm:$0xff]
  %v1311 = vld [vmem:[%s1262 + $0x180] sm:$0xff]
  %v1312 = vld [vmem:[%s1262 + $0x188] sm:$0xff]
  %v1313 = vld [vmem:[%s1262 + $0x190] sm:$0xff]
  %v1314 = vld [vmem:[%s1262 + $0x198] sm:$0xff]
  %v1315 = vld [vmem:[%s1262 + $0x1a0] sm:$0xff]
  %v1316 = vld [vmem:[%s1262 + $0x1a8] sm:$0xff]
  %v1317 = vld [vmem:[%s1262 + $0x1b0] sm:$0xff]
  %v1318 = vld [vmem:[%s1262 + $0x1b8] sm:$0xff]
  %v1319 = vld [vmem:[%s1262 + $0x1c0] sm:$0xff]
  %v1320 = vld [vmem:[%s1262 + $0x1c8] sm:$0xff]
  %v1321 = vld [vmem:[%s1262 + $0x1d0] sm:$0xff]
  %v1322 = vld [vmem:[%s1262 + $0x1d8] sm:$0xff]
  %v1323 = vld [vmem:[%s1262 + $0x1e0] sm:$0xff]
  %v1324 = vld [vmem:[%s1262 + $0x1e8] sm:$0xff]
  %v1325 = vld [vmem:[%s1262 + $0x1f0] sm:$0xff]
  %v1326 = vld [vmem:[%s1262 + $0x1f8] sm:$0xff]
  %v1327 = vld [vmem:[%s1262 + $0x200] sm:$0xff]
  %v1328 = vld [vmem:[%s1262 + $0x208] sm:$0xff]
  %v1329 = vld [vmem:[%s1262 + $0x210] sm:$0xff]
  %v1330 = vld [vmem:[%s1262 + $0x218] sm:$0xff]
  %v1331 = vld [vmem:[%s1262 + $0x220] sm:$0xff]
  %v1332 = vld [vmem:[%s1262 + $0x228] sm:$0xff]
  %v1333 = vld [vmem:[%s1262 + $0x230] sm:$0xff]
  %v1334 = vld [vmem:[%s1262 + $0x238] sm:$0xff]
  %v1335 = vld [vmem:[%s1262 + $0x240] sm:$0xff]
  %v1336 = vld [vmem:[%s1262 + $0x248] sm:$0xff]
  %v1337 = vld [vmem:[%s1262 + $0x250] sm:$0xff]
  %v1338 = vld [vmem:[%s1262 + $0x258] sm:$0xff]
  %v1339 = vld [vmem:[%s1262 + $0x260] sm:$0xff]
  %v1340 = vld [vmem:[%s1262 + $0x268] sm:$0xff]
  %v1341 = vld [vmem:[%s1262 + $0x270] sm:$0xff]
  %v1342 = vld [vmem:[%s1262 + $0x278] sm:$0xff]
  %v1343 = vld [vmem:[%s1262 + $0x280] sm:$0xff]
  %v1344 = vld [vmem:[%s1262 + $0x288] sm:$0xff]
  %v1345 = vld [vmem:[%s1262 + $0x290] sm:$0xff]
  %v1346 = vld [vmem:[%s1262 + $0x298] sm:$0xff]
  %v1347 = vld [vmem:[%s1262 + $0x2a0] sm:$0xff]
  %v1348 = vld [vmem:[%s1262 + $0x2a8] sm:$0xff]
  %v1349 = vld [vmem:[%s1262 + $0x2b0] sm:$0xff]
  %v1350 = vld [vmem:[%s1262 + $0x2b8] sm:$0xff]
  %v1351 = vld [vmem:[%s1262 + $0x2c0] sm:$0xff]
  %v1352 = vld [vmem:[%s1262 + $0x2c8] sm:$0xff]
  %v1353 = vld [vmem:[%s1262 + $0x2d0] sm:$0xff]
  %v1354 = vld [vmem:[%s1262 + $0x2d8] sm:$0xff]
  %v1355 = vld [vmem:[%s1262 + $0x2e0] sm:$0xff]
  %v1356 = vld [vmem:[%s1262 + $0x2e8] sm:$0xff]
  %v1357 = vld [vmem:[%s1262 + $0x2f0] sm:$0xff]
  %v1358 = vld [vmem:[%s1262 + $0x2f8] sm:$0xff]
  %1359 = vmatprep.subr.mxu0 %v1264
  %1360 = vmatpush1.msra.mxu0 %v1263
  %1361 = vmatprep.subr.mxu0 %v1266
  %1362 = vmatpush1.msra.mxu0 %v1265
  %1363 = vmatprep.subr.mxu0 %v1268
  %1364 = vmatpush1.msra.mxu0 %v1267
  %1365 = vmatprep.subr.mxu0 %v1270
  %1366 = vmatpush1.msra.mxu0 %v1269
  %1367 = vmatprep.subr.mxu0 %v1272
  %1368 = vmatpush1.msra.mxu0 %v1271
  %1369 = vmatprep.subr.mxu0 %v1274
  %1370 = vmatpush1.msra.mxu0 %v1273
  %1371 = vmatprep.subr.mxu0 %v1276
  %1372 = vmatpush1.msra.mxu0 %v1275
  %1373 = vmatprep.subr.mxu0 %v1278
  %1374 = vmatpush1.msra.mxu0 %v1277
  %1375 = vmatprep.subr.mxu0 %v1280
  %1376 = vmatpush1.msra.mxu0 %v1279
  %1377 = vmatprep.subr.mxu0 %v1282
  %1378 = vmatpush1.msra.mxu0 %v1281
  %1379 = vmatprep.subr.mxu0 %v1284
  %1380 = vmatpush1.msra.mxu0 %v1283
  %1381 = vmatprep.subr.mxu0 %v1286
  %1382 = vmatpush1.msra.mxu0 %v1285
  %1383 = vmatprep.subr.mxu0 %v1288
  %1384 = vmatpush1.msra.mxu0 %v1287
  %1385 = vmatprep.subr.mxu0 %v1290
  %1386 = vmatpush1.msra.mxu0 %v1289
  %1387 = vmatprep.subr.mxu0 %v1292
  %1388 = vmatpush1.msra.mxu0 %v1291
  %1389 = vmatprep.subr.mxu0 %v1294
  %1390 = vmatpush1.msra.mxu0 %v1293
  %1391 = vmatprep.subr.mxu0 %v1296
  %1392 = vmatpush1.msra.mxu0 %v1295
  %1393 = vmatprep.subr.mxu0 %v1298
  %1394 = vmatpush1.msra.mxu0 %v1297
  %1395 = vmatprep.subr.mxu0 %v1300
  %1396 = vmatpush1.msra.mxu0 %v1299
  %1397 = vmatprep.subr.mxu0 %v1302
  %1398 = vmatpush1.msra.mxu0 %v1301
  %1399 = vmatprep.subr.mxu0 %v1304
  %1400 = vmatpush1.msra.mxu0 %v1303
  %1401 = vmatprep.subr.mxu0 %v1306
  %1402 = vmatpush1.msra.mxu0 %v1305
  %1403 = vmatprep.subr.mxu0 %v1308
  %1404 = vmatpush1.msra.mxu0 %v1307
  %1405 = vmatprep.subr.mxu0 %v1310
  %1406 = vmatpush1.msra.mxu0 %v1309
  %1407 = vmatprep.subr.mxu0 %v1312
  %1408 = vmatpush1.msra.mxu0 %v1311
  %1409 = vmatprep.subr.mxu0 %v1314
  %1410 = vmatpush1.msra.mxu0 %v1313
  %1411 = vmatprep.subr.mxu0 %v1316
  %1412 = vmatpush1.msra.mxu0 %v1315
  %1413 = vmatprep.subr.mxu0 %v1318
  %1414 = vmatpush1.msra.mxu0 %v1317
  %1415 = vmatprep.subr.mxu0 %v1320
  %1416 = vmatpush1.msra.mxu0 %v1319
  %1417 = vmatprep.subr.mxu0 %v1322
  %1418 = vmatpush1.msra.mxu0 %v1321
  %1419 = vmatprep.subr.mxu0 %v1324
  %1420 = vmatpush1.msra.mxu0 %v1323
  %1421 = vmatprep.subr.mxu0 %v1326
  %1422 = vmatpush1.msra.mxu0 %v1325
  %1423 = vmatprep.mubr.f32.mxu0 %v169
  %1424 = vmatmul.mubr.f32.gmra.mrb[0].mxu0 %v167
  %v1425 = vpop.f32.mrb[0].mxu0
  %v1426 = vadd.f32 %v342, %v1425
  %v1427 = vpop.f32.mrb[0].mxu0
  %v1428 = vadd.f32 %v346, %v1427
  %1429 = vdwg.mxu0
  %1430 = vmatprep.subr.mxu0 %v1328
  %1431 = vmatpush1.msra.mxu0 %v1327
  %1432 = vmatprep.subr.mxu0 %v1330
  %1433 = vmatpush1.msra.mxu0 %v1329
  %1434 = vmatprep.subr.mxu0 %v1332
  %1435 = vmatpush1.msra.mxu0 %v1331
  %1436 = vmatprep.subr.mxu0 %v1334
  %1437 = vmatpush1.msra.mxu0 %v1333
  %1438 = vmatprep.subr.mxu0 %v1336
  %1439 = vmatpush1.msra.mxu0 %v1335
  %1440 = vmatprep.subr.mxu0 %v1338
  %1441 = vmatpush1.msra.mxu0 %v1337
  %1442 = vmatprep.subr.mxu0 %v1340
  %1443 = vmatpush1.msra.mxu0 %v1339
  %1444 = vmatprep.subr.mxu0 %v1342
  %1445 = vmatpush1.msra.mxu0 %v1341
  %1446 = vmatprep.subr.mxu0 %v1344
  %1447 = vmatpush1.msra.mxu0 %v1343
  %1448 = vmatprep.subr.mxu0 %v1346
  %1449 = vmatpush1.msra.mxu0 %v1345
  %1450 = vmatprep.subr.mxu0 %v1348
  %1451 = vmatpush1.msra.mxu0 %v1347
  %1452 = vmatprep.subr.mxu0 %v1350
  %1453 = vmatpush1.msra.mxu0 %v1349
  %1454 = vmatprep.subr.mxu0 %v1352
  %1455 = vmatpush1.msra.mxu0 %v1351
  %1456 = vmatprep.subr.mxu0 %v1354
  %1457 = vmatpush1.msra.mxu0 %v1353
  %1458 = vmatprep.subr.mxu0 %v1356
  %1459 = vmatpush1.msra.mxu0 %v1355
  %1460 = vmatprep.subr.mxu0 %v1358
  %1461 = vmatpush1.msra.mxu0 %v1357
  %1462 = vmatprep.subr.mxu0 0.0
  %1463 = vmatpush1.msra.mxu0 0.0
  %1464 = vmatprep.subr.mxu0 0.0
  %1465 = vmatpush1.msra.mxu0 0.0
  %1466 = vmatprep.subr.mxu0 0.0
  %1467 = vmatpush1.msra.mxu0 0.0
  %1468 = vmatprep.subr.mxu0 0.0
  %1469 = vmatpush1.msra.mxu0 0.0
  %1470 = vmatprep.subr.mxu0 0.0
  %1471 = vmatpush1.msra.mxu0 0.0
  %1472 = vmatprep.subr.mxu0 0.0
  %1473 = vmatpush1.msra.mxu0 0.0
  %1474 = vmatprep.subr.mxu0 0.0
  %1475 = vmatpush1.msra.mxu0 0.0
  %1476 = vmatprep.subr.mxu0 0.0
  %1477 = vmatpush1.msra.mxu0 0.0
  %1478 = vmatprep.subr.mxu0 0.0
  %1479 = vmatpush1.msra.mxu0 0.0
  %1480 = vmatprep.subr.mxu0 0.0
  %1481 = vmatpush1.msra.mxu0 0.0
  %1482 = vmatprep.subr.mxu0 0.0
  %1483 = vmatpush1.msra.mxu0 0.0
  %1484 = vmatprep.subr.mxu0 0.0
  %1485 = vmatpush1.msra.mxu0 0.0
  %1486 = vmatprep.subr.mxu0 0.0
  %1487 = vmatpush1.msra.mxu0 0.0
  %1488 = vmatprep.subr.mxu0 0.0
  %1489 = vmatpush1.msra.mxu0 0.0
  %1490 = vmatprep.subr.mxu0 0.0
  %1491 = vmatpush1.msra.mxu0 0.0
  %1492 = vmatprep.subr.mxu0 0.0
  %1493 = vmatpush1.msra.mxu0 0.0
  %1494 = vmatprep.mubr.f32.mxu0 0.0
  %1495 = vmatmul.mubr.f32.gmra.mrb[0].mxu0 %v238
  %v1496 = vpop.f32.mrb[0].mxu0
  %v1497 = vadd.f32 %v1426, %v1496
  %v1498 = vpop.f32.mrb[0].mxu0
  %v1499 = vadd.f32 %v1428, %v1498
  %1500 = vdwg.mxu0
  %v1503 = vcombine.low %v1497, %v1499
  %v1505 = vunpack.c.l.s4 1983009808
  %v1506 = vunpack.c.0.s8 %v1505
  %v1507 = vlaneseq
  %v1508 = vshrl.u32 %v1507, 7
  %v1509 = vsub.s32 %v1506, %v1508
  %v1510 = vrot.slane %v1503, %v1509
  %s1512 = scalar_lea.vmem %s7, 16
  %1513 = vst.msk [vmem:[%s1512] sm:$0xf] %vm504, %v1510
  %s1514 = scalar_lea.vmem %s3, 3840
  %v1515 = vld [vmem:[%s1514] sm:$0xff]
  %v1516 = vld [vmem:[%s1514 + $0x8] sm:$0xff]
  %v1517 = vld [vmem:[%s1514 + $0x10] sm:$0xff]
  %v1518 = vld [vmem:[%s1514 + $0x18] sm:$0xff]
  %v1519 = vld [vmem:[%s1514 + $0x20] sm:$0xff]
  %v1520 = vld [vmem:[%s1514 + $0x28] sm:$0xff]
  %v1521 = vld [vmem:[%s1514 + $0x30] sm:$0xff]
  %v1522 = vld [vmem:[%s1514 + $0x38] sm:$0xff]
  %v1523 = vld [vmem:[%s1514 + $0x40] sm:$0xff]
  %v1524 = vld [vmem:[%s1514 + $0x48] sm:$0xff]
  %v1525 = vld [vmem:[%s1514 + $0x50] sm:$0xff]
  %v1526 = vld [vmem:[%s1514 + $0x58] sm:$0xff]
  %v1527 = vld [vmem:[%s1514 + $0x60] sm:$0xff]
  %v1528 = vld [vmem:[%s1514 + $0x68] sm:$0xff]
  %v1529 = vld [vmem:[%s1514 + $0x70] sm:$0xff]
  %v1530 = vld [vmem:[%s1514 + $0x78] sm:$0xff]
  %v1531 = vld [vmem:[%s1514 + $0x80] sm:$0xff]
  %v1532 = vld [vmem:[%s1514 + $0x88] sm:$0xff]
  %v1533 = vld [vmem:[%s1514 + $0x90] sm:$0xff]
  %v1534 = vld [vmem:[%s1514 + $0x98] sm:$0xff]
  %v1535 = vld [vmem:[%s1514 + $0xa0] sm:$0xff]
  %v1536 = vld [vmem:[%s1514 + $0xa8] sm:$0xff]
  %v1537 = vld [vmem:[%s1514 + $0xb0] sm:$0xff]
  %v1538 = vld [vmem:[%s1514 + $0xb8] sm:$0xff]
  %v1539 = vld [vmem:[%s1514 + $0xc0] sm:$0xff]
  %v1540 = vld [vmem:[%s1514 + $0xc8] sm:$0xff]
  %v1541 = vld [vmem:[%s1514 + $0xd0] sm:$0xff]
  %v1542 = vld [vmem:[%s1514 + $0xd8] sm:$0xff]
  %v1543 = vld [vmem:[%s1514 + $0xe0] sm:$0xff]
  %v1544 = vld [vmem:[%s1514 + $0xe8] sm:$0xff]
  %v1545 = vld [vmem:[%s1514 + $0xf0] sm:$0xff]
  %v1546 = vld [vmem:[%s1514 + $0xf8] sm:$0xff]
  %v1547 = vld [vmem:[%s1514 + $0x100] sm:$0xff]
  %v1548 = vld [vmem:[%s1514 + $0x108] sm:$0xff]
  %v1549 = vld [vmem:[%s1514 + $0x110] sm:$0xff]
  %v1550 = vld [vmem:[%s1514 + $0x118] sm:$0xff]
  %v1551 = vld [vmem:[%s1514 + $0x120] sm:$0xff]
  %v1552 = vld [vmem:[%s1514 + $0x128] sm:$0xff]
  %v1553 = vld [vmem:[%s1514 + $0x130] sm:$0xff]
  %v1554 = vld [vmem:[%s1514 + $0x138] sm:$0xff]
  %v1555 = vld [vmem:[%s1514 + $0x140] sm:$0xff]
  %v1556 = vld [vmem:[%s1514 + $0x148] sm:$0xff]
  %v1557 = vld [vmem:[%s1514 + $0x150] sm:$0xff]
  %v1558 = vld [vmem:[%s1514 + $0x158] sm:$0xff]
  %v1559 = vld [vmem:[%s1514 + $0x160] sm:$0xff]
  %v1560 = vld [vmem:[%s1514 + $0x168] sm:$0xff]
  %v1561 = vld [vmem:[%s1514 + $0x170] sm:$0xff]
  %v1562 = vld [vmem:[%s1514 + $0x178] sm:$0xff]
  %v1563 = vld [vmem:[%s1514 + $0x180] sm:$0xff]
  %v1564 = vld [vmem:[%s1514 + $0x188] sm:$0xff]
  %v1565 = vld [vmem:[%s1514 + $0x190] sm:$0xff]
  %v1566 = vld [vmem:[%s1514 + $0x198] sm:$0xff]
  %v1567 = vld [vmem:[%s1514 + $0x1a0] sm:$0xff]
  %v1568 = vld [vmem:[%s1514 + $0x1a8] sm:$0xff]
  %v1569 = vld [vmem:[%s1514 + $0x1b0] sm:$0xff]
  %v1570 = vld [vmem:[%s1514 + $0x1b8] sm:$0xff]
  %v1571 = vld [vmem:[%s1514 + $0x1c0] sm:$0xff]
  %v1572 = vld [vmem:[%s1514 + $0x1c8] sm:$0xff]
  %v1573 = vld [vmem:[%s1514 + $0x1d0] sm:$0xff]
  %v1574 = vld [vmem:[%s1514 + $0x1d8] sm:$0xff]
  %v1575 = vld [vmem:[%s1514 + $0x1e0] sm:$0xff]
  %v1576 = vld [vmem:[%s1514 + $0x1e8] sm:$0xff]
  %v1577 = vld [vmem:[%s1514 + $0x1f0] sm:$0xff]
  %v1578 = vld [vmem:[%s1514 + $0x1f8] sm:$0xff]
  %v1579 = vld [vmem:[%s1514 + $0x200] sm:$0xff]
  %v1580 = vld [vmem:[%s1514 + $0x208] sm:$0xff]
  %v1581 = vld [vmem:[%s1514 + $0x210] sm:$0xff]
  %v1582 = vld [vmem:[%s1514 + $0x218] sm:$0xff]
  %v1583 = vld [vmem:[%s1514 + $0x220] sm:$0xff]
  %v1584 = vld [vmem:[%s1514 + $0x228] sm:$0xff]
  %v1585 = vld [vmem:[%s1514 + $0x230] sm:$0xff]
  %v1586 = vld [vmem:[%s1514 + $0x238] sm:$0xff]
  %v1587 = vld [vmem:[%s1514 + $0x240] sm:$0xff]
  %v1588 = vld [vmem:[%s1514 + $0x248] sm:$0xff]
  %v1589 = vld [vmem:[%s1514 + $0x250] sm:$0xff]
  %v1590 = vld [vmem:[%s1514 + $0x258] sm:$0xff]
  %v1591 = vld [vmem:[%s1514 + $0x260] sm:$0xff]
  %v1592 = vld [vmem:[%s1514 + $0x268] sm:$0xff]
  %v1593 = vld [vmem:[%s1514 + $0x270] sm:$0xff]
  %v1594 = vld [vmem:[%s1514 + $0x278] sm:$0xff]
  %v1595 = vld [vmem:[%s1514 + $0x280] sm:$0xff]
  %v1596 = vld [vmem:[%s1514 + $0x288] sm:$0xff]
  %v1597 = vld [vmem:[%s1514 + $0x290] sm:$0xff]
  %v1598 = vld [vmem:[%s1514 + $0x298] sm:$0xff]
  %v1599 = vld [vmem:[%s1514 + $0x2a0] sm:$0xff]
  %v1600 = vld [vmem:[%s1514 + $0x2a8] sm:$0xff]
  %v1601 = vld [vmem:[%s1514 + $0x2b0] sm:$0xff]
  %v1602 = vld [vmem:[%s1514 + $0x2b8] sm:$0xff]
  %v1603 = vld [vmem:[%s1514 + $0x2c0] sm:$0xff]
  %v1604 = vld [vmem:[%s1514 + $0x2c8] sm:$0xff]
  %v1605 = vld [vmem:[%s1514 + $0x2d0] sm:$0xff]
  %v1606 = vld [vmem:[%s1514 + $0x2d8] sm:$0xff]
  %v1607 = vld [vmem:[%s1514 + $0x2e0] sm:$0xff]
  %v1608 = vld [vmem:[%s1514 + $0x2e8] sm:$0xff]
  %v1609 = vld [vmem:[%s1514 + $0x2f0] sm:$0xff]
  %v1610 = vld [vmem:[%s1514 + $0x2f8] sm:$0xff]
  %1611 = vmatprep.subr.mxu0 %v1516
  %1612 = vmatpush1.msra.mxu0 %v1515
  %1613 = vmatprep.subr.mxu0 %v1518
  %1614 = vmatpush1.msra.mxu0 %v1517
  %1615 = vmatprep.subr.mxu0 %v1520
  %1616 = vmatpush1.msra.mxu0 %v1519
  %1617 = vmatprep.subr.mxu0 %v1522
  %1618 = vmatpush1.msra.mxu0 %v1521
  %1619 = vmatprep.subr.mxu0 %v1524
  %1620 = vmatpush1.msra.mxu0 %v1523
  %1621 = vmatprep.subr.mxu0 %v1526
  %1622 = vmatpush1.msra.mxu0 %v1525
  %1623 = vmatprep.subr.mxu0 %v1528
  %1624 = vmatpush1.msra.mxu0 %v1527
  %1625 = vmatprep.subr.mxu0 %v1530
  %1626 = vmatpush1.msra.mxu0 %v1529
  %1627 = vmatprep.subr.mxu0 %v1532
  %1628 = vmatpush1.msra.mxu0 %v1531
  %1629 = vmatprep.subr.mxu0 %v1534
  %1630 = vmatpush1.msra.mxu0 %v1533
  %1631 = vmatprep.subr.mxu0 %v1536
  %1632 = vmatpush1.msra.mxu0 %v1535
  %1633 = vmatprep.subr.mxu0 %v1538
  %1634 = vmatpush1.msra.mxu0 %v1537
  %1635 = vmatprep.subr.mxu0 %v1540
  %1636 = vmatpush1.msra.mxu0 %v1539
  %1637 = vmatprep.subr.mxu0 %v1542
  %1638 = vmatpush1.msra.mxu0 %v1541
  %1639 = vmatprep.subr.mxu0 %v1544
  %1640 = vmatpush1.msra.mxu0 %v1543
  %1641 = vmatprep.subr.mxu0 %v1546
  %1642 = vmatpush1.msra.mxu0 %v1545
  %1643 = vmatprep.subr.mxu0 %v1548
  %1644 = vmatpush1.msra.mxu0 %v1547
  %1645 = vmatprep.subr.mxu0 %v1550
  %1646 = vmatpush1.msra.mxu0 %v1549
  %1647 = vmatprep.subr.mxu0 %v1552
  %1648 = vmatpush1.msra.mxu0 %v1551
  %1649 = vmatprep.subr.mxu0 %v1554
  %1650 = vmatpush1.msra.mxu0 %v1553
  %1651 = vmatprep.subr.mxu0 %v1556
  %1652 = vmatpush1.msra.mxu0 %v1555
  %1653 = vmatprep.subr.mxu0 %v1558
  %1654 = vmatpush1.msra.mxu0 %v1557
  %1655 = vmatprep.subr.mxu0 %v1560
  %1656 = vmatpush1.msra.mxu0 %v1559
  %1657 = vmatprep.subr.mxu0 %v1562
  %1658 = vmatpush1.msra.mxu0 %v1561
  %1659 = vmatprep.subr.mxu0 %v1564
  %1660 = vmatpush1.msra.mxu0 %v1563
  %1661 = vmatprep.subr.mxu0 %v1566
  %1662 = vmatpush1.msra.mxu0 %v1565
  %1663 = vmatprep.subr.mxu0 %v1568
  %1664 = vmatpush1.msra.mxu0 %v1567
  %1665 = vmatprep.subr.mxu0 %v1570
  %1666 = vmatpush1.msra.mxu0 %v1569
  %1667 = vmatprep.subr.mxu0 %v1572
  %1668 = vmatpush1.msra.mxu0 %v1571
  %1669 = vmatprep.subr.mxu0 %v1574
  %1670 = vmatpush1.msra.mxu0 %v1573
  %1671 = vmatprep.subr.mxu0 %v1576
  %1672 = vmatpush1.msra.mxu0 %v1575
  %1673 = vmatprep.subr.mxu0 %v1578
  %1674 = vmatpush1.msra.mxu0 %v1577
  %1675 = vmatprep.mubr.f32.mxu0 %v169
  %1676 = vmatmul.mubr.f32.gmra.mrb[0].mxu0 %v167
  %v1677 = vpop.f32.mrb[0].mxu0
  %v1678 = vadd.f32 %v342, %v1677
  %v1679 = vpop.f32.mrb[0].mxu0
  %v1680 = vadd.f32 %v346, %v1679
  %1681 = vdwg.mxu0
  %1682 = vmatprep.subr.mxu0 %v1580
  %1683 = vmatpush1.msra.mxu0 %v1579
  %1684 = vmatprep.subr.mxu0 %v1582
  %1685 = vmatpush1.msra.mxu0 %v1581
  %1686 = vmatprep.subr.mxu0 %v1584
  %1687 = vmatpush1.msra.mxu0 %v1583
  %1688 = vmatprep.subr.mxu0 %v1586
  %1689 = vmatpush1.msra.mxu0 %v1585
  %1690 = vmatprep.subr.mxu0 %v1588
  %1691 = vmatpush1.msra.mxu0 %v1587
  %1692 = vmatprep.subr.mxu0 %v1590
  %1693 = vmatpush1.msra.mxu0 %v1589
  %1694 = vmatprep.subr.mxu0 %v1592
  %1695 = vmatpush1.msra.mxu0 %v1591
  %1696 = vmatprep.subr.mxu0 %v1594
  %1697 = vmatpush1.msra.mxu0 %v1593
  %1698 = vmatprep.subr.mxu0 %v1596
  %1699 = vmatpush1.msra.mxu0 %v1595
  %1700 = vmatprep.subr.mxu0 %v1598
  %1701 = vmatpush1.msra.mxu0 %v1597
  %1702 = vmatprep.subr.mxu0 %v1600
  %1703 = vmatpush1.msra.mxu0 %v1599
  %1704 = vmatprep.subr.mxu0 %v1602
  %1705 = vmatpush1.msra.mxu0 %v1601
  %1706 = vmatprep.subr.mxu0 %v1604
  %1707 = vmatpush1.msra.mxu0 %v1603
  %1708 = vmatprep.subr.mxu0 %v1606
  %1709 = vmatpush1.msra.mxu0 %v1605
  %1710 = vmatprep.subr.mxu0 %v1608
  %1711 = vmatpush1.msra.mxu0 %v1607
  %1712 = vmatprep.subr.mxu0 %v1610
  %1713 = vmatpush1.msra.mxu0 %v1609
  %1714 = vmatprep.subr.mxu0 0.0
  %1715 = vmatpush1.msra.mxu0 0.0
  %1716 = vmatprep.subr.mxu0 0.0
  %1717 = vmatpush1.msra.mxu0 0.0
  %1718 = vmatprep.subr.mxu0 0.0
  %1719 = vmatpush1.msra.mxu0 0.0
  %1720 = vmatprep.subr.mxu0 0.0
  %1721 = vmatpush1.msra.mxu0 0.0
  %1722 = vmatprep.subr.mxu0 0.0
  %1723 = vmatpush1.msra.mxu0 0.0
  %1724 = vmatprep.subr.mxu0 0.0
  %1725 = vmatpush1.msra.mxu0 0.0
  %1726 = vmatprep.subr.mxu0 0.0
  %1727 = vmatpush1.msra.mxu0 0.0
  %1728 = vmatprep.subr.mxu0 0.0
  %1729 = vmatpush1.msra.mxu0 0.0
  %1730 = vmatprep.subr.mxu0 0.0
  %1731 = vmatpush1.msra.mxu0 0.0
  %1732 = vmatprep.subr.mxu0 0.0
  %1733 = vmatpush1.msra.mxu0 0.0
  %1734 = vmatprep.subr.mxu0 0.0
  %1735 = vmatpush1.msra.mxu0 0.0
  %1736 = vmatprep.subr.mxu0 0.0
  %1737 = vmatpush1.msra.mxu0 0.0
  %1738 = vmatprep.subr.mxu0 0.0
  %1739 = vmatpush1.msra.mxu0 0.0
  %1740 = vmatprep.subr.mxu0 0.0
  %1741 = vmatpush1.msra.mxu0 0.0
  %1742 = vmatprep.subr.mxu0 0.0
  %1743 = vmatpush1.msra.mxu0 0.0
  %1744 = vmatprep.subr.mxu0 0.0
  %1745 = vmatpush1.msra.mxu0 0.0
  %1746 = vmatprep.mubr.f32.mxu0 0.0
  %1747 = vmatmul.mubr.f32.gmra.mrb[0].mxu0 %v238
  %v1748 = vpop.f32.mrb[0].mxu0
  %v1749 = vadd.f32 %v1678, %v1748
  %v1750 = vpop.f32.mrb[0].mxu0
  %v1751 = vadd.f32 %v1680, %v1750
  %1752 = vdwg.mxu0
  %v1755 = vcombine.low %v1749, %v1751
  %v1757 = vunpack.c.l.s4 1983009808
  %v1758 = vunpack.c.0.s8 %v1757
  %v1759 = vlaneseq
  %v1760 = vshrl.u32 %v1759, 7
  %v1761 = vsub.s32 %v1758, %v1760
  %v1762 = vrot.slane %v1755, %v1761
  %s1764 = scalar_lea.vmem %s7, 20
  %1765 = vst.msk [vmem:[%s1764] sm:$0xf] %vm504, %v1762
  %s1766 = scalar_lea.vmem %s3, 4608
  %v1767 = vld [vmem:[%s1766] sm:$0xff]
  %v1768 = vld [vmem:[%s1766 + $0x8] sm:$0xff]
  %v1769 = vld [vmem:[%s1766 + $0x10] sm:$0xff]
  %v1770 = vld [vmem:[%s1766 + $0x18] sm:$0xff]
  %v1771 = vld [vmem:[%s1766 + $0x20] sm:$0xff]
  %v1772 = vld [vmem:[%s1766 + $0x28] sm:$0xff]
  %v1773 = vld [vmem:[%s1766 + $0x30] sm:$0xff]
  %v1774 = vld [vmem:[%s1766 + $0x38] sm:$0xff]
  %v1775 = vld [vmem:[%s1766 + $0x40] sm:$0xff]
  %v1776 = vld [vmem:[%s1766 + $0x48] sm:$0xff]
  %v1777 = vld [vmem:[%s1766 + $0x50] sm:$0xff]
  %v1778 = vld [vmem:[%s1766 + $0x58] sm:$0xff]
  %v1779 = vld [vmem:[%s1766 + $0x60] sm:$0xff]
  %v1780 = vld [vmem:[%s1766 + $0x68] sm:$0xff]
  %v1781 = vld [vmem:[%s1766 + $0x70] sm:$0xff]
  %v1782 = vld [vmem:[%s1766 + $0x78] sm:$0xff]
  %v1783 = vld [vmem:[%s1766 + $0x80] sm:$0xff]
  %v1784 = vld [vmem:[%s1766 + $0x88] sm:$0xff]
  %v1785 = vld [vmem:[%s1766 + $0x90] sm:$0xff]
  %v1786 = vld [vmem:[%s1766 + $0x98] sm:$0xff]
  %v1787 = vld [vmem:[%s1766 + $0xa0] sm:$0xff]
  %v1788 = vld [vmem:[%s1766 + $0xa8] sm:$0xff]
  %v1789 = vld [vmem:[%s1766 + $0xb0] sm:$0xff]
  %v1790 = vld [vmem:[%s1766 + $0xb8] sm:$0xff]
  %v1791 = vld [vmem:[%s1766 + $0xc0] sm:$0xff]
  %v1792 = vld [vmem:[%s1766 + $0xc8] sm:$0xff]
  %v1793 = vld [vmem:[%s1766 + $0xd0] sm:$0xff]
  %v1794 = vld [vmem:[%s1766 + $0xd8] sm:$0xff]
  %v1795 = vld [vmem:[%s1766 + $0xe0] sm:$0xff]
  %v1796 = vld [vmem:[%s1766 + $0xe8] sm:$0xff]
  %v1797 = vld [vmem:[%s1766 + $0xf0] sm:$0xff]
  %v1798 = vld [vmem:[%s1766 + $0xf8] sm:$0xff]
  %v1799 = vld [vmem:[%s1766 + $0x100] sm:$0xff]
  %v1800 = vld [vmem:[%s1766 + $0x108] sm:$0xff]
  %v1801 = vld [vmem:[%s1766 + $0x110] sm:$0xff]
  %v1802 = vld [vmem:[%s1766 + $0x118] sm:$0xff]
  %v1803 = vld [vmem:[%s1766 + $0x120] sm:$0xff]
  %v1804 = vld [vmem:[%s1766 + $0x128] sm:$0xff]
  %v1805 = vld [vmem:[%s1766 + $0x130] sm:$0xff]
  %v1806 = vld [vmem:[%s1766 + $0x138] sm:$0xff]
  %v1807 = vld [vmem:[%s1766 + $0x140] sm:$0xff]
  %v1808 = vld [vmem:[%s1766 + $0x148] sm:$0xff]
  %v1809 = vld [vmem:[%s1766 + $0x150] sm:$0xff]
  %v1810 = vld [vmem:[%s1766 + $0x158] sm:$0xff]
  %v1811 = vld [vmem:[%s1766 + $0x160] sm:$0xff]
  %v1812 = vld [vmem:[%s1766 + $0x168] sm:$0xff]
  %v1813 = vld [vmem:[%s1766 + $0x170] sm:$0xff]
  %v1814 = vld [vmem:[%s1766 + $0x178] sm:$0xff]
  %v1815 = vld [vmem:[%s1766 + $0x180] sm:$0xff]
  %v1816 = vld [vmem:[%s1766 + $0x188] sm:$0xff]
  %v1817 = vld [vmem:[%s1766 + $0x190] sm:$0xff]
  %v1818 = vld [vmem:[%s1766 + $0x198] sm:$0xff]
  %v1819 = vld [vmem:[%s1766 + $0x1a0] sm:$0xff]
  %v1820 = vld [vmem:[%s1766 + $0x1a8] sm:$0xff]
  %v1821 = vld [vmem:[%s1766 + $0x1b0] sm:$0xff]
  %v1822 = vld [vmem:[%s1766 + $0x1b8] sm:$0xff]
  %v1823 = vld [vmem:[%s1766 + $0x1c0] sm:$0xff]
  %v1824 = vld [vmem:[%s1766 + $0x1c8] sm:$0xff]
  %v1825 = vld [vmem:[%s1766 + $0x1d0] sm:$0xff]
  %v1826 = vld [vmem:[%s1766 + $0x1d8] sm:$0xff]
  %v1827 = vld [vmem:[%s1766 + $0x1e0] sm:$0xff]
  %v1828 = vld [vmem:[%s1766 + $0x1e8] sm:$0xff]
  %v1829 = vld [vmem:[%s1766 + $0x1f0] sm:$0xff]
  %v1830 = vld [vmem:[%s1766 + $0x1f8] sm:$0xff]
  %v1831 = vld [vmem:[%s1766 + $0x200] sm:$0xff]
  %v1832 = vld [vmem:[%s1766 + $0x208] sm:$0xff]
  %v1833 = vld [vmem:[%s1766 + $0x210] sm:$0xff]
  %v1834 = vld [vmem:[%s1766 + $0x218] sm:$0xff]
  %v1835 = vld [vmem:[%s1766 + $0x220] sm:$0xff]
  %v1836 = vld [vmem:[%s1766 + $0x228] sm:$0xff]
  %v1837 = vld [vmem:[%s1766 + $0x230] sm:$0xff]
  %v1838 = vld [vmem:[%s1766 + $0x238] sm:$0xff]
  %v1839 = vld [vmem:[%s1766 + $0x240] sm:$0xff]
  %v1840 = vld [vmem:[%s1766 + $0x248] sm:$0xff]
  %v1841 = vld [vmem:[%s1766 + $0x250] sm:$0xff]
  %v1842 = vld [vmem:[%s1766 + $0x258] sm:$0xff]
  %v1843 = vld [vmem:[%s1766 + $0x260] sm:$0xff]
  %v1844 = vld [vmem:[%s1766 + $0x268] sm:$0xff]
  %v1845 = vld [vmem:[%s1766 + $0x270] sm:$0xff]
  %v1846 = vld [vmem:[%s1766 + $0x278] sm:$0xff]
  %v1847 = vld [vmem:[%s1766 + $0x280] sm:$0xff]
  %v1848 = vld [vmem:[%s1766 + $0x288] sm:$0xff]
  %v1849 = vld [vmem:[%s1766 + $0x290] sm:$0xff]
  %v1850 = vld [vmem:[%s1766 + $0x298] sm:$0xff]
  %v1851 = vld [vmem:[%s1766 + $0x2a0] sm:$0xff]
  %v1852 = vld [vmem:[%s1766 + $0x2a8] sm:$0xff]
  %v1853 = vld [vmem:[%s1766 + $0x2b0] sm:$0xff]
  %v1854 = vld [vmem:[%s1766 + $0x2b8] sm:$0xff]
  %v1855 = vld [vmem:[%s1766 + $0x2c0] sm:$0xff]
  %v1856 = vld [vmem:[%s1766 + $0x2c8] sm:$0xff]
  %v1857 = vld [vmem:[%s1766 + $0x2d0] sm:$0xff]
  %v1858 = vld [vmem:[%s1766 + $0x2d8] sm:$0xff]
  %v1859 = vld [vmem:[%s1766 + $0x2e0] sm:$0xff]
  %v1860 = vld [vmem:[%s1766 + $0x2e8] sm:$0xff]
  %v1861 = vld [vmem:[%s1766 + $0x2f0] sm:$0xff]
  %v1862 = vld [vmem:[%s1766 + $0x2f8] sm:$0xff]
  %1863 = vmatprep.subr.mxu0 %v1768
  %1864 = vmatpush1.msra.mxu0 %v1767
  %1865 = vmatprep.subr.mxu0 %v1770
  %1866 = vmatpush1.msra.mxu0 %v1769
  %1867 = vmatprep.subr.mxu0 %v1772
  %1868 = vmatpush1.msra.mxu0 %v1771
  %1869 = vmatprep.subr.mxu0 %v1774
  %1870 = vmatpush1.msra.mxu0 %v1773
  %1871 = vmatprep.subr.mxu0 %v1776
  %1872 = vmatpush1.msra.mxu0 %v1775
  %1873 = vmatprep.subr.mxu0 %v1778
  %1874 = vmatpush1.msra.mxu0 %v1777
  %1875 = vmatprep.subr.mxu0 %v1780
  %1876 = vmatpush1.msra.mxu0 %v1779
  %1877 = vmatprep.subr.mxu0 %v1782
  %1878 = vmatpush1.msra.mxu0 %v1781
  %1879 = vmatprep.subr.mxu0 %v1784
  %1880 = vmatpush1.msra.mxu0 %v1783
  %1881 = vmatprep.subr.mxu0 %v1786
  %1882 = vmatpush1.msra.mxu0 %v1785
  %1883 = vmatprep.subr.mxu0 %v1788
  %1884 = vmatpush1.msra.mxu0 %v1787
  %1885 = vmatprep.subr.mxu0 %v1790
  %1886 = vmatpush1.msra.mxu0 %v1789
  %1887 = vmatprep.subr.mxu0 %v1792
  %1888 = vmatpush1.msra.mxu0 %v1791
  %1889 = vmatprep.subr.mxu0 %v1794
  %1890 = vmatpush1.msra.mxu0 %v1793
  %1891 = vmatprep.subr.mxu0 %v1796
  %1892 = vmatpush1.msra.mxu0 %v1795
  %1893 = vmatprep.subr.mxu0 %v1798
  %1894 = vmatpush1.msra.mxu0 %v1797
  %1895 = vmatprep.subr.mxu0 %v1800
  %1896 = vmatpush1.msra.mxu0 %v1799
  %1897 = vmatprep.subr.mxu0 %v1802
  %1898 = vmatpush1.msra.mxu0 %v1801
  %1899 = vmatprep.subr.mxu0 %v1804
  %1900 = vmatpush1.msra.mxu0 %v1803
  %1901 = vmatprep.subr.mxu0 %v1806
  %1902 = vmatpush1.msra.mxu0 %v1805
  %1903 = vmatprep.subr.mxu0 %v1808
  %1904 = vmatpush1.msra.mxu0 %v1807
  %1905 = vmatprep.subr.mxu0 %v1810
  %1906 = vmatpush1.msra.mxu0 %v1809
  %1907 = vmatprep.subr.mxu0 %v1812
  %1908 = vmatpush1.msra.mxu0 %v1811
  %1909 = vmatprep.subr.mxu0 %v1814
  %1910 = vmatpush1.msra.mxu0 %v1813
  %1911 = vmatprep.subr.mxu0 %v1816
  %1912 = vmatpush1.msra.mxu0 %v1815
  %1913 = vmatprep.subr.mxu0 %v1818
  %1914 = vmatpush1.msra.mxu0 %v1817
  %1915 = vmatprep.subr.mxu0 %v1820
  %1916 = vmatpush1.msra.mxu0 %v1819
  %1917 = vmatprep.subr.mxu0 %v1822
  %1918 = vmatpush1.msra.mxu0 %v1821
  %1919 = vmatprep.subr.mxu0 %v1824
  %1920 = vmatpush1.msra.mxu0 %v1823
  %1921 = vmatprep.subr.mxu0 %v1826
  %1922 = vmatpush1.msra.mxu0 %v1825
  %1923 = vmatprep.subr.mxu0 %v1828
  %1924 = vmatpush1.msra.mxu0 %v1827
  %1925 = vmatprep.subr.mxu0 %v1830
  %1926 = vmatpush1.msra.mxu0 %v1829
  %1927 = vmatprep.mubr.f32.mxu0 %v169
  %1928 = vmatmul.mubr.f32.gmra.mrb[0].mxu0 %v167
  %v1929 = vpop.f32.mrb[0].mxu0
  %v1930 = vadd.f32 %v342, %v1929
  %v1931 = vpop.f32.mrb[0].mxu0
  %v1932 = vadd.f32 %v346, %v1931
  %1933 = vdwg.mxu0
  %1934 = vmatprep.subr.mxu0 %v1832
  %1935 = vmatpush1.msra.mxu0 %v1831
  %1936 = vmatprep.subr.mxu0 %v1834
  %1937 = vmatpush1.msra.mxu0 %v1833
  %1938 = vmatprep.subr.mxu0 %v1836
  %1939 = vmatpush1.msra.mxu0 %v1835
  %1940 = vmatprep.subr.mxu0 %v1838
  %1941 = vmatpush1.msra.mxu0 %v1837
  %1942 = vmatprep.subr.mxu0 %v1840
  %1943 = vmatpush1.msra.mxu0 %v1839
  %1944 = vmatprep.subr.mxu0 %v1842
  %1945 = vmatpush1.msra.mxu0 %v1841
  %1946 = vmatprep.subr.mxu0 %v1844
  %1947 = vmatpush1.msra.mxu0 %v1843
  %1948 = vmatprep.subr.mxu0 %v1846
  %1949 = vmatpush1.msra.mxu0 %v1845
  %1950 = vmatprep.subr.mxu0 %v1848
  %1951 = vmatpush1.msra.mxu0 %v1847
  %1952 = vmatprep.subr.mxu0 %v1850
  %1953 = vmatpush1.msra.mxu0 %v1849
  %1954 = vmatprep.subr.mxu0 %v1852
  %1955 = vmatpush1.msra.mxu0 %v1851
  %1956 = vmatprep.subr.mxu0 %v1854
  %1957 = vmatpush1.msra.mxu0 %v1853
  %1958 = vmatprep.subr.mxu0 %v1856
  %1959 = vmatpush1.msra.mxu0 %v1855
  %1960 = vmatprep.subr.mxu0 %v1858
  %1961 = vmatpush1.msra.mxu0 %v1857
  %1962 = vmatprep.subr.mxu0 %v1860
  %1963 = vmatpush1.msra.mxu0 %v1859
  %1964 = vmatprep.subr.mxu0 %v1862
  %1965 = vmatpush1.msra.mxu0 %v1861
  %1966 = vmatprep.subr.mxu0 0.0
  %1967 = vmatpush1.msra.mxu0 0.0
  %1968 = vmatprep.subr.mxu0 0.0
  %1969 = vmatpush1.msra.mxu0 0.0
  %1970 = vmatprep.subr.mxu0 0.0
  %1971 = vmatpush1.msra.mxu0 0.0
  %1972 = vmatprep.subr.mxu0 0.0
  %1973 = vmatpush1.msra.mxu0 0.0
  %1974 = vmatprep.subr.mxu0 0.0
  %1975 = vmatpush1.msra.mxu0 0.0
  %1976 = vmatprep.subr.mxu0 0.0
  %1977 = vmatpush1.msra.mxu0 0.0
  %1978 = vmatprep.subr.mxu0 0.0
  %1979 = vmatpush1.msra.mxu0 0.0
  %1980 = vmatprep.subr.mxu0 0.0
  %1981 = vmatpush1.msra.mxu0 0.0
  %1982 = vmatprep.subr.mxu0 0.0
  %1983 = vmatpush1.msra.mxu0 0.0
  %1984 = vmatprep.subr.mxu0 0.0
  %1985 = vmatpush1.msra.mxu0 0.0
  %1986 = vmatprep.subr.mxu0 0.0
  %1987 = vmatpush1.msra.mxu0 0.0
  %1988 = vmatprep.subr.mxu0 0.0
  %1989 = vmatpush1.msra.mxu0 0.0
  %1990 = vmatprep.subr.mxu0 0.0
  %1991 = vmatpush1.msra.mxu0 0.0
  %1992 = vmatprep.subr.mxu0 0.0
  %1993 = vmatpush1.msra.mxu0 0.0
  %1994 = vmatprep.subr.mxu0 0.0
  %1995 = vmatpush1.msra.mxu0 0.0
  %1996 = vmatprep.subr.mxu0 0.0
  %1997 = vmatpush1.msra.mxu0 0.0
  %1998 = vmatprep.mubr.f32.mxu0 0.0
  %1999 = vmatmul.mubr.f32.gmra.mrb[0].mxu0 %v238
  %v2000 = vpop.f32.mrb[0].mxu0
  %v2001 = vadd.f32 %v1930, %v2000
  %v2002 = vpop.f32.mrb[0].mxu0
  %v2003 = vadd.f32 %v1932, %v2002
  %2004 = vdwg.mxu0
  %v2007 = vcombine.low %v2001, %v2003
  %v2009 = vunpack.c.l.s4 1983009808
  %v2010 = vunpack.c.0.s8 %v2009
  %v2011 = vlaneseq
  %v2012 = vshrl.u32 %v2011, 7
  %v2013 = vsub.s32 %v2010, %v2012
  %v2014 = vrot.slane %v2007, %v2013
  %s2016 = scalar_lea.vmem %s7, 24
  %2017 = vst.msk [vmem:[%s2016] sm:$0xf] %vm504, %v2014
  %s2018 = scalar_lea.vmem %s3, 5376
  %v2019 = vld [vmem:[%s2018] sm:$0xff]
  %v2020 = vld [vmem:[%s2018 + $0x8] sm:$0xff]
  %v2021 = vld [vmem:[%s2018 + $0x10] sm:$0xff]
  %v2022 = vld [vmem:[%s2018 + $0x18] sm:$0xff]
  %v2023 = vld [vmem:[%s2018 + $0x20] sm:$0xff]
  %v2024 = vld [vmem:[%s2018 + $0x28] sm:$0xff]
  %v2025 = vld [vmem:[%s2018 + $0x30] sm:$0xff]
  %v2026 = vld [vmem:[%s2018 + $0x38] sm:$0xff]
  %v2027 = vld [vmem:[%s2018 + $0x40] sm:$0xff]
  %v2028 = vld [vmem:[%s2018 + $0x48] sm:$0xff]
  %v2029 = vld [vmem:[%s2018 + $0x50] sm:$0xff]
  %v2030 = vld [vmem:[%s2018 + $0x58] sm:$0xff]
  %v2031 = vld [vmem:[%s2018 + $0x60] sm:$0xff]
  %v2032 = vld [vmem:[%s2018 + $0x68] sm:$0xff]
  %v2033 = vld [vmem:[%s2018 + $0x70] sm:$0xff]
  %v2034 = vld [vmem:[%s2018 + $0x78] sm:$0xff]
  %v2035 = vld [vmem:[%s2018 + $0x80] sm:$0xff]
  %v2036 = vld [vmem:[%s2018 + $0x88] sm:$0xff]
  %v2037 = vld [vmem:[%s2018 + $0x90] sm:$0xff]
  %v2038 = vld [vmem:[%s2018 + $0x98] sm:$0xff]
  %v2039 = vld [vmem:[%s2018 + $0xa0] sm:$0xff]
  %v2040 = vld [vmem:[%s2018 + $0xa8] sm:$0xff]
  %v2041 = vld [vmem:[%s2018 + $0xb0] sm:$0xff]
  %v2042 = vld [vmem:[%s2018 + $0xb8] sm:$0xff]
  %v2043 = vld [vmem:[%s2018 + $0xc0] sm:$0xff]
  %v2044 = vld [vmem:[%s2018 + $0xc8] sm:$0xff]
  %v2045 = vld [vmem:[%s2018 + $0xd0] sm:$0xff]
  %v2046 = vld [vmem:[%s2018 + $0xd8] sm:$0xff]
  %v2047 = vld [vmem:[%s2018 + $0xe0] sm:$0xff]
  %v2048 = vld [vmem:[%s2018 + $0xe8] sm:$0xff]
  %v2049 = vld [vmem:[%s2018 + $0xf0] sm:$0xff]
  %v2050 = vld [vmem:[%s2018 + $0xf8] sm:$0xff]
  %v2051 = vld [vmem:[%s2018 + $0x100] sm:$0xff]
  %v2052 = vld [vmem:[%s2018 + $0x108] sm:$0xff]
  %v2053 = vld [vmem:[%s2018 + $0x110] sm:$0xff]
  %v2054 = vld [vmem:[%s2018 + $0x118] sm:$0xff]
  %v2055 = vld [vmem:[%s2018 + $0x120] sm:$0xff]
  %v2056 = vld [vmem:[%s2018 + $0x128] sm:$0xff]
  %v2057 = vld [vmem:[%s2018 + $0x130] sm:$0xff]
  %v2058 = vld [vmem:[%s2018 + $0x138] sm:$0xff]
  %v2059 = vld [vmem:[%s2018 + $0x140] sm:$0xff]
  %v2060 = vld [vmem:[%s2018 + $0x148] sm:$0xff]
  %v2061 = vld [vmem:[%s2018 + $0x150] sm:$0xff]
  %v2062 = vld [vmem:[%s2018 + $0x158] sm:$0xff]
  %v2063 = vld [vmem:[%s2018 + $0x160] sm:$0xff]
  %v2064 = vld [vmem:[%s2018 + $0x168] sm:$0xff]
  %v2065 = vld [vmem:[%s2018 + $0x170] sm:$0xff]
  %v2066 = vld [vmem:[%s2018 + $0x178] sm:$0xff]
  %v2067 = vld [vmem:[%s2018 + $0x180] sm:$0xff]
  %v2068 = vld [vmem:[%s2018 + $0x188] sm:$0xff]
  %v2069 = vld [vmem:[%s2018 + $0x190] sm:$0xff]
  %v2070 = vld [vmem:[%s2018 + $0x198] sm:$0xff]
  %v2071 = vld [vmem:[%s2018 + $0x1a0] sm:$0xff]
  %v2072 = vld [vmem:[%s2018 + $0x1a8] sm:$0xff]
  %v2073 = vld [vmem:[%s2018 + $0x1b0] sm:$0xff]
  %v2074 = vld [vmem:[%s2018 + $0x1b8] sm:$0xff]
  %v2075 = vld [vmem:[%s2018 + $0x1c0] sm:$0xff]
  %v2076 = vld [vmem:[%s2018 + $0x1c8] sm:$0xff]
  %v2077 = vld [vmem:[%s2018 + $0x1d0] sm:$0xff]
  %v2078 = vld [vmem:[%s2018 + $0x1d8] sm:$0xff]
  %v2079 = vld [vmem:[%s2018 + $0x1e0] sm:$0xff]
  %v2080 = vld [vmem:[%s2018 + $0x1e8] sm:$0xff]
  %v2081 = vld [vmem:[%s2018 + $0x1f0] sm:$0xff]
  %v2082 = vld [vmem:[%s2018 + $0x1f8] sm:$0xff]
  %v2083 = vld [vmem:[%s2018 + $0x200] sm:$0xff]
  %v2084 = vld [vmem:[%s2018 + $0x208] sm:$0xff]
  %v2085 = vld [vmem:[%s2018 + $0x210] sm:$0xff]
  %v2086 = vld [vmem:[%s2018 + $0x218] sm:$0xff]
  %v2087 = vld [vmem:[%s2018 + $0x220] sm:$0xff]
  %v2088 = vld [vmem:[%s2018 + $0x228] sm:$0xff]
  %v2089 = vld [vmem:[%s2018 + $0x230] sm:$0xff]
  %v2090 = vld [vmem:[%s2018 + $0x238] sm:$0xff]
  %v2091 = vld [vmem:[%s2018 + $0x240] sm:$0xff]
  %v2092 = vld [vmem:[%s2018 + $0x248] sm:$0xff]
  %v2093 = vld [vmem:[%s2018 + $0x250] sm:$0xff]
  %v2094 = vld [vmem:[%s2018 + $0x258] sm:$0xff]
  %v2095 = vld [vmem:[%s2018 + $0x260] sm:$0xff]
  %v2096 = vld [vmem:[%s2018 + $0x268] sm:$0xff]
  %v2097 = vld [vmem:[%s2018 + $0x270] sm:$0xff]
  %v2098 = vld [vmem:[%s2018 + $0x278] sm:$0xff]
  %v2099 = vld [vmem:[%s2018 + $0x280] sm:$0xff]
  %v2100 = vld [vmem:[%s2018 + $0x288] sm:$0xff]
  %v2101 = vld [vmem:[%s2018 + $0x290] sm:$0xff]
  %v2102 = vld [vmem:[%s2018 + $0x298] sm:$0xff]
  %v2103 = vld [vmem:[%s2018 + $0x2a0] sm:$0xff]
  %v2104 = vld [vmem:[%s2018 + $0x2a8] sm:$0xff]
  %v2105 = vld [vmem:[%s2018 + $0x2b0] sm:$0xff]
  %v2106 = vld [vmem:[%s2018 + $0x2b8] sm:$0xff]
  %v2107 = vld [vmem:[%s2018 + $0x2c0] sm:$0xff]
  %v2108 = vld [vmem:[%s2018 + $0x2c8] sm:$0xff]
  %v2109 = vld [vmem:[%s2018 + $0x2d0] sm:$0xff]
  %v2110 = vld [vmem:[%s2018 + $0x2d8] sm:$0xff]
  %v2111 = vld [vmem:[%s2018 + $0x2e0] sm:$0xff]
  %v2112 = vld [vmem:[%s2018 + $0x2e8] sm:$0xff]
  %v2113 = vld [vmem:[%s2018 + $0x2f0] sm:$0xff]
  %v2114 = vld [vmem:[%s2018 + $0x2f8] sm:$0xff]
  %2115 = vmatprep.subr.mxu0 %v2020
  %2116 = vmatpush1.msra.mxu0 %v2019
  %2117 = vmatprep.subr.mxu0 %v2022
  %2118 = vmatpush1.msra.mxu0 %v2021
  %2119 = vmatprep.subr.mxu0 %v2024
  %2120 = vmatpush1.msra.mxu0 %v2023
  %2121 = vmatprep.subr.mxu0 %v2026
  %2122 = vmatpush1.msra.mxu0 %v2025
  %2123 = vmatprep.subr.mxu0 %v2028
  %2124 = vmatpush1.msra.mxu0 %v2027
  %2125 = vmatprep.subr.mxu0 %v2030
  %2126 = vmatpush1.msra.mxu0 %v2029
  %2127 = vmatprep.subr.mxu0 %v2032
  %2128 = vmatpush1.msra.mxu0 %v2031
  %2129 = vmatprep.subr.mxu0 %v2034
  %2130 = vmatpush1.msra.mxu0 %v2033
  %2131 = vmatprep.subr.mxu0 %v2036
  %2132 = vmatpush1.msra.mxu0 %v2035
  %2133 = vmatprep.subr.mxu0 %v2038
  %2134 = vmatpush1.msra.mxu0 %v2037
  %2135 = vmatprep.subr.mxu0 %v2040
  %2136 = vmatpush1.msra.mxu0 %v2039
  %2137 = vmatprep.subr.mxu0 %v2042
  %2138 = vmatpush1.msra.mxu0 %v2041
  %2139 = vmatprep.subr.mxu0 %v2044
  %2140 = vmatpush1.msra.mxu0 %v2043
  %2141 = vmatprep.subr.mxu0 %v2046
  %2142 = vmatpush1.msra.mxu0 %v2045
  %2143 = vmatprep.subr.mxu0 %v2048
  %2144 = vmatpush1.msra.mxu0 %v2047
  %2145 = vmatprep.subr.mxu0 %v2050
  %2146 = vmatpush1.msra.mxu0 %v2049
  %2147 = vmatprep.subr.mxu0 %v2052
  %2148 = vmatpush1.msra.mxu0 %v2051
  %2149 = vmatprep.subr.mxu0 %v2054
  %2150 = vmatpush1.msra.mxu0 %v2053
  %2151 = vmatprep.subr.mxu0 %v2056
  %2152 = vmatpush1.msra.mxu0 %v2055
  %2153 = vmatprep.subr.mxu0 %v2058
  %2154 = vmatpush1.msra.mxu0 %v2057
  %2155 = vmatprep.subr.mxu0 %v2060
  %2156 = vmatpush1.msra.mxu0 %v2059
  %2157 = vmatprep.subr.mxu0 %v2062
  %2158 = vmatpush1.msra.mxu0 %v2061
  %2159 = vmatprep.subr.mxu0 %v2064
  %2160 = vmatpush1.msra.mxu0 %v2063
  %2161 = vmatprep.subr.mxu0 %v2066
  %2162 = vmatpush1.msra.mxu0 %v2065
  %2163 = vmatprep.subr.mxu0 %v2068
  %2164 = vmatpush1.msra.mxu0 %v2067
  %2165 = vmatprep.subr.mxu0 %v2070
  %2166 = vmatpush1.msra.mxu0 %v2069
  %2167 = vmatprep.subr.mxu0 %v2072
  %2168 = vmatpush1.msra.mxu0 %v2071
  %2169 = vmatprep.subr.mxu0 %v2074
  %2170 = vmatpush1.msra.mxu0 %v2073
  %2171 = vmatprep.subr.mxu0 %v2076
  %2172 = vmatpush1.msra.mxu0 %v2075
  %2173 = vmatprep.subr.mxu0 %v2078
  %2174 = vmatpush1.msra.mxu0 %v2077
  %2175 = vmatprep.subr.mxu0 %v2080
  %2176 = vmatpush1.msra.mxu0 %v2079
  %2177 = vmatprep.subr.mxu0 %v2082
  %2178 = vmatpush1.msra.mxu0 %v2081
  %2179 = vmatprep.mubr.f32.mxu0 %v169
  %2180 = vmatmul.mubr.f32.gmra.mrb[0].mxu0 %v167
  %v2181 = vpop.f32.mrb[0].mxu0
  %v2182 = vadd.f32 %v342, %v2181
  %v2183 = vpop.f32.mrb[0].mxu0
  %v2184 = vadd.f32 %v346, %v2183
  %2185 = vdwg.mxu0
  %2186 = vmatprep.subr.mxu0 %v2084
  %2187 = vmatpush1.msra.mxu0 %v2083
  %2188 = vmatprep.subr.mxu0 %v2086
  %2189 = vmatpush1.msra.mxu0 %v2085
  %2190 = vmatprep.subr.mxu0 %v2088
  %2191 = vmatpush1.msra.mxu0 %v2087
  %2192 = vmatprep.subr.mxu0 %v2090
  %2193 = vmatpush1.msra.mxu0 %v2089
  %2194 = vmatprep.subr.mxu0 %v2092
  %2195 = vmatpush1.msra.mxu0 %v2091
  %2196 = vmatprep.subr.mxu0 %v2094
  %2197 = vmatpush1.msra.mxu0 %v2093
  %2198 = vmatprep.subr.mxu0 %v2096
  %2199 = vmatpush1.msra.mxu0 %v2095
  %2200 = vmatprep.subr.mxu0 %v2098
  %2201 = vmatpush1.msra.mxu0 %v2097
  %2202 = vmatprep.subr.mxu0 %v2100
  %2203 = vmatpush1.msra.mxu0 %v2099
  %2204 = vmatprep.subr.mxu0 %v2102
  %2205 = vmatpush1.msra.mxu0 %v2101
  %2206 = vmatprep.subr.mxu0 %v2104
  %2207 = vmatpush1.msra.mxu0 %v2103
  %2208 = vmatprep.subr.mxu0 %v2106
  %2209 = vmatpush1.msra.mxu0 %v2105
  %2210 = vmatprep.subr.mxu0 %v2108
  %2211 = vmatpush1.msra.mxu0 %v2107
  %2212 = vmatprep.subr.mxu0 %v2110
  %2213 = vmatpush1.msra.mxu0 %v2109
  %2214 = vmatprep.subr.mxu0 %v2112
  %2215 = vmatpush1.msra.mxu0 %v2111
  %2216 = vmatprep.subr.mxu0 %v2114
  %2217 = vmatpush1.msra.mxu0 %v2113
  %2218 = vmatprep.subr.mxu0 0.0
  %2219 = vmatpush1.msra.mxu0 0.0
  %2220 = vmatprep.subr.mxu0 0.0
  %2221 = vmatpush1.msra.mxu0 0.0
  %2222 = vmatprep.subr.mxu0 0.0
  %2223 = vmatpush1.msra.mxu0 0.0
  %2224 = vmatprep.subr.mxu0 0.0
  %2225 = vmatpush1.msra.mxu0 0.0
  %2226 = vmatprep.subr.mxu0 0.0
  %2227 = vmatpush1.msra.mxu0 0.0
  %2228 = vmatprep.subr.mxu0 0.0
  %2229 = vmatpush1.msra.mxu0 0.0
  %2230 = vmatprep.subr.mxu0 0.0
  %2231 = vmatpush1.msra.mxu0 0.0
  %2232 = vmatprep.subr.mxu0 0.0
  %2233 = vmatpush1.msra.mxu0 0.0
  %2234 = vmatprep.subr.mxu0 0.0
  %2235 = vmatpush1.msra.mxu0 0.0
  %2236 = vmatprep.subr.mxu0 0.0
  %2237 = vmatpush1.msra.mxu0 0.0
  %2238 = vmatprep.subr.mxu0 0.0
  %2239 = vmatpush1.msra.mxu0 0.0
  %2240 = vmatprep.subr.mxu0 0.0
  %2241 = vmatpush1.msra.mxu0 0.0
  %2242 = vmatprep.subr.mxu0 0.0
  %2243 = vmatpush1.msra.mxu0 0.0
  %2244 = vmatprep.subr.mxu0 0.0
  %2245 = vmatpush1.msra.mxu0 0.0
  %2246 = vmatprep.subr.mxu0 0.0
  %2247 = vmatpush1.msra.mxu0 0.0
  %2248 = vmatprep.subr.mxu0 0.0
  %2249 = vmatpush1.msra.mxu0 0.0
  %2250 = vmatprep.mubr.f32.mxu0 0.0
  %2251 = vmatmul.mubr.f32.gmra.mrb[0].mxu0 %v238
  %v2252 = vpop.f32.mrb[0].mxu0
  %v2253 = vadd.f32 %v2182, %v2252
  %v2254 = vpop.f32.mrb[0].mxu0
  %v2255 = vadd.f32 %v2184, %v2254
  %2256 = vdwg.mxu0
  %v2259 = vcombine.low %v2253, %v2255
  %v2261 = vunpack.c.l.s4 1983009808
  %v2262 = vunpack.c.0.s8 %v2261
  %v2263 = vlaneseq
  %v2264 = vshrl.u32 %v2263, 7
  %v2265 = vsub.s32 %v2262, %v2264
  %v2266 = vrot.slane %v2259, %v2265
  %s2268 = scalar_lea.vmem %s7, 28
  %2269 = vst.msk [vmem:[%s2268] sm:$0xf] %vm504, %v2266
  %s2270 = scalar_lea.vmem %s3, 6144
  %v2271 = vld [vmem:[%s2270] sm:$0xff]
  %v2272 = vld [vmem:[%s2270 + $0x8] sm:$0xff]
  %v2273 = vld [vmem:[%s2270 + $0x10] sm:$0xff]
  %v2274 = vld [vmem:[%s2270 + $0x18] sm:$0xff]
  %v2275 = vld [vmem:[%s2270 + $0x20] sm:$0xff]
  %v2276 = vld [vmem:[%s2270 + $0x28] sm:$0xff]
  %v2277 = vld [vmem:[%s2270 + $0x30] sm:$0xff]
  %v2278 = vld [vmem:[%s2270 + $0x38] sm:$0xff]
  %v2279 = vld [vmem:[%s2270 + $0x40] sm:$0xff]
  %v2280 = vld [vmem:[%s2270 + $0x48] sm:$0xff]
  %v2281 = vld [vmem:[%s2270 + $0x50] sm:$0xff]
  %v2282 = vld [vmem:[%s2270 + $0x58] sm:$0xff]
  %v2283 = vld [vmem:[%s2270 + $0x60] sm:$0xff]
  %v2284 = vld [vmem:[%s2270 + $0x68] sm:$0xff]
  %v2285 = vld [vmem:[%s2270 + $0x70] sm:$0xff]
  %v2286 = vld [vmem:[%s2270 + $0x78] sm:$0xff]
  %v2287 = vld [vmem:[%s2270 + $0x80] sm:$0xff]
  %v2288 = vld [vmem:[%s2270 + $0x88] sm:$0xff]
  %v2289 = vld [vmem:[%s2270 + $0x90] sm:$0xff]
  %v2290 = vld [vmem:[%s2270 + $0x98] sm:$0xff]
  %v2291 = vld [vmem:[%s2270 + $0xa0] sm:$0xff]
  %v2292 = vld [vmem:[%s2270 + $0xa8] sm:$0xff]
  %v2293 = vld [vmem:[%s2270 + $0xb0] sm:$0xff]
  %v2294 = vld [vmem:[%s2270 + $0xb8] sm:$0xff]
  %v2295 = vld [vmem:[%s2270 + $0xc0] sm:$0xff]
  %v2296 = vld [vmem:[%s2270 + $0xc8] sm:$0xff]
  %v2297 = vld [vmem:[%s2270 + $0xd0] sm:$0xff]
  %v2298 = vld [vmem:[%s2270 + $0xd8] sm:$0xff]
  %v2299 = vld [vmem:[%s2270 + $0xe0] sm:$0xff]
  %v2300 = vld [vmem:[%s2270 + $0xe8] sm:$0xff]
  %v2301 = vld [vmem:[%s2270 + $0xf0] sm:$0xff]
  %v2302 = vld [vmem:[%s2270 + $0xf8] sm:$0xff]
  %v2303 = vld [vmem:[%s2270 + $0x100] sm:$0xff]
  %v2304 = vld [vmem:[%s2270 + $0x108] sm:$0xff]
  %v2305 = vld [vmem:[%s2270 + $0x110] sm:$0xff]
  %v2306 = vld [vmem:[%s2270 + $0x118] sm:$0xff]
  %v2307 = vld [vmem:[%s2270 + $0x120] sm:$0xff]
  %v2308 = vld [vmem:[%s2270 + $0x128] sm:$0xff]
  %v2309 = vld [vmem:[%s2270 + $0x130] sm:$0xff]
  %v2310 = vld [vmem:[%s2270 + $0x138] sm:$0xff]
  %v2311 = vld [vmem:[%s2270 + $0x140] sm:$0xff]
  %v2312 = vld [vmem:[%s2270 + $0x148] sm:$0xff]
  %v2313 = vld [vmem:[%s2270 + $0x150] sm:$0xff]
  %v2314 = vld [vmem:[%s2270 + $0x158] sm:$0xff]
  %v2315 = vld [vmem:[%s2270 + $0x160] sm:$0xff]
  %v2316 = vld [vmem:[%s2270 + $0x168] sm:$0xff]
  %v2317 = vld [vmem:[%s2270 + $0x170] sm:$0xff]
  %v2318 = vld [vmem:[%s2270 + $0x178] sm:$0xff]
  %v2319 = vld [vmem:[%s2270 + $0x180] sm:$0xff]
  %v2320 = vld [vmem:[%s2270 + $0x188] sm:$0xff]
  %v2321 = vld [vmem:[%s2270 + $0x190] sm:$0xff]
  %v2322 = vld [vmem:[%s2270 + $0x198] sm:$0xff]
  %v2323 = vld [vmem:[%s2270 + $0x1a0] sm:$0xff]
  %v2324 = vld [vmem:[%s2270 + $0x1a8] sm:$0xff]
  %v2325 = vld [vmem:[%s2270 + $0x1b0] sm:$0xff]
  %v2326 = vld [vmem:[%s2270 + $0x1b8] sm:$0xff]
  %v2327 = vld [vmem:[%s2270 + $0x1c0] sm:$0xff]
  %v2328 = vld [vmem:[%s2270 + $0x1c8] sm:$0xff]
  %v2329 = vld [vmem:[%s2270 + $0x1d0] sm:$0xff]
  %v2330 = vld [vmem:[%s2270 + $0x1d8] sm:$0xff]
  %v2331 = vld [vmem:[%s2270 + $0x1e0] sm:$0xff]
  %v2332 = vld [vmem:[%s2270 + $0x1e8] sm:$0xff]
  %v2333 = vld [vmem:[%s2270 + $0x1f0] sm:$0xff]
  %v2334 = vld [vmem:[%s2270 + $0x1f8] sm:$0xff]
  %v2335 = vld [vmem:[%s2270 + $0x200] sm:$0xff]
  %v2336 = vld [vmem:[%s2270 + $0x208] sm:$0xff]
  %v2337 = vld [vmem:[%s2270 + $0x210] sm:$0xff]
  %v2338 = vld [vmem:[%s2270 + $0x218] sm:$0xff]
  %v2339 = vld [vmem:[%s2270 + $0x220] sm:$0xff]
  %v2340 = vld [vmem:[%s2270 + $0x228] sm:$0xff]
  %v2341 = vld [vmem:[%s2270 + $0x230] sm:$0xff]
  %v2342 = vld [vmem:[%s2270 + $0x238] sm:$0xff]
  %v2343 = vld [vmem:[%s2270 + $0x240] sm:$0xff]
  %v2344 = vld [vmem:[%s2270 + $0x248] sm:$0xff]
  %v2345 = vld [vmem:[%s2270 + $0x250] sm:$0xff]
  %v2346 = vld [vmem:[%s2270 + $0x258] sm:$0xff]
  %v2347 = vld [vmem:[%s2270 + $0x260] sm:$0xff]
  %v2348 = vld [vmem:[%s2270 + $0x268] sm:$0xff]
  %v2349 = vld [vmem:[%s2270 + $0x270] sm:$0xff]
  %v2350 = vld [vmem:[%s2270 + $0x278] sm:$0xff]
  %v2351 = vld [vmem:[%s2270 + $0x280] sm:$0xff]
  %v2352 = vld [vmem:[%s2270 + $0x288] sm:$0xff]
  %v2353 = vld [vmem:[%s2270 + $0x290] sm:$0xff]
  %v2354 = vld [vmem:[%s2270 + $0x298] sm:$0xff]
  %v2355 = vld [vmem:[%s2270 + $0x2a0] sm:$0xff]
  %v2356 = vld [vmem:[%s2270 + $0x2a8] sm:$0xff]
  %v2357 = vld [vmem:[%s2270 + $0x2b0] sm:$0xff]
  %v2358 = vld [vmem:[%s2270 + $0x2b8] sm:$0xff]
  %v2359 = vld [vmem:[%s2270 + $0x2c0] sm:$0xff]
  %v2360 = vld [vmem:[%s2270 + $0x2c8] sm:$0xff]
  %v2361 = vld [vmem:[%s2270 + $0x2d0] sm:$0xff]
  %v2362 = vld [vmem:[%s2270 + $0x2d8] sm:$0xff]
  %v2363 = vld [vmem:[%s2270 + $0x2e0] sm:$0xff]
  %v2364 = vld [vmem:[%s2270 + $0x2e8] sm:$0xff]
  %v2365 = vld [vmem:[%s2270 + $0x2f0] sm:$0xff]
  %v2366 = vld [vmem:[%s2270 + $0x2f8] sm:$0xff]
  %2367 = vmatprep.subr.mxu0 %v2272
  %2368 = vmatpush1.msra.mxu0 %v2271
  %2369 = vmatprep.subr.mxu0 %v2274
  %2370 = vmatpush1.msra.mxu0 %v2273
  %2371 = vmatprep.subr.mxu0 %v2276
  %2372 = vmatpush1.msra.mxu0 %v2275
  %2373 = vmatprep.subr.mxu0 %v2278
  %2374 = vmatpush1.msra.mxu0 %v2277
  %2375 = vmatprep.subr.mxu0 %v2280
  %2376 = vmatpush1.msra.mxu0 %v2279
  %2377 = vmatprep.subr.mxu0 %v2282
  %2378 = vmatpush1.msra.mxu0 %v2281
  %2379 = vmatprep.subr.mxu0 %v2284
  %2380 = vmatpush1.msra.mxu0 %v2283
  %2381 = vmatprep.subr.mxu0 %v2286
  %2382 = vmatpush1.msra.mxu0 %v2285
  %2383 = vmatprep.subr.mxu0 %v2288
  %2384 = vmatpush1.msra.mxu0 %v2287
  %2385 = vmatprep.subr.mxu0 %v2290
  %2386 = vmatpush1.msra.mxu0 %v2289
  %2387 = vmatprep.subr.mxu0 %v2292
  %2388 = vmatpush1.msra.mxu0 %v2291
  %2389 = vmatprep.subr.mxu0 %v2294
  %2390 = vmatpush1.msra.mxu0 %v2293
  %2391 = vmatprep.subr.mxu0 %v2296
  %2392 = vmatpush1.msra.mxu0 %v2295
  %2393 = vmatprep.subr.mxu0 %v2298
  %2394 = vmatpush1.msra.mxu0 %v2297
  %2395 = vmatprep.subr.mxu0 %v2300
  %2396 = vmatpush1.msra.mxu0 %v2299
  %2397 = vmatprep.subr.mxu0 %v2302
  %2398 = vmatpush1.msra.mxu0 %v2301
  %2399 = vmatprep.subr.mxu0 %v2304
  %2400 = vmatpush1.msra.mxu0 %v2303
  %2401 = vmatprep.subr.mxu0 %v2306
  %2402 = vmatpush1.msra.mxu0 %v2305
  %2403 = vmatprep.subr.mxu0 %v2308
  %2404 = vmatpush1.msra.mxu0 %v2307
  %2405 = vmatprep.subr.mxu0 %v2310
  %2406 = vmatpush1.msra.mxu0 %v2309
  %2407 = vmatprep.subr.mxu0 %v2312
  %2408 = vmatpush1.msra.mxu0 %v2311
  %2409 = vmatprep.subr.mxu0 %v2314
  %2410 = vmatpush1.msra.mxu0 %v2313
  %2411 = vmatprep.subr.mxu0 %v2316
  %2412 = vmatpush1.msra.mxu0 %v2315
  %2413 = vmatprep.subr.mxu0 %v2318
  %2414 = vmatpush1.msra.mxu0 %v2317
  %2415 = vmatprep.subr.mxu0 %v2320
  %2416 = vmatpush1.msra.mxu0 %v2319
  %2417 = vmatprep.subr.mxu0 %v2322
  %2418 = vmatpush1.msra.mxu0 %v2321
  %2419 = vmatprep.subr.mxu0 %v2324
  %2420 = vmatpush1.msra.mxu0 %v2323
  %2421 = vmatprep.subr.mxu0 %v2326
  %2422 = vmatpush1.msra.mxu0 %v2325
  %2423 = vmatprep.subr.mxu0 %v2328
  %2424 = vmatpush1.msra.mxu0 %v2327
  %2425 = vmatprep.subr.mxu0 %v2330
  %2426 = vmatpush1.msra.mxu0 %v2329
  %2427 = vmatprep.subr.mxu0 %v2332
  %2428 = vmatpush1.msra.mxu0 %v2331
  %2429 = vmatprep.subr.mxu0 %v2334
  %2430 = vmatpush1.msra.mxu0 %v2333
  %2431 = vmatprep.mubr.f32.mxu0 %v169
  %2432 = vmatmul.mubr.f32.gmra.mrb[0].mxu0 %v167
  %v2433 = vpop.f32.mrb[0].mxu0
  %v2434 = vadd.f32 %v342, %v2433
  %v2435 = vpop.f32.mrb[0].mxu0
  %v2436 = vadd.f32 %v346, %v2435
  %2437 = vdwg.mxu0
  %2438 = vmatprep.subr.mxu0 %v2336
  %2439 = vmatpush1.msra.mxu0 %v2335
  %2440 = vmatprep.subr.mxu0 %v2338
  %2441 = vmatpush1.msra.mxu0 %v2337
  %2442 = vmatprep.subr.mxu0 %v2340
  %2443 = vmatpush1.msra.mxu0 %v2339
  %2444 = vmatprep.subr.mxu0 %v2342
  %2445 = vmatpush1.msra.mxu0 %v2341
  %2446 = vmatprep.subr.mxu0 %v2344
  %2447 = vmatpush1.msra.mxu0 %v2343
  %2448 = vmatprep.subr.mxu0 %v2346
  %2449 = vmatpush1.msra.mxu0 %v2345
  %2450 = vmatprep.subr.mxu0 %v2348
  %2451 = vmatpush1.msra.mxu0 %v2347
  %2452 = vmatprep.subr.mxu0 %v2350
  %2453 = vmatpush1.msra.mxu0 %v2349
  %2454 = vmatprep.subr.mxu0 %v2352
  %2455 = vmatpush1.msra.mxu0 %v2351
  %2456 = vmatprep.subr.mxu0 %v2354
  %2457 = vmatpush1.msra.mxu0 %v2353
  %2458 = vmatprep.subr.mxu0 %v2356
  %2459 = vmatpush1.msra.mxu0 %v2355
  %2460 = vmatprep.subr.mxu0 %v2358
  %2461 = vmatpush1.msra.mxu0 %v2357
  %2462 = vmatprep.subr.mxu0 %v2360
  %2463 = vmatpush1.msra.mxu0 %v2359
  %2464 = vmatprep.subr.mxu0 %v2362
  %2465 = vmatpush1.msra.mxu0 %v2361
  %2466 = vmatprep.subr.mxu0 %v2364
  %2467 = vmatpush1.msra.mxu0 %v2363
  %2468 = vmatprep.subr.mxu0 %v2366
  %2469 = vmatpush1.msra.mxu0 %v2365
  %2470 = vmatprep.subr.mxu0 0.0
  %2471 = vmatpush1.msra.mxu0 0.0
  %2472 = vmatprep.subr.mxu0 0.0
  %2473 = vmatpush1.msra.mxu0 0.0
  %2474 = vmatprep.subr.mxu0 0.0
  %2475 = vmatpush1.msra.mxu0 0.0
  %2476 = vmatprep.subr.mxu0 0.0
  %2477 = vmatpush1.msra.mxu0 0.0
  %2478 = vmatprep.subr.mxu0 0.0
  %2479 = vmatpush1.msra.mxu0 0.0
  %2480 = vmatprep.subr.mxu0 0.0
  %2481 = vmatpush1.msra.mxu0 0.0
  %2482 = vmatprep.subr.mxu0 0.0
  %2483 = vmatpush1.msra.mxu0 0.0
  %2484 = vmatprep.subr.mxu0 0.0
  %2485 = vmatpush1.msra.mxu0 0.0
  %2486 = vmatprep.subr.mxu0 0.0
  %2487 = vmatpush1.msra.mxu0 0.0
  %2488 = vmatprep.subr.mxu0 0.0
  %2489 = vmatpush1.msra.mxu0 0.0
  %2490 = vmatprep.subr.mxu0 0.0
  %2491 = vmatpush1.msra.mxu0 0.0
  %2492 = vmatprep.subr.mxu0 0.0
  %2493 = vmatpush1.msra.mxu0 0.0
  %2494 = vmatprep.subr.mxu0 0.0
  %2495 = vmatpush1.msra.mxu0 0.0
  %2496 = vmatprep.subr.mxu0 0.0
  %2497 = vmatpush1.msra.mxu0 0.0
  %2498 = vmatprep.subr.mxu0 0.0
  %2499 = vmatpush1.msra.mxu0 0.0
  %2500 = vmatprep.subr.mxu0 0.0
  %2501 = vmatpush1.msra.mxu0 0.0
  %2502 = vmatprep.mubr.f32.mxu0 0.0
  %2503 = vmatmul.mubr.f32.gmra.mrb[0].mxu0 %v238
  %v2504 = vpop.f32.mrb[0].mxu0
  %v2505 = vadd.f32 %v2434, %v2504
  %v2506 = vpop.f32.mrb[0].mxu0
  %v2507 = vadd.f32 %v2436, %v2506
  %2508 = vdwg.mxu0
  %v2511 = vcombine.low %v2505, %v2507
  %v2513 = vunpack.c.l.s4 1983009808
  %v2514 = vunpack.c.0.s8 %v2513
  %v2515 = vlaneseq
  %v2516 = vshrl.u32 %v2515, 7
  %v2517 = vsub.s32 %v2514, %v2516
  %v2518 = vrot.slane %v2511, %v2517
  %s2520 = scalar_lea.vmem %s7, 32
  %2521 = vst.msk [vmem:[%s2520] sm:$0xf] %vm504, %v2518
  %s2522 = scalar_lea.vmem %s3, 6912
  %v2523 = vld [vmem:[%s2522] sm:$0xff]
  %v2524 = vld [vmem:[%s2522 + $0x8] sm:$0xff]
  %v2525 = vld [vmem:[%s2522 + $0x10] sm:$0xff]
  %v2526 = vld [vmem:[%s2522 + $0x18] sm:$0xff]
  %v2527 = vld [vmem:[%s2522 + $0x20] sm:$0xff]
  %v2528 = vld [vmem:[%s2522 + $0x28] sm:$0xff]
  %v2529 = vld [vmem:[%s2522 + $0x30] sm:$0xff]
  %v2530 = vld [vmem:[%s2522 + $0x38] sm:$0xff]
  %v2531 = vld [vmem:[%s2522 + $0x40] sm:$0xff]
  %v2532 = vld [vmem:[%s2522 + $0x48] sm:$0xff]
  %v2533 = vld [vmem:[%s2522 + $0x50] sm:$0xff]
  %v2534 = vld [vmem:[%s2522 + $0x58] sm:$0xff]
  %v2535 = vld [vmem:[%s2522 + $0x60] sm:$0xff]
  %v2536 = vld [vmem:[%s2522 + $0x68] sm:$0xff]
  %v2537 = vld [vmem:[%s2522 + $0x70] sm:$0xff]
  %v2538 = vld [vmem:[%s2522 + $0x78] sm:$0xff]
  %v2539 = vld [vmem:[%s2522 + $0x80] sm:$0xff]
  %v2540 = vld [vmem:[%s2522 + $0x88] sm:$0xff]
  %v2541 = vld [vmem:[%s2522 + $0x90] sm:$0xff]
  %v2542 = vld [vmem:[%s2522 + $0x98] sm:$0xff]
  %v2543 = vld [vmem:[%s2522 + $0xa0] sm:$0xff]
  %v2544 = vld [vmem:[%s2522 + $0xa8] sm:$0xff]
  %v2545 = vld [vmem:[%s2522 + $0xb0] sm:$0xff]
  %v2546 = vld [vmem:[%s2522 + $0xb8] sm:$0xff]
  %v2547 = vld [vmem:[%s2522 + $0xc0] sm:$0xff]
  %v2548 = vld [vmem:[%s2522 + $0xc8] sm:$0xff]
  %v2549 = vld [vmem:[%s2522 + $0xd0] sm:$0xff]
  %v2550 = vld [vmem:[%s2522 + $0xd8] sm:$0xff]
  %v2551 = vld [vmem:[%s2522 + $0xe0] sm:$0xff]
  %v2552 = vld [vmem:[%s2522 + $0xe8] sm:$0xff]
  %v2553 = vld [vmem:[%s2522 + $0xf0] sm:$0xff]
  %v2554 = vld [vmem:[%s2522 + $0xf8] sm:$0xff]
  %v2555 = vld [vmem:[%s2522 + $0x100] sm:$0xff]
  %v2556 = vld [vmem:[%s2522 + $0x108] sm:$0xff]
  %v2557 = vld [vmem:[%s2522 + $0x110] sm:$0xff]
  %v2558 = vld [vmem:[%s2522 + $0x118] sm:$0xff]
  %v2559 = vld [vmem:[%s2522 + $0x120] sm:$0xff]
  %v2560 = vld [vmem:[%s2522 + $0x128] sm:$0xff]
  %v2561 = vld [vmem:[%s2522 + $0x130] sm:$0xff]
  %v2562 = vld [vmem:[%s2522 + $0x138] sm:$0xff]
  %v2563 = vld [vmem:[%s2522 + $0x140] sm:$0xff]
  %v2564 = vld [vmem:[%s2522 + $0x148] sm:$0xff]
  %v2565 = vld [vmem:[%s2522 + $0x150] sm:$0xff]
  %v2566 = vld [vmem:[%s2522 + $0x158] sm:$0xff]
  %v2567 = vld [vmem:[%s2522 + $0x160] sm:$0xff]
  %v2568 = vld [vmem:[%s2522 + $0x168] sm:$0xff]
  %v2569 = vld [vmem:[%s2522 + $0x170] sm:$0xff]
  %v2570 = vld [vmem:[%s2522 + $0x178] sm:$0xff]
  %v2571 = vld [vmem:[%s2522 + $0x180] sm:$0xff]
  %v2572 = vld [vmem:[%s2522 + $0x188] sm:$0xff]
  %v2573 = vld [vmem:[%s2522 + $0x190] sm:$0xff]
  %v2574 = vld [vmem:[%s2522 + $0x198] sm:$0xff]
  %v2575 = vld [vmem:[%s2522 + $0x1a0] sm:$0xff]
  %v2576 = vld [vmem:[%s2522 + $0x1a8] sm:$0xff]
  %v2577 = vld [vmem:[%s2522 + $0x1b0] sm:$0xff]
  %v2578 = vld [vmem:[%s2522 + $0x1b8] sm:$0xff]
  %v2579 = vld [vmem:[%s2522 + $0x1c0] sm:$0xff]
  %v2580 = vld [vmem:[%s2522 + $0x1c8] sm:$0xff]
  %v2581 = vld [vmem:[%s2522 + $0x1d0] sm:$0xff]
  %v2582 = vld [vmem:[%s2522 + $0x1d8] sm:$0xff]
  %v2583 = vld [vmem:[%s2522 + $0x1e0] sm:$0xff]
  %v2584 = vld [vmem:[%s2522 + $0x1e8] sm:$0xff]
  %v2585 = vld [vmem:[%s2522 + $0x1f0] sm:$0xff]
  %v2586 = vld [vmem:[%s2522 + $0x1f8] sm:$0xff]
  %v2587 = vld [vmem:[%s2522 + $0x200] sm:$0xff]
  %v2588 = vld [vmem:[%s2522 + $0x208] sm:$0xff]
  %v2589 = vld [vmem:[%s2522 + $0x210] sm:$0xff]
  %v2590 = vld [vmem:[%s2522 + $0x218] sm:$0xff]
  %v2591 = vld [vmem:[%s2522 + $0x220] sm:$0xff]
  %v2592 = vld [vmem:[%s2522 + $0x228] sm:$0xff]
  %v2593 = vld [vmem:[%s2522 + $0x230] sm:$0xff]
  %v2594 = vld [vmem:[%s2522 + $0x238] sm:$0xff]
  %v2595 = vld [vmem:[%s2522 + $0x240] sm:$0xff]
  %v2596 = vld [vmem:[%s2522 + $0x248] sm:$0xff]
  %v2597 = vld [vmem:[%s2522 + $0x250] sm:$0xff]
  %v2598 = vld [vmem:[%s2522 + $0x258] sm:$0xff]
  %v2599 = vld [vmem:[%s2522 + $0x260] sm:$0xff]
  %v2600 = vld [vmem:[%s2522 + $0x268] sm:$0xff]
  %v2601 = vld [vmem:[%s2522 + $0x270] sm:$0xff]
  %v2602 = vld [vmem:[%s2522 + $0x278] sm:$0xff]
  %v2603 = vld [vmem:[%s2522 + $0x280] sm:$0xff]
  %v2604 = vld [vmem:[%s2522 + $0x288] sm:$0xff]
  %v2605 = vld [vmem:[%s2522 + $0x290] sm:$0xff]
  %v2606 = vld [vmem:[%s2522 + $0x298] sm:$0xff]
  %v2607 = vld [vmem:[%s2522 + $0x2a0] sm:$0xff]
  %v2608 = vld [vmem:[%s2522 + $0x2a8] sm:$0xff]
  %v2609 = vld [vmem:[%s2522 + $0x2b0] sm:$0xff]
  %v2610 = vld [vmem:[%s2522 + $0x2b8] sm:$0xff]
  %v2611 = vld [vmem:[%s2522 + $0x2c0] sm:$0xff]
  %v2612 = vld [vmem:[%s2522 + $0x2c8] sm:$0xff]
  %v2613 = vld [vmem:[%s2522 + $0x2d0] sm:$0xff]
  %v2614 = vld [vmem:[%s2522 + $0x2d8] sm:$0xff]
  %v2615 = vld [vmem:[%s2522 + $0x2e0] sm:$0xff]
  %v2616 = vld [vmem:[%s2522 + $0x2e8] sm:$0xff]
  %v2617 = vld [vmem:[%s2522 + $0x2f0] sm:$0xff]
  %v2618 = vld [vmem:[%s2522 + $0x2f8] sm:$0xff]
  %2619 = vmatprep.subr.mxu0 %v2524
  %2620 = vmatpush1.msra.mxu0 %v2523
  %2621 = vmatprep.subr.mxu0 %v2526
  %2622 = vmatpush1.msra.mxu0 %v2525
  %2623 = vmatprep.subr.mxu0 %v2528
  %2624 = vmatpush1.msra.mxu0 %v2527
  %2625 = vmatprep.subr.mxu0 %v2530
  %2626 = vmatpush1.msra.mxu0 %v2529
  %2627 = vmatprep.subr.mxu0 %v2532
  %2628 = vmatpush1.msra.mxu0 %v2531
  %2629 = vmatprep.subr.mxu0 %v2534
  %2630 = vmatpush1.msra.mxu0 %v2533
  %2631 = vmatprep.subr.mxu0 %v2536
  %2632 = vmatpush1.msra.mxu0 %v2535
  %2633 = vmatprep.subr.mxu0 %v2538
  %2634 = vmatpush1.msra.mxu0 %v2537
  %2635 = vmatprep.subr.mxu0 %v2540
  %2636 = vmatpush1.msra.mxu0 %v2539
  %2637 = vmatprep.subr.mxu0 %v2542
  %2638 = vmatpush1.msra.mxu0 %v2541
  %2639 = vmatprep.subr.mxu0 %v2544
  %2640 = vmatpush1.msra.mxu0 %v2543
  %2641 = vmatprep.subr.mxu0 %v2546
  %2642 = vmatpush1.msra.mxu0 %v2545
  %2643 = vmatprep.subr.mxu0 %v2548
  %2644 = vmatpush1.msra.mxu0 %v2547
  %2645 = vmatprep.subr.mxu0 %v2550
  %2646 = vmatpush1.msra.mxu0 %v2549
  %2647 = vmatprep.subr.mxu0 %v2552
  %2648 = vmatpush1.msra.mxu0 %v2551
  %2649 = vmatprep.subr.mxu0 %v2554
  %2650 = vmatpush1.msra.mxu0 %v2553
  %2651 = vmatprep.subr.mxu0 %v2556
  %2652 = vmatpush1.msra.mxu0 %v2555
  %2653 = vmatprep.subr.mxu0 %v2558
  %2654 = vmatpush1.msra.mxu0 %v2557
  %2655 = vmatprep.subr.mxu0 %v2560
  %2656 = vmatpush1.msra.mxu0 %v2559
  %2657 = vmatprep.subr.mxu0 %v2562
  %2658 = vmatpush1.msra.mxu0 %v2561
  %2659 = vmatprep.subr.mxu0 %v2564
  %2660 = vmatpush1.msra.mxu0 %v2563
  %2661 = vmatprep.subr.mxu0 %v2566
  %2662 = vmatpush1.msra.mxu0 %v2565
  %2663 = vmatprep.subr.mxu0 %v2568
  %2664 = vmatpush1.msra.mxu0 %v2567
  %2665 = vmatprep.subr.mxu0 %v2570
  %2666 = vmatpush1.msra.mxu0 %v2569
  %2667 = vmatprep.subr.mxu0 %v2572
  %2668 = vmatpush1.msra.mxu0 %v2571
  %2669 = vmatprep.subr.mxu0 %v2574
  %2670 = vmatpush1.msra.mxu0 %v2573
  %2671 = vmatprep.subr.mxu0 %v2576
  %2672 = vmatpush1.msra.mxu0 %v2575
  %2673 = vmatprep.subr.mxu0 %v2578
  %2674 = vmatpush1.msra.mxu0 %v2577
  %2675 = vmatprep.subr.mxu0 %v2580
  %2676 = vmatpush1.msra.mxu0 %v2579
  %2677 = vmatprep.subr.mxu0 %v2582
  %2678 = vmatpush1.msra.mxu0 %v2581
  %2679 = vmatprep.subr.mxu0 %v2584
  %2680 = vmatpush1.msra.mxu0 %v2583
  %2681 = vmatprep.subr.mxu0 %v2586
  %2682 = vmatpush1.msra.mxu0 %v2585
  %2683 = vmatprep.mubr.f32.mxu0 %v169
  %2684 = vmatmul.mubr.f32.gmra.mrb[0].mxu0 %v167
  %v2685 = vpop.f32.mrb[0].mxu0
  %v2686 = vadd.f32 %v342, %v2685
  %v2687 = vpop.f32.mrb[0].mxu0
  %v2688 = vadd.f32 %v346, %v2687
  %2689 = vdwg.mxu0
  %2690 = vmatprep.subr.mxu0 %v2588
  %2691 = vmatpush1.msra.mxu0 %v2587
  %2692 = vmatprep.subr.mxu0 %v2590
  %2693 = vmatpush1.msra.mxu0 %v2589
  %2694 = vmatprep.subr.mxu0 %v2592
  %2695 = vmatpush1.msra.mxu0 %v2591
  %2696 = vmatprep.subr.mxu0 %v2594
  %2697 = vmatpush1.msra.mxu0 %v2593
  %2698 = vmatprep.subr.mxu0 %v2596
  %2699 = vmatpush1.msra.mxu0 %v2595
  %2700 = vmatprep.subr.mxu0 %v2598
  %2701 = vmatpush1.msra.mxu0 %v2597
  %2702 = vmatprep.subr.mxu0 %v2600
  %2703 = vmatpush1.msra.mxu0 %v2599
  %2704 = vmatprep.subr.mxu0 %v2602
  %2705 = vmatpush1.msra.mxu0 %v2601
  %2706 = vmatprep.subr.mxu0 %v2604
  %2707 = vmatpush1.msra.mxu0 %v2603
  %2708 = vmatprep.subr.mxu0 %v2606
  %2709 = vmatpush1.msra.mxu0 %v2605
  %2710 = vmatprep.subr.mxu0 %v2608
  %2711 = vmatpush1.msra.mxu0 %v2607
  %2712 = vmatprep.subr.mxu0 %v2610
  %2713 = vmatpush1.msra.mxu0 %v2609
  %2714 = vmatprep.subr.mxu0 %v2612
  %2715 = vmatpush1.msra.mxu0 %v2611
  %2716 = vmatprep.subr.mxu0 %v2614
  %2717 = vmatpush1.msra.mxu0 %v2613
  %2718 = vmatprep.subr.mxu0 %v2616
  %2719 = vmatpush1.msra.mxu0 %v2615
  %2720 = vmatprep.subr.mxu0 %v2618
  %2721 = vmatpush1.msra.mxu0 %v2617
  %2722 = vmatprep.subr.mxu0 0.0
  %2723 = vmatpush1.msra.mxu0 0.0
  %2724 = vmatprep.subr.mxu0 0.0
  %2725 = vmatpush1.msra.mxu0 0.0
  %2726 = vmatprep.subr.mxu0 0.0
  %2727 = vmatpush1.msra.mxu0 0.0
  %2728 = vmatprep.subr.mxu0 0.0
  %2729 = vmatpush1.msra.mxu0 0.0
  %2730 = vmatprep.subr.mxu0 0.0
  %2731 = vmatpush1.msra.mxu0 0.0
  %2732 = vmatprep.subr.mxu0 0.0
  %2733 = vmatpush1.msra.mxu0 0.0
  %2734 = vmatprep.subr.mxu0 0.0
  %2735 = vmatpush1.msra.mxu0 0.0
  %2736 = vmatprep.subr.mxu0 0.0
  %2737 = vmatpush1.msra.mxu0 0.0
  %2738 = vmatprep.subr.mxu0 0.0
  %2739 = vmatpush1.msra.mxu0 0.0
  %2740 = vmatprep.subr.mxu0 0.0
  %2741 = vmatpush1.msra.mxu0 0.0
  %2742 = vmatprep.subr.mxu0 0.0
  %2743 = vmatpush1.msra.mxu0 0.0
  %2744 = vmatprep.subr.mxu0 0.0
  %2745 = vmatpush1.msra.mxu0 0.0
  %2746 = vmatprep.subr.mxu0 0.0
  %2747 = vmatpush1.msra.mxu0 0.0
  %2748 = vmatprep.subr.mxu0 0.0
  %2749 = vmatpush1.msra.mxu0 0.0
  %2750 = vmatprep.subr.mxu0 0.0
  %2751 = vmatpush1.msra.mxu0 0.0
  %2752 = vmatprep.subr.mxu0 0.0
  %2753 = vmatpush1.msra.mxu0 0.0
  %2754 = vmatprep.mubr.f32.mxu0 0.0
  %2755 = vmatmul.mubr.f32.gmra.mrb[0].mxu0 %v238
  %v2756 = vpop.f32.mrb[0].mxu0
  %v2757 = vadd.f32 %v2686, %v2756
  %v2758 = vpop.f32.mrb[0].mxu0
  %v2759 = vadd.f32 %v2688, %v2758
  %2760 = vdwg.mxu0
  %v2763 = vcombine.low %v2757, %v2759
  %v2765 = vunpack.c.l.s4 1983009808
  %v2766 = vunpack.c.0.s8 %v2765
  %v2767 = vlaneseq
  %v2768 = vshrl.u32 %v2767, 7
  %v2769 = vsub.s32 %v2766, %v2768
  %v2770 = vrot.slane %v2763, %v2769
  %s2772 = scalar_lea.vmem %s7, 36
  %2773 = vst.msk [vmem:[%s2772] sm:$0xf] %vm504, %v2770
  %s2774 = scalar_lea.vmem %s3, 7680
  %v2775 = vld [vmem:[%s2774] sm:$0xff]
  %v2776 = vld [vmem:[%s2774 + $0x8] sm:$0xff]
  %v2777 = vld [vmem:[%s2774 + $0x10] sm:$0xff]
  %v2778 = vld [vmem:[%s2774 + $0x18] sm:$0xff]
  %v2779 = vld [vmem:[%s2774 + $0x20] sm:$0xff]
  %v2780 = vld [vmem:[%s2774 + $0x28] sm:$0xff]
  %v2781 = vld [vmem:[%s2774 + $0x30] sm:$0xff]
  %v2782 = vld [vmem:[%s2774 + $0x38] sm:$0xff]
  %v2783 = vld [vmem:[%s2774 + $0x40] sm:$0xff]
  %v2784 = vld [vmem:[%s2774 + $0x48] sm:$0xff]
  %v2785 = vld [vmem:[%s2774 + $0x50] sm:$0xff]
  %v2786 = vld [vmem:[%s2774 + $0x58] sm:$0xff]
  %v2787 = vld [vmem:[%s2774 + $0x60] sm:$0xff]
  %v2788 = vld [vmem:[%s2774 + $0x68] sm:$0xff]
  %v2789 = vld [vmem:[%s2774 + $0x70] sm:$0xff]
  %v2790 = vld [vmem:[%s2774 + $0x78] sm:$0xff]
  %v2791 = vld [vmem:[%s2774 + $0x80] sm:$0xff]
  %v2792 = vld [vmem:[%s2774 + $0x88] sm:$0xff]
  %v2793 = vld [vmem:[%s2774 + $0x90] sm:$0xff]
  %v2794 = vld [vmem:[%s2774 + $0x98] sm:$0xff]
  %v2795 = vld [vmem:[%s2774 + $0xa0] sm:$0xff]
  %v2796 = vld [vmem:[%s2774 + $0xa8] sm:$0xff]
  %v2797 = vld [vmem:[%s2774 + $0xb0] sm:$0xff]
  %v2798 = vld [vmem:[%s2774 + $0xb8] sm:$0xff]
  %v2799 = vld [vmem:[%s2774 + $0xc0] sm:$0xff]
  %v2800 = vld [vmem:[%s2774 + $0xc8] sm:$0xff]
  %v2801 = vld [vmem:[%s2774 + $0xd0] sm:$0xff]
  %v2802 = vld [vmem:[%s2774 + $0xd8] sm:$0xff]
  %v2803 = vld [vmem:[%s2774 + $0xe0] sm:$0xff]
  %v2804 = vld [vmem:[%s2774 + $0xe8] sm:$0xff]
  %v2805 = vld [vmem:[%s2774 + $0xf0] sm:$0xff]
  %v2806 = vld [vmem:[%s2774 + $0xf8] sm:$0xff]
  %v2807 = vld [vmem:[%s2774 + $0x100] sm:$0xff]
  %v2808 = vld [vmem:[%s2774 + $0x108] sm:$0xff]
  %v2809 = vld [vmem:[%s2774 + $0x110] sm:$0xff]
  %v2810 = vld [vmem:[%s2774 + $0x118] sm:$0xff]
  %v2811 = vld [vmem:[%s2774 + $0x120] sm:$0xff]
  %v2812 = vld [vmem:[%s2774 + $0x128] sm:$0xff]
  %v2813 = vld [vmem:[%s2774 + $0x130] sm:$0xff]
  %v2814 = vld [vmem:[%s2774 + $0x138] sm:$0xff]
  %v2815 = vld [vmem:[%s2774 + $0x140] sm:$0xff]
  %v2816 = vld [vmem:[%s2774 + $0x148] sm:$0xff]
  %v2817 = vld [vmem:[%s2774 + $0x150] sm:$0xff]
  %v2818 = vld [vmem:[%s2774 + $0x158] sm:$0xff]
  %v2819 = vld [vmem:[%s2774 + $0x160] sm:$0xff]
  %v2820 = vld [vmem:[%s2774 + $0x168] sm:$0xff]
  %v2821 = vld [vmem:[%s2774 + $0x170] sm:$0xff]
  %v2822 = vld [vmem:[%s2774 + $0x178] sm:$0xff]
  %v2823 = vld [vmem:[%s2774 + $0x180] sm:$0xff]
  %v2824 = vld [vmem:[%s2774 + $0x188] sm:$0xff]
  %v2825 = vld [vmem:[%s2774 + $0x190] sm:$0xff]
  %v2826 = vld [vmem:[%s2774 + $0x198] sm:$0xff]
  %v2827 = vld [vmem:[%s2774 + $0x1a0] sm:$0xff]
  %v2828 = vld [vmem:[%s2774 + $0x1a8] sm:$0xff]
  %v2829 = vld [vmem:[%s2774 + $0x1b0] sm:$0xff]
  %v2830 = vld [vmem:[%s2774 + $0x1b8] sm:$0xff]
  %v2831 = vld [vmem:[%s2774 + $0x1c0] sm:$0xff]
  %v2832 = vld [vmem:[%s2774 + $0x1c8] sm:$0xff]
  %v2833 = vld [vmem:[%s2774 + $0x1d0] sm:$0xff]
  %v2834 = vld [vmem:[%s2774 + $0x1d8] sm:$0xff]
  %v2835 = vld [vmem:[%s2774 + $0x1e0] sm:$0xff]
  %v2836 = vld [vmem:[%s2774 + $0x1e8] sm:$0xff]
  %v2837 = vld [vmem:[%s2774 + $0x1f0] sm:$0xff]
  %v2838 = vld [vmem:[%s2774 + $0x1f8] sm:$0xff]
  %v2839 = vld [vmem:[%s2774 + $0x200] sm:$0xff]
  %v2840 = vld [vmem:[%s2774 + $0x208] sm:$0xff]
  %v2841 = vld [vmem:[%s2774 + $0x210] sm:$0xff]
  %v2842 = vld [vmem:[%s2774 + $0x218] sm:$0xff]
  %v2843 = vld [vmem:[%s2774 + $0x220] sm:$0xff]
  %v2844 = vld [vmem:[%s2774 + $0x228] sm:$0xff]
  %v2845 = vld [vmem:[%s2774 + $0x230] sm:$0xff]
  %v2846 = vld [vmem:[%s2774 + $0x238] sm:$0xff]
  %v2847 = vld [vmem:[%s2774 + $0x240] sm:$0xff]
  %v2848 = vld [vmem:[%s2774 + $0x248] sm:$0xff]
  %v2849 = vld [vmem:[%s2774 + $0x250] sm:$0xff]
  %v2850 = vld [vmem:[%s2774 + $0x258] sm:$0xff]
  %v2851 = vld [vmem:[%s2774 + $0x260] sm:$0xff]
  %v2852 = vld [vmem:[%s2774 + $0x268] sm:$0xff]
  %v2853 = vld [vmem:[%s2774 + $0x270] sm:$0xff]
  %v2854 = vld [vmem:[%s2774 + $0x278] sm:$0xff]
  %v2855 = vld [vmem:[%s2774 + $0x280] sm:$0xff]
  %v2856 = vld [vmem:[%s2774 + $0x288] sm:$0xff]
  %v2857 = vld [vmem:[%s2774 + $0x290] sm:$0xff]
  %v2858 = vld [vmem:[%s2774 + $0x298] sm:$0xff]
  %v2859 = vld [vmem:[%s2774 + $0x2a0] sm:$0xff]
  %v2860 = vld [vmem:[%s2774 + $0x2a8] sm:$0xff]
  %v2861 = vld [vmem:[%s2774 + $0x2b0] sm:$0xff]
  %v2862 = vld [vmem:[%s2774 + $0x2b8] sm:$0xff]
  %v2863 = vld [vmem:[%s2774 + $0x2c0] sm:$0xff]
  %v2864 = vld [vmem:[%s2774 + $0x2c8] sm:$0xff]
  %v2865 = vld [vmem:[%s2774 + $0x2d0] sm:$0xff]
  %v2866 = vld [vmem:[%s2774 + $0x2d8] sm:$0xff]
  %v2867 = vld [vmem:[%s2774 + $0x2e0] sm:$0xff]
  %v2868 = vld [vmem:[%s2774 + $0x2e8] sm:$0xff]
  %v2869 = vld [vmem:[%s2774 + $0x2f0] sm:$0xff]
  %v2870 = vld [vmem:[%s2774 + $0x2f8] sm:$0xff]
  %2871 = vmatprep.subr.mxu0 %v2776
  %2872 = vmatpush1.msra.mxu0 %v2775
  %2873 = vmatprep.subr.mxu0 %v2778
  %2874 = vmatpush1.msra.mxu0 %v2777
  %2875 = vmatprep.subr.mxu0 %v2780
  %2876 = vmatpush1.msra.mxu0 %v2779
  %2877 = vmatprep.subr.mxu0 %v2782
  %2878 = vmatpush1.msra.mxu0 %v2781
  %2879 = vmatprep.subr.mxu0 %v2784
  %2880 = vmatpush1.msra.mxu0 %v2783
  %2881 = vmatprep.subr.mxu0 %v2786
  %2882 = vmatpush1.msra.mxu0 %v2785
  %2883 = vmatprep.subr.mxu0 %v2788
  %2884 = vmatpush1.msra.mxu0 %v2787
  %2885 = vmatprep.subr.mxu0 %v2790
  %2886 = vmatpush1.msra.mxu0 %v2789
  %2887 = vmatprep.subr.mxu0 %v2792
  %2888 = vmatpush1.msra.mxu0 %v2791
  %2889 = vmatprep.subr.mxu0 %v2794
  %2890 = vmatpush1.msra.mxu0 %v2793
  %2891 = vmatprep.subr.mxu0 %v2796
  %2892 = vmatpush1.msra.mxu0 %v2795
  %2893 = vmatprep.subr.mxu0 %v2798
  %2894 = vmatpush1.msra.mxu0 %v2797
  %2895 = vmatprep.subr.mxu0 %v2800
  %2896 = vmatpush1.msra.mxu0 %v2799
  %2897 = vmatprep.subr.mxu0 %v2802
  %2898 = vmatpush1.msra.mxu0 %v2801
  %2899 = vmatprep.subr.mxu0 %v2804
  %2900 = vmatpush1.msra.mxu0 %v2803
  %2901 = vmatprep.subr.mxu0 %v2806
  %2902 = vmatpush1.msra.mxu0 %v2805
  %2903 = vmatprep.subr.mxu0 %v2808
  %2904 = vmatpush1.msra.mxu0 %v2807
  %2905 = vmatprep.subr.mxu0 %v2810
  %2906 = vmatpush1.msra.mxu0 %v2809
  %2907 = vmatprep.subr.mxu0 %v2812
  %2908 = vmatpush1.msra.mxu0 %v2811
  %2909 = vmatprep.subr.mxu0 %v2814
  %2910 = vmatpush1.msra.mxu0 %v2813
  %2911 = vmatprep.subr.mxu0 %v2816
  %2912 = vmatpush1.msra.mxu0 %v2815
  %2913 = vmatprep.subr.mxu0 %v2818
  %2914 = vmatpush1.msra.mxu0 %v2817
  %2915 = vmatprep.subr.mxu0 %v2820
  %2916 = vmatpush1.msra.mxu0 %v2819
  %2917 = vmatprep.subr.mxu0 %v2822
  %2918 = vmatpush1.msra.mxu0 %v2821
  %2919 = vmatprep.subr.mxu0 %v2824
  %2920 = vmatpush1.msra.mxu0 %v2823
  %2921 = vmatprep.subr.mxu0 %v2826
  %2922 = vmatpush1.msra.mxu0 %v2825
  %2923 = vmatprep.subr.mxu0 %v2828
  %2924 = vmatpush1.msra.mxu0 %v2827
  %2925 = vmatprep.subr.mxu0 %v2830
  %2926 = vmatpush1.msra.mxu0 %v2829
  %2927 = vmatprep.subr.mxu0 %v2832
  %2928 = vmatpush1.msra.mxu0 %v2831
  %2929 = vmatprep.subr.mxu0 %v2834
  %2930 = vmatpush1.msra.mxu0 %v2833
  %2931 = vmatprep.subr.mxu0 %v2836
  %2932 = vmatpush1.msra.mxu0 %v2835
  %2933 = vmatprep.subr.mxu0 %v2838
  %2934 = vmatpush1.msra.mxu0 %v2837
  %2935 = vmatprep.mubr.f32.mxu0 %v169
  %2936 = vmatmul.mubr.f32.gmra.mrb[0].mxu0 %v167
  %v2937 = vpop.f32.mrb[0].mxu0
  %v2938 = vadd.f32 %v342, %v2937
  %v2939 = vpop.f32.mrb[0].mxu0
  %v2940 = vadd.f32 %v346, %v2939
  %2941 = vdwg.mxu0
  %2942 = vmatprep.subr.mxu0 %v2840
  %2943 = vmatpush1.msra.mxu0 %v2839
  %2944 = vmatprep.subr.mxu0 %v2842
  %2945 = vmatpush1.msra.mxu0 %v2841
  %2946 = vmatprep.subr.mxu0 %v2844
  %2947 = vmatpush1.msra.mxu0 %v2843
  %2948 = vmatprep.subr.mxu0 %v2846
  %2949 = vmatpush1.msra.mxu0 %v2845
  %2950 = vmatprep.subr.mxu0 %v2848
  %2951 = vmatpush1.msra.mxu0 %v2847
  %2952 = vmatprep.subr.mxu0 %v2850
  %2953 = vmatpush1.msra.mxu0 %v2849
  %2954 = vmatprep.subr.mxu0 %v2852
  %2955 = vmatpush1.msra.mxu0 %v2851
  %2956 = vmatprep.subr.mxu0 %v2854
  %2957 = vmatpush1.msra.mxu0 %v2853
  %2958 = vmatprep.subr.mxu0 %v2856
  %2959 = vmatpush1.msra.mxu0 %v2855
  %2960 = vmatprep.subr.mxu0 %v2858
  %2961 = vmatpush1.msra.mxu0 %v2857
  %2962 = vmatprep.subr.mxu0 %v2860
  %2963 = vmatpush1.msra.mxu0 %v2859
  %2964 = vmatprep.subr.mxu0 %v2862
  %2965 = vmatpush1.msra.mxu0 %v2861
  %2966 = vmatprep.subr.mxu0 %v2864
  %2967 = vmatpush1.msra.mxu0 %v2863
  %2968 = vmatprep.subr.mxu0 %v2866
  %2969 = vmatpush1.msra.mxu0 %v2865
  %2970 = vmatprep.subr.mxu0 %v2868
  %2971 = vmatpush1.msra.mxu0 %v2867
  %2972 = vmatprep.subr.mxu0 %v2870
  %2973 = vmatpush1.msra.mxu0 %v2869
  %2974 = vmatprep.subr.mxu0 0.0
  %2975 = vmatpush1.msra.mxu0 0.0
  %2976 = vmatprep.subr.mxu0 0.0
  %2977 = vmatpush1.msra.mxu0 0.0
  %2978 = vmatprep.subr.mxu0 0.0
  %2979 = vmatpush1.msra.mxu0 0.0
  %2980 = vmatprep.subr.mxu0 0.0
  %2981 = vmatpush1.msra.mxu0 0.0
  %2982 = vmatprep.subr.mxu0 0.0
  %2983 = vmatpush1.msra.mxu0 0.0
  %2984 = vmatprep.subr.mxu0 0.0
  %2985 = vmatpush1.msra.mxu0 0.0
  %2986 = vmatprep.subr.mxu0 0.0
  %2987 = vmatpush1.msra.mxu0 0.0
  %2988 = vmatprep.subr.mxu0 0.0
  %2989 = vmatpush1.msra.mxu0 0.0
  %2990 = vmatprep.subr.mxu0 0.0
  %2991 = vmatpush1.msra.mxu0 0.0
  %2992 = vmatprep.subr.mxu0 0.0
  %2993 = vmatpush1.msra.mxu0 0.0
  %2994 = vmatprep.subr.mxu0 0.0
  %2995 = vmatpush1.msra.mxu0 0.0
  %2996 = vmatprep.subr.mxu0 0.0
  %2997 = vmatpush1.msra.mxu0 0.0
  %2998 = vmatprep.subr.mxu0 0.0
  %2999 = vmatpush1.msra.mxu0 0.0
  %3000 = vmatprep.subr.mxu0 0.0
  %3001 = vmatpush1.msra.mxu0 0.0
  %3002 = vmatprep.subr.mxu0 0.0
  %3003 = vmatpush1.msra.mxu0 0.0
  %3004 = vmatprep.subr.mxu0 0.0
  %3005 = vmatpush1.msra.mxu0 0.0
  %3006 = vmatprep.mubr.f32.mxu0 0.0
  %3007 = vmatmul.mubr.f32.gmra.mrb[0].mxu0 %v238
  %v3008 = vpop.f32.mrb[0].mxu0
  %v3009 = vadd.f32 %v2938, %v3008
  %v3010 = vpop.f32.mrb[0].mxu0
  %v3011 = vadd.f32 %v2940, %v3010
  %3012 = vdwg.mxu0
  %v3015 = vcombine.low %v3009, %v3011
  %v3017 = vunpack.c.l.s4 1983009808
  %v3018 = vunpack.c.0.s8 %v3017
  %v3019 = vlaneseq
  %v3020 = vshrl.u32 %v3019, 7
  %v3021 = vsub.s32 %v3018, %v3020
  %v3022 = vrot.slane %v3015, %v3021
  %s3024 = scalar_lea.vmem %s7, 40
  %3025 = vst.msk [vmem:[%s3024] sm:$0xf] %vm504, %v3022
  %s3026 = scalar_lea.vmem %s3, 8448
  %v3027 = vld [vmem:[%s3026] sm:$0xff]
  %v3028 = vld [vmem:[%s3026 + $0x8] sm:$0xff]
  %v3029 = vld [vmem:[%s3026 + $0x10] sm:$0xff]
  %v3030 = vld [vmem:[%s3026 + $0x18] sm:$0xff]
  %v3031 = vld [vmem:[%s3026 + $0x20] sm:$0xff]
  %v3032 = vld [vmem:[%s3026 + $0x28] sm:$0xff]
  %v3033 = vld [vmem:[%s3026 + $0x30] sm:$0xff]
  %v3034 = vld [vmem:[%s3026 + $0x38] sm:$0xff]
  %v3035 = vld [vmem:[%s3026 + $0x40] sm:$0xff]
  %v3036 = vld [vmem:[%s3026 + $0x48] sm:$0xff]
  %v3037 = vld [vmem:[%s3026 + $0x50] sm:$0xff]
  %v3038 = vld [vmem:[%s3026 + $0x58] sm:$0xff]
  %v3039 = vld [vmem:[%s3026 + $0x60] sm:$0xff]
  %v3040 = vld [vmem:[%s3026 + $0x68] sm:$0xff]
  %v3041 = vld [vmem:[%s3026 + $0x70] sm:$0xff]
  %v3042 = vld [vmem:[%s3026 + $0x78] sm:$0xff]
  %v3043 = vld [vmem:[%s3026 + $0x80] sm:$0xff]
  %v3044 = vld [vmem:[%s3026 + $0x88] sm:$0xff]
  %v3045 = vld [vmem:[%s3026 + $0x90] sm:$0xff]
  %v3046 = vld [vmem:[%s3026 + $0x98] sm:$0xff]
  %v3047 = vld [vmem:[%s3026 + $0xa0] sm:$0xff]
  %v3048 = vld [vmem:[%s3026 + $0xa8] sm:$0xff]
  %v3049 = vld [vmem:[%s3026 + $0xb0] sm:$0xff]
  %v3050 = vld [vmem:[%s3026 + $0xb8] sm:$0xff]
  %v3051 = vld [vmem:[%s3026 + $0xc0] sm:$0xff]
  %v3052 = vld [vmem:[%s3026 + $0xc8] sm:$0xff]
  %v3053 = vld [vmem:[%s3026 + $0xd0] sm:$0xff]
  %v3054 = vld [vmem:[%s3026 + $0xd8] sm:$0xff]
  %v3055 = vld [vmem:[%s3026 + $0xe0] sm:$0xff]
  %v3056 = vld [vmem:[%s3026 + $0xe8] sm:$0xff]
  %v3057 = vld [vmem:[%s3026 + $0xf0] sm:$0xff]
  %v3058 = vld [vmem:[%s3026 + $0xf8] sm:$0xff]
  %v3059 = vld [vmem:[%s3026 + $0x100] sm:$0xff]
  %v3060 = vld [vmem:[%s3026 + $0x108] sm:$0xff]
  %v3061 = vld [vmem:[%s3026 + $0x110] sm:$0xff]
  %v3062 = vld [vmem:[%s3026 + $0x118] sm:$0xff]
  %v3063 = vld [vmem:[%s3026 + $0x120] sm:$0xff]
  %v3064 = vld [vmem:[%s3026 + $0x128] sm:$0xff]
  %v3065 = vld [vmem:[%s3026 + $0x130] sm:$0xff]
  %v3066 = vld [vmem:[%s3026 + $0x138] sm:$0xff]
  %v3067 = vld [vmem:[%s3026 + $0x140] sm:$0xff]
  %v3068 = vld [vmem:[%s3026 + $0x148] sm:$0xff]
  %v3069 = vld [vmem:[%s3026 + $0x150] sm:$0xff]
  %v3070 = vld [vmem:[%s3026 + $0x158] sm:$0xff]
  %v3071 = vld [vmem:[%s3026 + $0x160] sm:$0xff]
  %v3072 = vld [vmem:[%s3026 + $0x168] sm:$0xff]
  %v3073 = vld [vmem:[%s3026 + $0x170] sm:$0xff]
  %v3074 = vld [vmem:[%s3026 + $0x178] sm:$0xff]
  %v3075 = vld [vmem:[%s3026 + $0x180] sm:$0xff]
  %v3076 = vld [vmem:[%s3026 + $0x188] sm:$0xff]
  %v3077 = vld [vmem:[%s3026 + $0x190] sm:$0xff]
  %v3078 = vld [vmem:[%s3026 + $0x198] sm:$0xff]
  %v3079 = vld [vmem:[%s3026 + $0x1a0] sm:$0xff]
  %v3080 = vld [vmem:[%s3026 + $0x1a8] sm:$0xff]
  %v3081 = vld [vmem:[%s3026 + $0x1b0] sm:$0xff]
  %v3082 = vld [vmem:[%s3026 + $0x1b8] sm:$0xff]
  %v3083 = vld [vmem:[%s3026 + $0x1c0] sm:$0xff]
  %v3084 = vld [vmem:[%s3026 + $0x1c8] sm:$0xff]
  %v3085 = vld [vmem:[%s3026 + $0x1d0] sm:$0xff]
  %v3086 = vld [vmem:[%s3026 + $0x1d8] sm:$0xff]
  %v3087 = vld [vmem:[%s3026 + $0x1e0] sm:$0xff]
  %v3088 = vld [vmem:[%s3026 + $0x1e8] sm:$0xff]
  %v3089 = vld [vmem:[%s3026 + $0x1f0] sm:$0xff]
  %v3090 = vld [vmem:[%s3026 + $0x1f8] sm:$0xff]
  %v3091 = vld [vmem:[%s3026 + $0x200] sm:$0xff]
  %v3092 = vld [vmem:[%s3026 + $0x208] sm:$0xff]
  %v3093 = vld [vmem:[%s3026 + $0x210] sm:$0xff]
  %v3094 = vld [vmem:[%s3026 + $0x218] sm:$0xff]
  %v3095 = vld [vmem:[%s3026 + $0x220] sm:$0xff]
  %v3096 = vld [vmem:[%s3026 + $0x228] sm:$0xff]
  %v3097 = vld [vmem:[%s3026 + $0x230] sm:$0xff]
  %v3098 = vld [vmem:[%s3026 + $0x238] sm:$0xff]
  %v3099 = vld [vmem:[%s3026 + $0x240] sm:$0xff]
  %v3100 = vld [vmem:[%s3026 + $0x248] sm:$0xff]
  %v3101 = vld [vmem:[%s3026 + $0x250] sm:$0xff]
  %v3102 = vld [vmem:[%s3026 + $0x258] sm:$0xff]
  %v3103 = vld [vmem:[%s3026 + $0x260] sm:$0xff]
  %v3104 = vld [vmem:[%s3026 + $0x268] sm:$0xff]
  %v3105 = vld [vmem:[%s3026 + $0x270] sm:$0xff]
  %v3106 = vld [vmem:[%s3026 + $0x278] sm:$0xff]
  %v3107 = vld [vmem:[%s3026 + $0x280] sm:$0xff]
  %v3108 = vld [vmem:[%s3026 + $0x288] sm:$0xff]
  %v3109 = vld [vmem:[%s3026 + $0x290] sm:$0xff]
  %v3110 = vld [vmem:[%s3026 + $0x298] sm:$0xff]
  %v3111 = vld [vmem:[%s3026 + $0x2a0] sm:$0xff]
  %v3112 = vld [vmem:[%s3026 + $0x2a8] sm:$0xff]
  %v3113 = vld [vmem:[%s3026 + $0x2b0] sm:$0xff]
  %v3114 = vld [vmem:[%s3026 + $0x2b8] sm:$0xff]
  %v3115 = vld [vmem:[%s3026 + $0x2c0] sm:$0xff]
  %v3116 = vld [vmem:[%s3026 + $0x2c8] sm:$0xff]
  %v3117 = vld [vmem:[%s3026 + $0x2d0] sm:$0xff]
  %v3118 = vld [vmem:[%s3026 + $0x2d8] sm:$0xff]
  %v3119 = vld [vmem:[%s3026 + $0x2e0] sm:$0xff]
  %v3120 = vld [vmem:[%s3026 + $0x2e8] sm:$0xff]
  %v3121 = vld [vmem:[%s3026 + $0x2f0] sm:$0xff]
  %v3122 = vld [vmem:[%s3026 + $0x2f8] sm:$0xff]
  %3123 = vmatprep.subr.mxu0 %v3028
  %3124 = vmatpush1.msra.mxu0 %v3027
  %3125 = vmatprep.subr.mxu0 %v3030
  %3126 = vmatpush1.msra.mxu0 %v3029
  %3127 = vmatprep.subr.mxu0 %v3032
  %3128 = vmatpush1.msra.mxu0 %v3031
  %3129 = vmatprep.subr.mxu0 %v3034
  %3130 = vmatpush1.msra.mxu0 %v3033
  %3131 = vmatprep.subr.mxu0 %v3036
  %3132 = vmatpush1.msra.mxu0 %v3035
  %3133 = vmatprep.subr.mxu0 %v3038
  %3134 = vmatpush1.msra.mxu0 %v3037
  %3135 = vmatprep.subr.mxu0 %v3040
  %3136 = vmatpush1.msra.mxu0 %v3039
  %3137 = vmatprep.subr.mxu0 %v3042
  %3138 = vmatpush1.msra.mxu0 %v3041
  %3139 = vmatprep.subr.mxu0 %v3044
  %3140 = vmatpush1.msra.mxu0 %v3043
  %3141 = vmatprep.subr.mxu0 %v3046
  %3142 = vmatpush1.msra.mxu0 %v3045
  %3143 = vmatprep.subr.mxu0 %v3048
  %3144 = vmatpush1.msra.mxu0 %v3047
  %3145 = vmatprep.subr.mxu0 %v3050
  %3146 = vmatpush1.msra.mxu0 %v3049
  %3147 = vmatprep.subr.mxu0 %v3052
  %3148 = vmatpush1.msra.mxu0 %v3051
  %3149 = vmatprep.subr.mxu0 %v3054
  %3150 = vmatpush1.msra.mxu0 %v3053
  %3151 = vmatprep.subr.mxu0 %v3056
  %3152 = vmatpush1.msra.mxu0 %v3055
  %3153 = vmatprep.subr.mxu0 %v3058
  %3154 = vmatpush1.msra.mxu0 %v3057
  %3155 = vmatprep.subr.mxu0 %v3060
  %3156 = vmatpush1.msra.mxu0 %v3059
  %3157 = vmatprep.subr.mxu0 %v3062
  %3158 = vmatpush1.msra.mxu0 %v3061
  %3159 = vmatprep.subr.mxu0 %v3064
  %3160 = vmatpush1.msra.mxu0 %v3063
  %3161 = vmatprep.subr.mxu0 %v3066
  %3162 = vmatpush1.msra.mxu0 %v3065
  %3163 = vmatprep.subr.mxu0 %v3068
  %3164 = vmatpush1.msra.mxu0 %v3067
  %3165 = vmatprep.subr.mxu0 %v3070
  %3166 = vmatpush1.msra.mxu0 %v3069
  %3167 = vmatprep.subr.mxu0 %v3072
  %3168 = vmatpush1.msra.mxu0 %v3071
  %3169 = vmatprep.subr.mxu0 %v3074
  %3170 = vmatpush1.msra.mxu0 %v3073
  %3171 = vmatprep.subr.mxu0 %v3076
  %3172 = vmatpush1.msra.mxu0 %v3075
  %3173 = vmatprep.subr.mxu0 %v3078
  %3174 = vmatpush1.msra.mxu0 %v3077
  %3175 = vmatprep.subr.mxu0 %v3080
  %3176 = vmatpush1.msra.mxu0 %v3079
  %3177 = vmatprep.subr.mxu0 %v3082
  %3178 = vmatpush1.msra.mxu0 %v3081
  %3179 = vmatprep.subr.mxu0 %v3084
  %3180 = vmatpush1.msra.mxu0 %v3083
  %3181 = vmatprep.subr.mxu0 %v3086
  %3182 = vmatpush1.msra.mxu0 %v3085
  %3183 = vmatprep.subr.mxu0 %v3088
  %3184 = vmatpush1.msra.mxu0 %v3087
  %3185 = vmatprep.subr.mxu0 %v3090
  %3186 = vmatpush1.msra.mxu0 %v3089
  %3187 = vmatprep.mubr.f32.mxu0 %v169
  %3188 = vmatmul.mubr.f32.gmra.mrb[0].mxu0 %v167
  %v3189 = vpop.f32.mrb[0].mxu0
  %v3190 = vadd.f32 %v342, %v3189
  %v3191 = vpop.f32.mrb[0].mxu0
  %v3192 = vadd.f32 %v346, %v3191
  %3193 = vdwg.mxu0
  %3194 = vmatprep.subr.mxu0 %v3092
  %3195 = vmatpush1.msra.mxu0 %v3091
  %3196 = vmatprep.subr.mxu0 %v3094
  %3197 = vmatpush1.msra.mxu0 %v3093
  %3198 = vmatprep.subr.mxu0 %v3096
  %3199 = vmatpush1.msra.mxu0 %v3095
  %3200 = vmatprep.subr.mxu0 %v3098
  %3201 = vmatpush1.msra.mxu0 %v3097
  %3202 = vmatprep.subr.mxu0 %v3100
  %3203 = vmatpush1.msra.mxu0 %v3099
  %3204 = vmatprep.subr.mxu0 %v3102
  %3205 = vmatpush1.msra.mxu0 %v3101
  %3206 = vmatprep.subr.mxu0 %v3104
  %3207 = vmatpush1.msra.mxu0 %v3103
  %3208 = vmatprep.subr.mxu0 %v3106
  %3209 = vmatpush1.msra.mxu0 %v3105
  %3210 = vmatprep.subr.mxu0 %v3108
  %3211 = vmatpush1.msra.mxu0 %v3107
  %3212 = vmatprep.subr.mxu0 %v3110
  %3213 = vmatpush1.msra.mxu0 %v3109
  %3214 = vmatprep.subr.mxu0 %v3112
  %3215 = vmatpush1.msra.mxu0 %v3111
  %3216 = vmatprep.subr.mxu0 %v3114
  %3217 = vmatpush1.msra.mxu0 %v3113
  %3218 = vmatprep.subr.mxu0 %v3116
  %3219 = vmatpush1.msra.mxu0 %v3115
  %3220 = vmatprep.subr.mxu0 %v3118
  %3221 = vmatpush1.msra.mxu0 %v3117
  %3222 = vmatprep.subr.mxu0 %v3120
  %3223 = vmatpush1.msra.mxu0 %v3119
  %3224 = vmatprep.subr.mxu0 %v3122
  %3225 = vmatpush1.msra.mxu0 %v3121
  %3226 = vmatprep.subr.mxu0 0.0
  %3227 = vmatpush1.msra.mxu0 0.0
  %3228 = vmatprep.subr.mxu0 0.0
  %3229 = vmatpush1.msra.mxu0 0.0
  %3230 = vmatprep.subr.mxu0 0.0
  %3231 = vmatpush1.msra.mxu0 0.0
  %3232 = vmatprep.subr.mxu0 0.0
  %3233 = vmatpush1.msra.mxu0 0.0
  %3234 = vmatprep.subr.mxu0 0.0
  %3235 = vmatpush1.msra.mxu0 0.0
  %3236 = vmatprep.subr.mxu0 0.0
  %3237 = vmatpush1.msra.mxu0 0.0
  %3238 = vmatprep.subr.mxu0 0.0
  %3239 = vmatpush1.msra.mxu0 0.0
  %3240 = vmatprep.subr.mxu0 0.0
  %3241 = vmatpush1.msra.mxu0 0.0
  %3242 = vmatprep.subr.mxu0 0.0
  %3243 = vmatpush1.msra.mxu0 0.0
  %3244 = vmatprep.subr.mxu0 0.0
  %3245 = vmatpush1.msra.mxu0 0.0
  %3246 = vmatprep.subr.mxu0 0.0
  %3247 = vmatpush1.msra.mxu0 0.0
  %3248 = vmatprep.subr.mxu0 0.0
  %3249 = vmatpush1.msra.mxu0 0.0
  %3250 = vmatprep.subr.mxu0 0.0
  %3251 = vmatpush1.msra.mxu0 0.0
  %3252 = vmatprep.subr.mxu0 0.0
  %3253 = vmatpush1.msra.mxu0 0.0
  %3254 = vmatprep.subr.mxu0 0.0
  %3255 = vmatpush1.msra.mxu0 0.0
  %3256 = vmatprep.subr.mxu0 0.0
  %3257 = vmatpush1.msra.mxu0 0.0
  %3258 = vmatprep.mubr.f32.mxu0 0.0
  %3259 = vmatmul.mubr.f32.gmra.mrb[0].mxu0 %v238
  %v3260 = vpop.f32.mrb[0].mxu0
  %v3261 = vadd.f32 %v3190, %v3260
  %v3262 = vpop.f32.mrb[0].mxu0
  %v3263 = vadd.f32 %v3192, %v3262
  %3264 = vdwg.mxu0
  %v3267 = vcombine.low %v3261, %v3263
  %v3269 = vunpack.c.l.s4 1983009808
  %v3270 = vunpack.c.0.s8 %v3269
  %v3271 = vlaneseq
  %v3272 = vshrl.u32 %v3271, 7
  %v3273 = vsub.s32 %v3270, %v3272
  %v3274 = vrot.slane %v3267, %v3273
  %s3276 = scalar_lea.vmem %s7, 44
  %3277 = vst.msk [vmem:[%s3276] sm:$0xf] %vm504, %v3274
  %s3278 = scalar_lea.vmem %s3, 9216
  %v3279 = vld [vmem:[%s3278] sm:$0xff]
  %v3280 = vld [vmem:[%s3278 + $0x8] sm:$0xff]
  %v3281 = vld [vmem:[%s3278 + $0x10] sm:$0xff]
  %v3282 = vld [vmem:[%s3278 + $0x18] sm:$0xff]
  %v3283 = vld [vmem:[%s3278 + $0x20] sm:$0xff]
  %v3284 = vld [vmem:[%s3278 + $0x28] sm:$0xff]
  %v3285 = vld [vmem:[%s3278 + $0x30] sm:$0xff]
  %v3286 = vld [vmem:[%s3278 + $0x38] sm:$0xff]
  %v3287 = vld [vmem:[%s3278 + $0x40] sm:$0xff]
  %v3288 = vld [vmem:[%s3278 + $0x48] sm:$0xff]
  %v3289 = vld [vmem:[%s3278 + $0x50] sm:$0xff]
  %v3290 = vld [vmem:[%s3278 + $0x58] sm:$0xff]
  %v3291 = vld [vmem:[%s3278 + $0x60] sm:$0xff]
  %v3292 = vld [vmem:[%s3278 + $0x68] sm:$0xff]
  %v3293 = vld [vmem:[%s3278 + $0x70] sm:$0xff]
  %v3294 = vld [vmem:[%s3278 + $0x78] sm:$0xff]
  %v3295 = vld [vmem:[%s3278 + $0x80] sm:$0xff]
  %v3296 = vld [vmem:[%s3278 + $0x88] sm:$0xff]
  %v3297 = vld [vmem:[%s3278 + $0x90] sm:$0xff]
  %v3298 = vld [vmem:[%s3278 + $0x98] sm:$0xff]
  %v3299 = vld [vmem:[%s3278 + $0xa0] sm:$0xff]
  %v3300 = vld [vmem:[%s3278 + $0xa8] sm:$0xff]
  %v3301 = vld [vmem:[%s3278 + $0xb0] sm:$0xff]
  %v3302 = vld [vmem:[%s3278 + $0xb8] sm:$0xff]
  %v3303 = vld [vmem:[%s3278 + $0xc0] sm:$0xff]
  %v3304 = vld [vmem:[%s3278 + $0xc8] sm:$0xff]
  %v3305 = vld [vmem:[%s3278 + $0xd0] sm:$0xff]
  %v3306 = vld [vmem:[%s3278 + $0xd8] sm:$0xff]
  %v3307 = vld [vmem:[%s3278 + $0xe0] sm:$0xff]
  %v3308 = vld [vmem:[%s3278 + $0xe8] sm:$0xff]
  %v3309 = vld [vmem:[%s3278 + $0xf0] sm:$0xff]
  %v3310 = vld [vmem:[%s3278 + $0xf8] sm:$0xff]
  %v3311 = vld [vmem:[%s3278 + $0x100] sm:$0xff]
  %v3312 = vld [vmem:[%s3278 + $0x108] sm:$0xff]
  %v3313 = vld [vmem:[%s3278 + $0x110] sm:$0xff]
  %v3314 = vld [vmem:[%s3278 + $0x118] sm:$0xff]
  %v3315 = vld [vmem:[%s3278 + $0x120] sm:$0xff]
  %v3316 = vld [vmem:[%s3278 + $0x128] sm:$0xff]
  %v3317 = vld [vmem:[%s3278 + $0x130] sm:$0xff]
  %v3318 = vld [vmem:[%s3278 + $0x138] sm:$0xff]
  %v3319 = vld [vmem:[%s3278 + $0x140] sm:$0xff]
  %v3320 = vld [vmem:[%s3278 + $0x148] sm:$0xff]
  %v3321 = vld [vmem:[%s3278 + $0x150] sm:$0xff]
  %v3322 = vld [vmem:[%s3278 + $0x158] sm:$0xff]
  %v3323 = vld [vmem:[%s3278 + $0x160] sm:$0xff]
  %v3324 = vld [vmem:[%s3278 + $0x168] sm:$0xff]
  %v3325 = vld [vmem:[%s3278 + $0x170] sm:$0xff]
  %v3326 = vld [vmem:[%s3278 + $0x178] sm:$0xff]
  %v3327 = vld [vmem:[%s3278 + $0x180] sm:$0xff]
  %v3328 = vld [vmem:[%s3278 + $0x188] sm:$0xff]
  %v3329 = vld [vmem:[%s3278 + $0x190] sm:$0xff]
  %v3330 = vld [vmem:[%s3278 + $0x198] sm:$0xff]
  %v3331 = vld [vmem:[%s3278 + $0x1a0] sm:$0xff]
  %v3332 = vld [vmem:[%s3278 + $0x1a8] sm:$0xff]
  %v3333 = vld [vmem:[%s3278 + $0x1b0] sm:$0xff]
  %v3334 = vld [vmem:[%s3278 + $0x1b8] sm:$0xff]
  %v3335 = vld [vmem:[%s3278 + $0x1c0] sm:$0xff]
  %v3336 = vld [vmem:[%s3278 + $0x1c8] sm:$0xff]
  %v3337 = vld [vmem:[%s3278 + $0x1d0] sm:$0xff]
  %v3338 = vld [vmem:[%s3278 + $0x1d8] sm:$0xff]
  %v3339 = vld [vmem:[%s3278 + $0x1e0] sm:$0xff]
  %v3340 = vld [vmem:[%s3278 + $0x1e8] sm:$0xff]
  %v3341 = vld [vmem:[%s3278 + $0x1f0] sm:$0xff]
  %v3342 = vld [vmem:[%s3278 + $0x1f8] sm:$0xff]
  %v3343 = vld [vmem:[%s3278 + $0x200] sm:$0xff]
  %v3344 = vld [vmem:[%s3278 + $0x208] sm:$0xff]
  %v3345 = vld [vmem:[%s3278 + $0x210] sm:$0xff]
  %v3346 = vld [vmem:[%s3278 + $0x218] sm:$0xff]
  %v3347 = vld [vmem:[%s3278 + $0x220] sm:$0xff]
  %v3348 = vld [vmem:[%s3278 + $0x228] sm:$0xff]
  %v3349 = vld [vmem:[%s3278 + $0x230] sm:$0xff]
  %v3350 = vld [vmem:[%s3278 + $0x238] sm:$0xff]
  %v3351 = vld [vmem:[%s3278 + $0x240] sm:$0xff]
  %v3352 = vld [vmem:[%s3278 + $0x248] sm:$0xff]
  %v3353 = vld [vmem:[%s3278 + $0x250] sm:$0xff]
  %v3354 = vld [vmem:[%s3278 + $0x258] sm:$0xff]
  %v3355 = vld [vmem:[%s3278 + $0x260] sm:$0xff]
  %v3356 = vld [vmem:[%s3278 + $0x268] sm:$0xff]
  %v3357 = vld [vmem:[%s3278 + $0x270] sm:$0xff]
  %v3358 = vld [vmem:[%s3278 + $0x278] sm:$0xff]
  %v3359 = vld [vmem:[%s3278 + $0x280] sm:$0xff]
  %v3360 = vld [vmem:[%s3278 + $0x288] sm:$0xff]
  %v3361 = vld [vmem:[%s3278 + $0x290] sm:$0xff]
  %v3362 = vld [vmem:[%s3278 + $0x298] sm:$0xff]
  %v3363 = vld [vmem:[%s3278 + $0x2a0] sm:$0xff]
  %v3364 = vld [vmem:[%s3278 + $0x2a8] sm:$0xff]
  %v3365 = vld [vmem:[%s3278 + $0x2b0] sm:$0xff]
  %v3366 = vld [vmem:[%s3278 + $0x2b8] sm:$0xff]
  %v3367 = vld [vmem:[%s3278 + $0x2c0] sm:$0xff]
  %v3368 = vld [vmem:[%s3278 + $0x2c8] sm:$0xff]
  %v3369 = vld [vmem:[%s3278 + $0x2d0] sm:$0xff]
  %v3370 = vld [vmem:[%s3278 + $0x2d8] sm:$0xff]
  %v3371 = vld [vmem:[%s3278 + $0x2e0] sm:$0xff]
  %v3372 = vld [vmem:[%s3278 + $0x2e8] sm:$0xff]
  %v3373 = vld [vmem:[%s3278 + $0x2f0] sm:$0xff]
  %v3374 = vld [vmem:[%s3278 + $0x2f8] sm:$0xff]
  %3375 = vmatprep.subr.mxu0 %v3280
  %3376 = vmatpush1.msra.mxu0 %v3279
  %3377 = vmatprep.subr.mxu0 %v3282
  %3378 = vmatpush1.msra.mxu0 %v3281
  %3379 = vmatprep.subr.mxu0 %v3284
  %3380 = vmatpush1.msra.mxu0 %v3283
  %3381 = vmatprep.subr.mxu0 %v3286
  %3382 = vmatpush1.msra.mxu0 %v3285
  %3383 = vmatprep.subr.mxu0 %v3288
  %3384 = vmatpush1.msra.mxu0 %v3287
  %3385 = vmatprep.subr.mxu0 %v3290
  %3386 = vmatpush1.msra.mxu0 %v3289
  %3387 = vmatprep.subr.mxu0 %v3292
  %3388 = vmatpush1.msra.mxu0 %v3291
  %3389 = vmatprep.subr.mxu0 %v3294
  %3390 = vmatpush1.msra.mxu0 %v3293
  %3391 = vmatprep.subr.mxu0 %v3296
  %3392 = vmatpush1.msra.mxu0 %v3295
  %3393 = vmatprep.subr.mxu0 %v3298
  %3394 = vmatpush1.msra.mxu0 %v3297
  %3395 = vmatprep.subr.mxu0 %v3300
  %3396 = vmatpush1.msra.mxu0 %v3299
  %3397 = vmatprep.subr.mxu0 %v3302
  %3398 = vmatpush1.msra.mxu0 %v3301
  %3399 = vmatprep.subr.mxu0 %v3304
  %3400 = vmatpush1.msra.mxu0 %v3303
  %3401 = vmatprep.subr.mxu0 %v3306
  %3402 = vmatpush1.msra.mxu0 %v3305
  %3403 = vmatprep.subr.mxu0 %v3308
  %3404 = vmatpush1.msra.mxu0 %v3307
  %3405 = vmatprep.subr.mxu0 %v3310
  %3406 = vmatpush1.msra.mxu0 %v3309
  %3407 = vmatprep.subr.mxu0 %v3312
  %3408 = vmatpush1.msra.mxu0 %v3311
  %3409 = vmatprep.subr.mxu0 %v3314
  %3410 = vmatpush1.msra.mxu0 %v3313
  %3411 = vmatprep.subr.mxu0 %v3316
  %3412 = vmatpush1.msra.mxu0 %v3315
  %3413 = vmatprep.subr.mxu0 %v3318
  %3414 = vmatpush1.msra.mxu0 %v3317
  %3415 = vmatprep.subr.mxu0 %v3320
  %3416 = vmatpush1.msra.mxu0 %v3319
  %3417 = vmatprep.subr.mxu0 %v3322
  %3418 = vmatpush1.msra.mxu0 %v3321
  %3419 = vmatprep.subr.mxu0 %v3324
  %3420 = vmatpush1.msra.mxu0 %v3323
  %3421 = vmatprep.subr.mxu0 %v3326
  %3422 = vmatpush1.msra.mxu0 %v3325
  %3423 = vmatprep.subr.mxu0 %v3328
  %3424 = vmatpush1.msra.mxu0 %v3327
  %3425 = vmatprep.subr.mxu0 %v3330
  %3426 = vmatpush1.msra.mxu0 %v3329
  %3427 = vmatprep.subr.mxu0 %v3332
  %3428 = vmatpush1.msra.mxu0 %v3331
  %3429 = vmatprep.subr.mxu0 %v3334
  %3430 = vmatpush1.msra.mxu0 %v3333
  %3431 = vmatprep.subr.mxu0 %v3336
  %3432 = vmatpush1.msra.mxu0 %v3335
  %3433 = vmatprep.subr.mxu0 %v3338
  %3434 = vmatpush1.msra.mxu0 %v3337
  %3435 = vmatprep.subr.mxu0 %v3340
  %3436 = vmatpush1.msra.mxu0 %v3339
  %3437 = vmatprep.subr.mxu0 %v3342
  %3438 = vmatpush1.msra.mxu0 %v3341
  %3439 = vmatprep.mubr.f32.mxu0 %v169
  %3440 = vmatmul.mubr.f32.gmra.mrb[0].mxu0 %v167
  %v3441 = vpop.f32.mrb[0].mxu0
  %v3442 = vadd.f32 %v342, %v3441
  %v3443 = vpop.f32.mrb[0].mxu0
  %v3444 = vadd.f32 %v346, %v3443
  %3445 = vdwg.mxu0
  %3446 = vmatprep.subr.mxu0 %v3344
  %3447 = vmatpush1.msra.mxu0 %v3343
  %3448 = vmatprep.subr.mxu0 %v3346
  %3449 = vmatpush1.msra.mxu0 %v3345
  %3450 = vmatprep.subr.mxu0 %v3348
  %3451 = vmatpush1.msra.mxu0 %v3347
  %3452 = vmatprep.subr.mxu0 %v3350
  %3453 = vmatpush1.msra.mxu0 %v3349
  %3454 = vmatprep.subr.mxu0 %v3352
  %3455 = vmatpush1.msra.mxu0 %v3351
  %3456 = vmatprep.subr.mxu0 %v3354
  %3457 = vmatpush1.msra.mxu0 %v3353
  %3458 = vmatprep.subr.mxu0 %v3356
  %3459 = vmatpush1.msra.mxu0 %v3355
  %3460 = vmatprep.subr.mxu0 %v3358
  %3461 = vmatpush1.msra.mxu0 %v3357
  %3462 = vmatprep.subr.mxu0 %v3360
  %3463 = vmatpush1.msra.mxu0 %v3359
  %3464 = vmatprep.subr.mxu0 %v3362
  %3465 = vmatpush1.msra.mxu0 %v3361
  %3466 = vmatprep.subr.mxu0 %v3364
  %3467 = vmatpush1.msra.mxu0 %v3363
  %3468 = vmatprep.subr.mxu0 %v3366
  %3469 = vmatpush1.msra.mxu0 %v3365
  %3470 = vmatprep.subr.mxu0 %v3368
  %3471 = vmatpush1.msra.mxu0 %v3367
  %3472 = vmatprep.subr.mxu0 %v3370
  %3473 = vmatpush1.msra.mxu0 %v3369
  %3474 = vmatprep.subr.mxu0 %v3372
  %3475 = vmatpush1.msra.mxu0 %v3371
  %3476 = vmatprep.subr.mxu0 %v3374
  %3477 = vmatpush1.msra.mxu0 %v3373
  %3478 = vmatprep.subr.mxu0 0.0
  %3479 = vmatpush1.msra.mxu0 0.0
  %3480 = vmatprep.subr.mxu0 0.0
  %3481 = vmatpush1.msra.mxu0 0.0
  %3482 = vmatprep.subr.mxu0 0.0
  %3483 = vmatpush1.msra.mxu0 0.0
  %3484 = vmatprep.subr.mxu0 0.0
  %3485 = vmatpush1.msra.mxu0 0.0
  %3486 = vmatprep.subr.mxu0 0.0
  %3487 = vmatpush1.msra.mxu0 0.0
  %3488 = vmatprep.subr.mxu0 0.0
  %3489 = vmatpush1.msra.mxu0 0.0
  %3490 = vmatprep.subr.mxu0 0.0
  %3491 = vmatpush1.msra.mxu0 0.0
  %3492 = vmatprep.subr.mxu0 0.0
  %3493 = vmatpush1.msra.mxu0 0.0
  %3494 = vmatprep.subr.mxu0 0.0
  %3495 = vmatpush1.msra.mxu0 0.0
  %3496 = vmatprep.subr.mxu0 0.0
  %3497 = vmatpush1.msra.mxu0 0.0
  %3498 = vmatprep.subr.mxu0 0.0
  %3499 = vmatpush1.msra.mxu0 0.0
  %3500 = vmatprep.subr.mxu0 0.0
  %3501 = vmatpush1.msra.mxu0 0.0
  %3502 = vmatprep.subr.mxu0 0.0
  %3503 = vmatpush1.msra.mxu0 0.0
  %3504 = vmatprep.subr.mxu0 0.0
  %3505 = vmatpush1.msra.mxu0 0.0
  %3506 = vmatprep.subr.mxu0 0.0
  %3507 = vmatpush1.msra.mxu0 0.0
  %3508 = vmatprep.subr.mxu0 0.0
  %3509 = vmatpush1.msra.mxu0 0.0
  %3510 = vmatprep.mubr.f32.mxu0 0.0
  %3511 = vmatmul.mubr.f32.gmra.mrb[0].mxu0 %v238
  %v3512 = vpop.f32.mrb[0].mxu0
  %v3513 = vadd.f32 %v3442, %v3512
  %v3514 = vpop.f32.mrb[0].mxu0
  %v3515 = vadd.f32 %v3444, %v3514
  %3516 = vdwg.mxu0
  %v3519 = vcombine.low %v3513, %v3515
  %v3521 = vunpack.c.l.s4 1983009808
  %v3522 = vunpack.c.0.s8 %v3521
  %v3523 = vlaneseq
  %v3524 = vshrl.u32 %v3523, 7
  %v3525 = vsub.s32 %v3522, %v3524
  %v3526 = vrot.slane %v3519, %v3525
  %s3528 = scalar_lea.vmem %s7, 48
  %3529 = vst.msk [vmem:[%s3528] sm:$0xf] %vm504, %v3526
  %s3530 = scalar_lea.vmem %s3, 9984
  %v3531 = vld [vmem:[%s3530] sm:$0xff]
  %v3532 = vld [vmem:[%s3530 + $0x8] sm:$0xff]
  %v3533 = vld [vmem:[%s3530 + $0x10] sm:$0xff]
  %v3534 = vld [vmem:[%s3530 + $0x18] sm:$0xff]
  %v3535 = vld [vmem:[%s3530 + $0x20] sm:$0xff]
  %v3536 = vld [vmem:[%s3530 + $0x28] sm:$0xff]
  %v3537 = vld [vmem:[%s3530 + $0x30] sm:$0xff]
  %v3538 = vld [vmem:[%s3530 + $0x38] sm:$0xff]
  %v3539 = vld [vmem:[%s3530 + $0x40] sm:$0xff]
  %v3540 = vld [vmem:[%s3530 + $0x48] sm:$0xff]
  %v3541 = vld [vmem:[%s3530 + $0x50] sm:$0xff]
  %v3542 = vld [vmem:[%s3530 + $0x58] sm:$0xff]
  %v3543 = vld [vmem:[%s3530 + $0x60] sm:$0xff]
  %v3544 = vld [vmem:[%s3530 + $0x68] sm:$0xff]
  %v3545 = vld [vmem:[%s3530 + $0x70] sm:$0xff]
  %v3546 = vld [vmem:[%s3530 + $0x78] sm:$0xff]
  %v3547 = vld [vmem:[%s3530 + $0x80] sm:$0xff]
  %v3548 = vld [vmem:[%s3530 + $0x88] sm:$0xff]
  %v3549 = vld [vmem:[%s3530 + $0x90] sm:$0xff]
  %v3550 = vld [vmem:[%s3530 + $0x98] sm:$0xff]
  %v3551 = vld [vmem:[%s3530 + $0xa0] sm:$0xff]
  %v3552 = vld [vmem:[%s3530 + $0xa8] sm:$0xff]
  %v3553 = vld [vmem:[%s3530 + $0xb0] sm:$0xff]
  %v3554 = vld [vmem:[%s3530 + $0xb8] sm:$0xff]
  %v3555 = vld [vmem:[%s3530 + $0xc0] sm:$0xff]
  %v3556 = vld [vmem:[%s3530 + $0xc8] sm:$0xff]
  %v3557 = vld [vmem:[%s3530 + $0xd0] sm:$0xff]
  %v3558 = vld [vmem:[%s3530 + $0xd8] sm:$0xff]
  %v3559 = vld [vmem:[%s3530 + $0xe0] sm:$0xff]
  %v3560 = vld [vmem:[%s3530 + $0xe8] sm:$0xff]
  %v3561 = vld [vmem:[%s3530 + $0xf0] sm:$0xff]
  %v3562 = vld [vmem:[%s3530 + $0xf8] sm:$0xff]
  %v3563 = vld [vmem:[%s3530 + $0x100] sm:$0xff]
  %v3564 = vld [vmem:[%s3530 + $0x108] sm:$0xff]
  %v3565 = vld [vmem:[%s3530 + $0x110] sm:$0xff]
  %v3566 = vld [vmem:[%s3530 + $0x118] sm:$0xff]
  %v3567 = vld [vmem:[%s3530 + $0x120] sm:$0xff]
  %v3568 = vld [vmem:[%s3530 + $0x128] sm:$0xff]
  %v3569 = vld [vmem:[%s3530 + $0x130] sm:$0xff]
  %v3570 = vld [vmem:[%s3530 + $0x138] sm:$0xff]
  %v3571 = vld [vmem:[%s3530 + $0x140] sm:$0xff]
  %v3572 = vld [vmem:[%s3530 + $0x148] sm:$0xff]
  %v3573 = vld [vmem:[%s3530 + $0x150] sm:$0xff]
  %v3574 = vld [vmem:[%s3530 + $0x158] sm:$0xff]
  %v3575 = vld [vmem:[%s3530 + $0x160] sm:$0xff]
  %v3576 = vld [vmem:[%s3530 + $0x168] sm:$0xff]
  %v3577 = vld [vmem:[%s3530 + $0x170] sm:$0xff]
  %v3578 = vld [vmem:[%s3530 + $0x178] sm:$0xff]
  %v3579 = vld [vmem:[%s3530 + $0x180] sm:$0xff]
  %v3580 = vld [vmem:[%s3530 + $0x188] sm:$0xff]
  %v3581 = vld [vmem:[%s3530 + $0x190] sm:$0xff]
  %v3582 = vld [vmem:[%s3530 + $0x198] sm:$0xff]
  %v3583 = vld [vmem:[%s3530 + $0x1a0] sm:$0xff]
  %v3584 = vld [vmem:[%s3530 + $0x1a8] sm:$0xff]
  %v3585 = vld [vmem:[%s3530 + $0x1b0] sm:$0xff]
  %v3586 = vld [vmem:[%s3530 + $0x1b8] sm:$0xff]
  %v3587 = vld [vmem:[%s3530 + $0x1c0] sm:$0xff]
  %v3588 = vld [vmem:[%s3530 + $0x1c8] sm:$0xff]
  %v3589 = vld [vmem:[%s3530 + $0x1d0] sm:$0xff]
  %v3590 = vld [vmem:[%s3530 + $0x1d8] sm:$0xff]
  %v3591 = vld [vmem:[%s3530 + $0x1e0] sm:$0xff]
  %v3592 = vld [vmem:[%s3530 + $0x1e8] sm:$0xff]
  %v3593 = vld [vmem:[%s3530 + $0x1f0] sm:$0xff]
  %v3594 = vld [vmem:[%s3530 + $0x1f8] sm:$0xff]
  %v3595 = vld [vmem:[%s3530 + $0x200] sm:$0xff]
  %v3596 = vld [vmem:[%s3530 + $0x208] sm:$0xff]
  %v3597 = vld [vmem:[%s3530 + $0x210] sm:$0xff]
  %v3598 = vld [vmem:[%s3530 + $0x218] sm:$0xff]
  %v3599 = vld [vmem:[%s3530 + $0x220] sm:$0xff]
  %v3600 = vld [vmem:[%s3530 + $0x228] sm:$0xff]
  %v3601 = vld [vmem:[%s3530 + $0x230] sm:$0xff]
  %v3602 = vld [vmem:[%s3530 + $0x238] sm:$0xff]
  %v3603 = vld [vmem:[%s3530 + $0x240] sm:$0xff]
  %v3604 = vld [vmem:[%s3530 + $0x248] sm:$0xff]
  %v3605 = vld [vmem:[%s3530 + $0x250] sm:$0xff]
  %v3606 = vld [vmem:[%s3530 + $0x258] sm:$0xff]
  %v3607 = vld [vmem:[%s3530 + $0x260] sm:$0xff]
  %v3608 = vld [vmem:[%s3530 + $0x268] sm:$0xff]
  %v3609 = vld [vmem:[%s3530 + $0x270] sm:$0xff]
  %v3610 = vld [vmem:[%s3530 + $0x278] sm:$0xff]
  %v3611 = vld [vmem:[%s3530 + $0x280] sm:$0xff]
  %v3612 = vld [vmem:[%s3530 + $0x288] sm:$0xff]
  %v3613 = vld [vmem:[%s3530 + $0x290] sm:$0xff]
  %v3614 = vld [vmem:[%s3530 + $0x298] sm:$0xff]
  %v3615 = vld [vmem:[%s3530 + $0x2a0] sm:$0xff]
  %v3616 = vld [vmem:[%s3530 + $0x2a8] sm:$0xff]
  %v3617 = vld [vmem:[%s3530 + $0x2b0] sm:$0xff]
  %v3618 = vld [vmem:[%s3530 + $0x2b8] sm:$0xff]
  %v3619 = vld [vmem:[%s3530 + $0x2c0] sm:$0xff]
  %v3620 = vld [vmem:[%s3530 + $0x2c8] sm:$0xff]
  %v3621 = vld [vmem:[%s3530 + $0x2d0] sm:$0xff]
  %v3622 = vld [vmem:[%s3530 + $0x2d8] sm:$0xff]
  %v3623 = vld [vmem:[%s3530 + $0x2e0] sm:$0xff]
  %v3624 = vld [vmem:[%s3530 + $0x2e8] sm:$0xff]
  %v3625 = vld [vmem:[%s3530 + $0x2f0] sm:$0xff]
  %v3626 = vld [vmem:[%s3530 + $0x2f8] sm:$0xff]
  %3627 = vmatprep.subr.mxu0 %v3532
  %3628 = vmatpush1.msra.mxu0 %v3531
  %3629 = vmatprep.subr.mxu0 %v3534
  %3630 = vmatpush1.msra.mxu0 %v3533
  %3631 = vmatprep.subr.mxu0 %v3536
  %3632 = vmatpush1.msra.mxu0 %v3535
  %3633 = vmatprep.subr.mxu0 %v3538
  %3634 = vmatpush1.msra.mxu0 %v3537
  %3635 = vmatprep.subr.mxu0 %v3540
  %3636 = vmatpush1.msra.mxu0 %v3539
  %3637 = vmatprep.subr.mxu0 %v3542
  %3638 = vmatpush1.msra.mxu0 %v3541
  %3639 = vmatprep.subr.mxu0 %v3544
  %3640 = vmatpush1.msra.mxu0 %v3543
  %3641 = vmatprep.subr.mxu0 %v3546
  %3642 = vmatpush1.msra.mxu0 %v3545
  %3643 = vmatprep.subr.mxu0 %v3548
  %3644 = vmatpush1.msra.mxu0 %v3547
  %3645 = vmatprep.subr.mxu0 %v3550
  %3646 = vmatpush1.msra.mxu0 %v3549
  %3647 = vmatprep.subr.mxu0 %v3552
  %3648 = vmatpush1.msra.mxu0 %v3551
  %3649 = vmatprep.subr.mxu0 %v3554
  %3650 = vmatpush1.msra.mxu0 %v3553
  %3651 = vmatprep.subr.mxu0 %v3556
  %3652 = vmatpush1.msra.mxu0 %v3555
  %3653 = vmatprep.subr.mxu0 %v3558
  %3654 = vmatpush1.msra.mxu0 %v3557
  %3655 = vmatprep.subr.mxu0 %v3560
  %3656 = vmatpush1.msra.mxu0 %v3559
  %3657 = vmatprep.subr.mxu0 %v3562
  %3658 = vmatpush1.msra.mxu0 %v3561
  %3659 = vmatprep.subr.mxu0 %v3564
  %3660 = vmatpush1.msra.mxu0 %v3563
  %3661 = vmatprep.subr.mxu0 %v3566
  %3662 = vmatpush1.msra.mxu0 %v3565
  %3663 = vmatprep.subr.mxu0 %v3568
  %3664 = vmatpush1.msra.mxu0 %v3567
  %3665 = vmatprep.subr.mxu0 %v3570
  %3666 = vmatpush1.msra.mxu0 %v3569
  %3667 = vmatprep.subr.mxu0 %v3572
  %3668 = vmatpush1.msra.mxu0 %v3571
  %3669 = vmatprep.subr.mxu0 %v3574
  %3670 = vmatpush1.msra.mxu0 %v3573
  %3671 = vmatprep.subr.mxu0 %v3576
  %3672 = vmatpush1.msra.mxu0 %v3575
  %3673 = vmatprep.subr.mxu0 %v3578
  %3674 = vmatpush1.msra.mxu0 %v3577
  %3675 = vmatprep.subr.mxu0 %v3580
  %3676 = vmatpush1.msra.mxu0 %v3579
  %3677 = vmatprep.subr.mxu0 %v3582
  %3678 = vmatpush1.msra.mxu0 %v3581
  %3679 = vmatprep.subr.mxu0 %v3584
  %3680 = vmatpush1.msra.mxu0 %v3583
  %3681 = vmatprep.subr.mxu0 %v3586
  %3682 = vmatpush1.msra.mxu0 %v3585
  %3683 = vmatprep.subr.mxu0 %v3588
  %3684 = vmatpush1.msra.mxu0 %v3587
  %3685 = vmatprep.subr.mxu0 %v3590
  %3686 = vmatpush1.msra.mxu0 %v3589
  %3687 = vmatprep.subr.mxu0 %v3592
  %3688 = vmatpush1.msra.mxu0 %v3591
  %3689 = vmatprep.subr.mxu0 %v3594
  %3690 = vmatpush1.msra.mxu0 %v3593
  %3691 = vmatprep.mubr.f32.mxu0 %v169
  %3692 = vmatmul.mubr.f32.gmra.mrb[0].mxu0 %v167
  %v3693 = vpop.f32.mrb[0].mxu0
  %v3694 = vadd.f32 %v342, %v3693
  %v3695 = vpop.f32.mrb[0].mxu0
  %v3696 = vadd.f32 %v346, %v3695
  %3697 = vdwg.mxu0
  %3698 = vmatprep.subr.mxu0 %v3596
  %3699 = vmatpush1.msra.mxu0 %v3595
  %3700 = vmatprep.subr.mxu0 %v3598
  %3701 = vmatpush1.msra.mxu0 %v3597
  %3702 = vmatprep.subr.mxu0 %v3600
  %3703 = vmatpush1.msra.mxu0 %v3599
  %3704 = vmatprep.subr.mxu0 %v3602
  %3705 = vmatpush1.msra.mxu0 %v3601
  %3706 = vmatprep.subr.mxu0 %v3604
  %3707 = vmatpush1.msra.mxu0 %v3603
  %3708 = vmatprep.subr.mxu0 %v3606
  %3709 = vmatpush1.msra.mxu0 %v3605
  %3710 = vmatprep.subr.mxu0 %v3608
  %3711 = vmatpush1.msra.mxu0 %v3607
  %3712 = vmatprep.subr.mxu0 %v3610
  %3713 = vmatpush1.msra.mxu0 %v3609
  %3714 = vmatprep.subr.mxu0 %v3612
  %3715 = vmatpush1.msra.mxu0 %v3611
  %3716 = vmatprep.subr.mxu0 %v3614
  %3717 = vmatpush1.msra.mxu0 %v3613
  %3718 = vmatprep.subr.mxu0 %v3616
  %3719 = vmatpush1.msra.mxu0 %v3615
  %3720 = vmatprep.subr.mxu0 %v3618
  %3721 = vmatpush1.msra.mxu0 %v3617
  %3722 = vmatprep.subr.mxu0 %v3620
  %3723 = vmatpush1.msra.mxu0 %v3619
  %3724 = vmatprep.subr.mxu0 %v3622
  %3725 = vmatpush1.msra.mxu0 %v3621
  %3726 = vmatprep.subr.mxu0 %v3624
  %3727 = vmatpush1.msra.mxu0 %v3623
  %3728 = vmatprep.subr.mxu0 %v3626
  %3729 = vmatpush1.msra.mxu0 %v3625
  %3730 = vmatprep.subr.mxu0 0.0
  %3731 = vmatpush1.msra.mxu0 0.0
  %3732 = vmatprep.subr.mxu0 0.0
  %3733 = vmatpush1.msra.mxu0 0.0
  %3734 = vmatprep.subr.mxu0 0.0
  %3735 = vmatpush1.msra.mxu0 0.0
  %3736 = vmatprep.subr.mxu0 0.0
  %3737 = vmatpush1.msra.mxu0 0.0
  %3738 = vmatprep.subr.mxu0 0.0
  %3739 = vmatpush1.msra.mxu0 0.0
  %3740 = vmatprep.subr.mxu0 0.0
  %3741 = vmatpush1.msra.mxu0 0.0
  %3742 = vmatprep.subr.mxu0 0.0
  %3743 = vmatpush1.msra.mxu0 0.0
  %3744 = vmatprep.subr.mxu0 0.0
  %3745 = vmatpush1.msra.mxu0 0.0
  %3746 = vmatprep.subr.mxu0 0.0
  %3747 = vmatpush1.msra.mxu0 0.0
  %3748 = vmatprep.subr.mxu0 0.0
  %3749 = vmatpush1.msra.mxu0 0.0
  %3750 = vmatprep.subr.mxu0 0.0
  %3751 = vmatpush1.msra.mxu0 0.0
  %3752 = vmatprep.subr.mxu0 0.0
  %3753 = vmatpush1.msra.mxu0 0.0
  %3754 = vmatprep.subr.mxu0 0.0
  %3755 = vmatpush1.msra.mxu0 0.0
  %3756 = vmatprep.subr.mxu0 0.0
  %3757 = vmatpush1.msra.mxu0 0.0
  %3758 = vmatprep.subr.mxu0 0.0
  %3759 = vmatpush1.msra.mxu0 0.0
  %3760 = vmatprep.subr.mxu0 0.0
  %3761 = vmatpush1.msra.mxu0 0.0
  %3762 = vmatprep.mubr.f32.mxu0 0.0
  %3763 = vmatmul.mubr.f32.gmra.mrb[0].mxu0 %v238
  %v3764 = vpop.f32.mrb[0].mxu0
  %v3765 = vadd.f32 %v3694, %v3764
  %v3766 = vpop.f32.mrb[0].mxu0
  %v3767 = vadd.f32 %v3696, %v3766
  %3768 = vdwg.mxu0
  %v3771 = vcombine.low %v3765, %v3767
  %v3773 = vunpack.c.l.s4 1983009808
  %v3774 = vunpack.c.0.s8 %v3773
  %v3775 = vlaneseq
  %v3776 = vshrl.u32 %v3775, 7
  %v3777 = vsub.s32 %v3774, %v3776
  %v3778 = vrot.slane %v3771, %v3777
  %s3780 = scalar_lea.vmem %s7, 52
  %3781 = vst.msk [vmem:[%s3780] sm:$0xf] %vm504, %v3778
  %s3782 = scalar_lea.vmem %s3, 10752
  %v3783 = vld [vmem:[%s3782] sm:$0xff]
  %v3784 = vld [vmem:[%s3782 + $0x8] sm:$0xff]
  %v3785 = vld [vmem:[%s3782 + $0x10] sm:$0xff]
  %v3786 = vld [vmem:[%s3782 + $0x18] sm:$0xff]
  %v3787 = vld [vmem:[%s3782 + $0x20] sm:$0xff]
  %v3788 = vld [vmem:[%s3782 + $0x28] sm:$0xff]
  %v3789 = vld [vmem:[%s3782 + $0x30] sm:$0xff]
  %v3790 = vld [vmem:[%s3782 + $0x38] sm:$0xff]
  %v3791 = vld [vmem:[%s3782 + $0x40] sm:$0xff]
  %v3792 = vld [vmem:[%s3782 + $0x48] sm:$0xff]
  %v3793 = vld [vmem:[%s3782 + $0x50] sm:$0xff]
  %v3794 = vld [vmem:[%s3782 + $0x58] sm:$0xff]
  %v3795 = vld [vmem:[%s3782 + $0x60] sm:$0xff]
  %v3796 = vld [vmem:[%s3782 + $0x68] sm:$0xff]
  %v3797 = vld [vmem:[%s3782 + $0x70] sm:$0xff]
  %v3798 = vld [vmem:[%s3782 + $0x78] sm:$0xff]
  %v3799 = vld [vmem:[%s3782 + $0x80] sm:$0xff]
  %v3800 = vld [vmem:[%s3782 + $0x88] sm:$0xff]
  %v3801 = vld [vmem:[%s3782 + $0x90] sm:$0xff]
  %v3802 = vld [vmem:[%s3782 + $0x98] sm:$0xff]
  %v3803 = vld [vmem:[%s3782 + $0xa0] sm:$0xff]
  %v3804 = vld [vmem:[%s3782 + $0xa8] sm:$0xff]
  %v3805 = vld [vmem:[%s3782 + $0xb0] sm:$0xff]
  %v3806 = vld [vmem:[%s3782 + $0xb8] sm:$0xff]
  %v3807 = vld [vmem:[%s3782 + $0xc0] sm:$0xff]
  %v3808 = vld [vmem:[%s3782 + $0xc8] sm:$0xff]
  %v3809 = vld [vmem:[%s3782 + $0xd0] sm:$0xff]
  %v3810 = vld [vmem:[%s3782 + $0xd8] sm:$0xff]
  %v3811 = vld [vmem:[%s3782 + $0xe0] sm:$0xff]
  %v3812 = vld [vmem:[%s3782 + $0xe8] sm:$0xff]
  %v3813 = vld [vmem:[%s3782 + $0xf0] sm:$0xff]
  %v3814 = vld [vmem:[%s3782 + $0xf8] sm:$0xff]
  %v3815 = vld [vmem:[%s3782 + $0x100] sm:$0xff]
  %v3816 = vld [vmem:[%s3782 + $0x108] sm:$0xff]
  %v3817 = vld [vmem:[%s3782 + $0x110] sm:$0xff]
  %v3818 = vld [vmem:[%s3782 + $0x118] sm:$0xff]
  %v3819 = vld [vmem:[%s3782 + $0x120] sm:$0xff]
  %v3820 = vld [vmem:[%s3782 + $0x128] sm:$0xff]
  %v3821 = vld [vmem:[%s3782 + $0x130] sm:$0xff]
  %v3822 = vld [vmem:[%s3782 + $0x138] sm:$0xff]
  %v3823 = vld [vmem:[%s3782 + $0x140] sm:$0xff]
  %v3824 = vld [vmem:[%s3782 + $0x148] sm:$0xff]
  %v3825 = vld [vmem:[%s3782 + $0x150] sm:$0xff]
  %v3826 = vld [vmem:[%s3782 + $0x158] sm:$0xff]
  %v3827 = vld [vmem:[%s3782 + $0x160] sm:$0xff]
  %v3828 = vld [vmem:[%s3782 + $0x168] sm:$0xff]
  %v3829 = vld [vmem:[%s3782 + $0x170] sm:$0xff]
  %v3830 = vld [vmem:[%s3782 + $0x178] sm:$0xff]
  %v3831 = vld [vmem:[%s3782 + $0x180] sm:$0xff]
  %v3832 = vld [vmem:[%s3782 + $0x188] sm:$0xff]
  %v3833 = vld [vmem:[%s3782 + $0x190] sm:$0xff]
  %v3834 = vld [vmem:[%s3782 + $0x198] sm:$0xff]
  %v3835 = vld [vmem:[%s3782 + $0x1a0] sm:$0xff]
  %v3836 = vld [vmem:[%s3782 + $0x1a8] sm:$0xff]
  %v3837 = vld [vmem:[%s3782 + $0x1b0] sm:$0xff]
  %v3838 = vld [vmem:[%s3782 + $0x1b8] sm:$0xff]
  %v3839 = vld [vmem:[%s3782 + $0x1c0] sm:$0xff]
  %v3840 = vld [vmem:[%s3782 + $0x1c8] sm:$0xff]
  %v3841 = vld [vmem:[%s3782 + $0x1d0] sm:$0xff]
  %v3842 = vld [vmem:[%s3782 + $0x1d8] sm:$0xff]
  %v3843 = vld [vmem:[%s3782 + $0x1e0] sm:$0xff]
  %v3844 = vld [vmem:[%s3782 + $0x1e8] sm:$0xff]
  %v3845 = vld [vmem:[%s3782 + $0x1f0] sm:$0xff]
  %v3846 = vld [vmem:[%s3782 + $0x1f8] sm:$0xff]
  %v3847 = vld [vmem:[%s3782 + $0x200] sm:$0xff]
  %v3848 = vld [vmem:[%s3782 + $0x208] sm:$0xff]
  %v3849 = vld [vmem:[%s3782 + $0x210] sm:$0xff]
  %v3850 = vld [vmem:[%s3782 + $0x218] sm:$0xff]
  %v3851 = vld [vmem:[%s3782 + $0x220] sm:$0xff]
  %v3852 = vld [vmem:[%s3782 + $0x228] sm:$0xff]
  %v3853 = vld [vmem:[%s3782 + $0x230] sm:$0xff]
  %v3854 = vld [vmem:[%s3782 + $0x238] sm:$0xff]
  %v3855 = vld [vmem:[%s3782 + $0x240] sm:$0xff]
  %v3856 = vld [vmem:[%s3782 + $0x248] sm:$0xff]
  %v3857 = vld [vmem:[%s3782 + $0x250] sm:$0xff]
  %v3858 = vld [vmem:[%s3782 + $0x258] sm:$0xff]
  %v3859 = vld [vmem:[%s3782 + $0x260] sm:$0xff]
  %v3860 = vld [vmem:[%s3782 + $0x268] sm:$0xff]
  %v3861 = vld [vmem:[%s3782 + $0x270] sm:$0xff]
  %v3862 = vld [vmem:[%s3782 + $0x278] sm:$0xff]
  %v3863 = vld [vmem:[%s3782 + $0x280] sm:$0xff]
  %v3864 = vld [vmem:[%s3782 + $0x288] sm:$0xff]
  %v3865 = vld [vmem:[%s3782 + $0x290] sm:$0xff]
  %v3866 = vld [vmem:[%s3782 + $0x298] sm:$0xff]
  %v3867 = vld [vmem:[%s3782 + $0x2a0] sm:$0xff]
  %v3868 = vld [vmem:[%s3782 + $0x2a8] sm:$0xff]
  %v3869 = vld [vmem:[%s3782 + $0x2b0] sm:$0xff]
  %v3870 = vld [vmem:[%s3782 + $0x2b8] sm:$0xff]
  %v3871 = vld [vmem:[%s3782 + $0x2c0] sm:$0xff]
  %v3872 = vld [vmem:[%s3782 + $0x2c8] sm:$0xff]
  %v3873 = vld [vmem:[%s3782 + $0x2d0] sm:$0xff]
  %v3874 = vld [vmem:[%s3782 + $0x2d8] sm:$0xff]
  %v3875 = vld [vmem:[%s3782 + $0x2e0] sm:$0xff]
  %v3876 = vld [vmem:[%s3782 + $0x2e8] sm:$0xff]
  %v3877 = vld [vmem:[%s3782 + $0x2f0] sm:$0xff]
  %v3878 = vld [vmem:[%s3782 + $0x2f8] sm:$0xff]
  %3879 = vmatprep.subr.mxu0 %v3784
  %3880 = vmatpush1.msra.mxu0 %v3783
  %3881 = vmatprep.subr.mxu0 %v3786
  %3882 = vmatpush1.msra.mxu0 %v3785
  %3883 = vmatprep.subr.mxu0 %v3788
  %3884 = vmatpush1.msra.mxu0 %v3787
  %3885 = vmatprep.subr.mxu0 %v3790
  %3886 = vmatpush1.msra.mxu0 %v3789
  %3887 = vmatprep.subr.mxu0 %v3792
  %3888 = vmatpush1.msra.mxu0 %v3791
  %3889 = vmatprep.subr.mxu0 %v3794
  %3890 = vmatpush1.msra.mxu0 %v3793
  %3891 = vmatprep.subr.mxu0 %v3796
  %3892 = vmatpush1.msra.mxu0 %v3795
  %3893 = vmatprep.subr.mxu0 %v3798
  %3894 = vmatpush1.msra.mxu0 %v3797
  %3895 = vmatprep.subr.mxu0 %v3800
  %3896 = vmatpush1.msra.mxu0 %v3799
  %3897 = vmatprep.subr.mxu0 %v3802
  %3898 = vmatpush1.msra.mxu0 %v3801
  %3899 = vmatprep.subr.mxu0 %v3804
  %3900 = vmatpush1.msra.mxu0 %v3803
  %3901 = vmatprep.subr.mxu0 %v3806
  %3902 = vmatpush1.msra.mxu0 %v3805
  %3903 = vmatprep.subr.mxu0 %v3808
  %3904 = vmatpush1.msra.mxu0 %v3807
  %3905 = vmatprep.subr.mxu0 %v3810
  %3906 = vmatpush1.msra.mxu0 %v3809
  %3907 = vmatprep.subr.mxu0 %v3812
  %3908 = vmatpush1.msra.mxu0 %v3811
  %3909 = vmatprep.subr.mxu0 %v3814
  %3910 = vmatpush1.msra.mxu0 %v3813
  %3911 = vmatprep.subr.mxu0 %v3816
  %3912 = vmatpush1.msra.mxu0 %v3815
  %3913 = vmatprep.subr.mxu0 %v3818
  %3914 = vmatpush1.msra.mxu0 %v3817
  %3915 = vmatprep.subr.mxu0 %v3820
  %3916 = vmatpush1.msra.mxu0 %v3819
  %3917 = vmatprep.subr.mxu0 %v3822
  %3918 = vmatpush1.msra.mxu0 %v3821
  %3919 = vmatprep.subr.mxu0 %v3824
  %3920 = vmatpush1.msra.mxu0 %v3823
  %3921 = vmatprep.subr.mxu0 %v3826
  %3922 = vmatpush1.msra.mxu0 %v3825
  %3923 = vmatprep.subr.mxu0 %v3828
  %3924 = vmatpush1.msra.mxu0 %v3827
  %3925 = vmatprep.subr.mxu0 %v3830
  %3926 = vmatpush1.msra.mxu0 %v3829
  %3927 = vmatprep.subr.mxu0 %v3832
  %3928 = vmatpush1.msra.mxu0 %v3831
  %3929 = vmatprep.subr.mxu0 %v3834
  %3930 = vmatpush1.msra.mxu0 %v3833
  %3931 = vmatprep.subr.mxu0 %v3836
  %3932 = vmatpush1.msra.mxu0 %v3835
  %3933 = vmatprep.subr.mxu0 %v3838
  %3934 = vmatpush1.msra.mxu0 %v3837
  %3935 = vmatprep.subr.mxu0 %v3840
  %3936 = vmatpush1.msra.mxu0 %v3839
  %3937 = vmatprep.subr.mxu0 %v3842
  %3938 = vmatpush1.msra.mxu0 %v3841
  %3939 = vmatprep.subr.mxu0 %v3844
  %3940 = vmatpush1.msra.mxu0 %v3843
  %3941 = vmatprep.subr.mxu0 %v3846
  %3942 = vmatpush1.msra.mxu0 %v3845
  %3943 = vmatprep.mubr.f32.mxu0 %v169
  %3944 = vmatmul.mubr.f32.gmra.mrb[0].mxu0 %v167
  %v3945 = vpop.f32.mrb[0].mxu0
  %v3946 = vadd.f32 %v342, %v3945
  %v3947 = vpop.f32.mrb[0].mxu0
  %v3948 = vadd.f32 %v346, %v3947
  %3949 = vdwg.mxu0
  %3950 = vmatprep.subr.mxu0 %v3848
  %3951 = vmatpush1.msra.mxu0 %v3847
  %3952 = vmatprep.subr.mxu0 %v3850
  %3953 = vmatpush1.msra.mxu0 %v3849
  %3954 = vmatprep.subr.mxu0 %v3852
  %3955 = vmatpush1.msra.mxu0 %v3851
  %3956 = vmatprep.subr.mxu0 %v3854
  %3957 = vmatpush1.msra.mxu0 %v3853
  %3958 = vmatprep.subr.mxu0 %v3856
  %3959 = vmatpush1.msra.mxu0 %v3855
  %3960 = vmatprep.subr.mxu0 %v3858
  %3961 = vmatpush1.msra.mxu0 %v3857
  %3962 = vmatprep.subr.mxu0 %v3860
  %3963 = vmatpush1.msra.mxu0 %v3859
  %3964 = vmatprep.subr.mxu0 %v3862
  %3965 = vmatpush1.msra.mxu0 %v3861
  %3966 = vmatprep.subr.mxu0 %v3864
  %3967 = vmatpush1.msra.mxu0 %v3863
  %3968 = vmatprep.subr.mxu0 %v3866
  %3969 = vmatpush1.msra.mxu0 %v3865
  %3970 = vmatprep.subr.mxu0 %v3868
  %3971 = vmatpush1.msra.mxu0 %v3867
  %3972 = vmatprep.subr.mxu0 %v3870
  %3973 = vmatpush1.msra.mxu0 %v3869
  %3974 = vmatprep.subr.mxu0 %v3872
  %3975 = vmatpush1.msra.mxu0 %v3871
  %3976 = vmatprep.subr.mxu0 %v3874
  %3977 = vmatpush1.msra.mxu0 %v3873
  %3978 = vmatprep.subr.mxu0 %v3876
  %3979 = vmatpush1.msra.mxu0 %v3875
  %3980 = vmatprep.subr.mxu0 %v3878
  %3981 = vmatpush1.msra.mxu0 %v3877
  %3982 = vmatprep.subr.mxu0 0.0
  %3983 = vmatpush1.msra.mxu0 0.0
  %3984 = vmatprep.subr.mxu0 0.0
  %3985 = vmatpush1.msra.mxu0 0.0
  %3986 = vmatprep.subr.mxu0 0.0
  %3987 = vmatpush1.msra.mxu0 0.0
  %3988 = vmatprep.subr.mxu0 0.0
  %3989 = vmatpush1.msra.mxu0 0.0
  %3990 = vmatprep.subr.mxu0 0.0
  %3991 = vmatpush1.msra.mxu0 0.0
  %3992 = vmatprep.subr.mxu0 0.0
  %3993 = vmatpush1.msra.mxu0 0.0
  %3994 = vmatprep.subr.mxu0 0.0
  %3995 = vmatpush1.msra.mxu0 0.0
  %3996 = vmatprep.subr.mxu0 0.0
  %3997 = vmatpush1.msra.mxu0 0.0
  %3998 = vmatprep.subr.mxu0 0.0
  %3999 = vmatpush1.msra.mxu0 0.0
  %4000 = vmatprep.subr.mxu0 0.0
  %4001 = vmatpush1.msra.mxu0 0.0
  %4002 = vmatprep.subr.mxu0 0.0
  %4003 = vmatpush1.msra.mxu0 0.0
  %4004 = vmatprep.subr.mxu0 0.0
  %4005 = vmatpush1.msra.mxu0 0.0
  %4006 = vmatprep.subr.mxu0 0.0
  %4007 = vmatpush1.msra.mxu0 0.0
  %4008 = vmatprep.subr.mxu0 0.0
  %4009 = vmatpush1.msra.mxu0 0.0
  %4010 = vmatprep.subr.mxu0 0.0
  %4011 = vmatpush1.msra.mxu0 0.0
  %4012 = vmatprep.subr.mxu0 0.0
  %4013 = vmatpush1.msra.mxu0 0.0
  %4014 = vmatprep.mubr.f32.mxu0 0.0
  %4015 = vmatmul.mubr.f32.gmra.mrb[0].mxu0 %v238
  %v4016 = vpop.f32.mrb[0].mxu0
  %v4017 = vadd.f32 %v3946, %v4016
  %v4018 = vpop.f32.mrb[0].mxu0
  %v4019 = vadd.f32 %v3948, %v4018
  %4020 = vdwg.mxu0
  %v4023 = vcombine.low %v4017, %v4019
  %v4025 = vunpack.c.l.s4 1983009808
  %v4026 = vunpack.c.0.s8 %v4025
  %v4027 = vlaneseq
  %v4028 = vshrl.u32 %v4027, 7
  %v4029 = vsub.s32 %v4026, %v4028
  %v4030 = vrot.slane %v4023, %v4029
  %s4032 = scalar_lea.vmem %s7, 56
  %4033 = vst.msk [vmem:[%s4032] sm:$0xf] %vm504, %v4030
  %s4034 = scalar_lea.vmem %s3, 11520
  %v4035 = vld [vmem:[%s4034] sm:$0xff]
  %v4036 = vld [vmem:[%s4034 + $0x8] sm:$0xff]
  %v4037 = vld [vmem:[%s4034 + $0x10] sm:$0xff]
  %v4038 = vld [vmem:[%s4034 + $0x18] sm:$0xff]
  %v4039 = vld [vmem:[%s4034 + $0x20] sm:$0xff]
  %v4040 = vld [vmem:[%s4034 + $0x28] sm:$0xff]
  %v4041 = vld [vmem:[%s4034 + $0x30] sm:$0xff]
  %v4042 = vld [vmem:[%s4034 + $0x38] sm:$0xff]
  %v4043 = vld [vmem:[%s4034 + $0x40] sm:$0xff]
  %v4044 = vld [vmem:[%s4034 + $0x48] sm:$0xff]
  %v4045 = vld [vmem:[%s4034 + $0x50] sm:$0xff]
  %v4046 = vld [vmem:[%s4034 + $0x58] sm:$0xff]
  %v4047 = vld [vmem:[%s4034 + $0x60] sm:$0xff]
  %v4048 = vld [vmem:[%s4034 + $0x68] sm:$0xff]
  %v4049 = vld [vmem:[%s4034 + $0x70] sm:$0xff]
  %v4050 = vld [vmem:[%s4034 + $0x78] sm:$0xff]
  %v4051 = vld [vmem:[%s4034 + $0x80] sm:$0xff]
  %v4052 = vld [vmem:[%s4034 + $0x88] sm:$0xff]
  %v4053 = vld [vmem:[%s4034 + $0x90] sm:$0xff]
  %v4054 = vld [vmem:[%s4034 + $0x98] sm:$0xff]
  %v4055 = vld [vmem:[%s4034 + $0xa0] sm:$0xff]
  %v4056 = vld [vmem:[%s4034 + $0xa8] sm:$0xff]
  %v4057 = vld [vmem:[%s4034 + $0xb0] sm:$0xff]
  %v4058 = vld [vmem:[%s4034 + $0xb8] sm:$0xff]
  %v4059 = vld [vmem:[%s4034 + $0xc0] sm:$0xff]
  %v4060 = vld [vmem:[%s4034 + $0xc8] sm:$0xff]
  %v4061 = vld [vmem:[%s4034 + $0xd0] sm:$0xff]
  %v4062 = vld [vmem:[%s4034 + $0xd8] sm:$0xff]
  %v4063 = vld [vmem:[%s4034 + $0xe0] sm:$0xff]
  %v4064 = vld [vmem:[%s4034 + $0xe8] sm:$0xff]
  %v4065 = vld [vmem:[%s4034 + $0xf0] sm:$0xff]
  %v4066 = vld [vmem:[%s4034 + $0xf8] sm:$0xff]
  %v4067 = vld [vmem:[%s4034 + $0x100] sm:$0xff]
  %v4068 = vld [vmem:[%s4034 + $0x108] sm:$0xff]
  %v4069 = vld [vmem:[%s4034 + $0x110] sm:$0xff]
  %v4070 = vld [vmem:[%s4034 + $0x118] sm:$0xff]
  %v4071 = vld [vmem:[%s4034 + $0x120] sm:$0xff]
  %v4072 = vld [vmem:[%s4034 + $0x128] sm:$0xff]
  %v4073 = vld [vmem:[%s4034 + $0x130] sm:$0xff]
  %v4074 = vld [vmem:[%s4034 + $0x138] sm:$0xff]
  %v4075 = vld [vmem:[%s4034 + $0x140] sm:$0xff]
  %v4076 = vld [vmem:[%s4034 + $0x148] sm:$0xff]
  %v4077 = vld [vmem:[%s4034 + $0x150] sm:$0xff]
  %v4078 = vld [vmem:[%s4034 + $0x158] sm:$0xff]
  %v4079 = vld [vmem:[%s4034 + $0x160] sm:$0xff]
  %v4080 = vld [vmem:[%s4034 + $0x168] sm:$0xff]
  %v4081 = vld [vmem:[%s4034 + $0x170] sm:$0xff]
  %v4082 = vld [vmem:[%s4034 + $0x178] sm:$0xff]
  %v4083 = vld [vmem:[%s4034 + $0x180] sm:$0xff]
  %v4084 = vld [vmem:[%s4034 + $0x188] sm:$0xff]
  %v4085 = vld [vmem:[%s4034 + $0x190] sm:$0xff]
  %v4086 = vld [vmem:[%s4034 + $0x198] sm:$0xff]
  %v4087 = vld [vmem:[%s4034 + $0x1a0] sm:$0xff]
  %v4088 = vld [vmem:[%s4034 + $0x1a8] sm:$0xff]
  %v4089 = vld [vmem:[%s4034 + $0x1b0] sm:$0xff]
  %v4090 = vld [vmem:[%s4034 + $0x1b8] sm:$0xff]
  %v4091 = vld [vmem:[%s4034 + $0x1c0] sm:$0xff]
  %v4092 = vld [vmem:[%s4034 + $0x1c8] sm:$0xff]
  %v4093 = vld [vmem:[%s4034 + $0x1d0] sm:$0xff]
  %v4094 = vld [vmem:[%s4034 + $0x1d8] sm:$0xff]
  %v4095 = vld [vmem:[%s4034 + $0x1e0] sm:$0xff]
  %v4096 = vld [vmem:[%s4034 + $0x1e8] sm:$0xff]
  %v4097 = vld [vmem:[%s4034 + $0x1f0] sm:$0xff]
  %v4098 = vld [vmem:[%s4034 + $0x1f8] sm:$0xff]
  %v4099 = vld [vmem:[%s4034 + $0x200] sm:$0xff]
  %v4100 = vld [vmem:[%s4034 + $0x208] sm:$0xff]
  %v4101 = vld [vmem:[%s4034 + $0x210] sm:$0xff]
  %v4102 = vld [vmem:[%s4034 + $0x218] sm:$0xff]
  %v4103 = vld [vmem:[%s4034 + $0x220] sm:$0xff]
  %v4104 = vld [vmem:[%s4034 + $0x228] sm:$0xff]
  %v4105 = vld [vmem:[%s4034 + $0x230] sm:$0xff]
  %v4106 = vld [vmem:[%s4034 + $0x238] sm:$0xff]
  %v4107 = vld [vmem:[%s4034 + $0x240] sm:$0xff]
  %v4108 = vld [vmem:[%s4034 + $0x248] sm:$0xff]
  %v4109 = vld [vmem:[%s4034 + $0x250] sm:$0xff]
  %v4110 = vld [vmem:[%s4034 + $0x258] sm:$0xff]
  %v4111 = vld [vmem:[%s4034 + $0x260] sm:$0xff]
  %v4112 = vld [vmem:[%s4034 + $0x268] sm:$0xff]
  %v4113 = vld [vmem:[%s4034 + $0x270] sm:$0xff]
  %v4114 = vld [vmem:[%s4034 + $0x278] sm:$0xff]
  %v4115 = vld [vmem:[%s4034 + $0x280] sm:$0xff]
  %v4116 = vld [vmem:[%s4034 + $0x288] sm:$0xff]
  %v4117 = vld [vmem:[%s4034 + $0x290] sm:$0xff]
  %v4118 = vld [vmem:[%s4034 + $0x298] sm:$0xff]
  %v4119 = vld [vmem:[%s4034 + $0x2a0] sm:$0xff]
  %v4120 = vld [vmem:[%s4034 + $0x2a8] sm:$0xff]
  %v4121 = vld [vmem:[%s4034 + $0x2b0] sm:$0xff]
  %v4122 = vld [vmem:[%s4034 + $0x2b8] sm:$0xff]
  %v4123 = vld [vmem:[%s4034 + $0x2c0] sm:$0xff]
  %v4124 = vld [vmem:[%s4034 + $0x2c8] sm:$0xff]
  %v4125 = vld [vmem:[%s4034 + $0x2d0] sm:$0xff]
  %v4126 = vld [vmem:[%s4034 + $0x2d8] sm:$0xff]
  %v4127 = vld [vmem:[%s4034 + $0x2e0] sm:$0xff]
  %v4128 = vld [vmem:[%s4034 + $0x2e8] sm:$0xff]
  %v4129 = vld [vmem:[%s4034 + $0x2f0] sm:$0xff]
  %v4130 = vld [vmem:[%s4034 + $0x2f8] sm:$0xff]
  %4131 = vmatprep.subr.mxu0 %v4036
  %4132 = vmatpush1.msra.mxu0 %v4035
  %4133 = vmatprep.subr.mxu0 %v4038
  %4134 = vmatpush1.msra.mxu0 %v4037
  %4135 = vmatprep.subr.mxu0 %v4040
  %4136 = vmatpush1.msra.mxu0 %v4039
  %4137 = vmatprep.subr.mxu0 %v4042
  %4138 = vmatpush1.msra.mxu0 %v4041
  %4139 = vmatprep.subr.mxu0 %v4044
  %4140 = vmatpush1.msra.mxu0 %v4043
  %4141 = vmatprep.subr.mxu0 %v4046
  %4142 = vmatpush1.msra.mxu0 %v4045
  %4143 = vmatprep.subr.mxu0 %v4048
  %4144 = vmatpush1.msra.mxu0 %v4047
  %4145 = vmatprep.subr.mxu0 %v4050
  %4146 = vmatpush1.msra.mxu0 %v4049
  %4147 = vmatprep.subr.mxu0 %v4052
  %4148 = vmatpush1.msra.mxu0 %v4051
  %4149 = vmatprep.subr.mxu0 %v4054
  %4150 = vmatpush1.msra.mxu0 %v4053
  %4151 = vmatprep.subr.mxu0 %v4056
  %4152 = vmatpush1.msra.mxu0 %v4055
  %4153 = vmatprep.subr.mxu0 %v4058
  %4154 = vmatpush1.msra.mxu0 %v4057
  %4155 = vmatprep.subr.mxu0 %v4060
  %4156 = vmatpush1.msra.mxu0 %v4059
  %4157 = vmatprep.subr.mxu0 %v4062
  %4158 = vmatpush1.msra.mxu0 %v4061
  %4159 = vmatprep.subr.mxu0 %v4064
  %4160 = vmatpush1.msra.mxu0 %v4063
  %4161 = vmatprep.subr.mxu0 %v4066
  %4162 = vmatpush1.msra.mxu0 %v4065
  %4163 = vmatprep.subr.mxu0 %v4068
  %4164 = vmatpush1.msra.mxu0 %v4067
  %4165 = vmatprep.subr.mxu0 %v4070
  %4166 = vmatpush1.msra.mxu0 %v4069
  %4167 = vmatprep.subr.mxu0 %v4072
  %4168 = vmatpush1.msra.mxu0 %v4071
  %4169 = vmatprep.subr.mxu0 %v4074
  %4170 = vmatpush1.msra.mxu0 %v4073
  %4171 = vmatprep.subr.mxu0 %v4076
  %4172 = vmatpush1.msra.mxu0 %v4075
  %4173 = vmatprep.subr.mxu0 %v4078
  %4174 = vmatpush1.msra.mxu0 %v4077
  %4175 = vmatprep.subr.mxu0 %v4080
  %4176 = vmatpush1.msra.mxu0 %v4079
  %4177 = vmatprep.subr.mxu0 %v4082
  %4178 = vmatpush1.msra.mxu0 %v4081
  %4179 = vmatprep.subr.mxu0 %v4084
  %4180 = vmatpush1.msra.mxu0 %v4083
  %4181 = vmatprep.subr.mxu0 %v4086
  %4182 = vmatpush1.msra.mxu0 %v4085
  %4183 = vmatprep.subr.mxu0 %v4088
  %4184 = vmatpush1.msra.mxu0 %v4087
  %4185 = vmatprep.subr.mxu0 %v4090
  %4186 = vmatpush1.msra.mxu0 %v4089
  %4187 = vmatprep.subr.mxu0 %v4092
  %4188 = vmatpush1.msra.mxu0 %v4091
  %4189 = vmatprep.subr.mxu0 %v4094
  %4190 = vmatpush1.msra.mxu0 %v4093
  %4191 = vmatprep.subr.mxu0 %v4096
  %4192 = vmatpush1.msra.mxu0 %v4095
  %4193 = vmatprep.subr.mxu0 %v4098
  %4194 = vmatpush1.msra.mxu0 %v4097
  %4195 = vmatprep.mubr.f32.mxu0 %v169
  %4196 = vmatmul.mubr.f32.gmra.mrb[0].mxu0 %v167
  %v4197 = vpop.f32.mrb[0].mxu0
  %v4198 = vadd.f32 %v342, %v4197
  %v4199 = vpop.f32.mrb[0].mxu0
  %v4200 = vadd.f32 %v346, %v4199
  %4201 = vdwg.mxu0
  %4202 = vmatprep.subr.mxu0 %v4100
  %4203 = vmatpush1.msra.mxu0 %v4099
  %4204 = vmatprep.subr.mxu0 %v4102
  %4205 = vmatpush1.msra.mxu0 %v4101
  %4206 = vmatprep.subr.mxu0 %v4104
  %4207 = vmatpush1.msra.mxu0 %v4103
  %4208 = vmatprep.subr.mxu0 %v4106
  %4209 = vmatpush1.msra.mxu0 %v4105
  %4210 = vmatprep.subr.mxu0 %v4108
  %4211 = vmatpush1.msra.mxu0 %v4107
  %4212 = vmatprep.subr.mxu0 %v4110
  %4213 = vmatpush1.msra.mxu0 %v4109
  %4214 = vmatprep.subr.mxu0 %v4112
  %4215 = vmatpush1.msra.mxu0 %v4111
  %4216 = vmatprep.subr.mxu0 %v4114
  %4217 = vmatpush1.msra.mxu0 %v4113
  %4218 = vmatprep.subr.mxu0 %v4116
  %4219 = vmatpush1.msra.mxu0 %v4115
  %4220 = vmatprep.subr.mxu0 %v4118
  %4221 = vmatpush1.msra.mxu0 %v4117
  %4222 = vmatprep.subr.mxu0 %v4120
  %4223 = vmatpush1.msra.mxu0 %v4119
  %4224 = vmatprep.subr.mxu0 %v4122
  %4225 = vmatpush1.msra.mxu0 %v4121
  %4226 = vmatprep.subr.mxu0 %v4124
  %4227 = vmatpush1.msra.mxu0 %v4123
  %4228 = vmatprep.subr.mxu0 %v4126
  %4229 = vmatpush1.msra.mxu0 %v4125
  %4230 = vmatprep.subr.mxu0 %v4128
  %4231 = vmatpush1.msra.mxu0 %v4127
  %4232 = vmatprep.subr.mxu0 %v4130
  %4233 = vmatpush1.msra.mxu0 %v4129
  %4234 = vmatprep.subr.mxu0 0.0
  %4235 = vmatpush1.msra.mxu0 0.0
  %4236 = vmatprep.subr.mxu0 0.0
  %4237 = vmatpush1.msra.mxu0 0.0
  %4238 = vmatprep.subr.mxu0 0.0
  %4239 = vmatpush1.msra.mxu0 0.0
  %4240 = vmatprep.subr.mxu0 0.0
  %4241 = vmatpush1.msra.mxu0 0.0
  %4242 = vmatprep.subr.mxu0 0.0
  %4243 = vmatpush1.msra.mxu0 0.0
  %4244 = vmatprep.subr.mxu0 0.0
  %4245 = vmatpush1.msra.mxu0 0.0
  %4246 = vmatprep.subr.mxu0 0.0
  %4247 = vmatpush1.msra.mxu0 0.0
  %4248 = vmatprep.subr.mxu0 0.0
  %4249 = vmatpush1.msra.mxu0 0.0
  %4250 = vmatprep.subr.mxu0 0.0
  %4251 = vmatpush1.msra.mxu0 0.0
  %4252 = vmatprep.subr.mxu0 0.0
  %4253 = vmatpush1.msra.mxu0 0.0
  %4254 = vmatprep.subr.mxu0 0.0
  %4255 = vmatpush1.msra.mxu0 0.0
  %4256 = vmatprep.subr.mxu0 0.0
  %4257 = vmatpush1.msra.mxu0 0.0
  %4258 = vmatprep.subr.mxu0 0.0
  %4259 = vmatpush1.msra.mxu0 0.0
  %4260 = vmatprep.subr.mxu0 0.0
  %4261 = vmatpush1.msra.mxu0 0.0
  %4262 = vmatprep.subr.mxu0 0.0
  %4263 = vmatpush1.msra.mxu0 0.0
  %4264 = vmatprep.subr.mxu0 0.0
  %4265 = vmatpush1.msra.mxu0 0.0
  %4266 = vmatprep.mubr.f32.mxu0 0.0
  %4267 = vmatmul.mubr.f32.gmra.mrb[0].mxu0 %v238
  %v4268 = vpop.f32.mrb[0].mxu0
  %v4269 = vadd.f32 %v4198, %v4268
  %v4270 = vpop.f32.mrb[0].mxu0
  %v4271 = vadd.f32 %v4200, %v4270
  %4272 = vdwg.mxu0
  %v4275 = vcombine.low %v4269, %v4271
  %v4277 = vunpack.c.l.s4 1983009808
  %v4278 = vunpack.c.0.s8 %v4277
  %v4279 = vlaneseq
  %v4280 = vshrl.u32 %v4279, 7
  %v4281 = vsub.s32 %v4278, %v4280
  %v4282 = vrot.slane %v4275, %v4281
  %s4284 = scalar_lea.vmem %s7, 60
  %4285 = vst.msk [vmem:[%s4284] sm:$0xf] %vm504, %v4282
  %v4286 = vld [vmem:[%s7] sm:$0xf]
  %v4287 = vld [vmem:[%s7 + $0x4] sm:$0xf]
  %v4288 = vld [vmem:[%s7 + $0x8] sm:$0xf]
  %v4289 = vld [vmem:[%s7 + $0xc] sm:$0xf]
  %v4290 = vld [vmem:[%s7 + $0x10] sm:$0xf]
  %v4291 = vld [vmem:[%s7 + $0x14] sm:$0xf]
  %v4292 = vld [vmem:[%s7 + $0x18] sm:$0xf]
  %v4293 = vld [vmem:[%s7 + $0x1c] sm:$0xf]
  %v4294 = vld [vmem:[%s7 + $0x20] sm:$0xf]
  %v4295 = vld [vmem:[%s7 + $0x24] sm:$0xf]
  %v4296 = vld [vmem:[%s7 + $0x28] sm:$0xf]
  %v4297 = vld [vmem:[%s7 + $0x2c] sm:$0xf]
  %v4298 = vld [vmem:[%s7 + $0x30] sm:$0xf]
  %v4299 = vld [vmem:[%s7 + $0x34] sm:$0xf]
  %v4300 = vld [vmem:[%s7 + $0x38] sm:$0xf]
  %v4301 = vld [vmem:[%s7 + $0x3c] sm:$0xf]
  %v4319 = vunpack.c.l.s4 1983009808
  %v4320 = vunpack.c.0.s8 %v4319
  %v4321 = vlaneseq
  %v4322 = vshrl.u32 %v4321, 7
  %v4323 = vsub.s32 %v4320, %v4322
  %v4324 = vrot.slane %v4286, %v4323
  %v4325 = vcombine.high %v4324, %v4324
  %v4327 = vunpack.c.l.s4 1983009808
  %v4328 = vunpack.c.0.s8 %v4327
  %v4329 = vlaneseq
  %v4330 = vshrl.u32 %v4329, 7
  %v4331 = vsub.s32 %v4328, %v4330
  %v4332 = vrot.slane %v4287, %v4331
  %v4333 = vcombine.high %v4332, %v4332
  %v4335 = vunpack.c.l.s4 1983009808
  %v4336 = vunpack.c.0.s8 %v4335
  %v4337 = vlaneseq
  %v4338 = vshrl.u32 %v4337, 7
  %v4339 = vsub.s32 %v4336, %v4338
  %v4340 = vrot.slane %v4288, %v4339
  %v4341 = vcombine.high %v4340, %v4340
  %v4343 = vunpack.c.l.s4 1983009808
  %v4344 = vunpack.c.0.s8 %v4343
  %v4345 = vlaneseq
  %v4346 = vshrl.u32 %v4345, 7
  %v4347 = vsub.s32 %v4344, %v4346
  %v4348 = vrot.slane %v4289, %v4347
  %v4349 = vcombine.high %v4348, %v4348
  %v4351 = vunpack.c.l.s4 1983009808
  %v4352 = vunpack.c.0.s8 %v4351
  %v4353 = vlaneseq
  %v4354 = vshrl.u32 %v4353, 7
  %v4355 = vsub.s32 %v4352, %v4354
  %v4356 = vrot.slane %v4290, %v4355
  %v4357 = vcombine.high %v4356, %v4356
  %v4359 = vunpack.c.l.s4 1983009808
  %v4360 = vunpack.c.0.s8 %v4359
  %v4361 = vlaneseq
  %v4362 = vshrl.u32 %v4361, 7
  %v4363 = vsub.s32 %v4360, %v4362
  %v4364 = vrot.slane %v4291, %v4363
  %v4365 = vcombine.high %v4364, %v4364
  %v4367 = vunpack.c.l.s4 1983009808
  %v4368 = vunpack.c.0.s8 %v4367
  %v4369 = vlaneseq
  %v4370 = vshrl.u32 %v4369, 7
  %v4371 = vsub.s32 %v4368, %v4370
  %v4372 = vrot.slane %v4292, %v4371
  %v4373 = vcombine.high %v4372, %v4372
  %v4375 = vunpack.c.l.s4 1983009808
  %v4376 = vunpack.c.0.s8 %v4375
  %v4377 = vlaneseq
  %v4378 = vshrl.u32 %v4377, 7
  %v4379 = vsub.s32 %v4376, %v4378
  %v4380 = vrot.slane %v4293, %v4379
  %v4381 = vcombine.high %v4380, %v4380
  %v4383 = vunpack.c.l.s4 1983009808
  %v4384 = vunpack.c.0.s8 %v4383
  %v4385 = vlaneseq
  %v4386 = vshrl.u32 %v4385, 7
  %v4387 = vsub.s32 %v4384, %v4386
  %v4388 = vrot.slane %v4294, %v4387
  %v4389 = vcombine.high %v4388, %v4388
  %v4391 = vunpack.c.l.s4 1983009808
  %v4392 = vunpack.c.0.s8 %v4391
  %v4393 = vlaneseq
  %v4394 = vshrl.u32 %v4393, 7
  %v4395 = vsub.s32 %v4392, %v4394
  %v4396 = vrot.slane %v4295, %v4395
  %v4397 = vcombine.high %v4396, %v4396
  %v4399 = vunpack.c.l.s4 1983009808
  %v4400 = vunpack.c.0.s8 %v4399
  %v4401 = vlaneseq
  %v4402 = vshrl.u32 %v4401, 7
  %v4403 = vsub.s32 %v4400, %v4402
  %v4404 = vrot.slane %v4296, %v4403
  %v4405 = vcombine.high %v4404, %v4404
  %v4407 = vunpack.c.l.s4 1983009808
  %v4408 = vunpack.c.0.s8 %v4407
  %v4409 = vlaneseq
  %v4410 = vshrl.u32 %v4409, 7
  %v4411 = vsub.s32 %v4408, %v4410
  %v4412 = vrot.slane %v4297, %v4411
  %v4413 = vcombine.high %v4412, %v4412
  %v4415 = vunpack.c.l.s4 1983009808
  %v4416 = vunpack.c.0.s8 %v4415
  %v4417 = vlaneseq
  %v4418 = vshrl.u32 %v4417, 7
  %v4419 = vsub.s32 %v4416, %v4418
  %v4420 = vrot.slane %v4298, %v4419
  %v4421 = vcombine.high %v4420, %v4420
  %v4423 = vunpack.c.l.s4 1983009808
  %v4424 = vunpack.c.0.s8 %v4423
  %v4425 = vlaneseq
  %v4426 = vshrl.u32 %v4425, 7
  %v4427 = vsub.s32 %v4424, %v4426
  %v4428 = vrot.slane %v4299, %v4427
  %v4429 = vcombine.high %v4428, %v4428
  %v4431 = vunpack.c.l.s4 1983009808
  %v4432 = vunpack.c.0.s8 %v4431
  %v4433 = vlaneseq
  %v4434 = vshrl.u32 %v4433, 7
  %v4435 = vsub.s32 %v4432, %v4434
  %v4436 = vrot.slane %v4300, %v4435
  %v4437 = vcombine.high %v4436, %v4436
  %v4439 = vunpack.c.l.s4 1983009808
  %v4440 = vunpack.c.0.s8 %v4439
  %v4441 = vlaneseq
  %v4442 = vshrl.u32 %v4441, 7
  %v4443 = vsub.s32 %v4440, %v4442
  %v4444 = vrot.slane %v4301, %v4443
  %v4445 = vcombine.high %v4444, %v4444
  %v4478 = vsel %vm502, %v4324, 0.0
  %v4479 = vrot.slane %v4478, 4
  %v4480 = vadd.f32 %v4478, %v4479
  %v4481 = vrot.slane %v4480, 2
  %v4482 = vadd.f32 %v4480, %v4481
  %v4483 = vrot.slane %v4482, 1
  %v4484 = vadd.f32 %v4482, %v4483
  %vm4485 = vcmask 517120
  %v4486 = vsel %vm4485, %v4325, 0.0
  %v4487 = vrot.slane %v4486, 4
  %v4488 = vadd.f32 %v4486, %v4487
  %v4489 = vrot.slane %v4488, 2
  %v4490 = vadd.f32 %v4488, %v4489
  %v4491 = vrot.slane %v4490, 1
  %v4492 = vadd.f32 %v4490, %v4491
  %v4493 = vsel %vm502, %v4332, 0.0
  %v4494 = vrot.slane %v4493, 4
  %v4495 = vadd.f32 %v4493, %v4494
  %v4496 = vrot.slane %v4495, 2
  %v4497 = vadd.f32 %v4495, %v4496
  %v4498 = vrot.slane %v4497, 1
  %v4499 = vadd.f32 %v4497, %v4498
  %v4500 = vsel %vm4485, %v4333, 0.0
  %v4501 = vrot.slane %v4500, 4
  %v4502 = vadd.f32 %v4500, %v4501
  %v4503 = vrot.slane %v4502, 2
  %v4504 = vadd.f32 %v4502, %v4503
  %v4505 = vrot.slane %v4504, 1
  %v4506 = vadd.f32 %v4504, %v4505
  %v4507 = vsel %vm502, %v4340, 0.0
  %v4508 = vrot.slane %v4507, 4
  %v4509 = vadd.f32 %v4507, %v4508
  %v4510 = vrot.slane %v4509, 2
  %v4511 = vadd.f32 %v4509, %v4510
  %v4512 = vrot.slane %v4511, 1
  %v4513 = vadd.f32 %v4511, %v4512
  %v4514 = vsel %vm4485, %v4341, 0.0
  %v4515 = vrot.slane %v4514, 4
  %v4516 = vadd.f32 %v4514, %v4515
  %v4517 = vrot.slane %v4516, 2
  %v4518 = vadd.f32 %v4516, %v4517
  %v4519 = vrot.slane %v4518, 1
  %v4520 = vadd.f32 %v4518, %v4519
  %v4521 = vsel %vm502, %v4348, 0.0
  %v4522 = vrot.slane %v4521, 4
  %v4523 = vadd.f32 %v4521, %v4522
  %v4524 = vrot.slane %v4523, 2
  %v4525 = vadd.f32 %v4523, %v4524
  %v4526 = vrot.slane %v4525, 1
  %v4527 = vadd.f32 %v4525, %v4526
  %v4528 = vsel %vm4485, %v4349, 0.0
  %v4529 = vrot.slane %v4528, 4
  %v4530 = vadd.f32 %v4528, %v4529
  %v4531 = vrot.slane %v4530, 2
  %v4532 = vadd.f32 %v4530, %v4531
  %v4533 = vrot.slane %v4532, 1
  %v4534 = vadd.f32 %v4532, %v4533
  %v4535 = vsel %vm502, %v4356, 0.0
  %v4536 = vrot.slane %v4535, 4
  %v4537 = vadd.f32 %v4535, %v4536
  %v4538 = vrot.slane %v4537, 2
  %v4539 = vadd.f32 %v4537, %v4538
  %v4540 = vrot.slane %v4539, 1
  %v4541 = vadd.f32 %v4539, %v4540
  %v4542 = vsel %vm4485, %v4357, 0.0
  %v4543 = vrot.slane %v4542, 4
  %v4544 = vadd.f32 %v4542, %v4543
  %v4545 = vrot.slane %v4544, 2
  %v4546 = vadd.f32 %v4544, %v4545
  %v4547 = vrot.slane %v4546, 1
  %v4548 = vadd.f32 %v4546, %v4547
  %v4549 = vsel %vm502, %v4364, 0.0
  %v4550 = vrot.slane %v4549, 4
  %v4551 = vadd.f32 %v4549, %v4550
  %v4552 = vrot.slane %v4551, 2
  %v4553 = vadd.f32 %v4551, %v4552
  %v4554 = vrot.slane %v4553, 1
  %v4555 = vadd.f32 %v4553, %v4554
  %v4556 = vsel %vm4485, %v4365, 0.0
  %v4557 = vrot.slane %v4556, 4
  %v4558 = vadd.f32 %v4556, %v4557
  %v4559 = vrot.slane %v4558, 2
  %v4560 = vadd.f32 %v4558, %v4559
  %v4561 = vrot.slane %v4560, 1
  %v4562 = vadd.f32 %v4560, %v4561
  %v4563 = vsel %vm502, %v4372, 0.0
  %v4564 = vrot.slane %v4563, 4
  %v4565 = vadd.f32 %v4563, %v4564
  %v4566 = vrot.slane %v4565, 2
  %v4567 = vadd.f32 %v4565, %v4566
  %v4568 = vrot.slane %v4567, 1
  %v4569 = vadd.f32 %v4567, %v4568
  %v4570 = vsel %vm4485, %v4373, 0.0
  %v4571 = vrot.slane %v4570, 4
  %v4572 = vadd.f32 %v4570, %v4571
  %v4573 = vrot.slane %v4572, 2
  %v4574 = vadd.f32 %v4572, %v4573
  %v4575 = vrot.slane %v4574, 1
  %v4576 = vadd.f32 %v4574, %v4575
  %v4577 = vsel %vm502, %v4380, 0.0
  %v4578 = vrot.slane %v4577, 4
  %v4579 = vadd.f32 %v4577, %v4578
  %v4580 = vrot.slane %v4579, 2
  %v4581 = vadd.f32 %v4579, %v4580
  %v4582 = vrot.slane %v4581, 1
  %v4583 = vadd.f32 %v4581, %v4582
  %v4584 = vsel %vm4485, %v4381, 0.0
  %v4585 = vrot.slane %v4584, 4
  %v4586 = vadd.f32 %v4584, %v4585
  %v4587 = vrot.slane %v4586, 2
  %v4588 = vadd.f32 %v4586, %v4587
  %v4589 = vrot.slane %v4588, 1
  %v4590 = vadd.f32 %v4588, %v4589
  %v4591 = vsel %vm502, %v4388, 0.0
  %v4592 = vrot.slane %v4591, 4
  %v4593 = vadd.f32 %v4591, %v4592
  %v4594 = vrot.slane %v4593, 2
  %v4595 = vadd.f32 %v4593, %v4594
  %v4596 = vrot.slane %v4595, 1
  %v4597 = vadd.f32 %v4595, %v4596
  %v4598 = vsel %vm4485, %v4389, 0.0
  %v4599 = vrot.slane %v4598, 4
  %v4600 = vadd.f32 %v4598, %v4599
  %v4601 = vrot.slane %v4600, 2
  %v4602 = vadd.f32 %v4600, %v4601
  %v4603 = vrot.slane %v4602, 1
  %v4604 = vadd.f32 %v4602, %v4603
  %v4605 = vsel %vm502, %v4396, 0.0
  %v4606 = vrot.slane %v4605, 4
  %v4607 = vadd.f32 %v4605, %v4606
  %v4608 = vrot.slane %v4607, 2
  %v4609 = vadd.f32 %v4607, %v4608
  %v4610 = vrot.slane %v4609, 1
  %v4611 = vadd.f32 %v4609, %v4610
  %v4612 = vsel %vm4485, %v4397, 0.0
  %v4613 = vrot.slane %v4612, 4
  %v4614 = vadd.f32 %v4612, %v4613
  %v4615 = vrot.slane %v4614, 2
  %v4616 = vadd.f32 %v4614, %v4615
  %v4617 = vrot.slane %v4616, 1
  %v4618 = vadd.f32 %v4616, %v4617
  %v4619 = vsel %vm502, %v4404, 0.0
  %v4620 = vrot.slane %v4619, 4
  %v4621 = vadd.f32 %v4619, %v4620
  %v4622 = vrot.slane %v4621, 2
  %v4623 = vadd.f32 %v4621, %v4622
  %v4624 = vrot.slane %v4623, 1
  %v4625 = vadd.f32 %v4623, %v4624
  %v4626 = vsel %vm4485, %v4405, 0.0
  %v4627 = vrot.slane %v4626, 4
  %v4628 = vadd.f32 %v4626, %v4627
  %v4629 = vrot.slane %v4628, 2
  %v4630 = vadd.f32 %v4628, %v4629
  %v4631 = vrot.slane %v4630, 1
  %v4632 = vadd.f32 %v4630, %v4631
  %v4633 = vsel %vm502, %v4412, 0.0
  %v4634 = vrot.slane %v4633, 4
  %v4635 = vadd.f32 %v4633, %v4634
  %v4636 = vrot.slane %v4635, 2
  %v4637 = vadd.f32 %v4635, %v4636
  %v4638 = vrot.slane %v4637, 1
  %v4639 = vadd.f32 %v4637, %v4638
  %v4640 = vsel %vm4485, %v4413, 0.0
  %v4641 = vrot.slane %v4640, 4
  %v4642 = vadd.f32 %v4640, %v4641
  %v4643 = vrot.slane %v4642, 2
  %v4644 = vadd.f32 %v4642, %v4643
  %v4645 = vrot.slane %v4644, 1
  %v4646 = vadd.f32 %v4644, %v4645
  %v4647 = vsel %vm502, %v4420, 0.0
  %v4648 = vrot.slane %v4647, 4
  %v4649 = vadd.f32 %v4647, %v4648
  %v4650 = vrot.slane %v4649, 2
  %v4651 = vadd.f32 %v4649, %v4650
  %v4652 = vrot.slane %v4651, 1
  %v4653 = vadd.f32 %v4651, %v4652
  %v4654 = vsel %vm4485, %v4421, 0.0
  %v4655 = vrot.slane %v4654, 4
  %v4656 = vadd.f32 %v4654, %v4655
  %v4657 = vrot.slane %v4656, 2
  %v4658 = vadd.f32 %v4656, %v4657
  %v4659 = vrot.slane %v4658, 1
  %v4660 = vadd.f32 %v4658, %v4659
  %v4661 = vsel %vm502, %v4428, 0.0
  %v4662 = vrot.slane %v4661, 4
  %v4663 = vadd.f32 %v4661, %v4662
  %v4664 = vrot.slane %v4663, 2
  %v4665 = vadd.f32 %v4663, %v4664
  %v4666 = vrot.slane %v4665, 1
  %v4667 = vadd.f32 %v4665, %v4666
  %v4668 = vsel %vm4485, %v4429, 0.0
  %v4669 = vrot.slane %v4668, 4
  %v4670 = vadd.f32 %v4668, %v4669
  %v4671 = vrot.slane %v4670, 2
  %v4672 = vadd.f32 %v4670, %v4671
  %v4673 = vrot.slane %v4672, 1
  %v4674 = vadd.f32 %v4672, %v4673
  %v4675 = vsel %vm502, %v4436, 0.0
  %v4676 = vrot.slane %v4675, 4
  %v4677 = vadd.f32 %v4675, %v4676
  %v4678 = vrot.slane %v4677, 2
  %v4679 = vadd.f32 %v4677, %v4678
  %v4680 = vrot.slane %v4679, 1
  %v4681 = vadd.f32 %v4679, %v4680
  %v4682 = vsel %vm4485, %v4437, 0.0
  %v4683 = vrot.slane %v4682, 4
  %v4684 = vadd.f32 %v4682, %v4683
  %v4685 = vrot.slane %v4684, 2
  %v4686 = vadd.f32 %v4684, %v4685
  %v4687 = vrot.slane %v4686, 1
  %v4688 = vadd.f32 %v4686, %v4687
  %v4689 = vsel %vm502, %v4444, 0.0
  %v4690 = vrot.slane %v4689, 4
  %v4691 = vadd.f32 %v4689, %v4690
  %v4692 = vrot.slane %v4691, 2
  %v4693 = vadd.f32 %v4691, %v4692
  %v4694 = vrot.slane %v4693, 1
  %v4695 = vadd.f32 %v4693, %v4694
  %v4696 = vsel %vm4485, %v4445, 0.0
  %v4697 = vrot.slane %v4696, 4
  %v4698 = vadd.f32 %v4696, %v4697
  %v4699 = vrot.slane %v4698, 2
  %v4700 = vadd.f32 %v4698, %v4699
  %v4701 = vrot.slane %v4700, 1
  %v4702 = vadd.f32 %v4700, %v4701
  %v4703 = vadd.f32 %v4484, %v4499
  %v4704 = vadd.f32 %v4703, %v4513
  %v4705 = vadd.f32 %v4704, %v4527
  %v4706 = vadd.f32 %v4705, %v4541
  %v4707 = vadd.f32 %v4706, %v4555
  %v4708 = vadd.f32 %v4707, %v4569
  %v4709 = vadd.f32 %v4708, %v4583
  %v4710 = vadd.f32 %v4709, %v4597
  %v4711 = vadd.f32 %v4710, %v4611
  %v4712 = vadd.f32 %v4711, %v4625
  %v4713 = vadd.f32 %v4712, %v4639
  %v4714 = vadd.f32 %v4713, %v4653
  %v4715 = vadd.f32 %v4714, %v4667
  %v4716 = vadd.f32 %v4715, %v4681
  %v4717 = vadd.f32 %v4716, %v4695
  %vm4718 = vcmask 523264
  %v4719 = vsel %vm4718, %v4492, 0.0
  %v4720 = vsel %vm4718, %v4506, 0.0
  %v4721 = vadd.f32 %v4719, %v4720
  %v4722 = vsel %vm4718, %v4520, 0.0
  %v4723 = vadd.f32 %v4721, %v4722
  %v4724 = vsel %vm4718, %v4534, 0.0
  %v4725 = vadd.f32 %v4723, %v4724
  %v4726 = vsel %vm4718, %v4548, 0.0
  %v4727 = vadd.f32 %v4725, %v4726
  %v4728 = vsel %vm4718, %v4562, 0.0
  %v4729 = vadd.f32 %v4727, %v4728
  %v4730 = vsel %vm4718, %v4576, 0.0
  %v4731 = vadd.f32 %v4729, %v4730
  %v4732 = vsel %vm4718, %v4590, 0.0
  %v4733 = vadd.f32 %v4731, %v4732
  %v4734 = vsel %vm4718, %v4604, 0.0
  %v4735 = vadd.f32 %v4733, %v4734
  %v4736 = vsel %vm4718, %v4618, 0.0
  %v4737 = vadd.f32 %v4735, %v4736
  %v4738 = vsel %vm4718, %v4632, 0.0
  %v4739 = vadd.f32 %v4737, %v4738
  %v4740 = vsel %vm4718, %v4646, 0.0
  %v4741 = vadd.f32 %v4739, %v4740
  %v4742 = vsel %vm4718, %v4660, 0.0
  %v4743 = vadd.f32 %v4741, %v4742
  %v4744 = vsel %vm4718, %v4674, 0.0
  %v4745 = vadd.f32 %v4743, %v4744
  %v4746 = vsel %vm4718, %v4688, 0.0
  %v4747 = vadd.f32 %v4745, %v4746
  %v4748 = vsel %vm4718, %v4702, 0.0
  %v4749 = vadd.f32 %v4747, %v4748
  %v4750 = vmul.f32 %v4717, 0.03125
  %v4751 = vmul.f32 %v4749, 0.03125
  %v4754 = vcombine.low %v4750, %v4751
  %v4756 = vunpack.c.l.s4 1983009808
  %v4757 = vunpack.c.0.s8 %v4756
  %v4758 = vlaneseq
  %v4759 = vshrl.u32 %v4758, 7
  %v4760 = vsub.s32 %v4757, %v4759
  %v4761 = vrot.slane %v4754, %v4760
  %v4763 = vsub.f32 %v4286, %v4761
  %v4764 = vsub.f32 %v4287, %v4761
  %v4765 = vsub.f32 %v4288, %v4761
  %v4766 = vsub.f32 %v4289, %v4761
  %v4767 = vsub.f32 %v4290, %v4761
  %v4768 = vsub.f32 %v4291, %v4761
  %v4769 = vsub.f32 %v4292, %v4761
  %v4770 = vsub.f32 %v4293, %v4761
  %v4771 = vsub.f32 %v4294, %v4761
  %v4772 = vsub.f32 %v4295, %v4761
  %v4773 = vsub.f32 %v4296, %v4761
  %v4774 = vsub.f32 %v4297, %v4761
  %v4775 = vsub.f32 %v4298, %v4761
  %v4776 = vsub.f32 %v4299, %v4761
  %v4777 = vsub.f32 %v4300, %v4761
  %v4778 = vsub.f32 %v4301, %v4761
  %v4779 = vmul.f32 %v4763, %v4763
  %v4780 = vmul.f32 %v4764, %v4764
  %v4781 = vmul.f32 %v4765, %v4765
  %v4782 = vmul.f32 %v4766, %v4766
  %v4783 = vmul.f32 %v4767, %v4767
  %v4784 = vmul.f32 %v4768, %v4768
  %v4785 = vmul.f32 %v4769, %v4769
  %v4786 = vmul.f32 %v4770, %v4770
  %v4787 = vmul.f32 %v4771, %v4771
  %v4788 = vmul.f32 %v4772, %v4772
  %v4789 = vmul.f32 %v4773, %v4773
  %v4790 = vmul.f32 %v4774, %v4774
  %v4791 = vmul.f32 %v4775, %v4775
  %v4792 = vmul.f32 %v4776, %v4776
  %v4793 = vmul.f32 %v4777, %v4777
  %v4794 = vmul.f32 %v4778, %v4778
  %v4812 = vunpack.c.l.s4 1983009808
  %v4813 = vunpack.c.0.s8 %v4812
  %v4814 = vlaneseq
  %v4815 = vshrl.u32 %v4814, 7
  %v4816 = vsub.s32 %v4813, %v4815
  %v4817 = vrot.slane %v4779, %v4816
  %v4818 = vcombine.high %v4817, %v4817
  %v4820 = vunpack.c.l.s4 1983009808
  %v4821 = vunpack.c.0.s8 %v4820
  %v4822 = vlaneseq
  %v4823 = vshrl.u32 %v4822, 7
  %v4824 = vsub.s32 %v4821, %v4823
  %v4825 = vrot.slane %v4780, %v4824
  %v4826 = vcombine.high %v4825, %v4825
  %v4828 = vunpack.c.l.s4 1983009808
  %v4829 = vunpack.c.0.s8 %v4828
  %v4830 = vlaneseq
  %v4831 = vshrl.u32 %v4830, 7
  %v4832 = vsub.s32 %v4829, %v4831
  %v4833 = vrot.slane %v4781, %v4832
  %v4834 = vcombine.high %v4833, %v4833
  %v4836 = vunpack.c.l.s4 1983009808
  %v4837 = vunpack.c.0.s8 %v4836
  %v4838 = vlaneseq
  %v4839 = vshrl.u32 %v4838, 7
  %v4840 = vsub.s32 %v4837, %v4839
  %v4841 = vrot.slane %v4782, %v4840
  %v4842 = vcombine.high %v4841, %v4841
  %v4844 = vunpack.c.l.s4 1983009808
  %v4845 = vunpack.c.0.s8 %v4844
  %v4846 = vlaneseq
  %v4847 = vshrl.u32 %v4846, 7
  %v4848 = vsub.s32 %v4845, %v4847
  %v4849 = vrot.slane %v4783, %v4848
  %v4850 = vcombine.high %v4849, %v4849
  %v4852 = vunpack.c.l.s4 1983009808
  %v4853 = vunpack.c.0.s8 %v4852
  %v4854 = vlaneseq
  %v4855 = vshrl.u32 %v4854, 7
  %v4856 = vsub.s32 %v4853, %v4855
  %v4857 = vrot.slane %v4784, %v4856
  %v4858 = vcombine.high %v4857, %v4857
  %v4860 = vunpack.c.l.s4 1983009808
  %v4861 = vunpack.c.0.s8 %v4860
  %v4862 = vlaneseq
  %v4863 = vshrl.u32 %v4862, 7
  %v4864 = vsub.s32 %v4861, %v4863
  %v4865 = vrot.slane %v4785, %v4864
  %v4866 = vcombine.high %v4865, %v4865
  %v4868 = vunpack.c.l.s4 1983009808
  %v4869 = vunpack.c.0.s8 %v4868
  %v4870 = vlaneseq
  %v4871 = vshrl.u32 %v4870, 7
  %v4872 = vsub.s32 %v4869, %v4871
  %v4873 = vrot.slane %v4786, %v4872
  %v4874 = vcombine.high %v4873, %v4873
  %v4876 = vunpack.c.l.s4 1983009808
  %v4877 = vunpack.c.0.s8 %v4876
  %v4878 = vlaneseq
  %v4879 = vshrl.u32 %v4878, 7
  %v4880 = vsub.s32 %v4877, %v4879
  %v4881 = vrot.slane %v4787, %v4880
  %v4882 = vcombine.high %v4881, %v4881
  %v4884 = vunpack.c.l.s4 1983009808
  %v4885 = vunpack.c.0.s8 %v4884
  %v4886 = vlaneseq
  %v4887 = vshrl.u32 %v4886, 7
  %v4888 = vsub.s32 %v4885, %v4887
  %v4889 = vrot.slane %v4788, %v4888
  %v4890 = vcombine.high %v4889, %v4889
  %v4892 = vunpack.c.l.s4 1983009808
  %v4893 = vunpack.c.0.s8 %v4892
  %v4894 = vlaneseq
  %v4895 = vshrl.u32 %v4894, 7
  %v4896 = vsub.s32 %v4893, %v4895
  %v4897 = vrot.slane %v4789, %v4896
  %v4898 = vcombine.high %v4897, %v4897
  %v4900 = vunpack.c.l.s4 1983009808
  %v4901 = vunpack.c.0.s8 %v4900
  %v4902 = vlaneseq
  %v4903 = vshrl.u32 %v4902, 7
  %v4904 = vsub.s32 %v4901, %v4903
  %v4905 = vrot.slane %v4790, %v4904
  %v4906 = vcombine.high %v4905, %v4905
  %v4908 = vunpack.c.l.s4 1983009808
  %v4909 = vunpack.c.0.s8 %v4908
  %v4910 = vlaneseq
  %v4911 = vshrl.u32 %v4910, 7
  %v4912 = vsub.s32 %v4909, %v4911
  %v4913 = vrot.slane %v4791, %v4912
  %v4914 = vcombine.high %v4913, %v4913
  %v4916 = vunpack.c.l.s4 1983009808
  %v4917 = vunpack.c.0.s8 %v4916
  %v4918 = vlaneseq
  %v4919 = vshrl.u32 %v4918, 7
  %v4920 = vsub.s32 %v4917, %v4919
  %v4921 = vrot.slane %v4792, %v4920
  %v4922 = vcombine.high %v4921, %v4921
  %v4924 = vunpack.c.l.s4 1983009808
  %v4925 = vunpack.c.0.s8 %v4924
  %v4926 = vlaneseq
  %v4927 = vshrl.u32 %v4926, 7
  %v4928 = vsub.s32 %v4925, %v4927
  %v4929 = vrot.slane %v4793, %v4928
  %v4930 = vcombine.high %v4929, %v4929
  %v4932 = vunpack.c.l.s4 1983009808
  %v4933 = vunpack.c.0.s8 %v4932
  %v4934 = vlaneseq
  %v4935 = vshrl.u32 %v4934, 7
  %v4936 = vsub.s32 %v4933, %v4935
  %v4937 = vrot.slane %v4794, %v4936
  %v4938 = vcombine.high %v4937, %v4937
  %v4971 = vsel %vm502, %v4817, 0.0
  %v4972 = vrot.slane %v4971, 4
  %v4973 = vadd.f32 %v4971, %v4972
  %v4974 = vrot.slane %v4973, 2
  %v4975 = vadd.f32 %v4973, %v4974
  %v4976 = vrot.slane %v4975, 1
  %v4977 = vadd.f32 %v4975, %v4976
  %v4978 = vsel %vm4485, %v4818, 0.0
  %v4979 = vrot.slane %v4978, 4
  %v4980 = vadd.f32 %v4978, %v4979
  %v4981 = vrot.slane %v4980, 2
  %v4982 = vadd.f32 %v4980, %v4981
  %v4983 = vrot.slane %v4982, 1
  %v4984 = vadd.f32 %v4982, %v4983
  %v4985 = vsel %vm502, %v4825, 0.0
  %v4986 = vrot.slane %v4985, 4
  %v4987 = vadd.f32 %v4985, %v4986
  %v4988 = vrot.slane %v4987, 2
  %v4989 = vadd.f32 %v4987, %v4988
  %v4990 = vrot.slane %v4989, 1
  %v4991 = vadd.f32 %v4989, %v4990
  %v4992 = vsel %vm4485, %v4826, 0.0
  %v4993 = vrot.slane %v4992, 4
  %v4994 = vadd.f32 %v4992, %v4993
  %v4995 = vrot.slane %v4994, 2
  %v4996 = vadd.f32 %v4994, %v4995
  %v4997 = vrot.slane %v4996, 1
  %v4998 = vadd.f32 %v4996, %v4997
  %v4999 = vsel %vm502, %v4833, 0.0
  %v5000 = vrot.slane %v4999, 4
  %v5001 = vadd.f32 %v4999, %v5000
  %v5002 = vrot.slane %v5001, 2
  %v5003 = vadd.f32 %v5001, %v5002
  %v5004 = vrot.slane %v5003, 1
  %v5005 = vadd.f32 %v5003, %v5004
  %v5006 = vsel %vm4485, %v4834, 0.0
  %v5007 = vrot.slane %v5006, 4
  %v5008 = vadd.f32 %v5006, %v5007
  %v5009 = vrot.slane %v5008, 2
  %v5010 = vadd.f32 %v5008, %v5009
  %v5011 = vrot.slane %v5010, 1
  %v5012 = vadd.f32 %v5010, %v5011
  %v5013 = vsel %vm502, %v4841, 0.0
  %v5014 = vrot.slane %v5013, 4
  %v5015 = vadd.f32 %v5013, %v5014
  %v5016 = vrot.slane %v5015, 2
  %v5017 = vadd.f32 %v5015, %v5016
  %v5018 = vrot.slane %v5017, 1
  %v5019 = vadd.f32 %v5017, %v5018
  %v5020 = vsel %vm4485, %v4842, 0.0
  %v5021 = vrot.slane %v5020, 4
  %v5022 = vadd.f32 %v5020, %v5021
  %v5023 = vrot.slane %v5022, 2
  %v5024 = vadd.f32 %v5022, %v5023
  %v5025 = vrot.slane %v5024, 1
  %v5026 = vadd.f32 %v5024, %v5025
  %v5027 = vsel %vm502, %v4849, 0.0
  %v5028 = vrot.slane %v5027, 4
  %v5029 = vadd.f32 %v5027, %v5028
  %v5030 = vrot.slane %v5029, 2
  %v5031 = vadd.f32 %v5029, %v5030
  %v5032 = vrot.slane %v5031, 1
  %v5033 = vadd.f32 %v5031, %v5032
  %v5034 = vsel %vm4485, %v4850, 0.0
  %v5035 = vrot.slane %v5034, 4
  %v5036 = vadd.f32 %v5034, %v5035
  %v5037 = vrot.slane %v5036, 2
  %v5038 = vadd.f32 %v5036, %v5037
  %v5039 = vrot.slane %v5038, 1
  %v5040 = vadd.f32 %v5038, %v5039
  %v5041 = vsel %vm502, %v4857, 0.0
  %v5042 = vrot.slane %v5041, 4
  %v5043 = vadd.f32 %v5041, %v5042
  %v5044 = vrot.slane %v5043, 2
  %v5045 = vadd.f32 %v5043, %v5044
  %v5046 = vrot.slane %v5045, 1
  %v5047 = vadd.f32 %v5045, %v5046
  %v5048 = vsel %vm4485, %v4858, 0.0
  %v5049 = vrot.slane %v5048, 4
  %v5050 = vadd.f32 %v5048, %v5049
  %v5051 = vrot.slane %v5050, 2
  %v5052 = vadd.f32 %v5050, %v5051
  %v5053 = vrot.slane %v5052, 1
  %v5054 = vadd.f32 %v5052, %v5053
  %v5055 = vsel %vm502, %v4865, 0.0
  %v5056 = vrot.slane %v5055, 4
  %v5057 = vadd.f32 %v5055, %v5056
  %v5058 = vrot.slane %v5057, 2
  %v5059 = vadd.f32 %v5057, %v5058
  %v5060 = vrot.slane %v5059, 1
  %v5061 = vadd.f32 %v5059, %v5060
  %v5062 = vsel %vm4485, %v4866, 0.0
  %v5063 = vrot.slane %v5062, 4
  %v5064 = vadd.f32 %v5062, %v5063
  %v5065 = vrot.slane %v5064, 2
  %v5066 = vadd.f32 %v5064, %v5065
  %v5067 = vrot.slane %v5066, 1
  %v5068 = vadd.f32 %v5066, %v5067
  %v5069 = vsel %vm502, %v4873, 0.0
  %v5070 = vrot.slane %v5069, 4
  %v5071 = vadd.f32 %v5069, %v5070
  %v5072 = vrot.slane %v5071, 2
  %v5073 = vadd.f32 %v5071, %v5072
  %v5074 = vrot.slane %v5073, 1
  %v5075 = vadd.f32 %v5073, %v5074
  %v5076 = vsel %vm4485, %v4874, 0.0
  %v5077 = vrot.slane %v5076, 4
  %v5078 = vadd.f32 %v5076, %v5077
  %v5079 = vrot.slane %v5078, 2
  %v5080 = vadd.f32 %v5078, %v5079
  %v5081 = vrot.slane %v5080, 1
  %v5082 = vadd.f32 %v5080, %v5081
  %v5083 = vsel %vm502, %v4881, 0.0
  %v5084 = vrot.slane %v5083, 4
  %v5085 = vadd.f32 %v5083, %v5084
  %v5086 = vrot.slane %v5085, 2
  %v5087 = vadd.f32 %v5085, %v5086
  %v5088 = vrot.slane %v5087, 1
  %v5089 = vadd.f32 %v5087, %v5088
  %v5090 = vsel %vm4485, %v4882, 0.0
  %v5091 = vrot.slane %v5090, 4
  %v5092 = vadd.f32 %v5090, %v5091
  %v5093 = vrot.slane %v5092, 2
  %v5094 = vadd.f32 %v5092, %v5093
  %v5095 = vrot.slane %v5094, 1
  %v5096 = vadd.f32 %v5094, %v5095
  %v5097 = vsel %vm502, %v4889, 0.0
  %v5098 = vrot.slane %v5097, 4
  %v5099 = vadd.f32 %v5097, %v5098
  %v5100 = vrot.slane %v5099, 2
  %v5101 = vadd.f32 %v5099, %v5100
  %v5102 = vrot.slane %v5101, 1
  %v5103 = vadd.f32 %v5101, %v5102
  %v5104 = vsel %vm4485, %v4890, 0.0
  %v5105 = vrot.slane %v5104, 4
  %v5106 = vadd.f32 %v5104, %v5105
  %v5107 = vrot.slane %v5106, 2
  %v5108 = vadd.f32 %v5106, %v5107
  %v5109 = vrot.slane %v5108, 1
  %v5110 = vadd.f32 %v5108, %v5109
  %v5111 = vsel %vm502, %v4897, 0.0
  %v5112 = vrot.slane %v5111, 4
  %v5113 = vadd.f32 %v5111, %v5112
  %v5114 = vrot.slane %v5113, 2
  %v5115 = vadd.f32 %v5113, %v5114
  %v5116 = vrot.slane %v5115, 1
  %v5117 = vadd.f32 %v5115, %v5116
  %v5118 = vsel %vm4485, %v4898, 0.0
  %v5119 = vrot.slane %v5118, 4
  %v5120 = vadd.f32 %v5118, %v5119
  %v5121 = vrot.slane %v5120, 2
  %v5122 = vadd.f32 %v5120, %v5121
  %v5123 = vrot.slane %v5122, 1
  %v5124 = vadd.f32 %v5122, %v5123
  %v5125 = vsel %vm502, %v4905, 0.0
  %v5126 = vrot.slane %v5125, 4
  %v5127 = vadd.f32 %v5125, %v5126
  %v5128 = vrot.slane %v5127, 2
  %v5129 = vadd.f32 %v5127, %v5128
  %v5130 = vrot.slane %v5129, 1
  %v5131 = vadd.f32 %v5129, %v5130
  %v5132 = vsel %vm4485, %v4906, 0.0
  %v5133 = vrot.slane %v5132, 4
  %v5134 = vadd.f32 %v5132, %v5133
  %v5135 = vrot.slane %v5134, 2
  %v5136 = vadd.f32 %v5134, %v5135
  %v5137 = vrot.slane %v5136, 1
  %v5138 = vadd.f32 %v5136, %v5137
  %v5139 = vsel %vm502, %v4913, 0.0
  %v5140 = vrot.slane %v5139, 4
  %v5141 = vadd.f32 %v5139, %v5140
  %v5142 = vrot.slane %v5141, 2
  %v5143 = vadd.f32 %v5141, %v5142
  %v5144 = vrot.slane %v5143, 1
  %v5145 = vadd.f32 %v5143, %v5144
  %v5146 = vsel %vm4485, %v4914, 0.0
  %v5147 = vrot.slane %v5146, 4
  %v5148 = vadd.f32 %v5146, %v5147
  %v5149 = vrot.slane %v5148, 2
  %v5150 = vadd.f32 %v5148, %v5149
  %v5151 = vrot.slane %v5150, 1
  %v5152 = vadd.f32 %v5150, %v5151
  %v5153 = vsel %vm502, %v4921, 0.0
  %v5154 = vrot.slane %v5153, 4
  %v5155 = vadd.f32 %v5153, %v5154
  %v5156 = vrot.slane %v5155, 2
  %v5157 = vadd.f32 %v5155, %v5156
  %v5158 = vrot.slane %v5157, 1
  %v5159 = vadd.f32 %v5157, %v5158
  %v5160 = vsel %vm4485, %v4922, 0.0
  %v5161 = vrot.slane %v5160, 4
  %v5162 = vadd.f32 %v5160, %v5161
  %v5163 = vrot.slane %v5162, 2
  %v5164 = vadd.f32 %v5162, %v5163
  %v5165 = vrot.slane %v5164, 1
  %v5166 = vadd.f32 %v5164, %v5165
  %v5167 = vsel %vm502, %v4929, 0.0
  %v5168 = vrot.slane %v5167, 4
  %v5169 = vadd.f32 %v5167, %v5168
  %v5170 = vrot.slane %v5169, 2
  %v5171 = vadd.f32 %v5169, %v5170
  %v5172 = vrot.slane %v5171, 1
  %v5173 = vadd.f32 %v5171, %v5172
  %v5174 = vsel %vm4485, %v4930, 0.0
  %v5175 = vrot.slane %v5174, 4
  %v5176 = vadd.f32 %v5174, %v5175
  %v5177 = vrot.slane %v5176, 2
  %v5178 = vadd.f32 %v5176, %v5177
  %v5179 = vrot.slane %v5178, 1
  %v5180 = vadd.f32 %v5178, %v5179
  %v5181 = vsel %vm502, %v4937, 0.0
  %v5182 = vrot.slane %v5181, 4
  %v5183 = vadd.f32 %v5181, %v5182
  %v5184 = vrot.slane %v5183, 2
  %v5185 = vadd.f32 %v5183, %v5184
  %v5186 = vrot.slane %v5185, 1
  %v5187 = vadd.f32 %v5185, %v5186
  %v5188 = vsel %vm4485, %v4938, 0.0
  %v5189 = vrot.slane %v5188, 4
  %v5190 = vadd.f32 %v5188, %v5189
  %v5191 = vrot.slane %v5190, 2
  %v5192 = vadd.f32 %v5190, %v5191
  %v5193 = vrot.slane %v5192, 1
  %v5194 = vadd.f32 %v5192, %v5193
  %v5195 = vadd.f32 %v4977, %v4991
  %v5196 = vadd.f32 %v5195, %v5005
  %v5197 = vadd.f32 %v5196, %v5019
  %v5198 = vadd.f32 %v5197, %v5033
  %v5199 = vadd.f32 %v5198, %v5047
  %v5200 = vadd.f32 %v5199, %v5061
  %v5201 = vadd.f32 %v5200, %v5075
  %v5202 = vadd.f32 %v5201, %v5089
  %v5203 = vadd.f32 %v5202, %v5103
  %v5204 = vadd.f32 %v5203, %v5117
  %v5205 = vadd.f32 %v5204, %v5131
  %v5206 = vadd.f32 %v5205, %v5145
  %v5207 = vadd.f32 %v5206, %v5159
  %v5208 = vadd.f32 %v5207, %v5173
  %v5209 = vadd.f32 %v5208, %v5187
  %v5210 = vsel %vm4718, %v4984, 0.0
  %v5211 = vsel %vm4718, %v4998, 0.0
  %v5212 = vadd.f32 %v5210, %v5211
  %v5213 = vsel %vm4718, %v5012, 0.0
  %v5214 = vadd.f32 %v5212, %v5213
  %v5215 = vsel %vm4718, %v5026, 0.0
  %v5216 = vadd.f32 %v5214, %v5215
  %v5217 = vsel %vm4718, %v5040, 0.0
  %v5218 = vadd.f32 %v5216, %v5217
  %v5219 = vsel %vm4718, %v5054, 0.0
  %v5220 = vadd.f32 %v5218, %v5219
  %v5221 = vsel %vm4718, %v5068, 0.0
  %v5222 = vadd.f32 %v5220, %v5221
  %v5223 = vsel %vm4718, %v5082, 0.0
  %v5224 = vadd.f32 %v5222, %v5223
  %v5225 = vsel %vm4718, %v5096, 0.0
  %v5226 = vadd.f32 %v5224, %v5225
  %v5227 = vsel %vm4718, %v5110, 0.0
  %v5228 = vadd.f32 %v5226, %v5227
  %v5229 = vsel %vm4718, %v5124, 0.0
  %v5230 = vadd.f32 %v5228, %v5229
  %v5231 = vsel %vm4718, %v5138, 0.0
  %v5232 = vadd.f32 %v5230, %v5231
  %v5233 = vsel %vm4718, %v5152, 0.0
  %v5234 = vadd.f32 %v5232, %v5233
  %v5235 = vsel %vm4718, %v5166, 0.0
  %v5236 = vadd.f32 %v5234, %v5235
  %v5237 = vsel %vm4718, %v5180, 0.0
  %v5238 = vadd.f32 %v5236, %v5237
  %v5239 = vsel %vm4718, %v5194, 0.0
  %v5240 = vadd.f32 %v5238, %v5239
  %v5241 = vmul.f32 %v5209, 0.03125
  %v5242 = vmul.f32 %v5240, 0.03125
  %v5243 = vld [vmem:[%s5] sm:$0x3]
  %v5244 = vadd.f32 %v5241, 1e-05
  %v5245 = vadd.f32 %v5242, 1e-05
  %v5246 = vrsqrt.pop %v5244
  %v5247 = vrsqrt.pop %v5245
  %v5250 = vcombine.low %v5246, %v5247
  %v5252 = vunpack.c.l.s4 1966171168
  %v5253 = vunpack.c.0.s8 %v5252
  %v5254 = vlaneseq
  %v5255 = vshrl.u32 %v5254, 7
  %v5256 = vsub.s32 %v5253, %v5255
  %v5257 = vrot.slane %v5250, %v5256
  %v5259 = vunpack.c.l.s4 1966171168
  %v5260 = vunpack.c.0.s8 %v5259
  %v5261 = vlaneseq
  %v5262 = vshrl.u32 %v5261, 7
  %v5263 = vsub.s32 %v5260, %v5262
  %v5264 = vrot.slane %v5257, %v5263
  %v5266 = vmul.f32 %v5243, %v5264
  %v5268 = vlaneseq
  %v5269 = vshrl.u32 %v5268, 7
  %v5270 = vsub.s32 0, %v5269
  %v5271 = vrot.slane %v5266, %v5270
  %v5272 = vlaneseq
  %v5273 = vshrl.u32 %v5272, 7
  %v5274 = vsub.s32 1, %v5273
  %v5275 = vrot.slane %v5266, %v5274
  %v5276 = vcombine.low %v5271, %v5275
  %v5278 = vunpack.c.l.s4 1983009808
  %v5279 = vunpack.c.0.s8 %v5278
  %v5280 = vlaneseq
  %v5281 = vshrl.u32 %v5280, 7
  %v5282 = vsub.s32 %v5279, %v5281
  %v5283 = vrot.slane %v5276, %v5282
  %v5285 = vmul.f32 %v4763, %v5283
  %v5286 = vmul.f32 %v4764, %v5283
  %v5287 = vmul.f32 %v4765, %v5283
  %v5288 = vmul.f32 %v4766, %v5283
  %v5289 = vmul.f32 %v4767, %v5283
  %v5290 = vmul.f32 %v4768, %v5283
  %v5291 = vmul.f32 %v4769, %v5283
  %v5292 = vmul.f32 %v4770, %v5283
  %v5293 = vmul.f32 %v4771, %v5283
  %v5294 = vmul.f32 %v4772, %v5283
  %v5295 = vmul.f32 %v4773, %v5283
  %v5296 = vmul.f32 %v4774, %v5283
  %v5297 = vmul.f32 %v4775, %v5283
  %v5298 = vmul.f32 %v4776, %v5283
  %v5299 = vmul.f32 %v4777, %v5283
  %v5300 = vmul.f32 %v4778, %v5283
  %v5301 = vld [vmem:[%s6] sm:$0x3]
  %v5303 = vlaneseq
  %v5304 = vshrl.u32 %v5303, 7
  %v5305 = vsub.s32 0, %v5304
  %v5306 = vrot.slane %v5301, %v5305
  %v5307 = vlaneseq
  %v5308 = vshrl.u32 %v5307, 7
  %v5309 = vsub.s32 1, %v5308
  %v5310 = vrot.slane %v5301, %v5309
  %v5311 = vcombine.low %v5306, %v5310
  %v5313 = vunpack.c.l.s4 1983009808
  %v5314 = vunpack.c.0.s8 %v5313
  %v5315 = vlaneseq
  %v5316 = vshrl.u32 %v5315, 7
  %v5317 = vsub.s32 %v5314, %v5316
  %v5318 = vrot.slane %v5311, %v5317
  %v5320 = vadd.f32 %v5285, %v5318
  %v5321 = vadd.f32 %v5286, %v5318
  %v5322 = vadd.f32 %v5287, %v5318
  %v5323 = vadd.f32 %v5288, %v5318
  %v5324 = vadd.f32 %v5289, %v5318
  %v5325 = vadd.f32 %v5290, %v5318
  %v5326 = vadd.f32 %v5291, %v5318
  %v5327 = vadd.f32 %v5292, %v5318
  %v5328 = vadd.f32 %v5293, %v5318
  %v5329 = vadd.f32 %v5294, %v5318
  %v5330 = vadd.f32 %v5295, %v5318
  %v5331 = vadd.f32 %v5296, %v5318
  %v5332 = vadd.f32 %v5297, %v5318
  %v5333 = vadd.f32 %v5298, %v5318
  %v5334 = vadd.f32 %v5299, %v5318
  %v5335 = vadd.f32 %v5300, %v5318
  %v5336 = vmax.f32 %v5320, 0.0
  %v5337 = vmax.f32 %v5321, 0.0
  %v5338 = vmax.f32 %v5322, 0.0
  %v5339 = vmax.f32 %v5323, 0.0
  %v5340 = vmax.f32 %v5324, 0.0
  %v5341 = vmax.f32 %v5325, 0.0
  %v5342 = vmax.f32 %v5326, 0.0
  %v5343 = vmax.f32 %v5327, 0.0
  %v5344 = vmax.f32 %v5328, 0.0
  %v5345 = vmax.f32 %v5329, 0.0
  %v5346 = vmax.f32 %v5330, 0.0
  %v5347 = vmax.f32 %v5331, 0.0
  %v5348 = vmax.f32 %v5332, 0.0
  %v5349 = vmax.f32 %v5333, 0.0
  %v5350 = vmax.f32 %v5334, 0.0
  %v5351 = vmax.f32 %v5335, 0.0
  %5352 = vst.msk [vmem:[%s7] sm:$0xf] %vm504, %v5336
  %5353 = vst.msk [vmem:[%s7 + $0x4] sm:$0xf] %vm504, %v5337
  %5354 = vst.msk [vmem:[%s7 + $0x8] sm:$0xf] %vm504, %v5338
  %5355 = vst.msk [vmem:[%s7 + $0xc] sm:$0xf] %vm504, %v5339
  %5356 = vst.msk [vmem:[%s7 + $0x10] sm:$0xf] %vm504, %v5340
  %5357 = vst.msk [vmem:[%s7 + $0x14] sm:$0xf] %vm504, %v5341
  %5358 = vst.msk [vmem:[%s7 + $0x18] sm:$0xf] %vm504, %v5342
  %5359 = vst.msk [vmem:[%s7 + $0x1c] sm:$0xf] %vm504, %v5343
  %5360 = vst.msk [vmem:[%s7 + $0x20] sm:$0xf] %vm504, %v5344
  %5361 = vst.msk [vmem:[%s7 + $0x24] sm:$0xf] %vm504, %v5345
  %5362 = vst.msk [vmem:[%s7 + $0x28] sm:$0xf] %vm504, %v5346
  %5363 = vst.msk [vmem:[%s7 + $0x2c] sm:$0xf] %vm504, %v5347
  %5364 = vst.msk [vmem:[%s7 + $0x30] sm:$0xf] %vm504, %v5348
  %5365 = vst.msk [vmem:[%s7 + $0x34] sm:$0xf] %vm504, %v5349
  %5366 = vst.msk [vmem:[%s7 + $0x38] sm:$0xf] %vm504, %v5350
  %5367 = vst.msk [vmem:[%s7 + $0x3c] sm:$0xf] %vm504, %v5351
  // Predicated region
  $region30: #{generator_forward.4} parent=0 // pred_check
    _
  $region31: #{generator_forward.4} parent=0 // pred_check_branch
    %5369 = sbr.rel (0) target = $region33
  $region32: #{generator_forward.4} parent=0 // pred_region
    _
  $region33: #{generator_forward.4} parent=0 // pred_fallthru
    _
  // Predicated region
  $region34: #{generator_forward.4} parent=0 // pred_check
    _
  $region35: #{generator_forward.4} parent=0 // pred_check_branch
    %5371 = sbr.rel (0) target = $region37
  $region36: #{generator_forward.4} parent=0 // pred_region
    _
  $region37: #{generator_forward.4} parent=0 // pred_fallthru
    _

// kernel: generator_forward.5
$region0: #{generator_forward.5}
  #allocation0 [shape = 'u32[]', space=smem, size = 0x4, offset = 0x4, fixed_abs, tag = 'smem constant byte address 0x4 - core index']
  #allocation1 [shape = 'u32[144,128]{1,0:T(1,128)}', space=vmem, size = 0x12000, scoped, tag = 'internal scratch']
  %s0 = inlined_call_operand.vmem [shape: f32[4,96,768], index: 0, kind: input, shape index: {}]
  %s1 = inlined_call_operand.vmem [shape: f32[4,768,32], index: 1, kind: input, shape index: {}]
  %s2 = inlined_call_operand.vmem [shape: f32[96,1], index: 2, kind: input, shape index: {}]
  %s3 = inlined_call_operand.vmem [shape: f32[96,1], index: 3, kind: input, shape index: {}]
  %s4 = inlined_call_operand.vmem [shape: f32[96,1], index: 4, kind: input, shape index: {}]
  %s5 = inlined_call_operand.vmem [shape: f32[4,96,32], index: 5, kind: output, shape index: {}]
  %s6 = sld [smem:[#allocation0]]
  $region30: #{generator_forward.5} parent=0
    _
  %s8 = ssub.s32 1, %s6
  %s9 = scalar_select 0, %s8, %s6
  // Predicated region
  $region2: #{generator_forward.5} parent=0 // pred_check
    _
  $region3: #{generator_forward.5} parent=0 // pred_check_branch
    %11 = sbr.rel (0) target = $region5
  $region4: #{generator_forward.5} parent=0 // pred_region
    _
  $region5: #{generator_forward.5} parent=0 // pred_fallthru
    _
  // Predicated region
  $region6: #{generator_forward.5} parent=0 // pred_check
    _
  $region7: #{generator_forward.5} parent=0 // pred_check_branch
    %13 = sbr.rel (0) target = $region9
  $region8: #{generator_forward.5} parent=0 // pred_region
    _
  $region9: #{generator_forward.5} parent=0 // pred_fallthru
    _
  // Predicated region
  $region10: #{generator_forward.5} parent=0 // pred_check
    _
  $region11: #{generator_forward.5} parent=0 // pred_check_branch
    %15 = sbr.rel (0) target = $region13
  $region12: #{generator_forward.5} parent=0 // pred_region
    _
  $region13: #{generator_forward.5} parent=0 // pred_fallthru
    _
  // Predicated region
  $region14: #{generator_forward.5} parent=0 // pred_check
    _
  $region15: #{generator_forward.5} parent=0 // pred_check_branch
    %17 = sbr.rel (0) target = $region17
  $region16: #{generator_forward.5} parent=0 // pred_region
    _
  $region17: #{generator_forward.5} parent=0 // pred_fallthru
    _
  // Predicated region
  $region18: #{generator_forward.5} parent=0 // pred_check
    _
  $region19: #{generator_forward.5} parent=0 // pred_check_branch
    %19 = sbr.rel (0) target = $region21
  $region20: #{generator_forward.5} parent=0 // pred_region
    _
  $region21: #{generator_forward.5} parent=0 // pred_fallthru
    _
  %v20 = vld [vmem:[%s2] sm:$0xff]
  %v21 = vld [vmem:[%s2 + $0x8] sm:$0xff]
  %v22 = vld [vmem:[%s2 + $0x10] sm:$0xff]
  %v23 = vld [vmem:[%s2 + $0x18] sm:$0xff]
  %v24 = vld [vmem:[%s2 + $0x20] sm:$0xff]
  %v25 = vld [vmem:[%s2 + $0x28] sm:$0xff]
  %v26 = vld [vmem:[%s2 + $0x30] sm:$0xff]
  %v27 = vld [vmem:[%s2 + $0x38] sm:$0xff]
  %v28 = vld [vmem:[%s2 + $0x40] sm:$0xff]
  %v29 = vld [vmem:[%s2 + $0x48] sm:$0xff]
  %v30 = vld [vmem:[%s2 + $0x50] sm:$0xff]
  %v31 = vld [vmem:[%s2 + $0x58] sm:$0xff]
  %v32 = vld [vmem:[%s0] sm:$0xff]
  %v33 = vld [vmem:[%s0 + $0x8] sm:$0xff]
  %v34 = vld [vmem:[%s0 + $0x10] sm:$0xff]
  %v35 = vld [vmem:[%s0 + $0x18] sm:$0xff]
  %v36 = vld [vmem:[%s0 + $0x20] sm:$0xff]
  %v37 = vld [vmem:[%s0 + $0x28] sm:$0xff]
  %v38 = vld [vmem:[%s0 + $0x30] sm:$0xff]
  %v39 = vld [vmem:[%s0 + $0x38] sm:$0xff]
  %v40 = vld [vmem:[%s0 + $0x40] sm:$0xff]
  %v41 = vld [vmem:[%s0 + $0x48] sm:$0xff]
  %v42 = vld [vmem:[%s0 + $0x50] sm:$0xff]
  %v43 = vld [vmem:[%s0 + $0x58] sm:$0xff]
  %v44 = vld [vmem:[%s0 + $0x60] sm:$0xff]
  %v45 = vld [vmem:[%s0 + $0x68] sm:$0xff]
  %v46 = vld [vmem:[%s0 + $0x70] sm:$0xff]
  %v47 = vld [vmem:[%s0 + $0x78] sm:$0xff]
  %v48 = vld [vmem:[%s0 + $0x80] sm:$0xff]
  %v49 = vld [vmem:[%s0 + $0x88] sm:$0xff]
  %v50 = vld [vmem:[%s0 + $0x90] sm:$0xff]
  %v51 = vld [vmem:[%s0 + $0x98] sm:$0xff]
  %v52 = vld [vmem:[%s0 + $0xa0] sm:$0xff]
  %v53 = vld [vmem:[%s0 + $0xa8] sm:$0xff]
  %v54 = vld [vmem:[%s0 + $0xb0] sm:$0xff]
  %v55 = vld [vmem:[%s0 + $0xb8] sm:$0xff]
  %v56 = vld [vmem:[%s0 + $0xc0] sm:$0xff]
  %v57 = vld [vmem:[%s0 + $0xc8] sm:$0xff]
  %v58 = vld [vmem:[%s0 + $0xd0] sm:$0xff]
  %v59 = vld [vmem:[%s0 + $0xd8] sm:$0xff]
  %v60 = vld [vmem:[%s0 + $0xe0] sm:$0xff]
  %v61 = vld [vmem:[%s0 + $0xe8] sm:$0xff]
  %v62 = vld [vmem:[%s0 + $0xf0] sm:$0xff]
  %v63 = vld [vmem:[%s0 + $0xf8] sm:$0xff]
  %v64 = vld [vmem:[%s0 + $0x100] sm:$0xff]
  %v65 = vld [vmem:[%s0 + $0x108] sm:$0xff]
  %v66 = vld [vmem:[%s0 + $0x110] sm:$0xff]
  %v67 = vld [vmem:[%s0 + $0x118] sm:$0xff]
  %v68 = vld [vmem:[%s0 + $0x120] sm:$0xff]
  %v69 = vld [vmem:[%s0 + $0x128] sm:$0xff]
  %v70 = vld [vmem:[%s0 + $0x130] sm:$0xff]
  %v71 = vld [vmem:[%s0 + $0x138] sm:$0xff]
  %v72 = vld [vmem:[%s0 + $0x140] sm:$0xff]
  %v73 = vld [vmem:[%s0 + $0x148] sm:$0xff]
  %v74 = vld [vmem:[%s0 + $0x150] sm:$0xff]
  %v75 = vld [vmem:[%s0 + $0x158] sm:$0xff]
  %v76 = vld [vmem:[%s0 + $0x160] sm:$0xff]
  %v77 = vld [vmem:[%s0 + $0x168] sm:$0xff]
  %v78 = vld [vmem:[%s0 + $0x170] sm:$0xff]
  %v79 = vld [vmem:[%s0 + $0x178] sm:$0xff]
  %v80 = vld [vmem:[%s0 + $0x180] sm:$0xff]
  %v81 = vld [vmem:[%s0 + $0x188] sm:$0xff]
  %v82 = vld [vmem:[%s0 + $0x190] sm:$0xff]
  %v83 = vld [vmem:[%s0 + $0x198] sm:$0xff]
  %v84 = vld [vmem:[%s0 + $0x1a0] sm:$0xff]
  %v85 = vld [vmem:[%s0 + $0x1a8] sm:$0xff]
  %v86 = vld [vmem:[%s0 + $0x1b0] sm:$0xff]
  %v87 = vld [vmem:[%s0 + $0x1b8] sm:$0xff]
  %v88 = vld [vmem:[%s0 + $0x1c0] sm:$0xff]
  %v89 = vld [vmem:[%s0 + $0x1c8] sm:$0xff]
  %v90 = vld [vmem:[%s0 + $0x1d0] sm:$0xff]
  %v91 = vld [vmem:[%s0 + $0x1d8] sm:$0xff]
  %v92 = vld [vmem:[%s0 + $0x1e0] sm:$0xff]
  %v93 = vld [vmem:[%s0 + $0x1e8] sm:$0xff]
  %v94 = vld [vmem:[%s0 + $0x1f0] sm:$0xff]
  %v95 = vld [vmem:[%s0 + $0x1f8] sm:$0xff]
  %v96 = vld [vmem:[%s0 + $0x200] sm:$0xff]
  %v97 = vld [vmem:[%s0 + $0x208] sm:$0xff]
  %v98 = vld [vmem:[%s0 + $0x210] sm:$0xff]
  %v99 = vld [vmem:[%s0 + $0x218] sm:$0xff]
  %v100 = vld [vmem:[%s0 + $0x220] sm:$0xff]
  %v101 = vld [vmem:[%s0 + $0x228] sm:$0xff]
  %v102 = vld [vmem:[%s0 + $0x230] sm:$0xff]
  %v103 = vld [vmem:[%s0 + $0x238] sm:$0xff]
  %v104 = vld [vmem:[%s1] sm:$0xff]
  %v105 = vld [vmem:[%s1 + $0x8] sm:$0xff]
  %v106 = vld [vmem:[%s1 + $0x10] sm:$0xff]
  %v107 = vld [vmem:[%s1 + $0x18] sm:$0xff]
  %v108 = vld [vmem:[%s1 + $0x20] sm:$0xff]
  %v109 = vld [vmem:[%s1 + $0x28] sm:$0xff]
  %v110 = vld [vmem:[%s1 + $0x30] sm:$0xff]
  %v111 = vld [vmem:[%s1 + $0x38] sm:$0xff]
  %v112 = vld [vmem:[%s1 + $0x40] sm:$0xff]
  %v113 = vld [vmem:[%s1 + $0x48] sm:$0xff]
  %v114 = vld [vmem:[%s1 + $0x50] sm:$0xff]
  %v115 = vld [vmem:[%s1 + $0x58] sm:$0xff]
  %v116 = vld [vmem:[%s1 + $0x60] sm:$0xff]
  %v117 = vld [vmem:[%s1 + $0x68] sm:$0xff]
  %v118 = vld [vmem:[%s1 + $0x70] sm:$0xff]
  %v119 = vld [vmem:[%s1 + $0x78] sm:$0xff]
  %v120 = vld [vmem:[%s1 + $0x80] sm:$0xff]
  %v121 = vld [vmem:[%s1 + $0x88] sm:$0xff]
  %v122 = vld [vmem:[%s1 + $0x90] sm:$0xff]
  %v123 = vld [vmem:[%s1 + $0x98] sm:$0xff]
  %v124 = vld [vmem:[%s1 + $0xa0] sm:$0xff]
  %v125 = vld [vmem:[%s1 + $0xa8] sm:$0xff]
  %v126 = vld [vmem:[%s1 + $0xb0] sm:$0xff]
  %v127 = vld [vmem:[%s1 + $0xb8] sm:$0xff]
  %v128 = vld [vmem:[%s1 + $0xc0] sm:$0xff]
  %v129 = vld [vmem:[%s1 + $0xc8] sm:$0xff]
  %v130 = vld [vmem:[%s1 + $0xd0] sm:$0xff]
  %v131 = vld [vmem:[%s1 + $0xd8] sm:$0xff]
  %v132 = vld [vmem:[%s1 + $0xe0] sm:$0xff]
  %v133 = vld [vmem:[%s1 + $0xe8] sm:$0xff]
  %v134 = vld [vmem:[%s1 + $0xf0] sm:$0xff]
  %v135 = vld [vmem:[%s1 + $0xf8] sm:$0xff]
  %v136 = vld [vmem:[%s1 + $0x100] sm:$0xff]
  %v137 = vld [vmem:[%s1 + $0x108] sm:$0xff]
  %v138 = vld [vmem:[%s1 + $0x110] sm:$0xff]
  %v139 = vld [vmem:[%s1 + $0x118] sm:$0xff]
  %v140 = vld [vmem:[%s1 + $0x120] sm:$0xff]
  %v141 = vld [vmem:[%s1 + $0x128] sm:$0xff]
  %v142 = vld [vmem:[%s1 + $0x130] sm:$0xff]
  %v143 = vld [vmem:[%s1 + $0x138] sm:$0xff]
  %v144 = vld [vmem:[%s1 + $0x140] sm:$0xff]
  %v145 = vld [vmem:[%s1 + $0x148] sm:$0xff]
  %v146 = vld [vmem:[%s1 + $0x150] sm:$0xff]
  %v147 = vld [vmem:[%s1 + $0x158] sm:$0xff]
  %v148 = vld [vmem:[%s1 + $0x160] sm:$0xff]
  %v149 = vld [vmem:[%s1 + $0x168] sm:$0xff]
  %v150 = vld [vmem:[%s1 + $0x170] sm:$0xff]
  %v151 = vld [vmem:[%s1 + $0x178] sm:$0xff]
  %v152 = vld [vmem:[%s1 + $0x180] sm:$0xff]
  %v153 = vld [vmem:[%s1 + $0x188] sm:$0xff]
  %v154 = vld [vmem:[%s1 + $0x190] sm:$0xff]
  %v155 = vld [vmem:[%s1 + $0x198] sm:$0xff]
  %v156 = vld [vmem:[%s1 + $0x1a0] sm:$0xff]
  %v157 = vld [vmem:[%s1 + $0x1a8] sm:$0xff]
  %v158 = vld [vmem:[%s1 + $0x1b0] sm:$0xff]
  %v159 = vld [vmem:[%s1 + $0x1b8] sm:$0xff]
  %v160 = vld [vmem:[%s1 + $0x1c0] sm:$0xff]
  %v161 = vld [vmem:[%s1 + $0x1c8] sm:$0xff]
  %v162 = vld [vmem:[%s1 + $0x1d0] sm:$0xff]
  %v163 = vld [vmem:[%s1 + $0x1d8] sm:$0xff]
  %v164 = vld [vmem:[%s1 + $0x1e0] sm:$0xff]
  %v165 = vld [vmem:[%s1 + $0x1e8] sm:$0xff]
  %v166 = vld [vmem:[%s1 + $0x1f0] sm:$0xff]
  %v167 = vld [vmem:[%s1 + $0x1f8] sm:$0xff]
  %v168 = vld [vmem:[%s1 + $0x200] sm:$0xff]
  %v169 = vld [vmem:[%s1 + $0x208] sm:$0xff]
  %v170 = vld [vmem:[%s1 + $0x210] sm:$0xff]
  %v171 = vld [vmem:[%s1 + $0x218] sm:$0xff]
  %v172 = vld [vmem:[%s1 + $0x220] sm:$0xff]
  %v173 = vld [vmem:[%s1 + $0x228] sm:$0xff]
  %v174 = vld [vmem:[%s1 + $0x230] sm:$0xff]
  %v175 = vld [vmem:[%s1 + $0x238] sm:$0xff]
  %v176 = vld [vmem:[%s1 + $0x240] sm:$0xff]
  %v177 = vld [vmem:[%s1 + $0x248] sm:$0xff]
  %v178 = vld [vmem:[%s1 + $0x250] sm:$0xff]
  %v179 = vld [vmem:[%s1 + $0x258] sm:$0xff]
  %v180 = vld [vmem:[%s1 + $0x260] sm:$0xff]
  %v181 = vld [vmem:[%s1 + $0x268] sm:$0xff]
  %v182 = vld [vmem:[%s1 + $0x270] sm:$0xff]
  %v183 = vld [vmem:[%s1 + $0x278] sm:$0xff]
  %v184 = vld [vmem:[%s1 + $0x280] sm:$0xff]
  %v185 = vld [vmem:[%s1 + $0x288] sm:$0xff]
  %v186 = vld [vmem:[%s1 + $0x290] sm:$0xff]
  %v187 = vld [vmem:[%s1 + $0x298] sm:$0xff]
  %v188 = vld [vmem:[%s1 + $0x2a0] sm:$0xff]
  %v189 = vld [vmem:[%s1 + $0x2a8] sm:$0xff]
  %v190 = vld [vmem:[%s1 + $0x2b0] sm:$0xff]
  %v191 = vld [vmem:[%s1 + $0x2b8] sm:$0xff]
  %v192 = vld [vmem:[%s1 + $0x2c0] sm:$0xff]
  %v193 = vld [vmem:[%s1 + $0x2c8] sm:$0xff]
  %v194 = vld [vmem:[%s1 + $0x2d0] sm:$0xff]
  %v195 = vld [vmem:[%s1 + $0x2d8] sm:$0xff]
  %v196 = vld [vmem:[%s1 + $0x2e0] sm:$0xff]
  %v197 = vld [vmem:[%s1 + $0x2e8] sm:$0xff]
  %v198 = vld [vmem:[%s1 + $0x2f0] sm:$0xff]
  %v199 = vld [vmem:[%s1 + $0x2f8] sm:$0xff]
  %201 = vset.pattern.permute.xlu0 0
  %202 = vperm.xlu0 %201, %v20
  %v203 = vpop.permute.xlu0 %202
  %206 = vset.pattern.permute.xlu0 0
  %207 = vperm.xlu0 %206, %v21
  %v208 = vpop.permute.xlu0 %207
  %211 = vset.pattern.permute.xlu0 0
  %212 = vperm.xlu0 %211, %v22
  %v213 = vpop.permute.xlu0 %212
  %216 = vset.pattern.permute.xlu0 0
  %217 = vperm.xlu0 %216, %v23
  %v218 = vpop.permute.xlu0 %217
  %221 = vset.pattern.permute.xlu0 0
  %222 = vperm.xlu0 %221, %v24
  %v223 = vpop.permute.xlu0 %222
  %226 = vset.pattern.permute.xlu0 0
  %227 = vperm.xlu0 %226, %v25
  %v228 = vpop.permute.xlu0 %227
  %231 = vset.pattern.permute.xlu0 0
  %232 = vperm.xlu0 %231, %v26
  %v233 = vpop.permute.xlu0 %232
  %236 = vset.pattern.permute.xlu0 0
  %237 = vperm.xlu0 %236, %v27
  %v238 = vpop.permute.xlu0 %237
  %241 = vset.pattern.permute.xlu0 0
  %242 = vperm.xlu0 %241, %v28
  %v243 = vpop.permute.xlu0 %242
  %246 = vset.pattern.permute.xlu0 0
  %247 = vperm.xlu0 %246, %v29
  %v248 = vpop.permute.xlu0 %247
  %251 = vset.pattern.permute.xlu0 0
  %252 = vperm.xlu0 %251, %v30
  %v253 = vpop.permute.xlu0 %252
  %256 = vset.pattern.permute.xlu0 0
  %257 = vperm.xlu0 %256, %v31
  %v258 = vpop.permute.xlu0 %257
  %260 = vmatprep.subr.mxu0 0.0
  %261 = vmatpush1.msra.mxu0 %v104
  %262 = vmatprep.subr.mxu0 0.0
  %263 = vmatpush1.msra.mxu0 %v105
  %264 = vmatprep.subr.mxu0 0.0
  %265 = vmatpush1.msra.mxu0 %v106
  %266 = vmatprep.subr.mxu0 0.0
  %267 = vmatpush1.msra.mxu0 %v107
  %268 = vmatprep.subr.mxu0 0.0
  %269 = vmatpush1.msra.mxu0 %v108
  %270 = vmatprep.subr.mxu0 0.0
  %271 = vmatpush1.msra.mxu0 %v109
  %272 = vmatprep.subr.mxu0 0.0
  %273 = vmatpush1.msra.mxu0 %v110
  %274 = vmatprep.subr.mxu0 0.0
  %275 = vmatpush1.msra.mxu0 %v111
  %276 = vmatprep.subr.mxu0 0.0
  %277 = vmatpush1.msra.mxu0 %v112
  %278 = vmatprep.subr.mxu0 0.0
  %279 = vmatpush1.msra.mxu0 %v113
  %280 = vmatprep.subr.mxu0 0.0
  %281 = vmatpush1.msra.mxu0 %v114
  %282 = vmatprep.subr.mxu0 0.0
  %283 = vmatpush1.msra.mxu0 %v115
  %284 = vmatprep.subr.mxu0 0.0
  %285 = vmatpush1.msra.mxu0 %v116
  %286 = vmatprep.subr.mxu0 0.0
  %287 = vmatpush1.msra.mxu0 %v117
  %288 = vmatprep.subr.mxu0 0.0
  %289 = vmatpush1.msra.mxu0 %v118
  %290 = vmatprep.subr.mxu0 0.0
  %291 = vmatpush1.msra.mxu0 %v119
  %292 = vmatprep.subr.mxu0 0.0
  %293 = vmatpush1.msra.mxu0 %v120
  %294 = vmatprep.subr.mxu0 0.0
  %295 = vmatpush1.msra.mxu0 %v121
  %296 = vmatprep.subr.mxu0 0.0
  %297 = vmatpush1.msra.mxu0 %v122
  %298 = vmatprep.subr.mxu0 0.0
  %299 = vmatpush1.msra.mxu0 %v123
  %300 = vmatprep.subr.mxu0 0.0
  %301 = vmatpush1.msra.mxu0 %v124
  %302 = vmatprep.subr.mxu0 0.0
  %303 = vmatpush1.msra.mxu0 %v125
  %304 = vmatprep.subr.mxu0 0.0
  %305 = vmatpush1.msra.mxu0 %v126
  %306 = vmatprep.subr.mxu0 0.0
  %307 = vmatpush1.msra.mxu0 %v127
  %308 = vmatprep.subr.mxu0 0.0
  %309 = vmatpush1.msra.mxu0 %v128
  %310 = vmatprep.subr.mxu0 0.0
  %311 = vmatpush1.msra.mxu0 %v129
  %312 = vmatprep.subr.mxu0 0.0
  %313 = vmatpush1.msra.mxu0 %v130
  %314 = vmatprep.subr.mxu0 0.0
  %315 = vmatpush1.msra.mxu0 %v131
  %316 = vmatprep.subr.mxu0 0.0
  %317 = vmatpush1.msra.mxu0 %v132
  %318 = vmatprep.subr.mxu0 0.0
  %319 = vmatpush1.msra.mxu0 %v133
  %320 = vmatprep.subr.mxu0 0.0
  %321 = vmatpush1.msra.mxu0 %v134
  %322 = vmatprep.subr.mxu0 0.0
  %323 = vmatpush1.msra.mxu0 %v135
  %324 = vmatprep.mubr.f32.mxu0 %v33
  %325 = vmatmul.mubr.f32.gmra.mrb[0].mxu0 %v32
  %v326 = vpop.f32.mrb[0].mxu0
  %v327 = vadd.f32 %v203, %v326
  %v328 = vpop.f32.mrb[0].mxu0
  %329 = vmatprep.mubr.f32.mxu0 %v39
  %330 = vmatmul.mubr.f32.gmra.mrb[0].mxu0 %v38
  %v331 = vpop.f32.mrb[0].mxu0
  %v332 = vadd.f32 %v208, %v331
  %v333 = vpop.f32.mrb[0].mxu0
  %334 = vmatprep.mubr.f32.mxu0 %v45
  %335 = vmatmul.mubr.f32.gmra.mrb[0].mxu0 %v44
  %v336 = vpop.f32.mrb[0].mxu0
  %v337 = vadd.f32 %v213, %v336
  %v338 = vpop.f32.mrb[0].mxu0
  %339 = vmatprep.mubr.f32.mxu0 %v51
  %340 = vmatmul.mubr.f32.gmra.mrb[0].mxu0 %v50
  %v341 = vpop.f32.mrb[0].mxu0
  %v342 = vadd.f32 %v218, %v341
  %v343 = vpop.f32.mrb[0].mxu0
  %344 = vmatprep.mubr.f32.mxu0 %v57
  %345 = vmatmul.mubr.f32.gmra.mrb[0].mxu0 %v56
  %v346 = vpop.f32.mrb[0].mxu0
  %v347 = vadd.f32 %v223, %v346
  %v348 = vpop.f32.mrb[0].mxu0
  %349 = vmatprep.mubr.f32.mxu0 %v63
  %350 = vmatmul.mubr.f32.gmra.mrb[0].mxu0 %v62
  %v351 = vpop.f32.mrb[0].mxu0
  %v352 = vadd.f32 %v228, %v351
  %v353 = vpop.f32.mrb[0].mxu0
  %354 = vmatprep.mubr.f32.mxu0 %v69
  %355 = vmatmul.mubr.f32.gmra.mrb[0].mxu0 %v68
  %v356 = vpop.f32.mrb[0].mxu0
  %v357 = vadd.f32 %v233, %v356
  %v358 = vpop.f32.mrb[0].mxu0
  %359 = vmatprep.mubr.f32.mxu0 %v75
  %360 = vmatmul.mubr.f32.gmra.mrb[0].mxu0 %v74
  %v361 = vpop.f32.mrb[0].mxu0
  %v362 = vadd.f32 %v238, %v361
  %v363 = vpop.f32.mrb[0].mxu0
  %364 = vmatprep.mubr.f32.mxu0 %v81
  %365 = vmatmul.mubr.f32.gmra.mrb[0].mxu0 %v80
  %v366 = vpop.f32.mrb[0].mxu0
  %v367 = vadd.f32 %v243, %v366
  %v368 = vpop.f32.mrb[0].mxu0
  %369 = vmatprep.mubr.f32.mxu0 %v87
  %370 = vmatmul.mubr.f32.gmra.mrb[0].mxu0 %v86
  %v371 = vpop.f32.mrb[0].mxu0
  %v372 = vadd.f32 %v248, %v371
  %v373 = vpop.f32.mrb[0].mxu0
  %374 = vmatprep.mubr.f32.mxu0 %v93
  %375 = vmatmul.mubr.f32.gmra.mrb[0].mxu0 %v92
  %v376 = vpop.f32.mrb[0].mxu0
  %v377 = vadd.f32 %v253, %v376
  %v378 = vpop.f32.mrb[0].mxu0
  %379 = vmatprep.mubr.f32.mxu0 %v99
  %380 = vmatmul.mubr.f32.gmra.mrb[0].mxu0 %v98
  %v381 = vpop.f32.mrb[0].mxu0
  %v382 = vadd.f32 %v258, %v381
  %v383 = vpop.f32.mrb[0].mxu0
  %384 = vdwg.mxu0
  %385 = vmatprep.subr.mxu0 0.0
  %386 = vmatpush1.msra.mxu0 %v136
  %387 = vmatprep.subr.mxu0 0.0
  %388 = vmatpush1.msra.mxu0 %v137
  %389 = vmatprep.subr.mxu0 0.0
  %390 = vmatpush1.msra.mxu0 %v138
  %391 = vmatprep.subr.mxu0 0.0
  %392 = vmatpush1.msra.mxu0 %v139
  %393 = vmatprep.subr.mxu0 0.0
  %394 = vmatpush1.msra.mxu0 %v140
  %395 = vmatprep.subr.mxu0 0.0
  %396 = vmatpush1.msra.mxu0 %v141
  %397 = vmatprep.subr.mxu0 0.0
  %398 = vmatpush1.msra.mxu0 %v142
  %399 = vmatprep.subr.mxu0 0.0
  %400 = vmatpush1.msra.mxu0 %v143
  %401 = vmatprep.subr.mxu0 0.0
  %402 = vmatpush1.msra.mxu0 %v144
  %403 = vmatprep.subr.mxu0 0.0
  %404 = vmatpush1.msra.mxu0 %v145
  %405 = vmatprep.subr.mxu0 0.0
  %406 = vmatpush1.msra.mxu0 %v146
  %407 = vmatprep.subr.mxu0 0.0
  %408 = vmatpush1.msra.mxu0 %v147
  %409 = vmatprep.subr.mxu0 0.0
  %410 = vmatpush1.msra.mxu0 %v148
  %411 = vmatprep.subr.mxu0 0.0
  %412 = vmatpush1.msra.mxu0 %v149
  %413 = vmatprep.subr.mxu0 0.0
  %414 = vmatpush1.msra.mxu0 %v150
  %415 = vmatprep.subr.mxu0 0.0
  %416 = vmatpush1.msra.mxu0 %v151
  %417 = vmatprep.subr.mxu0 0.0
  %418 = vmatpush1.msra.mxu0 %v152
  %419 = vmatprep.subr.mxu0 0.0
  %420 = vmatpush1.msra.mxu0 %v153
  %421 = vmatprep.subr.mxu0 0.0
  %422 = vmatpush1.msra.mxu0 %v154
  %423 = vmatprep.subr.mxu0 0.0
  %424 = vmatpush1.msra.mxu0 %v155
  %425 = vmatprep.subr.mxu0 0.0
  %426 = vmatpush1.msra.mxu0 %v156
  %427 = vmatprep.subr.mxu0 0.0
  %428 = vmatpush1.msra.mxu0 %v157
  %429 = vmatprep.subr.mxu0 0.0
  %430 = vmatpush1.msra.mxu0 %v158
  %431 = vmatprep.subr.mxu0 0.0
  %432 = vmatpush1.msra.mxu0 %v159
  %433 = vmatprep.subr.mxu0 0.0
  %434 = vmatpush1.msra.mxu0 %v160
  %435 = vmatprep.subr.mxu0 0.0
  %436 = vmatpush1.msra.mxu0 %v161
  %437 = vmatprep.subr.mxu0 0.0
  %438 = vmatpush1.msra.mxu0 %v162
  %439 = vmatprep.subr.mxu0 0.0
  %440 = vmatpush1.msra.mxu0 %v163
  %441 = vmatprep.subr.mxu0 0.0
  %442 = vmatpush1.msra.mxu0 %v164
  %443 = vmatprep.subr.mxu0 0.0
  %444 = vmatpush1.msra.mxu0 %v165
  %445 = vmatprep.subr.mxu0 0.0
  %446 = vmatpush1.msra.mxu0 %v166
  %447 = vmatprep.subr.mxu0 0.0
  %448 = vmatpush1.msra.mxu0 %v167
  %449 = vmatprep.mubr.f32.mxu0 %v35
  %450 = vmatmul.mubr.f32.gmra.mrb[0].mxu0 %v34
  %v451 = vpop.f32.mrb[0].mxu0
  %v452 = vadd.f32 %v327, %v451
  %v453 = vpop.f32.mrb[0].mxu0
  %454 = vmatprep.mubr.f32.mxu0 %v41
  %455 = vmatmul.mubr.f32.gmra.mrb[0].mxu0 %v40
  %v456 = vpop.f32.mrb[0].mxu0
  %v457 = vadd.f32 %v332, %v456
  %v458 = vpop.f32.mrb[0].mxu0
  %459 = vmatprep.mubr.f32.mxu0 %v47
  %460 = vmatmul.mubr.f32.gmra.mrb[0].mxu0 %v46
  %v461 = vpop.f32.mrb[0].mxu0
  %v462 = vadd.f32 %v337, %v461
  %v463 = vpop.f32.mrb[0].mxu0
  %464 = vmatprep.mubr.f32.mxu0 %v53
  %465 = vmatmul.mubr.f32.gmra.mrb[0].mxu0 %v52
  %v466 = vpop.f32.mrb[0].mxu0
  %v467 = vadd.f32 %v342, %v466
  %v468 = vpop.f32.mrb[0].mxu0
  %469 = vmatprep.mubr.f32.mxu0 %v59
  %470 = vmatmul.mubr.f32.gmra.mrb[0].mxu0 %v58
  %v471 = vpop.f32.mrb[0].mxu0
  %v472 = vadd.f32 %v347, %v471
  %v473 = vpop.f32.mrb[0].mxu0
  %474 = vmatprep.mubr.f32.mxu0 %v65
  %475 = vmatmul.mubr.f32.gmra.mrb[0].mxu0 %v64
  %v476 = vpop.f32.mrb[0].mxu0
  %v477 = vadd.f32 %v352, %v476
  %v478 = vpop.f32.mrb[0].mxu0
  %479 = vmatprep.mubr.f32.mxu0 %v71
  %480 = vmatmul.mubr.f32.gmra.mrb[0].mxu0 %v70
  %v481 = vpop.f32.mrb[0].mxu0
  %v482 = vadd.f32 %v357, %v481
  %v483 = vpop.f32.mrb[0].mxu0
  %484 = vmatprep.mubr.f32.mxu0 %v77
  %485 = vmatmul.mubr.f32.gmra.mrb[0].mxu0 %v76
  %v486 = vpop.f32.mrb[0].mxu0
  %v487 = vadd.f32 %v362, %v486
  %v488 = vpop.f32.mrb[0].mxu0
  %489 = vmatprep.mubr.f32.mxu0 %v83
  %490 = vmatmul.mubr.f32.gmra.mrb[0].mxu0 %v82
  %v491 = vpop.f32.mrb[0].mxu0
  %v492 = vadd.f32 %v367, %v491
  %v493 = vpop.f32.mrb[0].mxu0
  %494 = vmatprep.mubr.f32.mxu0 %v89
  %495 = vmatmul.mubr.f32.gmra.mrb[0].mxu0 %v88
  %v496 = vpop.f32.mrb[0].mxu0
  %v497 = vadd.f32 %v372, %v496
  %v498 = vpop.f32.mrb[0].mxu0
  %499 = vmatprep.mubr.f32.mxu0 %v95
  %500 = vmatmul.mubr.f32.gmra.mrb[0].mxu0 %v94
  %v501 = vpop.f32.mrb[0].mxu0
  %v502 = vadd.f32 %v377, %v501
  %v503 = vpop.f32.mrb[0].mxu0
  %504 = vmatprep.mubr.f32.mxu0 %v101
  %505 = vmatmul.mubr.f32.gmra.mrb[0].mxu0 %v100
  %v506 = vpop.f32.mrb[0].mxu0
  %v507 = vadd.f32 %v382, %v506
  %v508 = vpop.f32.mrb[0].mxu0
  %509 = vdwg.mxu0
  %510 = vmatprep.subr.mxu0 0.0
  %511 = vmatpush1.msra.mxu0 %v168
  %512 = vmatprep.subr.mxu0 0.0
  %513 = vmatpush1.msra.mxu0 %v169
  %514 = vmatprep.subr.mxu0 0.0
  %515 = vmatpush1.msra.mxu0 %v170
  %516 = vmatprep.subr.mxu0 0.0
  %517 = vmatpush1.msra.mxu0 %v171
  %518 = vmatprep.subr.mxu0 0.0
  %519 = vmatpush1.msra.mxu0 %v172
  %520 = vmatprep.subr.mxu0 0.0
  %521 = vmatpush1.msra.mxu0 %v173
  %522 = vmatprep.subr.mxu0 0.0
  %523 = vmatpush1.msra.mxu0 %v174
  %524 = vmatprep.subr.mxu0 0.0
  %525 = vmatpush1.msra.mxu0 %v175
  %526 = vmatprep.subr.mxu0 0.0
  %527 = vmatpush1.msra.mxu0 %v176
  %528 = vmatprep.subr.mxu0 0.0
  %529 = vmatpush1.msra.mxu0 %v177
  %530 = vmatprep.subr.mxu0 0.0
  %531 = vmatpush1.msra.mxu0 %v178
  %532 = vmatprep.subr.mxu0 0.0
  %533 = vmatpush1.msra.mxu0 %v179
  %534 = vmatprep.subr.mxu0 0.0
  %535 = vmatpush1.msra.mxu0 %v180
  %536 = vmatprep.subr.mxu0 0.0
  %537 = vmatpush1.msra.mxu0 %v181
  %538 = vmatprep.subr.mxu0 0.0
  %539 = vmatpush1.msra.mxu0 %v182
  %540 = vmatprep.subr.mxu0 0.0
  %541 = vmatpush1.msra.mxu0 %v183
  %542 = vmatprep.subr.mxu0 0.0
  %543 = vmatpush1.msra.mxu0 %v184
  %544 = vmatprep.subr.mxu0 0.0
  %545 = vmatpush1.msra.mxu0 %v185
  %546 = vmatprep.subr.mxu0 0.0
  %547 = vmatpush1.msra.mxu0 %v186
  %548 = vmatprep.subr.mxu0 0.0
  %549 = vmatpush1.msra.mxu0 %v187
  %550 = vmatprep.subr.mxu0 0.0
  %551 = vmatpush1.msra.mxu0 %v188
  %552 = vmatprep.subr.mxu0 0.0
  %553 = vmatpush1.msra.mxu0 %v189
  %554 = vmatprep.subr.mxu0 0.0
  %555 = vmatpush1.msra.mxu0 %v190
  %556 = vmatprep.subr.mxu0 0.0
  %557 = vmatpush1.msra.mxu0 %v191
  %558 = vmatprep.subr.mxu0 0.0
  %559 = vmatpush1.msra.mxu0 %v192
  %560 = vmatprep.subr.mxu0 0.0
  %561 = vmatpush1.msra.mxu0 %v193
  %562 = vmatprep.subr.mxu0 0.0
  %563 = vmatpush1.msra.mxu0 %v194
  %564 = vmatprep.subr.mxu0 0.0
  %565 = vmatpush1.msra.mxu0 %v195
  %566 = vmatprep.subr.mxu0 0.0
  %567 = vmatpush1.msra.mxu0 %v196
  %568 = vmatprep.subr.mxu0 0.0
  %569 = vmatpush1.msra.mxu0 %v197
  %570 = vmatprep.subr.mxu0 0.0
  %571 = vmatpush1.msra.mxu0 %v198
  %572 = vmatprep.subr.mxu0 0.0
  %573 = vmatpush1.msra.mxu0 %v199
  %574 = vmatprep.mubr.f32.mxu0 %v37
  %575 = vmatmul.mubr.f32.gmra.mrb[0].mxu0 %v36
  %v576 = vpop.f32.mrb[0].mxu0
  %v577 = vadd.f32 %v452, %v576
  %v578 = vpop.f32.mrb[0].mxu0
  %579 = vmatprep.mubr.f32.mxu0 %v43
  %580 = vmatmul.mubr.f32.gmra.mrb[0].mxu0 %v42
  %v581 = vpop.f32.mrb[0].mxu0
  %v582 = vadd.f32 %v457, %v581
  %v583 = vpop.f32.mrb[0].mxu0
  %584 = vmatprep.mubr.f32.mxu0 %v49
  %585 = vmatmul.mubr.f32.gmra.mrb[0].mxu0 %v48
  %v586 = vpop.f32.mrb[0].mxu0
  %v587 = vadd.f32 %v462, %v586
  %v588 = vpop.f32.mrb[0].mxu0
  %589 = vmatprep.mubr.f32.mxu0 %v55
  %590 = vmatmul.mubr.f32.gmra.mrb[0].mxu0 %v54
  %v591 = vpop.f32.mrb[0].mxu0
  %v592 = vadd.f32 %v467, %v591
  %v593 = vpop.f32.mrb[0].mxu0
  %594 = vmatprep.mubr.f32.mxu0 %v61
  %595 = vmatmul.mubr.f32.gmra.mrb[0].mxu0 %v60
  %v596 = vpop.f32.mrb[0].mxu0
  %v597 = vadd.f32 %v472, %v596
  %v598 = vpop.f32.mrb[0].mxu0
  %599 = vmatprep.mubr.f32.mxu0 %v67
  %600 = vmatmul.mubr.f32.gmra.mrb[0].mxu0 %v66
  %v601 = vpop.f32.mrb[0].mxu0
  %v602 = vadd.f32 %v477, %v601
  %v603 = vpop.f32.mrb[0].mxu0
  %604 = vmatprep.mubr.f32.mxu0 %v73
  %605 = vmatmul.mubr.f32.gmra.mrb[0].mxu0 %v72
  %v606 = vpop.f32.mrb[0].mxu0
  %v607 = vadd.f32 %v482, %v606
  %v608 = vpop.f32.mrb[0].mxu0
  %609 = vmatprep.mubr.f32.mxu0 %v79
  %610 = vmatmul.mubr.f32.gmra.mrb[0].mxu0 %v78
  %v611 = vpop.f32.mrb[0].mxu0
  %v612 = vadd.f32 %v487, %v611
  %v613 = vpop.f32.mrb[0].mxu0
  %614 = vmatprep.mubr.f32.mxu0 %v85
  %615 = vmatmul.mubr.f32.gmra.mrb[0].mxu0 %v84
  %v616 = vpop.f32.mrb[0].mxu0
  %v617 = vadd.f32 %v492, %v616
  %v618 = vpop.f32.mrb[0].mxu0
  %619 = vmatprep.mubr.f32.mxu0 %v91
  %620 = vmatmul.mubr.f32.gmra.mrb[0].mxu0 %v90
  %v621 = vpop.f32.mrb[0].mxu0
  %v622 = vadd.f32 %v497, %v621
  %v623 = vpop.f32.mrb[0].mxu0
  %624 = vmatprep.mubr.f32.mxu0 %v97
  %625 = vmatmul.mubr.f32.gmra.mrb[0].mxu0 %v96
  %v626 = vpop.f32.mrb[0].mxu0
  %v627 = vadd.f32 %v502, %v626
  %v628 = vpop.f32.mrb[0].mxu0
  %629 = vmatprep.mubr.f32.mxu0 %v103
  %630 = vmatmul.mubr.f32.gmra.mrb[0].mxu0 %v102
  %v631 = vpop.f32.mrb[0].mxu0
  %v632 = vadd.f32 %v507, %v631
  %v633 = vpop.f32.mrb[0].mxu0
  %634 = vdwg.mxu0
  %vm635 = vcmask 261120
  %636 = vst.msk [vmem:[%s5] sm:$0xff] %vm635, %v577
  %637 = vst.msk [vmem:[%s5 + $0x8] sm:$0xff] %vm635, %v582
  %638 = vst.msk [vmem:[%s5 + $0x10] sm:$0xff] %vm635, %v587
  %639 = vst.msk [vmem:[%s5 + $0x18] sm:$0xff] %vm635, %v592
  %640 = vst.msk [vmem:[%s5 + $0x20] sm:$0xff] %vm635, %v597
  %641 = vst.msk [vmem:[%s5 + $0x28] sm:$0xff] %vm635, %v602
  %642 = vst.msk [vmem:[%s5 + $0x30] sm:$0xff] %vm635, %v607
  %643 = vst.msk [vmem:[%s5 + $0x38] sm:$0xff] %vm635, %v612
  %644 = vst.msk [vmem:[%s5 + $0x40] sm:$0xff] %vm635, %v617
  %645 = vst.msk [vmem:[%s5 + $0x48] sm:$0xff] %vm635, %v622
  %646 = vst.msk [vmem:[%s5 + $0x50] sm:$0xff] %vm635, %v627
  %647 = vst.msk [vmem:[%s5 + $0x58] sm:$0xff] %vm635, %v632
  %s648 = scalar_lea.vmem %s0, 576
  %v649 = vld [vmem:[%s648] sm:$0xff]
  %v650 = vld [vmem:[%s648 + $0x8] sm:$0xff]
  %v651 = vld [vmem:[%s648 + $0x10] sm:$0xff]
  %v652 = vld [vmem:[%s648 + $0x18] sm:$0xff]
  %v653 = vld [vmem:[%s648 + $0x20] sm:$0xff]
  %v654 = vld [vmem:[%s648 + $0x28] sm:$0xff]
  %v655 = vld [vmem:[%s648 + $0x30] sm:$0xff]
  %v656 = vld [vmem:[%s648 + $0x38] sm:$0xff]
  %v657 = vld [vmem:[%s648 + $0x40] sm:$0xff]
  %v658 = vld [vmem:[%s648 + $0x48] sm:$0xff]
  %v659 = vld [vmem:[%s648 + $0x50] sm:$0xff]
  %v660 = vld [vmem:[%s648 + $0x58] sm:$0xff]
  %v661 = vld [vmem:[%s648 + $0x60] sm:$0xff]
  %v662 = vld [vmem:[%s648 + $0x68] sm:$0xff]
  %v663 = vld [vmem:[%s648 + $0x70] sm:$0xff]
  %v664 = vld [vmem:[%s648 + $0x78] sm:$0xff]
  %v665 = vld [vmem:[%s648 + $0x80] sm:$0xff]
  %v666 = vld [vmem:[%s648 + $0x88] sm:$0xff]
  %v667 = vld [vmem:[%s648 + $0x90] sm:$0xff]
  %v668 = vld [vmem:[%s648 + $0x98] sm:$0xff]
  %v669 = vld [vmem:[%s648 + $0xa0] sm:$0xff]
  %v670 = vld [vmem:[%s648 + $0xa8] sm:$0xff]
  %v671 = vld [vmem:[%s648 + $0xb0] sm:$0xff]
  %v672 = vld [vmem:[%s648 + $0xb8] sm:$0xff]
  %v673 = vld [vmem:[%s648 + $0xc0] sm:$0xff]
  %v674 = vld [vmem:[%s648 + $0xc8] sm:$0xff]
  %v675 = vld [vmem:[%s648 + $0xd0] sm:$0xff]
  %v676 = vld [vmem:[%s648 + $0xd8] sm:$0xff]
  %v677 = vld [vmem:[%s648 + $0xe0] sm:$0xff]
  %v678 = vld [vmem:[%s648 + $0xe8] sm:$0xff]
  %v679 = vld [vmem:[%s648 + $0xf0] sm:$0xff]
  %v680 = vld [vmem:[%s648 + $0xf8] sm:$0xff]
  %v681 = vld [vmem:[%s648 + $0x100] sm:$0xff]
  %v682 = vld [vmem:[%s648 + $0x108] sm:$0xff]
  %v683 = vld [vmem:[%s648 + $0x110] sm:$0xff]
  %v684 = vld [vmem:[%s648 + $0x118] sm:$0xff]
  %v685 = vld [vmem:[%s648 + $0x120] sm:$0xff]
  %v686 = vld [vmem:[%s648 + $0x128] sm:$0xff]
  %v687 = vld [vmem:[%s648 + $0x130] sm:$0xff]
  %v688 = vld [vmem:[%s648 + $0x138] sm:$0xff]
  %v689 = vld [vmem:[%s648 + $0x140] sm:$0xff]
  %v690 = vld [vmem:[%s648 + $0x148] sm:$0xff]
  %v691 = vld [vmem:[%s648 + $0x150] sm:$0xff]
  %v692 = vld [vmem:[%s648 + $0x158] sm:$0xff]
  %v693 = vld [vmem:[%s648 + $0x160] sm:$0xff]
  %v694 = vld [vmem:[%s648 + $0x168] sm:$0xff]
  %v695 = vld [vmem:[%s648 + $0x170] sm:$0xff]
  %v696 = vld [vmem:[%s648 + $0x178] sm:$0xff]
  %v697 = vld [vmem:[%s648 + $0x180] sm:$0xff]
  %v698 = vld [vmem:[%s648 + $0x188] sm:$0xff]
  %v699 = vld [vmem:[%s648 + $0x190] sm:$0xff]
  %v700 = vld [vmem:[%s648 + $0x198] sm:$0xff]
  %v701 = vld [vmem:[%s648 + $0x1a0] sm:$0xff]
  %v702 = vld [vmem:[%s648 + $0x1a8] sm:$0xff]
  %v703 = vld [vmem:[%s648 + $0x1b0] sm:$0xff]
  %v704 = vld [vmem:[%s648 + $0x1b8] sm:$0xff]
  %v705 = vld [vmem:[%s648 + $0x1c0] sm:$0xff]
  %v706 = vld [vmem:[%s648 + $0x1c8] sm:$0xff]
  %v707 = vld [vmem:[%s648 + $0x1d0] sm:$0xff]
  %v708 = vld [vmem:[%s648 + $0x1d8] sm:$0xff]
  %v709 = vld [vmem:[%s648 + $0x1e0] sm:$0xff]
  %v710 = vld [vmem:[%s648 + $0x1e8] sm:$0xff]
  %v711 = vld [vmem:[%s648 + $0x1f0] sm:$0xff]
  %v712 = vld [vmem:[%s648 + $0x1f8] sm:$0xff]
  %v713 = vld [vmem:[%s648 + $0x200] sm:$0xff]
  %v714 = vld [vmem:[%s648 + $0x208] sm:$0xff]
  %v715 = vld [vmem:[%s648 + $0x210] sm:$0xff]
  %v716 = vld [vmem:[%s648 + $0x218] sm:$0xff]
  %v717 = vld [vmem:[%s648 + $0x220] sm:$0xff]
  %v718 = vld [vmem:[%s648 + $0x228] sm:$0xff]
  %v719 = vld [vmem:[%s648 + $0x230] sm:$0xff]
  %v720 = vld [vmem:[%s648 + $0x238] sm:$0xff]
  %s721 = scalar_lea.vmem %s1, 768
  %v722 = vld [vmem:[%s721] sm:$0xff]
  %v723 = vld [vmem:[%s721 + $0x8] sm:$0xff]
  %v724 = vld [vmem:[%s721 + $0x10] sm:$0xff]
  %v725 = vld [vmem:[%s721 + $0x18] sm:$0xff]
  %v726 = vld [vmem:[%s721 + $0x20] sm:$0xff]
  %v727 = vld [vmem:[%s721 + $0x28] sm:$0xff]
  %v728 = vld [vmem:[%s721 + $0x30] sm:$0xff]
  %v729 = vld [vmem:[%s721 + $0x38] sm:$0xff]
  %v730 = vld [vmem:[%s721 + $0x40] sm:$0xff]
  %v731 = vld [vmem:[%s721 + $0x48] sm:$0xff]
  %v732 = vld [vmem:[%s721 + $0x50] sm:$0xff]
  %v733 = vld [vmem:[%s721 + $0x58] sm:$0xff]
  %v734 = vld [vmem:[%s721 + $0x60] sm:$0xff]
  %v735 = vld [vmem:[%s721 + $0x68] sm:$0xff]
  %v736 = vld [vmem:[%s721 + $0x70] sm:$0xff]
  %v737 = vld [vmem:[%s721 + $0x78] sm:$0xff]
  %v738 = vld [vmem:[%s721 + $0x80] sm:$0xff]
  %v739 = vld [vmem:[%s721 + $0x88] sm:$0xff]
  %v740 = vld [vmem:[%s721 + $0x90] sm:$0xff]
  %v741 = vld [vmem:[%s721 + $0x98] sm:$0xff]
  %v742 = vld [vmem:[%s721 + $0xa0] sm:$0xff]
  %v743 = vld [vmem:[%s721 + $0xa8] sm:$0xff]
  %v744 = vld [vmem:[%s721 + $0xb0] sm:$0xff]
  %v745 = vld [vmem:[%s721 + $0xb8] sm:$0xff]
  %v746 = vld [vmem:[%s721 + $0xc0] sm:$0xff]
  %v747 = vld [vmem:[%s721 + $0xc8] sm:$0xff]
  %v748 = vld [vmem:[%s721 + $0xd0] sm:$0xff]
  %v749 = vld [vmem:[%s721 + $0xd8] sm:$0xff]
  %v750 = vld [vmem:[%s721 + $0xe0] sm:$0xff]
  %v751 = vld [vmem:[%s721 + $0xe8] sm:$0xff]
  %v752 = vld [vmem:[%s721 + $0xf0] sm:$0xff]
  %v753 = vld [vmem:[%s721 + $0xf8] sm:$0xff]
  %v754 = vld [vmem:[%s721 + $0x100] sm:$0xff]
  %v755 = vld [vmem:[%s721 + $0x108] sm:$0xff]
  %v756 = vld [vmem:[%s721 + $0x110] sm:$0xff]
  %v757 = vld [vmem:[%s721 + $0x118] sm:$0xff]
  %v758 = vld [vmem:[%s721 + $0x120] sm:$0xff]
  %v759 = vld [vmem:[%s721 + $0x128] sm:$0xff]
  %v760 = vld [vmem:[%s721 + $0x130] sm:$0xff]
  %v761 = vld [vmem:[%s721 + $0x138] sm:$0xff]
  %v762 = vld [vmem:[%s721 + $0x140] sm:$0xff]
  %v763 = vld [vmem:[%s721 + $0x148] sm:$0xff]
  %v764 = vld [vmem:[%s721 + $0x150] sm:$0xff]
  %v765 = vld [vmem:[%s721 + $0x158] sm:$0xff]
  %v766 = vld [vmem:[%s721 + $0x160] sm:$0xff]
  %v767 = vld [vmem:[%s721 + $0x168] sm:$0xff]
  %v768 = vld [vmem:[%s721 + $0x170] sm:$0xff]
  %v769 = vld [vmem:[%s721 + $0x178] sm:$0xff]
  %v770 = vld [vmem:[%s721 + $0x180] sm:$0xff]
  %v771 = vld [vmem:[%s721 + $0x188] sm:$0xff]
  %v772 = vld [vmem:[%s721 + $0x190] sm:$0xff]
  %v773 = vld [vmem:[%s721 + $0x198] sm:$0xff]
  %v774 = vld [vmem:[%s721 + $0x1a0] sm:$0xff]
  %v775 = vld [vmem:[%s721 + $0x1a8] sm:$0xff]
  %v776 = vld [vmem:[%s721 + $0x1b0] sm:$0xff]
  %v777 = vld [vmem:[%s721 + $0x1b8] sm:$0xff]
  %v778 = vld [vmem:[%s721 + $0x1c0] sm:$0xff]
  %v779 = vld [vmem:[%s721 + $0x1c8] sm:$0xff]
  %v780 = vld [vmem:[%s721 + $0x1d0] sm:$0xff]
  %v781 = vld [vmem:[%s721 + $0x1d8] sm:$0xff]
  %v782 = vld [vmem:[%s721 + $0x1e0] sm:$0xff]
  %v783 = vld [vmem:[%s721 + $0x1e8] sm:$0xff]
  %v784 = vld [vmem:[%s721 + $0x1f0] sm:$0xff]
  %v785 = vld [vmem:[%s721 + $0x1f8] sm:$0xff]
  %v786 = vld [vmem:[%s721 + $0x200] sm:$0xff]
  %v787 = vld [vmem:[%s721 + $0x208] sm:$0xff]
  %v788 = vld [vmem:[%s721 + $0x210] sm:$0xff]
  %v789 = vld [vmem:[%s721 + $0x218] sm:$0xff]
  %v790 = vld [vmem:[%s721 + $0x220] sm:$0xff]
  %v791 = vld [vmem:[%s721 + $0x228] sm:$0xff]
  %v792 = vld [vmem:[%s721 + $0x230] sm:$0xff]
  %v793 = vld [vmem:[%s721 + $0x238] sm:$0xff]
  %v794 = vld [vmem:[%s721 + $0x240] sm:$0xff]
  %v795 = vld [vmem:[%s721 + $0x248] sm:$0xff]
  %v796 = vld [vmem:[%s721 + $0x250] sm:$0xff]
  %v797 = vld [vmem:[%s721 + $0x258] sm:$0xff]
  %v798 = vld [vmem:[%s721 + $0x260] sm:$0xff]
  %v799 = vld [vmem:[%s721 + $0x268] sm:$0xff]
  %v800 = vld [vmem:[%s721 + $0x270] sm:$0xff]
  %v801 = vld [vmem:[%s721 + $0x278] sm:$0xff]
  %v802 = vld [vmem:[%s721 + $0x280] sm:$0xff]
  %v803 = vld [vmem:[%s721 + $0x288] sm:$0xff]
  %v804 = vld [vmem:[%s721 + $0x290] sm:$0xff]
  %v805 = vld [vmem:[%s721 + $0x298] sm:$0xff]
  %v806 = vld [vmem:[%s721 + $0x2a0] sm:$0xff]
  %v807 = vld [vmem:[%s721 + $0x2a8] sm:$0xff]
  %v808 = vld [vmem:[%s721 + $0x2b0] sm:$0xff]
  %v809 = vld [vmem:[%s721 + $0x2b8] sm:$0xff]
  %v810 = vld [vmem:[%s721 + $0x2c0] sm:$0xff]
  %v811 = vld [vmem:[%s721 + $0x2c8] sm:$0xff]
  %v812 = vld [vmem:[%s721 + $0x2d0] sm:$0xff]
  %v813 = vld [vmem:[%s721 + $0x2d8] sm:$0xff]
  %v814 = vld [vmem:[%s721 + $0x2e0] sm:$0xff]
  %v815 = vld [vmem:[%s721 + $0x2e8] sm:$0xff]
  %v816 = vld [vmem:[%s721 + $0x2f0] sm:$0xff]
  %v817 = vld [vmem:[%s721 + $0x2f8] sm:$0xff]
  %818 = vmatprep.subr.mxu0 0.0
  %819 = vmatpush1.msra.mxu0 %v722
  %820 = vmatprep.subr.mxu0 0.0
  %821 = vmatpush1.msra.mxu0 %v723
  %822 = vmatprep.subr.mxu0 0.0
  %823 = vmatpush1.msra.mxu0 %v724
  %824 = vmatprep.subr.mxu0 0.0
  %825 = vmatpush1.msra.mxu0 %v725
  %826 = vmatprep.subr.mxu0 0.0
  %827 = vmatpush1.msra.mxu0 %v726
  %828 = vmatprep.subr.mxu0 0.0
  %829 = vmatpush1.msra.mxu0 %v727
  %830 = vmatprep.subr.mxu0 0.0
  %831 = vmatpush1.msra.mxu0 %v728
  %832 = vmatprep.subr.mxu0 0.0
  %833 = vmatpush1.msra.mxu0 %v729
  %834 = vmatprep.subr.mxu0 0.0
  %835 = vmatpush1.msra.mxu0 %v730
  %836 = vmatprep.subr.mxu0 0.0
  %837 = vmatpush1.msra.mxu0 %v731
  %838 = vmatprep.subr.mxu0 0.0
  %839 = vmatpush1.msra.mxu0 %v732
  %840 = vmatprep.subr.mxu0 0.0
  %841 = vmatpush1.msra.mxu0 %v733
  %842 = vmatprep.subr.mxu0 0.0
  %843 = vmatpush1.msra.mxu0 %v734
  %844 = vmatprep.subr.mxu0 0.0
  %845 = vmatpush1.msra.mxu0 %v735
  %846 = vmatprep.subr.mxu0 0.0
  %847 = vmatpush1.msra.mxu0 %v736
  %848 = vmatprep.subr.mxu0 0.0
  %849 = vmatpush1.msra.mxu0 %v737
  %850 = vmatprep.subr.mxu0 0.0
  %851 = vmatpush1.msra.mxu0 %v738
  %852 = vmatprep.subr.mxu0 0.0
  %853 = vmatpush1.msra.mxu0 %v739
  %854 = vmatprep.subr.mxu0 0.0
  %855 = vmatpush1.msra.mxu0 %v740
  %856 = vmatprep.subr.mxu0 0.0
  %857 = vmatpush1.msra.mxu0 %v741
  %858 = vmatprep.subr.mxu0 0.0
  %859 = vmatpush1.msra.mxu0 %v742
  %860 = vmatprep.subr.mxu0 0.0
  %861 = vmatpush1.msra.mxu0 %v743
  %862 = vmatprep.subr.mxu0 0.0
  %863 = vmatpush1.msra.mxu0 %v744
  %864 = vmatprep.subr.mxu0 0.0
  %865 = vmatpush1.msra.mxu0 %v745
  %866 = vmatprep.subr.mxu0 0.0
  %867 = vmatpush1.msra.mxu0 %v746
  %868 = vmatprep.subr.mxu0 0.0
  %869 = vmatpush1.msra.mxu0 %v747
  %870 = vmatprep.subr.mxu0 0.0
  %871 = vmatpush1.msra.mxu0 %v748
  %872 = vmatprep.subr.mxu0 0.0
  %873 = vmatpush1.msra.mxu0 %v749
  %874 = vmatprep.subr.mxu0 0.0
  %875 = vmatpush1.msra.mxu0 %v750
  %876 = vmatprep.subr.mxu0 0.0
  %877 = vmatpush1.msra.mxu0 %v751
  %878 = vmatprep.subr.mxu0 0.0
  %879 = vmatpush1.msra.mxu0 %v752
  %880 = vmatprep.subr.mxu0 0.0
  %881 = vmatpush1.msra.mxu0 %v753
  %882 = vmatprep.mubr.f32.mxu0 %v650
  %883 = vmatmul.mubr.f32.gmra.mrb[0].mxu0 %v649
  %v884 = vpop.f32.mrb[0].mxu0
  %v885 = vadd.f32 %v203, %v884
  %v886 = vpop.f32.mrb[0].mxu0
  %887 = vmatprep.mubr.f32.mxu0 %v656
  %888 = vmatmul.mubr.f32.gmra.mrb[0].mxu0 %v655
  %v889 = vpop.f32.mrb[0].mxu0
  %v890 = vadd.f32 %v208, %v889
  %v891 = vpop.f32.mrb[0].mxu0
  %892 = vmatprep.mubr.f32.mxu0 %v662
  %893 = vmatmul.mubr.f32.gmra.mrb[0].mxu0 %v661
  %v894 = vpop.f32.mrb[0].mxu0
  %v895 = vadd.f32 %v213, %v894
  %v896 = vpop.f32.mrb[0].mxu0
  %897 = vmatprep.mubr.f32.mxu0 %v668
  %898 = vmatmul.mubr.f32.gmra.mrb[0].mxu0 %v667
  %v899 = vpop.f32.mrb[0].mxu0
  %v900 = vadd.f32 %v218, %v899
  %v901 = vpop.f32.mrb[0].mxu0
  %902 = vmatprep.mubr.f32.mxu0 %v674
  %903 = vmatmul.mubr.f32.gmra.mrb[0].mxu0 %v673
  %v904 = vpop.f32.mrb[0].mxu0
  %v905 = vadd.f32 %v223, %v904
  %v906 = vpop.f32.mrb[0].mxu0
  %907 = vmatprep.mubr.f32.mxu0 %v680
  %908 = vmatmul.mubr.f32.gmra.mrb[0].mxu0 %v679
  %v909 = vpop.f32.mrb[0].mxu0
  %v910 = vadd.f32 %v228, %v909
  %v911 = vpop.f32.mrb[0].mxu0
  %912 = vmatprep.mubr.f32.mxu0 %v686
  %913 = vmatmul.mubr.f32.gmra.mrb[0].mxu0 %v685
  %v914 = vpop.f32.mrb[0].mxu0
  %v915 = vadd.f32 %v233, %v914
  %v916 = vpop.f32.mrb[0].mxu0
  %917 = vmatprep.mubr.f32.mxu0 %v692
  %918 = vmatmul.mubr.f32.gmra.mrb[0].mxu0 %v691
  %v919 = vpop.f32.mrb[0].mxu0
  %v920 = vadd.f32 %v238, %v919
  %v921 = vpop.f32.mrb[0].mxu0
  %922 = vmatprep.mubr.f32.mxu0 %v698
  %923 = vmatmul.mubr.f32.gmra.mrb[0].mxu0 %v697
  %v924 = vpop.f32.mrb[0].mxu0
  %v925 = vadd.f32 %v243, %v924
  %v926 = vpop.f32.mrb[0].mxu0
  %927 = vmatprep.mubr.f32.mxu0 %v704
  %928 = vmatmul.mubr.f32.gmra.mrb[0].mxu0 %v703
  %v929 = vpop.f32.mrb[0].mxu0
  %v930 = vadd.f32 %v248, %v929
  %v931 = vpop.f32.mrb[0].mxu0
  %932 = vmatprep.mubr.f32.mxu0 %v710
  %933 = vmatmul.mubr.f32.gmra.mrb[0].mxu0 %v709
  %v934 = vpop.f32.mrb[0].mxu0
  %v935 = vadd.f32 %v253, %v934
  %v936 = vpop.f32.mrb[0].mxu0
  %937 = vmatprep.mubr.f32.mxu0 %v716
  %938 = vmatmul.mubr.f32.gmra.mrb[0].mxu0 %v715
  %v939 = vpop.f32.mrb[0].mxu0
  %v940 = vadd.f32 %v258, %v939
  %v941 = vpop.f32.mrb[0].mxu0
  %942 = vdwg.mxu0
  %943 = vmatprep.subr.mxu0 0.0
  %944 = vmatpush1.msra.mxu0 %v754
  %945 = vmatprep.subr.mxu0 0.0
  %946 = vmatpush1.msra.mxu0 %v755
  %947 = vmatprep.subr.mxu0 0.0
  %948 = vmatpush1.msra.mxu0 %v756
  %949 = vmatprep.subr.mxu0 0.0
  %950 = vmatpush1.msra.mxu0 %v757
  %951 = vmatprep.subr.mxu0 0.0
  %952 = vmatpush1.msra.mxu0 %v758
  %953 = vmatprep.subr.mxu0 0.0
  %954 = vmatpush1.msra.mxu0 %v759
  %955 = vmatprep.subr.mxu0 0.0
  %956 = vmatpush1.msra.mxu0 %v760
  %957 = vmatprep.subr.mxu0 0.0
  %958 = vmatpush1.msra.mxu0 %v761
  %959 = vmatprep.subr.mxu0 0.0
  %960 = vmatpush1.msra.mxu0 %v762
  %961 = vmatprep.subr.mxu0 0.0
  %962 = vmatpush1.msra.mxu0 %v763
  %963 = vmatprep.subr.mxu0 0.0
  %964 = vmatpush1.msra.mxu0 %v764
  %965 = vmatprep.subr.mxu0 0.0
  %966 = vmatpush1.msra.mxu0 %v765
  %967 = vmatprep.subr.mxu0 0.0
  %968 = vmatpush1.msra.mxu0 %v766
  %969 = vmatprep.subr.mxu0 0.0
  %970 = vmatpush1.msra.mxu0 %v767
  %971 = vmatprep.subr.mxu0 0.0
  %972 = vmatpush1.msra.mxu0 %v768
  %973 = vmatprep.subr.mxu0 0.0
  %974 = vmatpush1.msra.mxu0 %v769
  %975 = vmatprep.subr.mxu0 0.0
  %976 = vmatpush1.msra.mxu0 %v770
  %977 = vmatprep.subr.mxu0 0.0
  %978 = vmatpush1.msra.mxu0 %v771
  %979 = vmatprep.subr.mxu0 0.0
  %980 = vmatpush1.msra.mxu0 %v772
  %981 = vmatprep.subr.mxu0 0.0
  %982 = vmatpush1.msra.mxu0 %v773
  %983 = vmatprep.subr.mxu0 0.0
  %984 = vmatpush1.msra.mxu0 %v774
  %985 = vmatprep.subr.mxu0 0.0
  %986 = vmatpush1.msra.mxu0 %v775
  %987 = vmatprep.subr.mxu0 0.0
  %988 = vmatpush1.msra.mxu0 %v776
  %989 = vmatprep.subr.mxu0 0.0
  %990 = vmatpush1.msra.mxu0 %v777
  %991 = vmatprep.subr.mxu0 0.0
  %992 = vmatpush1.msra.mxu0 %v778
  %993 = vmatprep.subr.mxu0 0.0
  %994 = vmatpush1.msra.mxu0 %v779
  %995 = vmatprep.subr.mxu0 0.0
  %996 = vmatpush1.msra.mxu0 %v780
  %997 = vmatprep.subr.mxu0 0.0
  %998 = vmatpush1.msra.mxu0 %v781
  %999 = vmatprep.subr.mxu0 0.0
  %1000 = vmatpush1.msra.mxu0 %v782
  %1001 = vmatprep.subr.mxu0 0.0
  %1002 = vmatpush1.msra.mxu0 %v783
  %1003 = vmatprep.subr.mxu0 0.0
  %1004 = vmatpush1.msra.mxu0 %v784
  %1005 = vmatprep.subr.mxu0 0.0
  %1006 = vmatpush1.msra.mxu0 %v785
  %1007 = vmatprep.mubr.f32.mxu0 %v652
  %1008 = vmatmul.mubr.f32.gmra.mrb[0].mxu0 %v651
  %v1009 = vpop.f32.mrb[0].mxu0
  %v1010 = vadd.f32 %v885, %v1009
  %v1011 = vpop.f32.mrb[0].mxu0
  %1012 = vmatprep.mubr.f32.mxu0 %v658
  %1013 = vmatmul.mubr.f32.gmra.mrb[0].mxu0 %v657
  %v1014 = vpop.f32.mrb[0].mxu0
  %v1015 = vadd.f32 %v890, %v1014
  %v1016 = vpop.f32.mrb[0].mxu0
  %1017 = vmatprep.mubr.f32.mxu0 %v664
  %1018 = vmatmul.mubr.f32.gmra.mrb[0].mxu0 %v663
  %v1019 = vpop.f32.mrb[0].mxu0
  %v1020 = vadd.f32 %v895, %v1019
  %v1021 = vpop.f32.mrb[0].mxu0
  %1022 = vmatprep.mubr.f32.mxu0 %v670
  %1023 = vmatmul.mubr.f32.gmra.mrb[0].mxu0 %v669
  %v1024 = vpop.f32.mrb[0].mxu0
  %v1025 = vadd.f32 %v900, %v1024
  %v1026 = vpop.f32.mrb[0].mxu0
  %1027 = vmatprep.mubr.f32.mxu0 %v676
  %1028 = vmatmul.mubr.f32.gmra.mrb[0].mxu0 %v675
  %v1029 = vpop.f32.mrb[0].mxu0
  %v1030 = vadd.f32 %v905, %v1029
  %v1031 = vpop.f32.mrb[0].mxu0
  %1032 = vmatprep.mubr.f32.mxu0 %v682
  %1033 = vmatmul.mubr.f32.gmra.mrb[0].mxu0 %v681
  %v1034 = vpop.f32.mrb[0].mxu0
  %v1035 = vadd.f32 %v910, %v1034
  %v1036 = vpop.f32.mrb[0].mxu0
  %1037 = vmatprep.mubr.f32.mxu0 %v688
  %1038 = vmatmul.mubr.f32.gmra.mrb[0].mxu0 %v687
  %v1039 = vpop.f32.mrb[0].mxu0
  %v1040 = vadd.f32 %v915, %v1039
  %v1041 = vpop.f32.mrb[0].mxu0
  %1042 = vmatprep.mubr.f32.mxu0 %v694
  %1043 = vmatmul.mubr.f32.gmra.mrb[0].mxu0 %v693
  %v1044 = vpop.f32.mrb[0].mxu0
  %v1045 = vadd.f32 %v920, %v1044
  %v1046 = vpop.f32.mrb[0].mxu0
  %1047 = vmatprep.mubr.f32.mxu0 %v700
  %1048 = vmatmul.mubr.f32.gmra.mrb[0].mxu0 %v699
  %v1049 = vpop.f32.mrb[0].mxu0
  %v1050 = vadd.f32 %v925, %v1049
  %v1051 = vpop.f32.mrb[0].mxu0
  %1052 = vmatprep.mubr.f32.mxu0 %v706
  %1053 = vmatmul.mubr.f32.gmra.mrb[0].mxu0 %v705
  %v1054 = vpop.f32.mrb[0].mxu0
  %v1055 = vadd.f32 %v930, %v1054
  %v1056 = vpop.f32.mrb[0].mxu0
  %1057 = vmatprep.mubr.f32.mxu0 %v712
  %1058 = vmatmul.mubr.f32.gmra.mrb[0].mxu0 %v711
  %v1059 = vpop.f32.mrb[0].mxu0
  %v1060 = vadd.f32 %v935, %v1059
  %v1061 = vpop.f32.mrb[0].mxu0
  %1062 = vmatprep.mubr.f32.mxu0 %v718
  %1063 = vmatmul.mubr.f32.gmra.mrb[0].mxu0 %v717
  %v1064 = vpop.f32.mrb[0].mxu0
  %v1065 = vadd.f32 %v940, %v1064
  %v1066 = vpop.f32.mrb[0].mxu0
  %1067 = vdwg.mxu0
  %1068 = vmatprep.subr.mxu0 0.0
  %1069 = vmatpush1.msra.mxu0 %v786
  %1070 = vmatprep.subr.mxu0 0.0
  %1071 = vmatpush1.msra.mxu0 %v787
  %1072 = vmatprep.subr.mxu0 0.0
  %1073 = vmatpush1.msra.mxu0 %v788
  %1074 = vmatprep.subr.mxu0 0.0
  %1075 = vmatpush1.msra.mxu0 %v789
  %1076 = vmatprep.subr.mxu0 0.0
  %1077 = vmatpush1.msra.mxu0 %v790
  %1078 = vmatprep.subr.mxu0 0.0
  %1079 = vmatpush1.msra.mxu0 %v791
  %1080 = vmatprep.subr.mxu0 0.0
  %1081 = vmatpush1.msra.mxu0 %v792
  %1082 = vmatprep.subr.mxu0 0.0
  %1083 = vmatpush1.msra.mxu0 %v793
  %1084 = vmatprep.subr.mxu0 0.0
  %1085 = vmatpush1.msra.mxu0 %v794
  %1086 = vmatprep.subr.mxu0 0.0
  %1087 = vmatpush1.msra.mxu0 %v795
  %1088 = vmatprep.subr.mxu0 0.0
  %1089 = vmatpush1.msra.mxu0 %v796
  %1090 = vmatprep.subr.mxu0 0.0
  %1091 = vmatpush1.msra.mxu0 %v797
  %1092 = vmatprep.subr.mxu0 0.0
  %1093 = vmatpush1.msra.mxu0 %v798
  %1094 = vmatprep.subr.mxu0 0.0
  %1095 = vmatpush1.msra.mxu0 %v799
  %1096 = vmatprep.subr.mxu0 0.0
  %1097 = vmatpush1.msra.mxu0 %v800
  %1098 = vmatprep.subr.mxu0 0.0
  %1099 = vmatpush1.msra.mxu0 %v801
  %1100 = vmatprep.subr.mxu0 0.0
  %1101 = vmatpush1.msra.mxu0 %v802
  %1102 = vmatprep.subr.mxu0 0.0
  %1103 = vmatpush1.msra.mxu0 %v803
  %1104 = vmatprep.subr.mxu0 0.0
  %1105 = vmatpush1.msra.mxu0 %v804
  %1106 = vmatprep.subr.mxu0 0.0
  %1107 = vmatpush1.msra.mxu0 %v805
  %1108 = vmatprep.subr.mxu0 0.0
  %1109 = vmatpush1.msra.mxu0 %v806
  %1110 = vmatprep.subr.mxu0 0.0
  %1111 = vmatpush1.msra.mxu0 %v807
  %1112 = vmatprep.subr.mxu0 0.0
  %1113 = vmatpush1.msra.mxu0 %v808
  %1114 = vmatprep.subr.mxu0 0.0
  %1115 = vmatpush1.msra.mxu0 %v809
  %1116 = vmatprep.subr.mxu0 0.0
  %1117 = vmatpush1.msra.mxu0 %v810
  %1118 = vmatprep.subr.mxu0 0.0
  %1119 = vmatpush1.msra.mxu0 %v811
  %1120 = vmatprep.subr.mxu0 0.0
  %1121 = vmatpush1.msra.mxu0 %v812
  %1122 = vmatprep.subr.mxu0 0.0
  %1123 = vmatpush1.msra.mxu0 %v813
  %1124 = vmatprep.subr.mxu0 0.0
  %1125 = vmatpush1.msra.mxu0 %v814
  %1126 = vmatprep.subr.mxu0 0.0
  %1127 = vmatpush1.msra.mxu0 %v815
  %1128 = vmatprep.subr.mxu0 0.0
  %1129 = vmatpush1.msra.mxu0 %v816
  %1130 = vmatprep.subr.mxu0 0.0
  %1131 = vmatpush1.msra.mxu0 %v817
  %1132 = vmatprep.mubr.f32.mxu0 %v654
  %1133 = vmatmul.mubr.f32.gmra.mrb[0].mxu0 %v653
  %v1134 = vpop.f32.mrb[0].mxu0
  %v1135 = vadd.f32 %v1010, %v1134
  %v1136 = vpop.f32.mrb[0].mxu0
  %1137 = vmatprep.mubr.f32.mxu0 %v660
  %1138 = vmatmul.mubr.f32.gmra.mrb[0].mxu0 %v659
  %v1139 = vpop.f32.mrb[0].mxu0
  %v1140 = vadd.f32 %v1015, %v1139
  %v1141 = vpop.f32.mrb[0].mxu0
  %1142 = vmatprep.mubr.f32.mxu0 %v666
  %1143 = vmatmul.mubr.f32.gmra.mrb[0].mxu0 %v665
  %v1144 = vpop.f32.mrb[0].mxu0
  %v1145 = vadd.f32 %v1020, %v1144
  %v1146 = vpop.f32.mrb[0].mxu0
  %1147 = vmatprep.mubr.f32.mxu0 %v672
  %1148 = vmatmul.mubr.f32.gmra.mrb[0].mxu0 %v671
  %v1149 = vpop.f32.mrb[0].mxu0
  %v1150 = vadd.f32 %v1025, %v1149
  %v1151 = vpop.f32.mrb[0].mxu0
  %1152 = vmatprep.mubr.f32.mxu0 %v678
  %1153 = vmatmul.mubr.f32.gmra.mrb[0].mxu0 %v677
  %v1154 = vpop.f32.mrb[0].mxu0
  %v1155 = vadd.f32 %v1030, %v1154
  %v1156 = vpop.f32.mrb[0].mxu0
  %1157 = vmatprep.mubr.f32.mxu0 %v684
  %1158 = vmatmul.mubr.f32.gmra.mrb[0].mxu0 %v683
  %v1159 = vpop.f32.mrb[0].mxu0
  %v1160 = vadd.f32 %v1035, %v1159
  %v1161 = vpop.f32.mrb[0].mxu0
  %1162 = vmatprep.mubr.f32.mxu0 %v690
  %1163 = vmatmul.mubr.f32.gmra.mrb[0].mxu0 %v689
  %v1164 = vpop.f32.mrb[0].mxu0
  %v1165 = vadd.f32 %v1040, %v1164
  %v1166 = vpop.f32.mrb[0].mxu0
  %1167 = vmatprep.mubr.f32.mxu0 %v696
  %1168 = vmatmul.mubr.f32.gmra.mrb[0].mxu0 %v695
  %v1169 = vpop.f32.mrb[0].mxu0
  %v1170 = vadd.f32 %v1045, %v1169
  %v1171 = vpop.f32.mrb[0].mxu0
  %1172 = vmatprep.mubr.f32.mxu0 %v702
  %1173 = vmatmul.mubr.f32.gmra.mrb[0].mxu0 %v701
  %v1174 = vpop.f32.mrb[0].mxu0
  %v1175 = vadd.f32 %v1050, %v1174
  %v1176 = vpop.f32.mrb[0].mxu0
  %1177 = vmatprep.mubr.f32.mxu0 %v708
  %1178 = vmatmul.mubr.f32.gmra.mrb[0].mxu0 %v707
  %v1179 = vpop.f32.mrb[0].mxu0
  %v1180 = vadd.f32 %v1055, %v1179
  %v1181 = vpop.f32.mrb[0].mxu0
  %1182 = vmatprep.mubr.f32.mxu0 %v714
  %1183 = vmatmul.mubr.f32.gmra.mrb[0].mxu0 %v713
  %v1184 = vpop.f32.mrb[0].mxu0
  %v1185 = vadd.f32 %v1060, %v1184
  %v1186 = vpop.f32.mrb[0].mxu0
  %1187 = vmatprep.mubr.f32.mxu0 %v720
  %1188 = vmatmul.mubr.f32.gmra.mrb[0].mxu0 %v719
  %v1189 = vpop.f32.mrb[0].mxu0
  %v1190 = vadd.f32 %v1065, %v1189
  %v1191 = vpop.f32.mrb[0].mxu0
  %1192 = vdwg.mxu0
  %s1193 = scalar_lea.vmem %s5, 96
  %1194 = vst.msk [vmem:[%s1193] sm:$0xff] %vm635, %v1135
  %1195 = vst.msk [vmem:[%s1193 + $0x8] sm:$0xff] %vm635, %v1140
  %1196 = vst.msk [vmem:[%s1193 + $0x10] sm:$0xff] %vm635, %v1145
  %1197 = vst.msk [vmem:[%s1193 + $0x18] sm:$0xff] %vm635, %v1150
  %1198 = vst.msk [vmem:[%s1193 + $0x20] sm:$0xff] %vm635, %v1155
  %1199 = vst.msk [vmem:[%s1193 + $0x28] sm:$0xff] %vm635, %v1160
  %1200 = vst.msk [vmem:[%s1193 + $0x30] sm:$0xff] %vm635, %v1165
  %1201 = vst.msk [vmem:[%s1193 + $0x38] sm:$0xff] %vm635, %v1170
  %1202 = vst.msk [vmem:[%s1193 + $0x40] sm:$0xff] %vm635, %v1175
  %1203 = vst.msk [vmem:[%s1193 + $0x48] sm:$0xff] %vm635, %v1180
  %1204 = vst.msk [vmem:[%s1193 + $0x50] sm:$0xff] %vm635, %v1185
  %1205 = vst.msk [vmem:[%s1193 + $0x58] sm:$0xff] %vm635, %v1190
  %s1206 = scalar_lea.vmem %s0, 1152
  %v1207 = vld [vmem:[%s1206] sm:$0xff]
  %v1208 = vld [vmem:[%s1206 + $0x8] sm:$0xff]
  %v1209 = vld [vmem:[%s1206 + $0x10] sm:$0xff]
  %v1210 = vld [vmem:[%s1206 + $0x18] sm:$0xff]
  %v1211 = vld [vmem:[%s1206 + $0x20] sm:$0xff]
  %v1212 = vld [vmem:[%s1206 + $0x28] sm:$0xff]
  %v1213 = vld [vmem:[%s1206 + $0x30] sm:$0xff]
  %v1214 = vld [vmem:[%s1206 + $0x38] sm:$0xff]
  %v1215 = vld [vmem:[%s1206 + $0x40] sm:$0xff]
  %v1216 = vld [vmem:[%s1206 + $0x48] sm:$0xff]
  %v1217 = vld [vmem:[%s1206 + $0x50] sm:$0xff]
  %v1218 = vld [vmem:[%s1206 + $0x58] sm:$0xff]
  %v1219 = vld [vmem:[%s1206 + $0x60] sm:$0xff]
  %v1220 = vld [vmem:[%s1206 + $0x68] sm:$0xff]
  %v1221 = vld [vmem:[%s1206 + $0x70] sm:$0xff]
  %v1222 = vld [vmem:[%s1206 + $0x78] sm:$0xff]
  %v1223 = vld [vmem:[%s1206 + $0x80] sm:$0xff]
  %v1224 = vld [vmem:[%s1206 + $0x88] sm:$0xff]
  %v1225 = vld [vmem:[%s1206 + $0x90] sm:$0xff]
  %v1226 = vld [vmem:[%s1206 + $0x98] sm:$0xff]
  %v1227 = vld [vmem:[%s1206 + $0xa0] sm:$0xff]
  %v1228 = vld [vmem:[%s1206 + $0xa8] sm:$0xff]
  %v1229 = vld [vmem:[%s1206 + $0xb0] sm:$0xff]
  %v1230 = vld [vmem:[%s1206 + $0xb8] sm:$0xff]
  %v1231 = vld [vmem:[%s1206 + $0xc0] sm:$0xff]
  %v1232 = vld [vmem:[%s1206 + $0xc8] sm:$0xff]
  %v1233 = vld [vmem:[%s1206 + $0xd0] sm:$0xff]
  %v1234 = vld [vmem:[%s1206 + $0xd8] sm:$0xff]
  %v1235 = vld [vmem:[%s1206 + $0xe0] sm:$0xff]
  %v1236 = vld [vmem:[%s1206 + $0xe8] sm:$0xff]
  %v1237 = vld [vmem:[%s1206 + $0xf0] sm:$0xff]
  %v1238 = vld [vmem:[%s1206 + $0xf8] sm:$0xff]
  %v1239 = vld [vmem:[%s1206 + $0x100] sm:$0xff]
  %v1240 = vld [vmem:[%s1206 + $0x108] sm:$0xff]
  %v1241 = vld [vmem:[%s1206 + $0x110] sm:$0xff]
  %v1242 = vld [vmem:[%s1206 + $0x118] sm:$0xff]
  %v1243 = vld [vmem:[%s1206 + $0x120] sm:$0xff]
  %v1244 = vld [vmem:[%s1206 + $0x128] sm:$0xff]
  %v1245 = vld [vmem:[%s1206 + $0x130] sm:$0xff]
  %v1246 = vld [vmem:[%s1206 + $0x138] sm:$0xff]
  %v1247 = vld [vmem:[%s1206 + $0x140] sm:$0xff]
  %v1248 = vld [vmem:[%s1206 + $0x148] sm:$0xff]
  %v1249 = vld [vmem:[%s1206 + $0x150] sm:$0xff]
  %v1250 = vld [vmem:[%s1206 + $0x158] sm:$0xff]
  %v1251 = vld [vmem:[%s1206 + $0x160] sm:$0xff]
  %v1252 = vld [vmem:[%s1206 + $0x168] sm:$0xff]
  %v1253 = vld [vmem:[%s1206 + $0x170] sm:$0xff]
  %v1254 = vld [vmem:[%s1206 + $0x178] sm:$0xff]
  %v1255 = vld [vmem:[%s1206 + $0x180] sm:$0xff]
  %v1256 = vld [vmem:[%s1206 + $0x188] sm:$0xff]
  %v1257 = vld [vmem:[%s1206 + $0x190] sm:$0xff]
  %v1258 = vld [vmem:[%s1206 + $0x198] sm:$0xff]
  %v1259 = vld [vmem:[%s1206 + $0x1a0] sm:$0xff]
  %v1260 = vld [vmem:[%s1206 + $0x1a8] sm:$0xff]
  %v1261 = vld [vmem:[%s1206 + $0x1b0] sm:$0xff]
  %v1262 = vld [vmem:[%s1206 + $0x1b8] sm:$0xff]
  %v1263 = vld [vmem:[%s1206 + $0x1c0] sm:$0xff]
  %v1264 = vld [vmem:[%s1206 + $0x1c8] sm:$0xff]
  %v1265 = vld [vmem:[%s1206 + $0x1d0] sm:$0xff]
  %v1266 = vld [vmem:[%s1206 + $0x1d8] sm:$0xff]
  %v1267 = vld [vmem:[%s1206 + $0x1e0] sm:$0xff]
  %v1268 = vld [vmem:[%s1206 + $0x1e8] sm:$0xff]
  %v1269 = vld [vmem:[%s1206 + $0x1f0] sm:$0xff]
  %v1270 = vld [vmem:[%s1206 + $0x1f8] sm:$0xff]
  %v1271 = vld [vmem:[%s1206 + $0x200] sm:$0xff]
  %v1272 = vld [vmem:[%s1206 + $0x208] sm:$0xff]
  %v1273 = vld [vmem:[%s1206 + $0x210] sm:$0xff]
  %v1274 = vld [vmem:[%s1206 + $0x218] sm:$0xff]
  %v1275 = vld [vmem:[%s1206 + $0x220] sm:$0xff]
  %v1276 = vld [vmem:[%s1206 + $0x228] sm:$0xff]
  %v1277 = vld [vmem:[%s1206 + $0x230] sm:$0xff]
  %v1278 = vld [vmem:[%s1206 + $0x238] sm:$0xff]
  %s1279 = scalar_lea.vmem %s1, 1536
  %v1280 = vld [vmem:[%s1279] sm:$0xff]
  %v1281 = vld [vmem:[%s1279 + $0x8] sm:$0xff]
  %v1282 = vld [vmem:[%s1279 + $0x10] sm:$0xff]
  %v1283 = vld [vmem:[%s1279 + $0x18] sm:$0xff]
  %v1284 = vld [vmem:[%s1279 + $0x20] sm:$0xff]
  %v1285 = vld [vmem:[%s1279 + $0x28] sm:$0xff]
  %v1286 = vld [vmem:[%s1279 + $0x30] sm:$0xff]
  %v1287 = vld [vmem:[%s1279 + $0x38] sm:$0xff]
  %v1288 = vld [vmem:[%s1279 + $0x40] sm:$0xff]
  %v1289 = vld [vmem:[%s1279 + $0x48] sm:$0xff]
  %v1290 = vld [vmem:[%s1279 + $0x50] sm:$0xff]
  %v1291 = vld [vmem:[%s1279 + $0x58] sm:$0xff]
  %v1292 = vld [vmem:[%s1279 + $0x60] sm:$0xff]
  %v1293 = vld [vmem:[%s1279 + $0x68] sm:$0xff]
  %v1294 = vld [vmem:[%s1279 + $0x70] sm:$0xff]
  %v1295 = vld [vmem:[%s1279 + $0x78] sm:$0xff]
  %v1296 = vld [vmem:[%s1279 + $0x80] sm:$0xff]
  %v1297 = vld [vmem:[%s1279 + $0x88] sm:$0xff]
  %v1298 = vld [vmem:[%s1279 + $0x90] sm:$0xff]
  %v1299 = vld [vmem:[%s1279 + $0x98] sm:$0xff]
  %v1300 = vld [vmem:[%s1279 + $0xa0] sm:$0xff]
  %v1301 = vld [vmem:[%s1279 + $0xa8] sm:$0xff]
  %v1302 = vld [vmem:[%s1279 + $0xb0] sm:$0xff]
  %v1303 = vld [vmem:[%s1279 + $0xb8] sm:$0xff]
  %v1304 = vld [vmem:[%s1279 + $0xc0] sm:$0xff]
  %v1305 = vld [vmem:[%s1279 + $0xc8] sm:$0xff]
  %v1306 = vld [vmem:[%s1279 + $0xd0] sm:$0xff]
  %v1307 = vld [vmem:[%s1279 + $0xd8] sm:$0xff]
  %v1308 = vld [vmem:[%s1279 + $0xe0] sm:$0xff]
  %v1309 = vld [vmem:[%s1279 + $0xe8] sm:$0xff]
  %v1310 = vld [vmem:[%s1279 + $0xf0] sm:$0xff]
  %v1311 = vld [vmem:[%s1279 + $0xf8] sm:$0xff]
  %v1312 = vld [vmem:[%s1279 + $0x100] sm:$0xff]
  %v1313 = vld [vmem:[%s1279 + $0x108] sm:$0xff]
  %v1314 = vld [vmem:[%s1279 + $0x110] sm:$0xff]
  %v1315 = vld [vmem:[%s1279 + $0x118] sm:$0xff]
  %v1316 = vld [vmem:[%s1279 + $0x120] sm:$0xff]
  %v1317 = vld [vmem:[%s1279 + $0x128] sm:$0xff]
  %v1318 = vld [vmem:[%s1279 + $0x130] sm:$0xff]
  %v1319 = vld [vmem:[%s1279 + $0x138] sm:$0xff]
  %v1320 = vld [vmem:[%s1279 + $0x140] sm:$0xff]
  %v1321 = vld [vmem:[%s1279 + $0x148] sm:$0xff]
  %v1322 = vld [vmem:[%s1279 + $0x150] sm:$0xff]
  %v1323 = vld [vmem:[%s1279 + $0x158] sm:$0xff]
  %v1324 = vld [vmem:[%s1279 + $0x160] sm:$0xff]
  %v1325 = vld [vmem:[%s1279 + $0x168] sm:$0xff]
  %v1326 = vld [vmem:[%s1279 + $0x170] sm:$0xff]
  %v1327 = vld [vmem:[%s1279 + $0x178] sm:$0xff]
  %v1328 = vld [vmem:[%s1279 + $0x180] sm:$0xff]
  %v1329 = vld [vmem:[%s1279 + $0x188] sm:$0xff]
  %v1330 = vld [vmem:[%s1279 + $0x190] sm:$0xff]
  %v1331 = vld [vmem:[%s1279 + $0x198] sm:$0xff]
  %v1332 = vld [vmem:[%s1279 + $0x1a0] sm:$0xff]
  %v1333 = vld [vmem:[%s1279 + $0x1a8] sm:$0xff]
  %v1334 = vld [vmem:[%s1279 + $0x1b0] sm:$0xff]
  %v1335 = vld [vmem:[%s1279 + $0x1b8] sm:$0xff]
  %v1336 = vld [vmem:[%s1279 + $0x1c0] sm:$0xff]
  %v1337 = vld [vmem:[%s1279 + $0x1c8] sm:$0xff]
  %v1338 = vld [vmem:[%s1279 + $0x1d0] sm:$0xff]
  %v1339 = vld [vmem:[%s1279 + $0x1d8] sm:$0xff]
  %v1340 = vld [vmem:[%s1279 + $0x1e0] sm:$0xff]
  %v1341 = vld [vmem:[%s1279 + $0x1e8] sm:$0xff]
  %v1342 = vld [vmem:[%s1279 + $0x1f0] sm:$0xff]
  %v1343 = vld [vmem:[%s1279 + $0x1f8] sm:$0xff]
  %v1344 = vld [vmem:[%s1279 + $0x200] sm:$0xff]
  %v1345 = vld [vmem:[%s1279 + $0x208] sm:$0xff]
  %v1346 = vld [vmem:[%s1279 + $0x210] sm:$0xff]
  %v1347 = vld [vmem:[%s1279 + $0x218] sm:$0xff]
  %v1348 = vld [vmem:[%s1279 + $0x220] sm:$0xff]
  %v1349 = vld [vmem:[%s1279 + $0x228] sm:$0xff]
  %v1350 = vld [vmem:[%s1279 + $0x230] sm:$0xff]
  %v1351 = vld [vmem:[%s1279 + $0x238] sm:$0xff]
  %v1352 = vld [vmem:[%s1279 + $0x240] sm:$0xff]
  %v1353 = vld [vmem:[%s1279 + $0x248] sm:$0xff]
  %v1354 = vld [vmem:[%s1279 + $0x250] sm:$0xff]
  %v1355 = vld [vmem:[%s1279 + $0x258] sm:$0xff]
  %v1356 = vld [vmem:[%s1279 + $0x260] sm:$0xff]
  %v1357 = vld [vmem:[%s1279 + $0x268] sm:$0xff]
  %v1358 = vld [vmem:[%s1279 + $0x270] sm:$0xff]
  %v1359 = vld [vmem:[%s1279 + $0x278] sm:$0xff]
  %v1360 = vld [vmem:[%s1279 + $0x280] sm:$0xff]
  %v1361 = vld [vmem:[%s1279 + $0x288] sm:$0xff]
  %v1362 = vld [vmem:[%s1279 + $0x290] sm:$0xff]
  %v1363 = vld [vmem:[%s1279 + $0x298] sm:$0xff]
  %v1364 = vld [vmem:[%s1279 + $0x2a0] sm:$0xff]
  %v1365 = vld [vmem:[%s1279 + $0x2a8] sm:$0xff]
  %v1366 = vld [vmem:[%s1279 + $0x2b0] sm:$0xff]
  %v1367 = vld [vmem:[%s1279 + $0x2b8] sm:$0xff]
  %v1368 = vld [vmem:[%s1279 + $0x2c0] sm:$0xff]
  %v1369 = vld [vmem:[%s1279 + $0x2c8] sm:$0xff]
  %v1370 = vld [vmem:[%s1279 + $0x2d0] sm:$0xff]
  %v1371 = vld [vmem:[%s1279 + $0x2d8] sm:$0xff]
  %v1372 = vld [vmem:[%s1279 + $0x2e0] sm:$0xff]
  %v1373 = vld [vmem:[%s1279 + $0x2e8] sm:$0xff]
  %v1374 = vld [vmem:[%s1279 + $0x2f0] sm:$0xff]
  %v1375 = vld [vmem:[%s1279 + $0x2f8] sm:$0xff]
  %1376 = vmatprep.subr.mxu0 0.0
  %1377 = vmatpush1.msra.mxu0 %v1280
  %1378 = vmatprep.subr.mxu0 0.0
  %1379 = vmatpush1.msra.mxu0 %v1281
  %1380 = vmatprep.subr.mxu0 0.0
  %1381 = vmatpush1.msra.mxu0 %v1282
  %1382 = vmatprep.subr.mxu0 0.0
  %1383 = vmatpush1.msra.mxu0 %v1283
  %1384 = vmatprep.subr.mxu0 0.0
  %1385 = vmatpush1.msra.mxu0 %v1284
  %1386 = vmatprep.subr.mxu0 0.0
  %1387 = vmatpush1.msra.mxu0 %v1285
  %1388 = vmatprep.subr.mxu0 0.0
  %1389 = vmatpush1.msra.mxu0 %v1286
  %1390 = vmatprep.subr.mxu0 0.0
  %1391 = vmatpush1.msra.mxu0 %v1287
  %1392 = vmatprep.subr.mxu0 0.0
  %1393 = vmatpush1.msra.mxu0 %v1288
  %1394 = vmatprep.subr.mxu0 0.0
  %1395 = vmatpush1.msra.mxu0 %v1289
  %1396 = vmatprep.subr.mxu0 0.0
  %1397 = vmatpush1.msra.mxu0 %v1290
  %1398 = vmatprep.subr.mxu0 0.0
  %1399 = vmatpush1.msra.mxu0 %v1291
  %1400 = vmatprep.subr.mxu0 0.0
  %1401 = vmatpush1.msra.mxu0 %v1292
  %1402 = vmatprep.subr.mxu0 0.0
  %1403 = vmatpush1.msra.mxu0 %v1293
  %1404 = vmatprep.subr.mxu0 0.0
  %1405 = vmatpush1.msra.mxu0 %v1294
  %1406 = vmatprep.subr.mxu0 0.0
  %1407 = vmatpush1.msra.mxu0 %v1295
  %1408 = vmatprep.subr.mxu0 0.0
  %1409 = vmatpush1.msra.mxu0 %v1296
  %1410 = vmatprep.subr.mxu0 0.0
  %1411 = vmatpush1.msra.mxu0 %v1297
  %1412 = vmatprep.subr.mxu0 0.0
  %1413 = vmatpush1.msra.mxu0 %v1298
  %1414 = vmatprep.subr.mxu0 0.0
  %1415 = vmatpush1.msra.mxu0 %v1299
  %1416 = vmatprep.subr.mxu0 0.0
  %1417 = vmatpush1.msra.mxu0 %v1300
  %1418 = vmatprep.subr.mxu0 0.0
  %1419 = vmatpush1.msra.mxu0 %v1301
  %1420 = vmatprep.subr.mxu0 0.0
  %1421 = vmatpush1.msra.mxu0 %v1302
  %1422 = vmatprep.subr.mxu0 0.0
  %1423 = vmatpush1.msra.mxu0 %v1303
  %1424 = vmatprep.subr.mxu0 0.0
  %1425 = vmatpush1.msra.mxu0 %v1304
  %1426 = vmatprep.subr.mxu0 0.0
  %1427 = vmatpush1.msra.mxu0 %v1305
  %1428 = vmatprep.subr.mxu0 0.0
  %1429 = vmatpush1.msra.mxu0 %v1306
  %1430 = vmatprep.subr.mxu0 0.0
  %1431 = vmatpush1.msra.mxu0 %v1307
  %1432 = vmatprep.subr.mxu0 0.0
  %1433 = vmatpush1.msra.mxu0 %v1308
  %1434 = vmatprep.subr.mxu0 0.0
  %1435 = vmatpush1.msra.mxu0 %v1309
  %1436 = vmatprep.subr.mxu0 0.0
  %1437 = vmatpush1.msra.mxu0 %v1310
  %1438 = vmatprep.subr.mxu0 0.0
  %1439 = vmatpush1.msra.mxu0 %v1311
  %1440 = vmatprep.mubr.f32.mxu0 %v1208
  %1441 = vmatmul.mubr.f32.gmra.mrb[0].mxu0 %v1207
  %v1442 = vpop.f32.mrb[0].mxu0
  %v1443 = vadd.f32 %v203, %v1442
  %v1444 = vpop.f32.mrb[0].mxu0
  %1445 = vmatprep.mubr.f32.mxu0 %v1214
  %1446 = vmatmul.mubr.f32.gmra.mrb[0].mxu0 %v1213
  %v1447 = vpop.f32.mrb[0].mxu0
  %v1448 = vadd.f32 %v208, %v1447
  %v1449 = vpop.f32.mrb[0].mxu0
  %1450 = vmatprep.mubr.f32.mxu0 %v1220
  %1451 = vmatmul.mubr.f32.gmra.mrb[0].mxu0 %v1219
  %v1452 = vpop.f32.mrb[0].mxu0
  %v1453 = vadd.f32 %v213, %v1452
  %v1454 = vpop.f32.mrb[0].mxu0
  %1455 = vmatprep.mubr.f32.mxu0 %v1226
  %1456 = vmatmul.mubr.f32.gmra.mrb[0].mxu0 %v1225
  %v1457 = vpop.f32.mrb[0].mxu0
  %v1458 = vadd.f32 %v218, %v1457
  %v1459 = vpop.f32.mrb[0].mxu0
  %1460 = vmatprep.mubr.f32.mxu0 %v1232
  %1461 = vmatmul.mubr.f32.gmra.mrb[0].mxu0 %v1231
  %v1462 = vpop.f32.mrb[0].mxu0
  %v1463 = vadd.f32 %v223, %v1462
  %v1464 = vpop.f32.mrb[0].mxu0
  %1465 = vmatprep.mubr.f32.mxu0 %v1238
  %1466 = vmatmul.mubr.f32.gmra.mrb[0].mxu0 %v1237
  %v1467 = vpop.f32.mrb[0].mxu0
  %v1468 = vadd.f32 %v228, %v1467
  %v1469 = vpop.f32.mrb[0].mxu0
  %1470 = vmatprep.mubr.f32.mxu0 %v1244
  %1471 = vmatmul.mubr.f32.gmra.mrb[0].mxu0 %v1243
  %v1472 = vpop.f32.mrb[0].mxu0
  %v1473 = vadd.f32 %v233, %v1472
  %v1474 = vpop.f32.mrb[0].mxu0
  %1475 = vmatprep.mubr.f32.mxu0 %v1250
  %1476 = vmatmul.mubr.f32.gmra.mrb[0].mxu0 %v1249
  %v1477 = vpop.f32.mrb[0].mxu0
  %v1478 = vadd.f32 %v238, %v1477
  %v1479 = vpop.f32.mrb[0].mxu0
  %1480 = vmatprep.mubr.f32.mxu0 %v1256
  %1481 = vmatmul.mubr.f32.gmra.mrb[0].mxu0 %v1255
  %v1482 = vpop.f32.mrb[0].mxu0
  %v1483 = vadd.f32 %v243, %v1482
  %v1484 = vpop.f32.mrb[0].mxu0
  %1485 = vmatprep.mubr.f32.mxu0 %v1262
  %1486 = vmatmul.mubr.f32.gmra.mrb[0].mxu0 %v1261
  %v1487 = vpop.f32.mrb[0].mxu0
  %v1488 = vadd.f32 %v248, %v1487
  %v1489 = vpop.f32.mrb[0].mxu0
  %1490 = vmatprep.mubr.f32.mxu0 %v1268
  %1491 = vmatmul.mubr.f32.gmra.mrb[0].mxu0 %v1267
  %v1492 = vpop.f32.mrb[0].mxu0
  %v1493 = vadd.f32 %v253, %v1492
  %v1494 = vpop.f32.mrb[0].mxu0
  %1495 = vmatprep.mubr.f32.mxu0 %v1274
  %1496 = vmatmul.mubr.f32.gmra.mrb[0].mxu0 %v1273
  %v1497 = vpop.f32.mrb[0].mxu0
  %v1498 = vadd.f32 %v258, %v1497
  %v1499 = vpop.f32.mrb[0].mxu0
  %1500 = vdwg.mxu0
  %1501 = vmatprep.subr.mxu0 0.0
  %1502 = vmatpush1.msra.mxu0 %v1312
  %1503 = vmatprep.subr.mxu0 0.0
  %1504 = vmatpush1.msra.mxu0 %v1313
  %1505 = vmatprep.subr.mxu0 0.0
  %1506 = vmatpush1.msra.mxu0 %v1314
  %1507 = vmatprep.subr.mxu0 0.0
  %1508 = vmatpush1.msra.mxu0 %v1315
  %1509 = vmatprep.subr.mxu0 0.0
  %1510 = vmatpush1.msra.mxu0 %v1316
  %1511 = vmatprep.subr.mxu0 0.0
  %1512 = vmatpush1.msra.mxu0 %v1317
  %1513 = vmatprep.subr.mxu0 0.0
  %1514 = vmatpush1.msra.mxu0 %v1318
  %1515 = vmatprep.subr.mxu0 0.0
  %1516 = vmatpush1.msra.mxu0 %v1319
  %1517 = vmatprep.subr.mxu0 0.0
  %1518 = vmatpush1.msra.mxu0 %v1320
  %1519 = vmatprep.subr.mxu0 0.0
  %1520 = vmatpush1.msra.mxu0 %v1321
  %1521 = vmatprep.subr.mxu0 0.0
  %1522 = vmatpush1.msra.mxu0 %v1322
  %1523 = vmatprep.subr.mxu0 0.0
  %1524 = vmatpush1.msra.mxu0 %v1323
  %1525 = vmatprep.subr.mxu0 0.0
  %1526 = vmatpush1.msra.mxu0 %v1324
  %1527 = vmatprep.subr.mxu0 0.0
  %1528 = vmatpush1.msra.mxu0 %v1325
  %1529 = vmatprep.subr.mxu0 0.0
  %1530 = vmatpush1.msra.mxu0 %v1326
  %1531 = vmatprep.subr.mxu0 0.0
  %1532 = vmatpush1.msra.mxu0 %v1327
  %1533 = vmatprep.subr.mxu0 0.0
  %1534 = vmatpush1.msra.mxu0 %v1328
  %1535 = vmatprep.subr.mxu0 0.0
  %1536 = vmatpush1.msra.mxu0 %v1329
  %1537 = vmatprep.subr.mxu0 0.0
  %1538 = vmatpush1.msra.mxu0 %v1330
  %1539 = vmatprep.subr.mxu0 0.0
  %1540 = vmatpush1.msra.mxu0 %v1331
  %1541 = vmatprep.subr.mxu0 0.0
  %1542 = vmatpush1.msra.mxu0 %v1332
  %1543 = vmatprep.subr.mxu0 0.0
  %1544 = vmatpush1.msra.mxu0 %v1333
  %1545 = vmatprep.subr.mxu0 0.0
  %1546 = vmatpush1.msra.mxu0 %v1334
  %1547 = vmatprep.subr.mxu0 0.0
  %1548 = vmatpush1.msra.mxu0 %v1335
  %1549 = vmatprep.subr.mxu0 0.0
  %1550 = vmatpush1.msra.mxu0 %v1336
  %1551 = vmatprep.subr.mxu0 0.0
  %1552 = vmatpush1.msra.mxu0 %v1337
  %1553 = vmatprep.subr.mxu0 0.0
  %1554 = vmatpush1.msra.mxu0 %v1338
  %1555 = vmatprep.subr.mxu0 0.0
  %1556 = vmatpush1.msra.mxu0 %v1339
  %1557 = vmatprep.subr.mxu0 0.0
  %1558 = vmatpush1.msra.mxu0 %v1340
  %1559 = vmatprep.subr.mxu0 0.0
  %1560 = vmatpush1.msra.mxu0 %v1341
  %1561 = vmatprep.subr.mxu0 0.0
  %1562 = vmatpush1.msra.mxu0 %v1342
  %1563 = vmatprep.subr.mxu0 0.0
  %1564 = vmatpush1.msra.mxu0 %v1343
  %1565 = vmatprep.mubr.f32.mxu0 %v1210
  %1566 = vmatmul.mubr.f32.gmra.mrb[0].mxu0 %v1209
  %v1567 = vpop.f32.mrb[0].mxu0
  %v1568 = vadd.f32 %v1443, %v1567
  %v1569 = vpop.f32.mrb[0].mxu0
  %1570 = vmatprep.mubr.f32.mxu0 %v1216
  %1571 = vmatmul.mubr.f32.gmra.mrb[0].mxu0 %v1215
  %v1572 = vpop.f32.mrb[0].mxu0
  %v1573 = vadd.f32 %v1448, %v1572
  %v1574 = vpop.f32.mrb[0].mxu0
  %1575 = vmatprep.mubr.f32.mxu0 %v1222
  %1576 = vmatmul.mubr.f32.gmra.mrb[0].mxu0 %v1221
  %v1577 = vpop.f32.mrb[0].mxu0
  %v1578 = vadd.f32 %v1453, %v1577
  %v1579 = vpop.f32.mrb[0].mxu0
  %1580 = vmatprep.mubr.f32.mxu0 %v1228
  %1581 = vmatmul.mubr.f32.gmra.mrb[0].mxu0 %v1227
  %v1582 = vpop.f32.mrb[0].mxu0
  %v1583 = vadd.f32 %v1458, %v1582
  %v1584 = vpop.f32.mrb[0].mxu0
  %1585 = vmatprep.mubr.f32.mxu0 %v1234
  %1586 = vmatmul.mubr.f32.gmra.mrb[0].mxu0 %v1233
  %v1587 = vpop.f32.mrb[0].mxu0
  %v1588 = vadd.f32 %v1463, %v1587
  %v1589 = vpop.f32.mrb[0].mxu0
  %1590 = vmatprep.mubr.f32.mxu0 %v1240
  %1591 = vmatmul.mubr.f32.gmra.mrb[0].mxu0 %v1239
  %v1592 = vpop.f32.mrb[0].mxu0
  %v1593 = vadd.f32 %v1468, %v1592
  %v1594 = vpop.f32.mrb[0].mxu0
  %1595 = vmatprep.mubr.f32.mxu0 %v1246
  %1596 = vmatmul.mubr.f32.gmra.mrb[0].mxu0 %v1245
  %v1597 = vpop.f32.mrb[0].mxu0
  %v1598 = vadd.f32 %v1473, %v1597
  %v1599 = vpop.f32.mrb[0].mxu0
  %1600 = vmatprep.mubr.f32.mxu0 %v1252
  %1601 = vmatmul.mubr.f32.gmra.mrb[0].mxu0 %v1251
  %v1602 = vpop.f32.mrb[0].mxu0
  %v1603 = vadd.f32 %v1478, %v1602
  %v1604 = vpop.f32.mrb[0].mxu0
  %1605 = vmatprep.mubr.f32.mxu0 %v1258
  %1606 = vmatmul.mubr.f32.gmra.mrb[0].mxu0 %v1257
  %v1607 = vpop.f32.mrb[0].mxu0
  %v1608 = vadd.f32 %v1483, %v1607
  %v1609 = vpop.f32.mrb[0].mxu0
  %1610 = vmatprep.mubr.f32.mxu0 %v1264
  %1611 = vmatmul.mubr.f32.gmra.mrb[0].mxu0 %v1263
  %v1612 = vpop.f32.mrb[0].mxu0
  %v1613 = vadd.f32 %v1488, %v1612
  %v1614 = vpop.f32.mrb[0].mxu0
  %1615 = vmatprep.mubr.f32.mxu0 %v1270
  %1616 = vmatmul.mubr.f32.gmra.mrb[0].mxu0 %v1269
  %v1617 = vpop.f32.mrb[0].mxu0
  %v1618 = vadd.f32 %v1493, %v1617
  %v1619 = vpop.f32.mrb[0].mxu0
  %1620 = vmatprep.mubr.f32.mxu0 %v1276
  %1621 = vmatmul.mubr.f32.gmra.mrb[0].mxu0 %v1275
  %v1622 = vpop.f32.mrb[0].mxu0
  %v1623 = vadd.f32 %v1498, %v1622
  %v1624 = vpop.f32.mrb[0].mxu0
  %1625 = vdwg.mxu0
  %1626 = vmatprep.subr.mxu0 0.0
  %1627 = vmatpush1.msra.mxu0 %v1344
  %1628 = vmatprep.subr.mxu0 0.0
  %1629 = vmatpush1.msra.mxu0 %v1345
  %1630 = vmatprep.subr.mxu0 0.0
  %1631 = vmatpush1.msra.mxu0 %v1346
  %1632 = vmatprep.subr.mxu0 0.0
  %1633 = vmatpush1.msra.mxu0 %v1347
  %1634 = vmatprep.subr.mxu0 0.0
  %1635 = vmatpush1.msra.mxu0 %v1348
  %1636 = vmatprep.subr.mxu0 0.0
  %1637 = vmatpush1.msra.mxu0 %v1349
  %1638 = vmatprep.subr.mxu0 0.0
  %1639 = vmatpush1.msra.mxu0 %v1350
  %1640 = vmatprep.subr.mxu0 0.0
  %1641 = vmatpush1.msra.mxu0 %v1351
  %1642 = vmatprep.subr.mxu0 0.0
  %1643 = vmatpush1.msra.mxu0 %v1352
  %1644 = vmatprep.subr.mxu0 0.0
  %1645 = vmatpush1.msra.mxu0 %v1353
  %1646 = vmatprep.subr.mxu0 0.0
  %1647 = vmatpush1.msra.mxu0 %v1354
  %1648 = vmatprep.subr.mxu0 0.0
  %1649 = vmatpush1.msra.mxu0 %v1355
  %1650 = vmatprep.subr.mxu0 0.0
  %1651 = vmatpush1.msra.mxu0 %v1356
  %1652 = vmatprep.subr.mxu0 0.0
  %1653 = vmatpush1.msra.mxu0 %v1357
  %1654 = vmatprep.subr.mxu0 0.0
  %1655 = vmatpush1.msra.mxu0 %v1358
  %1656 = vmatprep.subr.mxu0 0.0
  %1657 = vmatpush1.msra.mxu0 %v1359
  %1658 = vmatprep.subr.mxu0 0.0
  %1659 = vmatpush1.msra.mxu0 %v1360
  %1660 = vmatprep.subr.mxu0 0.0
  %1661 = vmatpush1.msra.mxu0 %v1361
  %1662 = vmatprep.subr.mxu0 0.0
  %1663 = vmatpush1.msra.mxu0 %v1362
  %1664 = vmatprep.subr.mxu0 0.0
  %1665 = vmatpush1.msra.mxu0 %v1363
  %1666 = vmatprep.subr.mxu0 0.0
  %1667 = vmatpush1.msra.mxu0 %v1364
  %1668 = vmatprep.subr.mxu0 0.0
  %1669 = vmatpush1.msra.mxu0 %v1365
  %1670 = vmatprep.subr.mxu0 0.0
  %1671 = vmatpush1.msra.mxu0 %v1366
  %1672 = vmatprep.subr.mxu0 0.0
  %1673 = vmatpush1.msra.mxu0 %v1367
  %1674 = vmatprep.subr.mxu0 0.0
  %1675 = vmatpush1.msra.mxu0 %v1368
  %1676 = vmatprep.subr.mxu0 0.0
  %1677 = vmatpush1.msra.mxu0 %v1369
  %1678 = vmatprep.subr.mxu0 0.0
  %1679 = vmatpush1.msra.mxu0 %v1370
  %1680 = vmatprep.subr.mxu0 0.0
  %1681 = vmatpush1.msra.mxu0 %v1371
  %1682 = vmatprep.subr.mxu0 0.0
  %1683 = vmatpush1.msra.mxu0 %v1372
  %1684 = vmatprep.subr.mxu0 0.0
  %1685 = vmatpush1.msra.mxu0 %v1373
  %1686 = vmatprep.subr.mxu0 0.0
  %1687 = vmatpush1.msra.mxu0 %v1374
  %1688 = vmatprep.subr.mxu0 0.0
  %1689 = vmatpush1.msra.mxu0 %v1375
  %1690 = vmatprep.mubr.f32.mxu0 %v1212
  %1691 = vmatmul.mubr.f32.gmra.mrb[0].mxu0 %v1211
  %v1692 = vpop.f32.mrb[0].mxu0
  %v1693 = vadd.f32 %v1568, %v1692
  %v1694 = vpop.f32.mrb[0].mxu0
  %1695 = vmatprep.mubr.f32.mxu0 %v1218
  %1696 = vmatmul.mubr.f32.gmra.mrb[0].mxu0 %v1217
  %v1697 = vpop.f32.mrb[0].mxu0
  %v1698 = vadd.f32 %v1573, %v1697
  %v1699 = vpop.f32.mrb[0].mxu0
  %1700 = vmatprep.mubr.f32.mxu0 %v1224
  %1701 = vmatmul.mubr.f32.gmra.mrb[0].mxu0 %v1223
  %v1702 = vpop.f32.mrb[0].mxu0
  %v1703 = vadd.f32 %v1578, %v1702
  %v1704 = vpop.f32.mrb[0].mxu0
  %1705 = vmatprep.mubr.f32.mxu0 %v1230
  %1706 = vmatmul.mubr.f32.gmra.mrb[0].mxu0 %v1229
  %v1707 = vpop.f32.mrb[0].mxu0
  %v1708 = vadd.f32 %v1583, %v1707
  %v1709 = vpop.f32.mrb[0].mxu0
  %1710 = vmatprep.mubr.f32.mxu0 %v1236
  %1711 = vmatmul.mubr.f32.gmra.mrb[0].mxu0 %v1235
  %v1712 = vpop.f32.mrb[0].mxu0
  %v1713 = vadd.f32 %v1588, %v1712
  %v1714 = vpop.f32.mrb[0].mxu0
  %1715 = vmatprep.mubr.f32.mxu0 %v1242
  %1716 = vmatmul.mubr.f32.gmra.mrb[0].mxu0 %v1241
  %v1717 = vpop.f32.mrb[0].mxu0
  %v1718 = vadd.f32 %v1593, %v1717
  %v1719 = vpop.f32.mrb[0].mxu0
  %1720 = vmatprep.mubr.f32.mxu0 %v1248
  %1721 = vmatmul.mubr.f32.gmra.mrb[0].mxu0 %v1247
  %v1722 = vpop.f32.mrb[0].mxu0
  %v1723 = vadd.f32 %v1598, %v1722
  %v1724 = vpop.f32.mrb[0].mxu0
  %1725 = vmatprep.mubr.f32.mxu0 %v1254
  %1726 = vmatmul.mubr.f32.gmra.mrb[0].mxu0 %v1253
  %v1727 = vpop.f32.mrb[0].mxu0
  %v1728 = vadd.f32 %v1603, %v1727
  %v1729 = vpop.f32.mrb[0].mxu0
  %1730 = vmatprep.mubr.f32.mxu0 %v1260
  %1731 = vmatmul.mubr.f32.gmra.mrb[0].mxu0 %v1259
  %v1732 = vpop.f32.mrb[0].mxu0
  %v1733 = vadd.f32 %v1608, %v1732
  %v1734 = vpop.f32.mrb[0].mxu0
  %1735 = vmatprep.mubr.f32.mxu0 %v1266
  %1736 = vmatmul.mubr.f32.gmra.mrb[0].mxu0 %v1265
  %v1737 = vpop.f32.mrb[0].mxu0
  %v1738 = vadd.f32 %v1613, %v1737
  %v1739 = vpop.f32.mrb[0].mxu0
  %1740 = vmatprep.mubr.f32.mxu0 %v1272
  %1741 = vmatmul.mubr.f32.gmra.mrb[0].mxu0 %v1271
  %v1742 = vpop.f32.mrb[0].mxu0
  %v1743 = vadd.f32 %v1618, %v1742
  %v1744 = vpop.f32.mrb[0].mxu0
  %1745 = vmatprep.mubr.f32.mxu0 %v1278
  %1746 = vmatmul.mubr.f32.gmra.mrb[0].mxu0 %v1277
  %v1747 = vpop.f32.mrb[0].mxu0
  %v1748 = vadd.f32 %v1623, %v1747
  %v1749 = vpop.f32.mrb[0].mxu0
  %1750 = vdwg.mxu0
  %s1751 = scalar_lea.vmem %s5, 192
  %1752 = vst.msk [vmem:[%s1751] sm:$0xff] %vm635, %v1693
  %1753 = vst.msk [vmem:[%s1751 + $0x8] sm:$0xff] %vm635, %v1698
  %1754 = vst.msk [vmem:[%s1751 + $0x10] sm:$0xff] %vm635, %v1703
  %1755 = vst.msk [vmem:[%s1751 + $0x18] sm:$0xff] %vm635, %v1708
  %1756 = vst.msk [vmem:[%s1751 + $0x20] sm:$0xff] %vm635, %v1713
  %1757 = vst.msk [vmem:[%s1751 + $0x28] sm:$0xff] %vm635, %v1718
  %1758 = vst.msk [vmem:[%s1751 + $0x30] sm:$0xff] %vm635, %v1723
  %1759 = vst.msk [vmem:[%s1751 + $0x38] sm:$0xff] %vm635, %v1728
  %1760 = vst.msk [vmem:[%s1751 + $0x40] sm:$0xff] %vm635, %v1733
  %1761 = vst.msk [vmem:[%s1751 + $0x48] sm:$0xff] %vm635, %v1738
  %1762 = vst.msk [vmem:[%s1751 + $0x50] sm:$0xff] %vm635, %v1743
  %1763 = vst.msk [vmem:[%s1751 + $0x58] sm:$0xff] %vm635, %v1748
  %s1764 = scalar_lea.vmem %s0, 1728
  %v1765 = vld [vmem:[%s1764] sm:$0xff]
  %v1766 = vld [vmem:[%s1764 + $0x8] sm:$0xff]
  %v1767 = vld [vmem:[%s1764 + $0x10] sm:$0xff]
  %v1768 = vld [vmem:[%s1764 + $0x18] sm:$0xff]
  %v1769 = vld [vmem:[%s1764 + $0x20] sm:$0xff]
  %v1770 = vld [vmem:[%s1764 + $0x28] sm:$0xff]
  %v1771 = vld [vmem:[%s1764 + $0x30] sm:$0xff]
  %v1772 = vld [vmem:[%s1764 + $0x38] sm:$0xff]
  %v1773 = vld [vmem:[%s1764 + $0x40] sm:$0xff]
  %v1774 = vld [vmem:[%s1764 + $0x48] sm:$0xff]
  %v1775 = vld [vmem:[%s1764 + $0x50] sm:$0xff]
  %v1776 = vld [vmem:[%s1764 + $0x58] sm:$0xff]
  %v1777 = vld [vmem:[%s1764 + $0x60] sm:$0xff]
  %v1778 = vld [vmem:[%s1764 + $0x68] sm:$0xff]
  %v1779 = vld [vmem:[%s1764 + $0x70] sm:$0xff]
  %v1780 = vld [vmem:[%s1764 + $0x78] sm:$0xff]
  %v1781 = vld [vmem:[%s1764 + $0x80] sm:$0xff]
  %v1782 = vld [vmem:[%s1764 + $0x88] sm:$0xff]
  %v1783 = vld [vmem:[%s1764 + $0x90] sm:$0xff]
  %v1784 = vld [vmem:[%s1764 + $0x98] sm:$0xff]
  %v1785 = vld [vmem:[%s1764 + $0xa0] sm:$0xff]
  %v1786 = vld [vmem:[%s1764 + $0xa8] sm:$0xff]
  %v1787 = vld [vmem:[%s1764 + $0xb0] sm:$0xff]
  %v1788 = vld [vmem:[%s1764 + $0xb8] sm:$0xff]
  %v1789 = vld [vmem:[%s1764 + $0xc0] sm:$0xff]
  %v1790 = vld [vmem:[%s1764 + $0xc8] sm:$0xff]
  %v1791 = vld [vmem:[%s1764 + $0xd0] sm:$0xff]
  %v1792 = vld [vmem:[%s1764 + $0xd8] sm:$0xff]
  %v1793 = vld [vmem:[%s1764 + $0xe0] sm:$0xff]
  %v1794 = vld [vmem:[%s1764 + $0xe8] sm:$0xff]
  %v1795 = vld [vmem:[%s1764 + $0xf0] sm:$0xff]
  %v1796 = vld [vmem:[%s1764 + $0xf8] sm:$0xff]
  %v1797 = vld [vmem:[%s1764 + $0x100] sm:$0xff]
  %v1798 = vld [vmem:[%s1764 + $0x108] sm:$0xff]
  %v1799 = vld [vmem:[%s1764 + $0x110] sm:$0xff]
  %v1800 = vld [vmem:[%s1764 + $0x118] sm:$0xff]
  %v1801 = vld [vmem:[%s1764 + $0x120] sm:$0xff]
  %v1802 = vld [vmem:[%s1764 + $0x128] sm:$0xff]
  %v1803 = vld [vmem:[%s1764 + $0x130] sm:$0xff]
  %v1804 = vld [vmem:[%s1764 + $0x138] sm:$0xff]
  %v1805 = vld [vmem:[%s1764 + $0x140] sm:$0xff]
  %v1806 = vld [vmem:[%s1764 + $0x148] sm:$0xff]
  %v1807 = vld [vmem:[%s1764 + $0x150] sm:$0xff]
  %v1808 = vld [vmem:[%s1764 + $0x158] sm:$0xff]
  %v1809 = vld [vmem:[%s1764 + $0x160] sm:$0xff]
  %v1810 = vld [vmem:[%s1764 + $0x168] sm:$0xff]
  %v1811 = vld [vmem:[%s1764 + $0x170] sm:$0xff]
  %v1812 = vld [vmem:[%s1764 + $0x178] sm:$0xff]
  %v1813 = vld [vmem:[%s1764 + $0x180] sm:$0xff]
  %v1814 = vld [vmem:[%s1764 + $0x188] sm:$0xff]
  %v1815 = vld [vmem:[%s1764 + $0x190] sm:$0xff]
  %v1816 = vld [vmem:[%s1764 + $0x198] sm:$0xff]
  %v1817 = vld [vmem:[%s1764 + $0x1a0] sm:$0xff]
  %v1818 = vld [vmem:[%s1764 + $0x1a8] sm:$0xff]
  %v1819 = vld [vmem:[%s1764 + $0x1b0] sm:$0xff]
  %v1820 = vld [vmem:[%s1764 + $0x1b8] sm:$0xff]
  %v1821 = vld [vmem:[%s1764 + $0x1c0] sm:$0xff]
  %v1822 = vld [vmem:[%s1764 + $0x1c8] sm:$0xff]
  %v1823 = vld [vmem:[%s1764 + $0x1d0] sm:$0xff]
  %v1824 = vld [vmem:[%s1764 + $0x1d8] sm:$0xff]
  %v1825 = vld [vmem:[%s1764 + $0x1e0] sm:$0xff]
  %v1826 = vld [vmem:[%s1764 + $0x1e8] sm:$0xff]
  %v1827 = vld [vmem:[%s1764 + $0x1f0] sm:$0xff]
  %v1828 = vld [vmem:[%s1764 + $0x1f8] sm:$0xff]
  %v1829 = vld [vmem:[%s1764 + $0x200] sm:$0xff]
  %v1830 = vld [vmem:[%s1764 + $0x208] sm:$0xff]
  %v1831 = vld [vmem:[%s1764 + $0x210] sm:$0xff]
  %v1832 = vld [vmem:[%s1764 + $0x218] sm:$0xff]
  %v1833 = vld [vmem:[%s1764 + $0x220] sm:$0xff]
  %v1834 = vld [vmem:[%s1764 + $0x228] sm:$0xff]
  %v1835 = vld [vmem:[%s1764 + $0x230] sm:$0xff]
  %v1836 = vld [vmem:[%s1764 + $0x238] sm:$0xff]
  %s1837 = scalar_lea.vmem %s1, 2304
  %v1838 = vld [vmem:[%s1837] sm:$0xff]
  %v1839 = vld [vmem:[%s1837 + $0x8] sm:$0xff]
  %v1840 = vld [vmem:[%s1837 + $0x10] sm:$0xff]
  %v1841 = vld [vmem:[%s1837 + $0x18] sm:$0xff]
  %v1842 = vld [vmem:[%s1837 + $0x20] sm:$0xff]
  %v1843 = vld [vmem:[%s1837 + $0x28] sm:$0xff]
  %v1844 = vld [vmem:[%s1837 + $0x30] sm:$0xff]
  %v1845 = vld [vmem:[%s1837 + $0x38] sm:$0xff]
  %v1846 = vld [vmem:[%s1837 + $0x40] sm:$0xff]
  %v1847 = vld [vmem:[%s1837 + $0x48] sm:$0xff]
  %v1848 = vld [vmem:[%s1837 + $0x50] sm:$0xff]
  %v1849 = vld [vmem:[%s1837 + $0x58] sm:$0xff]
  %v1850 = vld [vmem:[%s1837 + $0x60] sm:$0xff]
  %v1851 = vld [vmem:[%s1837 + $0x68] sm:$0xff]
  %v1852 = vld [vmem:[%s1837 + $0x70] sm:$0xff]
  %v1853 = vld [vmem:[%s1837 + $0x78] sm:$0xff]
  %v1854 = vld [vmem:[%s1837 + $0x80] sm:$0xff]
  %v1855 = vld [vmem:[%s1837 + $0x88] sm:$0xff]
  %v1856 = vld [vmem:[%s1837 + $0x90] sm:$0xff]
  %v1857 = vld [vmem:[%s1837 + $0x98] sm:$0xff]
  %v1858 = vld [vmem:[%s1837 + $0xa0] sm:$0xff]
  %v1859 = vld [vmem:[%s1837 + $0xa8] sm:$0xff]
  %v1860 = vld [vmem:[%s1837 + $0xb0] sm:$0xff]
  %v1861 = vld [vmem:[%s1837 + $0xb8] sm:$0xff]
  %v1862 = vld [vmem:[%s1837 + $0xc0] sm:$0xff]
  %v1863 = vld [vmem:[%s1837 + $0xc8] sm:$0xff]
  %v1864 = vld [vmem:[%s1837 + $0xd0] sm:$0xff]
  %v1865 = vld [vmem:[%s1837 + $0xd8] sm:$0xff]
  %v1866 = vld [vmem:[%s1837 + $0xe0] sm:$0xff]
  %v1867 = vld [vmem:[%s1837 + $0xe8] sm:$0xff]
  %v1868 = vld [vmem:[%s1837 + $0xf0] sm:$0xff]
  %v1869 = vld [vmem:[%s1837 + $0xf8] sm:$0xff]
  %v1870 = vld [vmem:[%s1837 + $0x100] sm:$0xff]
  %v1871 = vld [vmem:[%s1837 + $0x108] sm:$0xff]
  %v1872 = vld [vmem:[%s1837 + $0x110] sm:$0xff]
  %v1873 = vld [vmem:[%s1837 + $0x118] sm:$0xff]
  %v1874 = vld [vmem:[%s1837 + $0x120] sm:$0xff]
  %v1875 = vld [vmem:[%s1837 + $0x128] sm:$0xff]
  %v1876 = vld [vmem:[%s1837 + $0x130] sm:$0xff]
  %v1877 = vld [vmem:[%s1837 + $0x138] sm:$0xff]
  %v1878 = vld [vmem:[%s1837 + $0x140] sm:$0xff]
  %v1879 = vld [vmem:[%s1837 + $0x148] sm:$0xff]
  %v1880 = vld [vmem:[%s1837 + $0x150] sm:$0xff]
  %v1881 = vld [vmem:[%s1837 + $0x158] sm:$0xff]
  %v1882 = vld [vmem:[%s1837 + $0x160] sm:$0xff]
  %v1883 = vld [vmem:[%s1837 + $0x168] sm:$0xff]
  %v1884 = vld [vmem:[%s1837 + $0x170] sm:$0xff]
  %v1885 = vld [vmem:[%s1837 + $0x178] sm:$0xff]
  %v1886 = vld [vmem:[%s1837 + $0x180] sm:$0xff]
  %v1887 = vld [vmem:[%s1837 + $0x188] sm:$0xff]
  %v1888 = vld [vmem:[%s1837 + $0x190] sm:$0xff]
  %v1889 = vld [vmem:[%s1837 + $0x198] sm:$0xff]
  %v1890 = vld [vmem:[%s1837 + $0x1a0] sm:$0xff]
  %v1891 = vld [vmem:[%s1837 + $0x1a8] sm:$0xff]
  %v1892 = vld [vmem:[%s1837 + $0x1b0] sm:$0xff]
  %v1893 = vld [vmem:[%s1837 + $0x1b8] sm:$0xff]
  %v1894 = vld [vmem:[%s1837 + $0x1c0] sm:$0xff]
  %v1895 = vld [vmem:[%s1837 + $0x1c8] sm:$0xff]
  %v1896 = vld [vmem:[%s1837 + $0x1d0] sm:$0xff]
  %v1897 = vld [vmem:[%s1837 + $0x1d8] sm:$0xff]
  %v1898 = vld [vmem:[%s1837 + $0x1e0] sm:$0xff]
  %v1899 = vld [vmem:[%s1837 + $0x1e8] sm:$0xff]
  %v1900 = vld [vmem:[%s1837 + $0x1f0] sm:$0xff]
  %v1901 = vld [vmem:[%s1837 + $0x1f8] sm:$0xff]
  %v1902 = vld [vmem:[%s1837 + $0x200] sm:$0xff]
  %v1903 = vld [vmem:[%s1837 + $0x208] sm:$0xff]
  %v1904 = vld [vmem:[%s1837 + $0x210] sm:$0xff]
  %v1905 = vld [vmem:[%s1837 + $0x218] sm:$0xff]
  %v1906 = vld [vmem:[%s1837 + $0x220] sm:$0xff]
  %v1907 = vld [vmem:[%s1837 + $0x228] sm:$0xff]
  %v1908 = vld [vmem:[%s1837 + $0x230] sm:$0xff]
  %v1909 = vld [vmem:[%s1837 + $0x238] sm:$0xff]
  %v1910 = vld [vmem:[%s1837 + $0x240] sm:$0xff]
  %v1911 = vld [vmem:[%s1837 + $0x248] sm:$0xff]
  %v1912 = vld [vmem:[%s1837 + $0x250] sm:$0xff]
  %v1913 = vld [vmem:[%s1837 + $0x258] sm:$0xff]
  %v1914 = vld [vmem:[%s1837 + $0x260] sm:$0xff]
  %v1915 = vld [vmem:[%s1837 + $0x268] sm:$0xff]
  %v1916 = vld [vmem:[%s1837 + $0x270] sm:$0xff]
  %v1917 = vld [vmem:[%s1837 + $0x278] sm:$0xff]
  %v1918 = vld [vmem:[%s1837 + $0x280] sm:$0xff]
  %v1919 = vld [vmem:[%s1837 + $0x288] sm:$0xff]
  %v1920 = vld [vmem:[%s1837 + $0x290] sm:$0xff]
  %v1921 = vld [vmem:[%s1837 + $0x298] sm:$0xff]
  %v1922 = vld [vmem:[%s1837 + $0x2a0] sm:$0xff]
  %v1923 = vld [vmem:[%s1837 + $0x2a8] sm:$0xff]
  %v1924 = vld [vmem:[%s1837 + $0x2b0] sm:$0xff]
  %v1925 = vld [vmem:[%s1837 + $0x2b8] sm:$0xff]
  %v1926 = vld [vmem:[%s1837 + $0x2c0] sm:$0xff]
  %v1927 = vld [vmem:[%s1837 + $0x2c8] sm:$0xff]
  %v1928 = vld [vmem:[%s1837 + $0x2d0] sm:$0xff]
  %v1929 = vld [vmem:[%s1837 + $0x2d8] sm:$0xff]
  %v1930 = vld [vmem:[%s1837 + $0x2e0] sm:$0xff]
  %v1931 = vld [vmem:[%s1837 + $0x2e8] sm:$0xff]
  %v1932 = vld [vmem:[%s1837 + $0x2f0] sm:$0xff]
  %v1933 = vld [vmem:[%s1837 + $0x2f8] sm:$0xff]
  %1934 = vmatprep.subr.mxu0 0.0
  %1935 = vmatpush1.msra.mxu0 %v1838
  %1936 = vmatprep.subr.mxu0 0.0
  %1937 = vmatpush1.msra.mxu0 %v1839
  %1938 = vmatprep.subr.mxu0 0.0
  %1939 = vmatpush1.msra.mxu0 %v1840
  %1940 = vmatprep.subr.mxu0 0.0
  %1941 = vmatpush1.msra.mxu0 %v1841
  %1942 = vmatprep.subr.mxu0 0.0
  %1943 = vmatpush1.msra.mxu0 %v1842
  %1944 = vmatprep.subr.mxu0 0.0
  %1945 = vmatpush1.msra.mxu0 %v1843
  %1946 = vmatprep.subr.mxu0 0.0
  %1947 = vmatpush1.msra.mxu0 %v1844
  %1948 = vmatprep.subr.mxu0 0.0
  %1949 = vmatpush1.msra.mxu0 %v1845
  %1950 = vmatprep.subr.mxu0 0.0
  %1951 = vmatpush1.msra.mxu0 %v1846
  %1952 = vmatprep.subr.mxu0 0.0
  %1953 = vmatpush1.msra.mxu0 %v1847
  %1954 = vmatprep.subr.mxu0 0.0
  %1955 = vmatpush1.msra.mxu0 %v1848
  %1956 = vmatprep.subr.mxu0 0.0
  %1957 = vmatpush1.msra.mxu0 %v1849
  %1958 = vmatprep.subr.mxu0 0.0
  %1959 = vmatpush1.msra.mxu0 %v1850
  %1960 = vmatprep.subr.mxu0 0.0
  %1961 = vmatpush1.msra.mxu0 %v1851
  %1962 = vmatprep.subr.mxu0 0.0
  %1963 = vmatpush1.msra.mxu0 %v1852
  %1964 = vmatprep.subr.mxu0 0.0
  %1965 = vmatpush1.msra.mxu0 %v1853
  %1966 = vmatprep.subr.mxu0 0.0
  %1967 = vmatpush1.msra.mxu0 %v1854
  %1968 = vmatprep.subr.mxu0 0.0
  %1969 = vmatpush1.msra.mxu0 %v1855
  %1970 = vmatprep.subr.mxu0 0.0
  %1971 = vmatpush1.msra.mxu0 %v1856
  %1972 = vmatprep.subr.mxu0 0.0
  %1973 = vmatpush1.msra.mxu0 %v1857
  %1974 = vmatprep.subr.mxu0 0.0
  %1975 = vmatpush1.msra.mxu0 %v1858
  %1976 = vmatprep.subr.mxu0 0.0
  %1977 = vmatpush1.msra.mxu0 %v1859
  %1978 = vmatprep.subr.mxu0 0.0
  %1979 = vmatpush1.msra.mxu0 %v1860
  %1980 = vmatprep.subr.mxu0 0.0
  %1981 = vmatpush1.msra.mxu0 %v1861
  %1982 = vmatprep.subr.mxu0 0.0
  %1983 = vmatpush1.msra.mxu0 %v1862
  %1984 = vmatprep.subr.mxu0 0.0
  %1985 = vmatpush1.msra.mxu0 %v1863
  %1986 = vmatprep.subr.mxu0 0.0
  %1987 = vmatpush1.msra.mxu0 %v1864
  %1988 = vmatprep.subr.mxu0 0.0
  %1989 = vmatpush1.msra.mxu0 %v1865
  %1990 = vmatprep.subr.mxu0 0.0
  %1991 = vmatpush1.msra.mxu0 %v1866
  %1992 = vmatprep.subr.mxu0 0.0
  %1993 = vmatpush1.msra.mxu0 %v1867
  %1994 = vmatprep.subr.mxu0 0.0
  %1995 = vmatpush1.msra.mxu0 %v1868
  %1996 = vmatprep.subr.mxu0 0.0
  %1997 = vmatpush1.msra.mxu0 %v1869
  %1998 = vmatprep.mubr.f32.mxu0 %v1766
  %1999 = vmatmul.mubr.f32.gmra.mrb[0].mxu0 %v1765
  %v2000 = vpop.f32.mrb[0].mxu0
  %v2001 = vadd.f32 %v203, %v2000
  %v2002 = vpop.f32.mrb[0].mxu0
  %2003 = vmatprep.mubr.f32.mxu0 %v1772
  %2004 = vmatmul.mubr.f32.gmra.mrb[0].mxu0 %v1771
  %v2005 = vpop.f32.mrb[0].mxu0
  %v2006 = vadd.f32 %v208, %v2005
  %v2007 = vpop.f32.mrb[0].mxu0
  %2008 = vmatprep.mubr.f32.mxu0 %v1778
  %2009 = vmatmul.mubr.f32.gmra.mrb[0].mxu0 %v1777
  %v2010 = vpop.f32.mrb[0].mxu0
  %v2011 = vadd.f32 %v213, %v2010
  %v2012 = vpop.f32.mrb[0].mxu0
  %2013 = vmatprep.mubr.f32.mxu0 %v1784
  %2014 = vmatmul.mubr.f32.gmra.mrb[0].mxu0 %v1783
  %v2015 = vpop.f32.mrb[0].mxu0
  %v2016 = vadd.f32 %v218, %v2015
  %v2017 = vpop.f32.mrb[0].mxu0
  %2018 = vmatprep.mubr.f32.mxu0 %v1790
  %2019 = vmatmul.mubr.f32.gmra.mrb[0].mxu0 %v1789
  %v2020 = vpop.f32.mrb[0].mxu0
  %v2021 = vadd.f32 %v223, %v2020
  %v2022 = vpop.f32.mrb[0].mxu0
  %2023 = vmatprep.mubr.f32.mxu0 %v1796
  %2024 = vmatmul.mubr.f32.gmra.mrb[0].mxu0 %v1795
  %v2025 = vpop.f32.mrb[0].mxu0
  %v2026 = vadd.f32 %v228, %v2025
  %v2027 = vpop.f32.mrb[0].mxu0
  %2028 = vmatprep.mubr.f32.mxu0 %v1802
  %2029 = vmatmul.mubr.f32.gmra.mrb[0].mxu0 %v1801
  %v2030 = vpop.f32.mrb[0].mxu0
  %v2031 = vadd.f32 %v233, %v2030
  %v2032 = vpop.f32.mrb[0].mxu0
  %2033 = vmatprep.mubr.f32.mxu0 %v1808
  %2034 = vmatmul.mubr.f32.gmra.mrb[0].mxu0 %v1807
  %v2035 = vpop.f32.mrb[0].mxu0
  %v2036 = vadd.f32 %v238, %v2035
  %v2037 = vpop.f32.mrb[0].mxu0
  %2038 = vmatprep.mubr.f32.mxu0 %v1814
  %2039 = vmatmul.mubr.f32.gmra.mrb[0].mxu0 %v1813
  %v2040 = vpop.f32.mrb[0].mxu0
  %v2041 = vadd.f32 %v243, %v2040
  %v2042 = vpop.f32.mrb[0].mxu0
  %2043 = vmatprep.mubr.f32.mxu0 %v1820
  %2044 = vmatmul.mubr.f32.gmra.mrb[0].mxu0 %v1819
  %v2045 = vpop.f32.mrb[0].mxu0
  %v2046 = vadd.f32 %v248, %v2045
  %v2047 = vpop.f32.mrb[0].mxu0
  %2048 = vmatprep.mubr.f32.mxu0 %v1826
  %2049 = vmatmul.mubr.f32.gmra.mrb[0].mxu0 %v1825
  %v2050 = vpop.f32.mrb[0].mxu0
  %v2051 = vadd.f32 %v253, %v2050
  %v2052 = vpop.f32.mrb[0].mxu0
  %2053 = vmatprep.mubr.f32.mxu0 %v1832
  %2054 = vmatmul.mubr.f32.gmra.mrb[0].mxu0 %v1831
  %v2055 = vpop.f32.mrb[0].mxu0
  %v2056 = vadd.f32 %v258, %v2055
  %v2057 = vpop.f32.mrb[0].mxu0
  %2058 = vdwg.mxu0
  %2059 = vmatprep.subr.mxu0 0.0
  %2060 = vmatpush1.msra.mxu0 %v1870
  %2061 = vmatprep.subr.mxu0 0.0
  %2062 = vmatpush1.msra.mxu0 %v1871
  %2063 = vmatprep.subr.mxu0 0.0
  %2064 = vmatpush1.msra.mxu0 %v1872
  %2065 = vmatprep.subr.mxu0 0.0
  %2066 = vmatpush1.msra.mxu0 %v1873
  %2067 = vmatprep.subr.mxu0 0.0
  %2068 = vmatpush1.msra.mxu0 %v1874
  %2069 = vmatprep.subr.mxu0 0.0
  %2070 = vmatpush1.msra.mxu0 %v1875
  %2071 = vmatprep.subr.mxu0 0.0
  %2072 = vmatpush1.msra.mxu0 %v1876
  %2073 = vmatprep.subr.mxu0 0.0
  %2074 = vmatpush1.msra.mxu0 %v1877
  %2075 = vmatprep.subr.mxu0 0.0
  %2076 = vmatpush1.msra.mxu0 %v1878
  %2077 = vmatprep.subr.mxu0 0.0
  %2078 = vmatpush1.msra.mxu0 %v1879
  %2079 = vmatprep.subr.mxu0 0.0
  %2080 = vmatpush1.msra.mxu0 %v1880
  %2081 = vmatprep.subr.mxu0 0.0
  %2082 = vmatpush1.msra.mxu0 %v1881
  %2083 = vmatprep.subr.mxu0 0.0
  %2084 = vmatpush1.msra.mxu0 %v1882
  %2085 = vmatprep.subr.mxu0 0.0
  %2086 = vmatpush1.msra.mxu0 %v1883
  %2087 = vmatprep.subr.mxu0 0.0
  %2088 = vmatpush1.msra.mxu0 %v1884
  %2089 = vmatprep.subr.mxu0 0.0
  %2090 = vmatpush1.msra.mxu0 %v1885
  %2091 = vmatprep.subr.mxu0 0.0
  %2092 = vmatpush1.msra.mxu0 %v1886
  %2093 = vmatprep.subr.mxu0 0.0
  %2094 = vmatpush1.msra.mxu0 %v1887
  %2095 = vmatprep.subr.mxu0 0.0
  %2096 = vmatpush1.msra.mxu0 %v1888
  %2097 = vmatprep.subr.mxu0 0.0
  %2098 = vmatpush1.msra.mxu0 %v1889
  %2099 = vmatprep.subr.mxu0 0.0
  %2100 = vmatpush1.msra.mxu0 %v1890
  %2101 = vmatprep.subr.mxu0 0.0
  %2102 = vmatpush1.msra.mxu0 %v1891
  %2103 = vmatprep.subr.mxu0 0.0
  %2104 = vmatpush1.msra.mxu0 %v1892
  %2105 = vmatprep.subr.mxu0 0.0
  %2106 = vmatpush1.msra.mxu0 %v1893
  %2107 = vmatprep.subr.mxu0 0.0
  %2108 = vmatpush1.msra.mxu0 %v1894
  %2109 = vmatprep.subr.mxu0 0.0
  %2110 = vmatpush1.msra.mxu0 %v1895
  %2111 = vmatprep.subr.mxu0 0.0
  %2112 = vmatpush1.msra.mxu0 %v1896
  %2113 = vmatprep.subr.mxu0 0.0
  %2114 = vmatpush1.msra.mxu0 %v1897
  %2115 = vmatprep.subr.mxu0 0.0
  %2116 = vmatpush1.msra.mxu0 %v1898
  %2117 = vmatprep.subr.mxu0 0.0
  %2118 = vmatpush1.msra.mxu0 %v1899
  %2119 = vmatprep.subr.mxu0 0.0
  %2120 = vmatpush1.msra.mxu0 %v1900
  %2121 = vmatprep.subr.mxu0 0.0
  %2122 = vmatpush1.msra.mxu0 %v1901
  %2123 = vmatprep.mubr.f32.mxu0 %v1768
  %2124 = vmatmul.mubr.f32.gmra.mrb[0].mxu0 %v1767
  %v2125 = vpop.f32.mrb[0].mxu0
  %v2126 = vadd.f32 %v2001, %v2125
  %v2127 = vpop.f32.mrb[0].mxu0
  %2128 = vmatprep.mubr.f32.mxu0 %v1774
  %2129 = vmatmul.mubr.f32.gmra.mrb[0].mxu0 %v1773
  %v2130 = vpop.f32.mrb[0].mxu0
  %v2131 = vadd.f32 %v2006, %v2130
  %v2132 = vpop.f32.mrb[0].mxu0
  %2133 = vmatprep.mubr.f32.mxu0 %v1780
  %2134 = vmatmul.mubr.f32.gmra.mrb[0].mxu0 %v1779
  %v2135 = vpop.f32.mrb[0].mxu0
  %v2136 = vadd.f32 %v2011, %v2135
  %v2137 = vpop.f32.mrb[0].mxu0
  %2138 = vmatprep.mubr.f32.mxu0 %v1786
  %2139 = vmatmul.mubr.f32.gmra.mrb[0].mxu0 %v1785
  %v2140 = vpop.f32.mrb[0].mxu0
  %v2141 = vadd.f32 %v2016, %v2140
  %v2142 = vpop.f32.mrb[0].mxu0
  %2143 = vmatprep.mubr.f32.mxu0 %v1792
  %2144 = vmatmul.mubr.f32.gmra.mrb[0].mxu0 %v1791
  %v2145 = vpop.f32.mrb[0].mxu0
  %v2146 = vadd.f32 %v2021, %v2145
  %v2147 = vpop.f32.mrb[0].mxu0
  %2148 = vmatprep.mubr.f32.mxu0 %v1798
  %2149 = vmatmul.mubr.f32.gmra.mrb[0].mxu0 %v1797
  %v2150 = vpop.f32.mrb[0].mxu0
  %v2151 = vadd.f32 %v2026, %v2150
  %v2152 = vpop.f32.mrb[0].mxu0
  %2153 = vmatprep.mubr.f32.mxu0 %v1804
  %2154 = vmatmul.mubr.f32.gmra.mrb[0].mxu0 %v1803
  %v2155 = vpop.f32.mrb[0].mxu0
  %v2156 = vadd.f32 %v2031, %v2155
  %v2157 = vpop.f32.mrb[0].mxu0
  %2158 = vmatprep.mubr.f32.mxu0 %v1810
  %2159 = vmatmul.mubr.f32.gmra.mrb[0].mxu0 %v1809
  %v2160 = vpop.f32.mrb[0].mxu0
  %v2161 = vadd.f32 %v2036, %v2160
  %v2162 = vpop.f32.mrb[0].mxu0
  %2163 = vmatprep.mubr.f32.mxu0 %v1816
  %2164 = vmatmul.mubr.f32.gmra.mrb[0].mxu0 %v1815
  %v2165 = vpop.f32.mrb[0].mxu0
  %v2166 = vadd.f32 %v2041, %v2165
  %v2167 = vpop.f32.mrb[0].mxu0
  %2168 = vmatprep.mubr.f32.mxu0 %v1822
  %2169 = vmatmul.mubr.f32.gmra.mrb[0].mxu0 %v1821
  %v2170 = vpop.f32.mrb[0].mxu0
  %v2171 = vadd.f32 %v2046, %v2170
  %v2172 = vpop.f32.mrb[0].mxu0
  %2173 = vmatprep.mubr.f32.mxu0 %v1828
  %2174 = vmatmul.mubr.f32.gmra.mrb[0].mxu0 %v1827
  %v2175 = vpop.f32.mrb[0].mxu0
  %v2176 = vadd.f32 %v2051, %v2175
  %v2177 = vpop.f32.mrb[0].mxu0
  %2178 = vmatprep.mubr.f32.mxu0 %v1834
  %2179 = vmatmul.mubr.f32.gmra.mrb[0].mxu0 %v1833
  %v2180 = vpop.f32.mrb[0].mxu0
  %v2181 = vadd.f32 %v2056, %v2180
  %v2182 = vpop.f32.mrb[0].mxu0
  %2183 = vdwg.mxu0
  %2184 = vmatprep.subr.mxu0 0.0
  %2185 = vmatpush1.msra.mxu0 %v1902
  %2186 = vmatprep.subr.mxu0 0.0
  %2187 = vmatpush1.msra.mxu0 %v1903
  %2188 = vmatprep.subr.mxu0 0.0
  %2189 = vmatpush1.msra.mxu0 %v1904
  %2190 = vmatprep.subr.mxu0 0.0
  %2191 = vmatpush1.msra.mxu0 %v1905
  %2192 = vmatprep.subr.mxu0 0.0
  %2193 = vmatpush1.msra.mxu0 %v1906
  %2194 = vmatprep.subr.mxu0 0.0
  %2195 = vmatpush1.msra.mxu0 %v1907
  %2196 = vmatprep.subr.mxu0 0.0
  %2197 = vmatpush1.msra.mxu0 %v1908
  %2198 = vmatprep.subr.mxu0 0.0
  %2199 = vmatpush1.msra.mxu0 %v1909
  %2200 = vmatprep.subr.mxu0 0.0
  %2201 = vmatpush1.msra.mxu0 %v1910
  %2202 = vmatprep.subr.mxu0 0.0
  %2203 = vmatpush1.msra.mxu0 %v1911
  %2204 = vmatprep.subr.mxu0 0.0
  %2205 = vmatpush1.msra.mxu0 %v1912
  %2206 = vmatprep.subr.mxu0 0.0
  %2207 = vmatpush1.msra.mxu0 %v1913
  %2208 = vmatprep.subr.mxu0 0.0
  %2209 = vmatpush1.msra.mxu0 %v1914
  %2210 = vmatprep.subr.mxu0 0.0
  %2211 = vmatpush1.msra.mxu0 %v1915
  %2212 = vmatprep.subr.mxu0 0.0
  %2213 = vmatpush1.msra.mxu0 %v1916
  %2214 = vmatprep.subr.mxu0 0.0
  %2215 = vmatpush1.msra.mxu0 %v1917
  %2216 = vmatprep.subr.mxu0 0.0
  %2217 = vmatpush1.msra.mxu0 %v1918
  %2218 = vmatprep.subr.mxu0 0.0
  %2219 = vmatpush1.msra.mxu0 %v1919
  %2220 = vmatprep.subr.mxu0 0.0
  %2221 = vmatpush1.msra.mxu0 %v1920
  %2222 = vmatprep.subr.mxu0 0.0
  %2223 = vmatpush1.msra.mxu0 %v1921
  %2224 = vmatprep.subr.mxu0 0.0
  %2225 = vmatpush1.msra.mxu0 %v1922
  %2226 = vmatprep.subr.mxu0 0.0
  %2227 = vmatpush1.msra.mxu0 %v1923
  %2228 = vmatprep.subr.mxu0 0.0
  %2229 = vmatpush1.msra.mxu0 %v1924
  %2230 = vmatprep.subr.mxu0 0.0
  %2231 = vmatpush1.msra.mxu0 %v1925
  %2232 = vmatprep.subr.mxu0 0.0
  %2233 = vmatpush1.msra.mxu0 %v1926
  %2234 = vmatprep.subr.mxu0 0.0
  %2235 = vmatpush1.msra.mxu0 %v1927
  %2236 = vmatprep.subr.mxu0 0.0
  %2237 = vmatpush1.msra.mxu0 %v1928
  %2238 = vmatprep.subr.mxu0 0.0
  %2239 = vmatpush1.msra.mxu0 %v1929
  %2240 = vmatprep.subr.mxu0 0.0
  %2241 = vmatpush1.msra.mxu0 %v1930
  %2242 = vmatprep.subr.mxu0 0.0
  %2243 = vmatpush1.msra.mxu0 %v1931
  %2244 = vmatprep.subr.mxu0 0.0
  %2245 = vmatpush1.msra.mxu0 %v1932
  %2246 = vmatprep.subr.mxu0 0.0
  %2247 = vmatpush1.msra.mxu0 %v1933
  %2248 = vmatprep.mubr.f32.mxu0 %v1770
  %2249 = vmatmul.mubr.f32.gmra.mrb[0].mxu0 %v1769
  %v2250 = vpop.f32.mrb[0].mxu0
  %v2251 = vadd.f32 %v2126, %v2250
  %v2252 = vpop.f32.mrb[0].mxu0
  %2253 = vmatprep.mubr.f32.mxu0 %v1776
  %2254 = vmatmul.mubr.f32.gmra.mrb[0].mxu0 %v1775
  %v2255 = vpop.f32.mrb[0].mxu0
  %v2256 = vadd.f32 %v2131, %v2255
  %v2257 = vpop.f32.mrb[0].mxu0
  %2258 = vmatprep.mubr.f32.mxu0 %v1782
  %2259 = vmatmul.mubr.f32.gmra.mrb[0].mxu0 %v1781
  %v2260 = vpop.f32.mrb[0].mxu0
  %v2261 = vadd.f32 %v2136, %v2260
  %v2262 = vpop.f32.mrb[0].mxu0
  %2263 = vmatprep.mubr.f32.mxu0 %v1788
  %2264 = vmatmul.mubr.f32.gmra.mrb[0].mxu0 %v1787
  %v2265 = vpop.f32.mrb[0].mxu0
  %v2266 = vadd.f32 %v2141, %v2265
  %v2267 = vpop.f32.mrb[0].mxu0
  %2268 = vmatprep.mubr.f32.mxu0 %v1794
  %2269 = vmatmul.mubr.f32.gmra.mrb[0].mxu0 %v1793
  %v2270 = vpop.f32.mrb[0].mxu0
  %v2271 = vadd.f32 %v2146, %v2270
  %v2272 = vpop.f32.mrb[0].mxu0
  %2273 = vmatprep.mubr.f32.mxu0 %v1800
  %2274 = vmatmul.mubr.f32.gmra.mrb[0].mxu0 %v1799
  %v2275 = vpop.f32.mrb[0].mxu0
  %v2276 = vadd.f32 %v2151, %v2275
  %v2277 = vpop.f32.mrb[0].mxu0
  %2278 = vmatprep.mubr.f32.mxu0 %v1806
  %2279 = vmatmul.mubr.f32.gmra.mrb[0].mxu0 %v1805
  %v2280 = vpop.f32.mrb[0].mxu0
  %v2281 = vadd.f32 %v2156, %v2280
  %v2282 = vpop.f32.mrb[0].mxu0
  %2283 = vmatprep.mubr.f32.mxu0 %v1812
  %2284 = vmatmul.mubr.f32.gmra.mrb[0].mxu0 %v1811
  %v2285 = vpop.f32.mrb[0].mxu0
  %v2286 = vadd.f32 %v2161, %v2285
  %v2287 = vpop.f32.mrb[0].mxu0
  %2288 = vmatprep.mubr.f32.mxu0 %v1818
  %2289 = vmatmul.mubr.f32.gmra.mrb[0].mxu0 %v1817
  %v2290 = vpop.f32.mrb[0].mxu0
  %v2291 = vadd.f32 %v2166, %v2290
  %v2292 = vpop.f32.mrb[0].mxu0
  %2293 = vmatprep.mubr.f32.mxu0 %v1824
  %2294 = vmatmul.mubr.f32.gmra.mrb[0].mxu0 %v1823
  %v2295 = vpop.f32.mrb[0].mxu0
  %v2296 = vadd.f32 %v2171, %v2295
  %v2297 = vpop.f32.mrb[0].mxu0
  %2298 = vmatprep.mubr.f32.mxu0 %v1830
  %2299 = vmatmul.mubr.f32.gmra.mrb[0].mxu0 %v1829
  %v2300 = vpop.f32.mrb[0].mxu0
  %v2301 = vadd.f32 %v2176, %v2300
  %v2302 = vpop.f32.mrb[0].mxu0
  %2303 = vmatprep.mubr.f32.mxu0 %v1836
  %2304 = vmatmul.mubr.f32.gmra.mrb[0].mxu0 %v1835
  %v2305 = vpop.f32.mrb[0].mxu0
  %v2306 = vadd.f32 %v2181, %v2305
  %v2307 = vpop.f32.mrb[0].mxu0
  %2308 = vdwg.mxu0
  %s2309 = scalar_lea.vmem %s5, 288
  %2310 = vst.msk [vmem:[%s2309] sm:$0xff] %vm635, %v2251
  %2311 = vst.msk [vmem:[%s2309 + $0x8] sm:$0xff] %vm635, %v2256
  %2312 = vst.msk [vmem:[%s2309 + $0x10] sm:$0xff] %vm635, %v2261
  %2313 = vst.msk [vmem:[%s2309 + $0x18] sm:$0xff] %vm635, %v2266
  %2314 = vst.msk [vmem:[%s2309 + $0x20] sm:$0xff] %vm635, %v2271
  %2315 = vst.msk [vmem:[%s2309 + $0x28] sm:$0xff] %vm635, %v2276
  %2316 = vst.msk [vmem:[%s2309 + $0x30] sm:$0xff] %vm635, %v2281
  %2317 = vst.msk [vmem:[%s2309 + $0x38] sm:$0xff] %vm635, %v2286
  %2318 = vst.msk [vmem:[%s2309 + $0x40] sm:$0xff] %vm635, %v2291
  %2319 = vst.msk [vmem:[%s2309 + $0x48] sm:$0xff] %vm635, %v2296
  %2320 = vst.msk [vmem:[%s2309 + $0x50] sm:$0xff] %vm635, %v2301
  %2321 = vst.msk [vmem:[%s2309 + $0x58] sm:$0xff] %vm635, %v2306
  %v2322 = vld [vmem:[%s5] sm:$0xff]
  %v2323 = vld [vmem:[%s5 + $0x8] sm:$0xff]
  %v2324 = vld [vmem:[%s5 + $0x10] sm:$0xff]
  %v2325 = vld [vmem:[%s5 + $0x18] sm:$0xff]
  %v2326 = vld [vmem:[%s5 + $0x20] sm:$0xff]
  %v2327 = vld [vmem:[%s5 + $0x28] sm:$0xff]
  %v2328 = vld [vmem:[%s5 + $0x30] sm:$0xff]
  %v2329 = vld [vmem:[%s5 + $0x38] sm:$0xff]
  %v2330 = vld [vmem:[%s5 + $0x40] sm:$0xff]
  %v2331 = vld [vmem:[%s5 + $0x48] sm:$0xff]
  %v2332 = vld [vmem:[%s5 + $0x50] sm:$0xff]
  %v2333 = vld [vmem:[%s5 + $0x58] sm:$0xff]
  %v2334 = vld [vmem:[%s5 + $0x60] sm:$0xff]
  %v2335 = vld [vmem:[%s5 + $0x68] sm:$0xff]
  %v2336 = vld [vmem:[%s5 + $0x70] sm:$0xff]
  %v2337 = vld [vmem:[%s5 + $0x78] sm:$0xff]
  %v2338 = vld [vmem:[%s5 + $0x80] sm:$0xff]
  %v2339 = vld [vmem:[%s5 + $0x88] sm:$0xff]
  %v2340 = vld [vmem:[%s5 + $0x90] sm:$0xff]
  %v2341 = vld [vmem:[%s5 + $0x98] sm:$0xff]
  %v2342 = vld [vmem:[%s5 + $0xa0] sm:$0xff]
  %v2343 = vld [vmem:[%s5 + $0xa8] sm:$0xff]
  %v2344 = vld [vmem:[%s5 + $0xb0] sm:$0xff]
  %v2345 = vld [vmem:[%s5 + $0xb8] sm:$0xff]
  %v2346 = vld [vmem:[%s5 + $0xc0] sm:$0xff]
  %v2347 = vld [vmem:[%s5 + $0xc8] sm:$0xff]
  %v2348 = vld [vmem:[%s5 + $0xd0] sm:$0xff]
  %v2349 = vld [vmem:[%s5 + $0xd8] sm:$0xff]
  %v2350 = vld [vmem:[%s5 + $0xe0] sm:$0xff]
  %v2351 = vld [vmem:[%s5 + $0xe8] sm:$0xff]
  %v2352 = vld [vmem:[%s5 + $0xf0] sm:$0xff]
  %v2353 = vld [vmem:[%s5 + $0xf8] sm:$0xff]
  %v2354 = vld [vmem:[%s5 + $0x100] sm:$0xff]
  %v2355 = vld [vmem:[%s5 + $0x108] sm:$0xff]
  %v2356 = vld [vmem:[%s5 + $0x110] sm:$0xff]
  %v2357 = vld [vmem:[%s5 + $0x118] sm:$0xff]
  %v2358 = vld [vmem:[%s5 + $0x120] sm:$0xff]
  %v2359 = vld [vmem:[%s5 + $0x128] sm:$0xff]
  %v2360 = vld [vmem:[%s5 + $0x130] sm:$0xff]
  %v2361 = vld [vmem:[%s5 + $0x138] sm:$0xff]
  %v2362 = vld [vmem:[%s5 + $0x140] sm:$0xff]
  %v2363 = vld [vmem:[%s5 + $0x148] sm:$0xff]
  %v2364 = vld [vmem:[%s5 + $0x150] sm:$0xff]
  %v2365 = vld [vmem:[%s5 + $0x158] sm:$0xff]
  %v2366 = vld [vmem:[%s5 + $0x160] sm:$0xff]
  %v2367 = vld [vmem:[%s5 + $0x168] sm:$0xff]
  %v2368 = vld [vmem:[%s5 + $0x170] sm:$0xff]
  %v2369 = vld [vmem:[%s5 + $0x178] sm:$0xff]
  %v2370 = vsel %vm635, %v2322, 0.0
  %2371 = vadd.xlane.f32.xlu0 %v2370
  %v2372 = vpop.xlane.xlu0 %2371
  %v2373 = vsel %vm635, %v2323, 0.0
  %2374 = vadd.xlane.f32.xlu0 %v2373
  %v2375 = vpop.xlane.xlu0 %2374
  %v2376 = vsel %vm635, %v2324, 0.0
  %2377 = vadd.xlane.f32.xlu0 %v2376
  %v2378 = vpop.xlane.xlu0 %2377
  %v2379 = vsel %vm635, %v2325, 0.0
  %2380 = vadd.xlane.f32.xlu0 %v2379
  %v2381 = vpop.xlane.xlu0 %2380
  %v2382 = vsel %vm635, %v2326, 0.0
  %2383 = vadd.xlane.f32.xlu0 %v2382
  %v2384 = vpop.xlane.xlu0 %2383
  %v2385 = vsel %vm635, %v2327, 0.0
  %2386 = vadd.xlane.f32.xlu0 %v2385
  %v2387 = vpop.xlane.xlu0 %2386
  %v2388 = vsel %vm635, %v2328, 0.0
  %2389 = vadd.xlane.f32.xlu0 %v2388
  %v2390 = vpop.xlane.xlu0 %2389
  %v2391 = vsel %vm635, %v2329, 0.0
  %2392 = vadd.xlane.f32.xlu0 %v2391
  %v2393 = vpop.xlane.xlu0 %2392
  %v2394 = vsel %vm635, %v2330, 0.0
  %2395 = vadd.xlane.f32.xlu0 %v2394
  %v2396 = vpop.xlane.xlu0 %2395
  %v2397 = vsel %vm635, %v2331, 0.0
  %2398 = vadd.xlane.f32.xlu0 %v2397
  %v2399 = vpop.xlane.xlu0 %2398
  %v2400 = vsel %vm635, %v2332, 0.0
  %2401 = vadd.xlane.f32.xlu0 %v2400
  %v2402 = vpop.xlane.xlu0 %2401
  %v2403 = vsel %vm635, %v2333, 0.0
  %2404 = vadd.xlane.f32.xlu0 %v2403
  %v2405 = vpop.xlane.xlu0 %2404
  %v2406 = vsel %vm635, %v2334, 0.0
  %2407 = vadd.xlane.f32.xlu0 %v2406
  %v2408 = vpop.xlane.xlu0 %2407
  %v2409 = vsel %vm635, %v2335, 0.0
  %2410 = vadd.xlane.f32.xlu0 %v2409
  %v2411 = vpop.xlane.xlu0 %2410
  %v2412 = vsel %vm635, %v2336, 0.0
  %2413 = vadd.xlane.f32.xlu0 %v2412
  %v2414 = vpop.xlane.xlu0 %2413
  %v2415 = vsel %vm635, %v2337, 0.0
  %2416 = vadd.xlane.f32.xlu0 %v2415
  %v2417 = vpop.xlane.xlu0 %2416
  %v2418 = vsel %vm635, %v2338, 0.0
  %2419 = vadd.xlane.f32.xlu0 %v2418
  %v2420 = vpop.xlane.xlu0 %2419
  %v2421 = vsel %vm635, %v2339, 0.0
  %2422 = vadd.xlane.f32.xlu0 %v2421
  %v2423 = vpop.xlane.xlu0 %2422
  %v2424 = vsel %vm635, %v2340, 0.0
  %2425 = vadd.xlane.f32.xlu0 %v2424
  %v2426 = vpop.xlane.xlu0 %2425
  %v2427 = vsel %vm635, %v2341, 0.0
  %2428 = vadd.xlane.f32.xlu0 %v2427
  %v2429 = vpop.xlane.xlu0 %2428
  %v2430 = vsel %vm635, %v2342, 0.0
  %2431 = vadd.xlane.f32.xlu0 %v2430
  %v2432 = vpop.xlane.xlu0 %2431
  %v2433 = vsel %vm635, %v2343, 0.0
  %2434 = vadd.xlane.f32.xlu0 %v2433
  %v2435 = vpop.xlane.xlu0 %2434
  %v2436 = vsel %vm635, %v2344, 0.0
  %2437 = vadd.xlane.f32.xlu0 %v2436
  %v2438 = vpop.xlane.xlu0 %2437
  %v2439 = vsel %vm635, %v2345, 0.0
  %2440 = vadd.xlane.f32.xlu0 %v2439
  %v2441 = vpop.xlane.xlu0 %2440
  %v2442 = vsel %vm635, %v2346, 0.0
  %2443 = vadd.xlane.f32.xlu0 %v2442
  %v2444 = vpop.xlane.xlu0 %2443
  %v2445 = vsel %vm635, %v2347, 0.0
  %2446 = vadd.xlane.f32.xlu0 %v2445
  %v2447 = vpop.xlane.xlu0 %2446
  %v2448 = vsel %vm635, %v2348, 0.0
  %2449 = vadd.xlane.f32.xlu0 %v2448
  %v2450 = vpop.xlane.xlu0 %2449
  %v2451 = vsel %vm635, %v2349, 0.0
  %2452 = vadd.xlane.f32.xlu0 %v2451
  %v2453 = vpop.xlane.xlu0 %2452
  %v2454 = vsel %vm635, %v2350, 0.0
  %2455 = vadd.xlane.f32.xlu0 %v2454
  %v2456 = vpop.xlane.xlu0 %2455
  %v2457 = vsel %vm635, %v2351, 0.0
  %2458 = vadd.xlane.f32.xlu0 %v2457
  %v2459 = vpop.xlane.xlu0 %2458
  %v2460 = vsel %vm635, %v2352, 0.0
  %2461 = vadd.xlane.f32.xlu0 %v2460
  %v2462 = vpop.xlane.xlu0 %2461
  %v2463 = vsel %vm635, %v2353, 0.0
  %2464 = vadd.xlane.f32.xlu0 %v2463
  %v2465 = vpop.xlane.xlu0 %2464
  %v2466 = vsel %vm635, %v2354, 0.0
  %2467 = vadd.xlane.f32.xlu0 %v2466
  %v2468 = vpop.xlane.xlu0 %2467
  %v2469 = vsel %vm635, %v2355, 0.0
  %2470 = vadd.xlane.f32.xlu0 %v2469
  %v2471 = vpop.xlane.xlu0 %2470
  %v2472 = vsel %vm635, %v2356, 0.0
  %2473 = vadd.xlane.f32.xlu0 %v2472
  %v2474 = vpop.xlane.xlu0 %2473
  %v2475 = vsel %vm635, %v2357, 0.0
  %2476 = vadd.xlane.f32.xlu0 %v2475
  %v2477 = vpop.xlane.xlu0 %2476
  %v2478 = vsel %vm635, %v2358, 0.0
  %2479 = vadd.xlane.f32.xlu0 %v2478
  %v2480 = vpop.xlane.xlu0 %2479
  %v2481 = vsel %vm635, %v2359, 0.0
  %2482 = vadd.xlane.f32.xlu0 %v2481
  %v2483 = vpop.xlane.xlu0 %2482
  %v2484 = vsel %vm635, %v2360, 0.0
  %2485 = vadd.xlane.f32.xlu0 %v2484
  %v2486 = vpop.xlane.xlu0 %2485
  %v2487 = vsel %vm635, %v2361, 0.0
  %2488 = vadd.xlane.f32.xlu0 %v2487
  %v2489 = vpop.xlane.xlu0 %2488
  %v2490 = vsel %vm635, %v2362, 0.0
  %2491 = vadd.xlane.f32.xlu0 %v2490
  %v2492 = vpop.xlane.xlu0 %2491
  %v2493 = vsel %vm635, %v2363, 0.0
  %2494 = vadd.xlane.f32.xlu0 %v2493
  %v2495 = vpop.xlane.xlu0 %2494
  %v2496 = vsel %vm635, %v2364, 0.0
  %2497 = vadd.xlane.f32.xlu0 %v2496
  %v2498 = vpop.xlane.xlu0 %2497
  %v2499 = vsel %vm635, %v2365, 0.0
  %2500 = vadd.xlane.f32.xlu0 %v2499
  %v2501 = vpop.xlane.xlu0 %2500
  %v2502 = vsel %vm635, %v2366, 0.0
  %2503 = vadd.xlane.f32.xlu0 %v2502
  %v2504 = vpop.xlane.xlu0 %2503
  %v2505 = vsel %vm635, %v2367, 0.0
  %2506 = vadd.xlane.f32.xlu0 %v2505
  %v2507 = vpop.xlane.xlu0 %2506
  %v2508 = vsel %vm635, %v2368, 0.0
  %2509 = vadd.xlane.f32.xlu0 %v2508
  %v2510 = vpop.xlane.xlu0 %2509
  %v2511 = vsel %vm635, %v2369, 0.0
  %2512 = vadd.xlane.f32.xlu0 %v2511
  %v2513 = vpop.xlane.xlu0 %2512
  %v2514 = vadd.f32 %v2372, %v2408
  %v2515 = vadd.f32 %v2514, %v2444
  %v2516 = vadd.f32 %v2515, %v2480
  %v2517 = vadd.f32 %v2375, %v2411
  %v2518 = vadd.f32 %v2517, %v2447
  %v2519 = vadd.f32 %v2518, %v2483
  %v2520 = vadd.f32 %v2378, %v2414
  %v2521 = vadd.f32 %v2520, %v2450
  %v2522 = vadd.f32 %v2521, %v2486
  %v2523 = vadd.f32 %v2381, %v2417
  %v2524 = vadd.f32 %v2523, %v2453
  %v2525 = vadd.f32 %v2524, %v2489
  %v2526 = vadd.f32 %v2384, %v2420
  %v2527 = vadd.f32 %v2526, %v2456
  %v2528 = vadd.f32 %v2527, %v2492
  %v2529 = vadd.f32 %v2387, %v2423
  %v2530 = vadd.f32 %v2529, %v2459
  %v2531 = vadd.f32 %v2530, %v2495
  %v2532 = vadd.f32 %v2390, %v2426
  %v2533 = vadd.f32 %v2532, %v2462
  %v2534 = vadd.f32 %v2533, %v2498
  %v2535 = vadd.f32 %v2393, %v2429
  %v2536 = vadd.f32 %v2535, %v2465
  %v2537 = vadd.f32 %v2536, %v2501
  %v2538 = vadd.f32 %v2396, %v2432
  %v2539 = vadd.f32 %v2538, %v2468
  %v2540 = vadd.f32 %v2539, %v2504
  %v2541 = vadd.f32 %v2399, %v2435
  %v2542 = vadd.f32 %v2541, %v2471
  %v2543 = vadd.f32 %v2542, %v2507
  %v2544 = vadd.f32 %v2402, %v2438
  %v2545 = vadd.f32 %v2544, %v2474
  %v2546 = vadd.f32 %v2545, %v2510
  %v2547 = vadd.f32 %v2405, %v2441
  %v2548 = vadd.f32 %v2547, %v2477
  %v2549 = vadd.f32 %v2548, %v2513
  %v2550 = vmul.f32 %v2516, 0.0078125
  %v2551 = vmul.f32 %v2519, 0.0078125
  %v2552 = vmul.f32 %v2522, 0.0078125
  %v2553 = vmul.f32 %v2525, 0.0078125
  %v2554 = vmul.f32 %v2528, 0.0078125
  %v2555 = vmul.f32 %v2531, 0.0078125
  %v2556 = vmul.f32 %v2534, 0.0078125
  %v2557 = vmul.f32 %v2537, 0.0078125
  %v2558 = vmul.f32 %v2540, 0.0078125
  %v2559 = vmul.f32 %v2543, 0.0078125
  %v2560 = vmul.f32 %v2546, 0.0078125
  %v2561 = vmul.f32 %v2549, 0.0078125
  %v2562 = vsub.f32 %v2322, %v2550
  %v2563 = vsub.f32 %v2323, %v2551
  %v2564 = vsub.f32 %v2324, %v2552
  %v2565 = vsub.f32 %v2325, %v2553
  %v2566 = vsub.f32 %v2326, %v2554
  %v2567 = vsub.f32 %v2327, %v2555
  %v2568 = vsub.f32 %v2328, %v2556
  %v2569 = vsub.f32 %v2329, %v2557
  %v2570 = vsub.f32 %v2330, %v2558
  %v2571 = vsub.f32 %v2331, %v2559
  %v2572 = vsub.f32 %v2332, %v2560
  %v2573 = vsub.f32 %v2333, %v2561
  %v2574 = vsub.f32 %v2334, %v2550
  %v2575 = vsub.f32 %v2335, %v2551
  %v2576 = vsub.f32 %v2336, %v2552
  %v2577 = vsub.f32 %v2337, %v2553
  %v2578 = vsub.f32 %v2338, %v2554
  %v2579 = vsub.f32 %v2339, %v2555
  %v2580 = vsub.f32 %v2340, %v2556
  %v2581 = vsub.f32 %v2341, %v2557
  %v2582 = vsub.f32 %v2342, %v2558
  %v2583 = vsub.f32 %v2343, %v2559
  %v2584 = vsub.f32 %v2344, %v2560
  %v2585 = vsub.f32 %v2345, %v2561
  %v2586 = vsub.f32 %v2346, %v2550
  %v2587 = vsub.f32 %v2347, %v2551
  %v2588 = vsub.f32 %v2348, %v2552
  %v2589 = vsub.f32 %v2349, %v2553
  %v2590 = vsub.f32 %v2350, %v2554
  %v2591 = vsub.f32 %v2351, %v2555
  %v2592 = vsub.f32 %v2352, %v2556
  %v2593 = vsub.f32 %v2353, %v2557
  %v2594 = vsub.f32 %v2354, %v2558
  %v2595 = vsub.f32 %v2355, %v2559
  %v2596 = vsub.f32 %v2356, %v2560
  %v2597 = vsub.f32 %v2357, %v2561
  %v2598 = vsub.f32 %v2358, %v2550
  %v2599 = vsub.f32 %v2359, %v2551
  %v2600 = vsub.f32 %v2360, %v2552
  %v2601 = vsub.f32 %v2361, %v2553
  %v2602 = vsub.f32 %v2362, %v2554
  %v2603 = vsub.f32 %v2363, %v2555
  %v2604 = vsub.f32 %v2364, %v2556
  %v2605 = vsub.f32 %v2365, %v2557
  %v2606 = vsub.f32 %v2366, %v2558
  %v2607 = vsub.f32 %v2367, %v2559
  %v2608 = vsub.f32 %v2368, %v2560
  %v2609 = vsub.f32 %v2369, %v2561
  %v2610 = vmul.f32 %v2562, %v2562
  %v2611 = vmul.f32 %v2563, %v2563
  %v2612 = vmul.f32 %v2564, %v2564
  %v2613 = vmul.f32 %v2565, %v2565
  %v2614 = vmul.f32 %v2566, %v2566
  %v2615 = vmul.f32 %v2567, %v2567
  %v2616 = vmul.f32 %v2568, %v2568
  %v2617 = vmul.f32 %v2569, %v2569
  %v2618 = vmul.f32 %v2570, %v2570
  %v2619 = vmul.f32 %v2571, %v2571
  %v2620 = vmul.f32 %v2572, %v2572
  %v2621 = vmul.f32 %v2573, %v2573
  %v2622 = vmul.f32 %v2574, %v2574
  %v2623 = vmul.f32 %v2575, %v2575
  %v2624 = vmul.f32 %v2576, %v2576
  %v2625 = vmul.f32 %v2577, %v2577
  %v2626 = vmul.f32 %v2578, %v2578
  %v2627 = vmul.f32 %v2579, %v2579
  %v2628 = vmul.f32 %v2580, %v2580
  %v2629 = vmul.f32 %v2581, %v2581
  %v2630 = vmul.f32 %v2582, %v2582
  %v2631 = vmul.f32 %v2583, %v2583
  %v2632 = vmul.f32 %v2584, %v2584
  %v2633 = vmul.f32 %v2585, %v2585
  %v2634 = vmul.f32 %v2586, %v2586
  %v2635 = vmul.f32 %v2587, %v2587
  %v2636 = vmul.f32 %v2588, %v2588
  %v2637 = vmul.f32 %v2589, %v2589
  %v2638 = vmul.f32 %v2590, %v2590
  %v2639 = vmul.f32 %v2591, %v2591
  %v2640 = vmul.f32 %v2592, %v2592
  %v2641 = vmul.f32 %v2593, %v2593
  %v2642 = vmul.f32 %v2594, %v2594
  %v2643 = vmul.f32 %v2595, %v2595
  %v2644 = vmul.f32 %v2596, %v2596
  %v2645 = vmul.f32 %v2597, %v2597
  %v2646 = vmul.f32 %v2598, %v2598
  %v2647 = vmul.f32 %v2599, %v2599
  %v2648 = vmul.f32 %v2600, %v2600
  %v2649 = vmul.f32 %v2601, %v2601
  %v2650 = vmul.f32 %v2602, %v2602
  %v2651 = vmul.f32 %v2603, %v2603
  %v2652 = vmul.f32 %v2604, %v2604
  %v2653 = vmul.f32 %v2605, %v2605
  %v2654 = vmul.f32 %v2606, %v2606
  %v2655 = vmul.f32 %v2607, %v2607
  %v2656 = vmul.f32 %v2608, %v2608
  %v2657 = vmul.f32 %v2609, %v2609
  %v2658 = vsel %vm635, %v2610, 0.0
  %2659 = vadd.xlane.f32.xlu0 %v2658
  %v2660 = vpop.xlane.xlu0 %2659
  %v2661 = vsel %vm635, %v2611, 0.0
  %2662 = vadd.xlane.f32.xlu0 %v2661
  %v2663 = vpop.xlane.xlu0 %2662
  %v2664 = vsel %vm635, %v2612, 0.0
  %2665 = vadd.xlane.f32.xlu0 %v2664
  %v2666 = vpop.xlane.xlu0 %2665
  %v2667 = vsel %vm635, %v2613, 0.0
  %2668 = vadd.xlane.f32.xlu0 %v2667
  %v2669 = vpop.xlane.xlu0 %2668
  %v2670 = vsel %vm635, %v2614, 0.0
  %2671 = vadd.xlane.f32.xlu0 %v2670
  %v2672 = vpop.xlane.xlu0 %2671
  %v2673 = vsel %vm635, %v2615, 0.0
  %2674 = vadd.xlane.f32.xlu0 %v2673
  %v2675 = vpop.xlane.xlu0 %2674
  %v2676 = vsel %vm635, %v2616, 0.0
  %2677 = vadd.xlane.f32.xlu0 %v2676
  %v2678 = vpop.xlane.xlu0 %2677
  %v2679 = vsel %vm635, %v2617, 0.0
  %2680 = vadd.xlane.f32.xlu0 %v2679
  %v2681 = vpop.xlane.xlu0 %2680
  %v2682 = vsel %vm635, %v2618, 0.0
  %2683 = vadd.xlane.f32.xlu0 %v2682
  %v2684 = vpop.xlane.xlu0 %2683
  %v2685 = vsel %vm635, %v2619, 0.0
  %2686 = vadd.xlane.f32.xlu0 %v2685
  %v2687 = vpop.xlane.xlu0 %2686
  %v2688 = vsel %vm635, %v2620, 0.0
  %2689 = vadd.xlane.f32.xlu0 %v2688
  %v2690 = vpop.xlane.xlu0 %2689
  %v2691 = vsel %vm635, %v2621, 0.0
  %2692 = vadd.xlane.f32.xlu0 %v2691
  %v2693 = vpop.xlane.xlu0 %2692
  %v2694 = vsel %vm635, %v2622, 0.0
  %2695 = vadd.xlane.f32.xlu0 %v2694
  %v2696 = vpop.xlane.xlu0 %2695
  %v2697 = vsel %vm635, %v2623, 0.0
  %2698 = vadd.xlane.f32.xlu0 %v2697
  %v2699 = vpop.xlane.xlu0 %2698
  %v2700 = vsel %vm635, %v2624, 0.0
  %2701 = vadd.xlane.f32.xlu0 %v2700
  %v2702 = vpop.xlane.xlu0 %2701
  %v2703 = vsel %vm635, %v2625, 0.0
  %2704 = vadd.xlane.f32.xlu0 %v2703
  %v2705 = vpop.xlane.xlu0 %2704
  %v2706 = vsel %vm635, %v2626, 0.0
  %2707 = vadd.xlane.f32.xlu0 %v2706
  %v2708 = vpop.xlane.xlu0 %2707
  %v2709 = vsel %vm635, %v2627, 0.0
  %2710 = vadd.xlane.f32.xlu0 %v2709
  %v2711 = vpop.xlane.xlu0 %2710
  %v2712 = vsel %vm635, %v2628, 0.0
  %2713 = vadd.xlane.f32.xlu0 %v2712
  %v2714 = vpop.xlane.xlu0 %2713
  %v2715 = vsel %vm635, %v2629, 0.0
  %2716 = vadd.xlane.f32.xlu0 %v2715
  %v2717 = vpop.xlane.xlu0 %2716
  %v2718 = vsel %vm635, %v2630, 0.0
  %2719 = vadd.xlane.f32.xlu0 %v2718
  %v2720 = vpop.xlane.xlu0 %2719
  %v2721 = vsel %vm635, %v2631, 0.0
  %2722 = vadd.xlane.f32.xlu0 %v2721
  %v2723 = vpop.xlane.xlu0 %2722
  %v2724 = vsel %vm635, %v2632, 0.0
  %2725 = vadd.xlane.f32.xlu0 %v2724
  %v2726 = vpop.xlane.xlu0 %2725
  %v2727 = vsel %vm635, %v2633, 0.0
  %2728 = vadd.xlane.f32.xlu0 %v2727
  %v2729 = vpop.xlane.xlu0 %2728
  %v2730 = vsel %vm635, %v2634, 0.0
  %2731 = vadd.xlane.f32.xlu0 %v2730
  %v2732 = vpop.xlane.xlu0 %2731
  %v2733 = vsel %vm635, %v2635, 0.0
  %2734 = vadd.xlane.f32.xlu0 %v2733
  %v2735 = vpop.xlane.xlu0 %2734
  %v2736 = vsel %vm635, %v2636, 0.0
  %2737 = vadd.xlane.f32.xlu0 %v2736
  %v2738 = vpop.xlane.xlu0 %2737
  %v2739 = vsel %vm635, %v2637, 0.0
  %2740 = vadd.xlane.f32.xlu0 %v2739
  %v2741 = vpop.xlane.xlu0 %2740
  %v2742 = vsel %vm635, %v2638, 0.0
  %2743 = vadd.xlane.f32.xlu0 %v2742
  %v2744 = vpop.xlane.xlu0 %2743
  %v2745 = vsel %vm635, %v2639, 0.0
  %2746 = vadd.xlane.f32.xlu0 %v2745
  %v2747 = vpop.xlane.xlu0 %2746
  %v2748 = vsel %vm635, %v2640, 0.0
  %2749 = vadd.xlane.f32.xlu0 %v2748
  %v2750 = vpop.xlane.xlu0 %2749
  %v2751 = vsel %vm635, %v2641, 0.0
  %2752 = vadd.xlane.f32.xlu0 %v2751
  %v2753 = vpop.xlane.xlu0 %2752
  %v2754 = vsel %vm635, %v2642, 0.0
  %2755 = vadd.xlane.f32.xlu0 %v2754
  %v2756 = vpop.xlane.xlu0 %2755
  %v2757 = vsel %vm635, %v2643, 0.0
  %2758 = vadd.xlane.f32.xlu0 %v2757
  %v2759 = vpop.xlane.xlu0 %2758
  %v2760 = vsel %vm635, %v2644, 0.0
  %2761 = vadd.xlane.f32.xlu0 %v2760
  %v2762 = vpop.xlane.xlu0 %2761
  %v2763 = vsel %vm635, %v2645, 0.0
  %2764 = vadd.xlane.f32.xlu0 %v2763
  %v2765 = vpop.xlane.xlu0 %2764
  %v2766 = vsel %vm635, %v2646, 0.0
  %2767 = vadd.xlane.f32.xlu0 %v2766
  %v2768 = vpop.xlane.xlu0 %2767
  %v2769 = vsel %vm635, %v2647, 0.0
  %2770 = vadd.xlane.f32.xlu0 %v2769
  %v2771 = vpop.xlane.xlu0 %2770
  %v2772 = vsel %vm635, %v2648, 0.0
  %2773 = vadd.xlane.f32.xlu0 %v2772
  %v2774 = vpop.xlane.xlu0 %2773
  %v2775 = vsel %vm635, %v2649, 0.0
  %2776 = vadd.xlane.f32.xlu0 %v2775
  %v2777 = vpop.xlane.xlu0 %2776
  %v2778 = vsel %vm635, %v2650, 0.0
  %2779 = vadd.xlane.f32.xlu0 %v2778
  %v2780 = vpop.xlane.xlu0 %2779
  %v2781 = vsel %vm635, %v2651, 0.0
  %2782 = vadd.xlane.f32.xlu0 %v2781
  %v2783 = vpop.xlane.xlu0 %2782
  %v2784 = vsel %vm635, %v2652, 0.0
  %2785 = vadd.xlane.f32.xlu0 %v2784
  %v2786 = vpop.xlane.xlu0 %2785
  %v2787 = vsel %vm635, %v2653, 0.0
  %2788 = vadd.xlane.f32.xlu0 %v2787
  %v2789 = vpop.xlane.xlu0 %2788
  %v2790 = vsel %vm635, %v2654, 0.0
  %2791 = vadd.xlane.f32.xlu0 %v2790
  %v2792 = vpop.xlane.xlu0 %2791
  %v2793 = vsel %vm635, %v2655, 0.0
  %2794 = vadd.xlane.f32.xlu0 %v2793
  %v2795 = vpop.xlane.xlu0 %2794
  %v2796 = vsel %vm635, %v2656, 0.0
  %2797 = vadd.xlane.f32.xlu0 %v2796
  %v2798 = vpop.xlane.xlu0 %2797
  %v2799 = vsel %vm635, %v2657, 0.0
  %2800 = vadd.xlane.f32.xlu0 %v2799
  %v2801 = vpop.xlane.xlu0 %2800
  %v2802 = vadd.f32 %v2660, %v2696
  %v2803 = vadd.f32 %v2802, %v2732
  %v2804 = vadd.f32 %v2803, %v2768
  %v2805 = vadd.f32 %v2663, %v2699
  %v2806 = vadd.f32 %v2805, %v2735
  %v2807 = vadd.f32 %v2806, %v2771
  %v2808 = vadd.f32 %v2666, %v2702
  %v2809 = vadd.f32 %v2808, %v2738
  %v2810 = vadd.f32 %v2809, %v2774
  %v2811 = vadd.f32 %v2669, %v2705
  %v2812 = vadd.f32 %v2811, %v2741
  %v2813 = vadd.f32 %v2812, %v2777
  %v2814 = vadd.f32 %v2672, %v2708
  %v2815 = vadd.f32 %v2814, %v2744
  %v2816 = vadd.f32 %v2815, %v2780
  %v2817 = vadd.f32 %v2675, %v2711
  %v2818 = vadd.f32 %v2817, %v2747
  %v2819 = vadd.f32 %v2818, %v2783
  %v2820 = vadd.f32 %v2678, %v2714
  %v2821 = vadd.f32 %v2820, %v2750
  %v2822 = vadd.f32 %v2821, %v2786
  %v2823 = vadd.f32 %v2681, %v2717
  %v2824 = vadd.f32 %v2823, %v2753
  %v2825 = vadd.f32 %v2824, %v2789
  %v2826 = vadd.f32 %v2684, %v2720
  %v2827 = vadd.f32 %v2826, %v2756
  %v2828 = vadd.f32 %v2827, %v2792
  %v2829 = vadd.f32 %v2687, %v2723
  %v2830 = vadd.f32 %v2829, %v2759
  %v2831 = vadd.f32 %v2830, %v2795
  %v2832 = vadd.f32 %v2690, %v2726
  %v2833 = vadd.f32 %v2832, %v2762
  %v2834 = vadd.f32 %v2833, %v2798
  %v2835 = vadd.f32 %v2693, %v2729
  %v2836 = vadd.f32 %v2835, %v2765
  %v2837 = vadd.f32 %v2836, %v2801
  %v2838 = vmul.f32 %v2804, 0.0078125
  %v2839 = vmul.f32 %v2807, 0.0078125
  %v2840 = vmul.f32 %v2810, 0.0078125
  %v2841 = vmul.f32 %v2813, 0.0078125
  %v2842 = vmul.f32 %v2816, 0.0078125
  %v2843 = vmul.f32 %v2819, 0.0078125
  %v2844 = vmul.f32 %v2822, 0.0078125
  %v2845 = vmul.f32 %v2825, 0.0078125
  %v2846 = vmul.f32 %v2828, 0.0078125
  %v2847 = vmul.f32 %v2831, 0.0078125
  %v2848 = vmul.f32 %v2834, 0.0078125
  %v2849 = vmul.f32 %v2837, 0.0078125
  %v2850 = vld [vmem:[%s3] sm:$0xff]
  %v2851 = vld [vmem:[%s3 + $0x8] sm:$0xff]
  %v2852 = vld [vmem:[%s3 + $0x10] sm:$0xff]
  %v2853 = vld [vmem:[%s3 + $0x18] sm:$0xff]
  %v2854 = vld [vmem:[%s3 + $0x20] sm:$0xff]
  %v2855 = vld [vmem:[%s3 + $0x28] sm:$0xff]
  %v2856 = vld [vmem:[%s3 + $0x30] sm:$0xff]
  %v2857 = vld [vmem:[%s3 + $0x38] sm:$0xff]
  %v2858 = vld [vmem:[%s3 + $0x40] sm:$0xff]
  %v2859 = vld [vmem:[%s3 + $0x48] sm:$0xff]
  %v2860 = vld [vmem:[%s3 + $0x50] sm:$0xff]
  %v2861 = vld [vmem:[%s3 + $0x58] sm:$0xff]
  %v2862 = vadd.f32 %v2838, 1e-05
  %v2863 = vadd.f32 %v2839, 1e-05
  %v2864 = vadd.f32 %v2840, 1e-05
  %v2865 = vadd.f32 %v2841, 1e-05
  %v2866 = vadd.f32 %v2842, 1e-05
  %v2867 = vadd.f32 %v2843, 1e-05
  %v2868 = vadd.f32 %v2844, 1e-05
  %v2869 = vadd.f32 %v2845, 1e-05
  %v2870 = vadd.f32 %v2846, 1e-05
  %v2871 = vadd.f32 %v2847, 1e-05
  %v2872 = vadd.f32 %v2848, 1e-05
  %v2873 = vadd.f32 %v2849, 1e-05
  %v2874 = vrsqrt.pop %v2862
  %v2875 = vrsqrt.pop %v2863
  %v2876 = vrsqrt.pop %v2864
  %v2877 = vrsqrt.pop %v2865
  %v2878 = vrsqrt.pop %v2866
  %v2879 = vrsqrt.pop %v2867
  %v2880 = vrsqrt.pop %v2868
  %v2881 = vrsqrt.pop %v2869
  %v2882 = vrsqrt.pop %v2870
  %v2883 = vrsqrt.pop %v2871
  %v2884 = vrsqrt.pop %v2872
  %v2885 = vrsqrt.pop %v2873
  %v2886 = vmul.f32 %v2850, %v2874
  %v2887 = vmul.f32 %v2851, %v2875
  %v2888 = vmul.f32 %v2852, %v2876
  %v2889 = vmul.f32 %v2853, %v2877
  %v2890 = vmul.f32 %v2854, %v2878
  %v2891 = vmul.f32 %v2855, %v2879
  %v2892 = vmul.f32 %v2856, %v2880
  %v2893 = vmul.f32 %v2857, %v2881
  %v2894 = vmul.f32 %v2858, %v2882
  %v2895 = vmul.f32 %v2859, %v2883
  %v2896 = vmul.f32 %v2860, %v2884
  %v2897 = vmul.f32 %v2861, %v2885
  %2899 = vset.pattern.permute.xlu0 0
  %2900 = vperm.xlu0 %2899, %v2886
  %v2901 = vpop.permute.xlu0 %2900
  %2904 = vset.pattern.permute.xlu0 0
  %2905 = vperm.xlu0 %2904, %v2887
  %v2906 = vpop.permute.xlu0 %2905
  %2909 = vset.pattern.permute.xlu0 0
  %2910 = vperm.xlu0 %2909, %v2888
  %v2911 = vpop.permute.xlu0 %2910
  %2914 = vset.pattern.permute.xlu0 0
  %2915 = vperm.xlu0 %2914, %v2889
  %v2916 = vpop.permute.xlu0 %2915
  %2919 = vset.pattern.permute.xlu0 0
  %2920 = vperm.xlu0 %2919, %v2890
  %v2921 = vpop.permute.xlu0 %2920
  %2924 = vset.pattern.permute.xlu0 0
  %2925 = vperm.xlu0 %2924, %v2891
  %v2926 = vpop.permute.xlu0 %2925
  %2929 = vset.pattern.permute.xlu0 0
  %2930 = vperm.xlu0 %2929, %v2892
  %v2931 = vpop.permute.xlu0 %2930
  %2934 = vset.pattern.permute.xlu0 0
  %2935 = vperm.xlu0 %2934, %v2893
  %v2936 = vpop.permute.xlu0 %2935
  %2939 = vset.pattern.permute.xlu0 0
  %2940 = vperm.xlu0 %2939, %v2894
  %v2941 = vpop.permute.xlu0 %2940
  %2944 = vset.pattern.permute.xlu0 0
  %2945 = vperm.xlu0 %2944, %v2895
  %v2946 = vpop.permute.xlu0 %2945
  %2949 = vset.pattern.permute.xlu0 0
  %2950 = vperm.xlu0 %2949, %v2896
  %v2951 = vpop.permute.xlu0 %2950
  %2954 = vset.pattern.permute.xlu0 0
  %2955 = vperm.xlu0 %2954, %v2897
  %v2956 = vpop.permute.xlu0 %2955
  %v2958 = vmul.f32 %v2562, %v2901
  %v2959 = vmul.f32 %v2563, %v2906
  %v2960 = vmul.f32 %v2564, %v2911
  %v2961 = vmul.f32 %v2565, %v2916
  %v2962 = vmul.f32 %v2566, %v2921
  %v2963 = vmul.f32 %v2567, %v2926
  %v2964 = vmul.f32 %v2568, %v2931
  %v2965 = vmul.f32 %v2569, %v2936
  %v2966 = vmul.f32 %v2570, %v2941
  %v2967 = vmul.f32 %v2571, %v2946
  %v2968 = vmul.f32 %v2572, %v2951
  %v2969 = vmul.f32 %v2573, %v2956
  %v2970 = vmul.f32 %v2574, %v2901
  %v2971 = vmul.f32 %v2575, %v2906
  %v2972 = vmul.f32 %v2576, %v2911
  %v2973 = vmul.f32 %v2577, %v2916
  %v2974 = vmul.f32 %v2578, %v2921
  %v2975 = vmul.f32 %v2579, %v2926
  %v2976 = vmul.f32 %v2580, %v2931
  %v2977 = vmul.f32 %v2581, %v2936
  %v2978 = vmul.f32 %v2582, %v2941
  %v2979 = vmul.f32 %v2583, %v2946
  %v2980 = vmul.f32 %v2584, %v2951
  %v2981 = vmul.f32 %v2585, %v2956
  %v2982 = vmul.f32 %v2586, %v2901
  %v2983 = vmul.f32 %v2587, %v2906
  %v2984 = vmul.f32 %v2588, %v2911
  %v2985 = vmul.f32 %v2589, %v2916
  %v2986 = vmul.f32 %v2590, %v2921
  %v2987 = vmul.f32 %v2591, %v2926
  %v2988 = vmul.f32 %v2592, %v2931
  %v2989 = vmul.f32 %v2593, %v2936
  %v2990 = vmul.f32 %v2594, %v2941
  %v2991 = vmul.f32 %v2595, %v2946
  %v2992 = vmul.f32 %v2596, %v2951
  %v2993 = vmul.f32 %v2597, %v2956
  %v2994 = vmul.f32 %v2598, %v2901
  %v2995 = vmul.f32 %v2599, %v2906
  %v2996 = vmul.f32 %v2600, %v2911
  %v2997 = vmul.f32 %v2601, %v2916
  %v2998 = vmul.f32 %v2602, %v2921
  %v2999 = vmul.f32 %v2603, %v2926
  %v3000 = vmul.f32 %v2604, %v2931
  %v3001 = vmul.f32 %v2605, %v2936
  %v3002 = vmul.f32 %v2606, %v2941
  %v3003 = vmul.f32 %v2607, %v2946
  %v3004 = vmul.f32 %v2608, %v2951
  %v3005 = vmul.f32 %v2609, %v2956
  %v3006 = vld [vmem:[%s4] sm:$0xff]
  %v3007 = vld [vmem:[%s4 + $0x8] sm:$0xff]
  %v3008 = vld [vmem:[%s4 + $0x10] sm:$0xff]
  %v3009 = vld [vmem:[%s4 + $0x18] sm:$0xff]
  %v3010 = vld [vmem:[%s4 + $0x20] sm:$0xff]
  %v3011 = vld [vmem:[%s4 + $0x28] sm:$0xff]
  %v3012 = vld [vmem:[%s4 + $0x30] sm:$0xff]
  %v3013 = vld [vmem:[%s4 + $0x38] sm:$0xff]
  %v3014 = vld [vmem:[%s4 + $0x40] sm:$0xff]
  %v3015 = vld [vmem:[%s4 + $0x48] sm:$0xff]
  %v3016 = vld [vmem:[%s4 + $0x50] sm:$0xff]
  %v3017 = vld [vmem:[%s4 + $0x58] sm:$0xff]
  %3019 = vset.pattern.permute.xlu0 0
  %3020 = vperm.xlu0 %3019, %v3006
  %v3021 = vpop.permute.xlu0 %3020
  %3024 = vset.pattern.permute.xlu0 0
  %3025 = vperm.xlu0 %3024, %v3007
  %v3026 = vpop.permute.xlu0 %3025
  %3029 = vset.pattern.permute.xlu0 0
  %3030 = vperm.xlu0 %3029, %v3008
  %v3031 = vpop.permute.xlu0 %3030
  %3034 = vset.pattern.permute.xlu0 0
  %3035 = vperm.xlu0 %3034, %v3009
  %v3036 = vpop.permute.xlu0 %3035
  %3039 = vset.pattern.permute.xlu0 0
  %3040 = vperm.xlu0 %3039, %v3010
  %v3041 = vpop.permute.xlu0 %3040
  %3044 = vset.pattern.permute.xlu0 0
  %3045 = vperm.xlu0 %3044, %v3011
  %v3046 = vpop.permute.xlu0 %3045
  %3049 = vset.pattern.permute.xlu0 0
  %3050 = vperm.xlu0 %3049, %v3012
  %v3051 = vpop.permute.xlu0 %3050
  %3054 = vset.pattern.permute.xlu0 0
  %3055 = vperm.xlu0 %3054, %v3013
  %v3056 = vpop.permute.xlu0 %3055
  %3059 = vset.pattern.permute.xlu0 0
  %3060 = vperm.xlu0 %3059, %v3014
  %v3061 = vpop.permute.xlu0 %3060
  %3064 = vset.pattern.permute.xlu0 0
  %3065 = vperm.xlu0 %3064, %v3015
  %v3066 = vpop.permute.xlu0 %3065
  %3069 = vset.pattern.permute.xlu0 0
  %3070 = vperm.xlu0 %3069, %v3016
  %v3071 = vpop.permute.xlu0 %3070
  %3074 = vset.pattern.permute.xlu0 0
  %3075 = vperm.xlu0 %3074, %v3017
  %v3076 = vpop.permute.xlu0 %3075
  %v3078 = vadd.f32 %v2958, %v3021
  %v3079 = vadd.f32 %v2959, %v3026
  %v3080 = vadd.f32 %v2960, %v3031
  %v3081 = vadd.f32 %v2961, %v3036
  %v3082 = vadd.f32 %v2962, %v3041
  %v3083 = vadd.f32 %v2963, %v3046
  %v3084 = vadd.f32 %v2964, %v3051
  %v3085 = vadd.f32 %v2965, %v3056
  %v3086 = vadd.f32 %v2966, %v3061
  %v3087 = vadd.f32 %v2967, %v3066
  %v3088 = vadd.f32 %v2968, %v3071
  %v3089 = vadd.f32 %v2969, %v3076
  %v3090 = vadd.f32 %v2970, %v3021
  %v3091 = vadd.f32 %v2971, %v3026
  %v3092 = vadd.f32 %v2972, %v3031
  %v3093 = vadd.f32 %v2973, %v3036
  %v3094 = vadd.f32 %v2974, %v3041
  %v3095 = vadd.f32 %v2975, %v3046
  %v3096 = vadd.f32 %v2976, %v3051
  %v3097 = vadd.f32 %v2977, %v3056
  %v3098 = vadd.f32 %v2978, %v3061
  %v3099 = vadd.f32 %v2979, %v3066
  %v3100 = vadd.f32 %v2980, %v3071
  %v3101 = vadd.f32 %v2981, %v3076
  %v3102 = vadd.f32 %v2982, %v3021
  %v3103 = vadd.f32 %v2983, %v3026
  %v3104 = vadd.f32 %v2984, %v3031
  %v3105 = vadd.f32 %v2985, %v3036
  %v3106 = vadd.f32 %v2986, %v3041
  %v3107 = vadd.f32 %v2987, %v3046
  %v3108 = vadd.f32 %v2988, %v3051
  %v3109 = vadd.f32 %v2989, %v3056
  %v3110 = vadd.f32 %v2990, %v3061
  %v3111 = vadd.f32 %v2991, %v3066
  %v3112 = vadd.f32 %v2992, %v3071
  %v3113 = vadd.f32 %v2993, %v3076
  %v3114 = vadd.f32 %v2994, %v3021
  %v3115 = vadd.f32 %v2995, %v3026
  %v3116 = vadd.f32 %v2996, %v3031
  %v3117 = vadd.f32 %v2997, %v3036
  %v3118 = vadd.f32 %v2998, %v3041
  %v3119 = vadd.f32 %v2999, %v3046
  %v3120 = vadd.f32 %v3000, %v3051
  %v3121 = vadd.f32 %v3001, %v3056
  %v3122 = vadd.f32 %v3002, %v3061
  %v3123 = vadd.f32 %v3003, %v3066
  %v3124 = vadd.f32 %v3004, %v3071
  %v3125 = vadd.f32 %v3005, %v3076
  %v3126 = vmax.f32 %v3078, 0.0
  %v3127 = vmax.f32 %v3079, 0.0
  %v3128 = vmax.f32 %v3080, 0.0
  %v3129 = vmax.f32 %v3081, 0.0
  %v3130 = vmax.f32 %v3082, 0.0
  %v3131 = vmax.f32 %v3083, 0.0
  %v3132 = vmax.f32 %v3084, 0.0
  %v3133 = vmax.f32 %v3085, 0.0
  %v3134 = vmax.f32 %v3086, 0.0
  %v3135 = vmax.f32 %v3087, 0.0
  %v3136 = vmax.f32 %v3088, 0.0
  %v3137 = vmax.f32 %v3089, 0.0
  %v3138 = vmax.f32 %v3090, 0.0
  %v3139 = vmax.f32 %v3091, 0.0
  %v3140 = vmax.f32 %v3092, 0.0
  %v3141 = vmax.f32 %v3093, 0.0
  %v3142 = vmax.f32 %v3094, 0.0
  %v3143 = vmax.f32 %v3095, 0.0
  %v3144 = vmax.f32 %v3096, 0.0
  %v3145 = vmax.f32 %v3097, 0.0
  %v3146 = vmax.f32 %v3098, 0.0
  %v3147 = vmax.f32 %v3099, 0.0
  %v3148 = vmax.f32 %v3100, 0.0
  %v3149 = vmax.f32 %v3101, 0.0
  %v3150 = vmax.f32 %v3102, 0.0
  %v3151 = vmax.f32 %v3103, 0.0
  %v3152 = vmax.f32 %v3104, 0.0
  %v3153 = vmax.f32 %v3105, 0.0
  %v3154 = vmax.f32 %v3106, 0.0
  %v3155 = vmax.f32 %v3107, 0.0
  %v3156 = vmax.f32 %v3108, 0.0
  %v3157 = vmax.f32 %v3109, 0.0
  %v3158 = vmax.f32 %v3110, 0.0
  %v3159 = vmax.f32 %v3111, 0.0
  %v3160 = vmax.f32 %v3112, 0.0
  %v3161 = vmax.f32 %v3113, 0.0
  %v3162 = vmax.f32 %v3114, 0.0
  %v3163 = vmax.f32 %v3115, 0.0
  %v3164 = vmax.f32 %v3116, 0.0
  %v3165 = vmax.f32 %v3117, 0.0
  %v3166 = vmax.f32 %v3118, 0.0
  %v3167 = vmax.f32 %v3119, 0.0
  %v3168 = vmax.f32 %v3120, 0.0
  %v3169 = vmax.f32 %v3121, 0.0
  %v3170 = vmax.f32 %v3122, 0.0
  %v3171 = vmax.f32 %v3123, 0.0
  %v3172 = vmax.f32 %v3124, 0.0
  %v3173 = vmax.f32 %v3125, 0.0
  %3174 = vst.msk [vmem:[%s5] sm:$0xff] %vm635, %v3126
  %3175 = vst.msk [vmem:[%s5 + $0x8] sm:$0xff] %vm635, %v3127
  %3176 = vst.msk [vmem:[%s5 + $0x10] sm:$0xff] %vm635, %v3128
  %3177 = vst.msk [vmem:[%s5 + $0x18] sm:$0xff] %vm635, %v3129
  %3178 = vst.msk [vmem:[%s5 + $0x20] sm:$0xff] %vm635, %v3130
  %3179 = vst.msk [vmem:[%s5 + $0x28] sm:$0xff] %vm635, %v3131
  %3180 = vst.msk [vmem:[%s5 + $0x30] sm:$0xff] %vm635, %v3132
  %3181 = vst.msk [vmem:[%s5 + $0x38] sm:$0xff] %vm635, %v3133
  %3182 = vst.msk [vmem:[%s5 + $0x40] sm:$0xff] %vm635, %v3134
  %3183 = vst.msk [vmem:[%s5 + $0x48] sm:$0xff] %vm635, %v3135
  %3184 = vst.msk [vmem:[%s5 + $0x50] sm:$0xff] %vm635, %v3136
  %3185 = vst.msk [vmem:[%s5 + $0x58] sm:$0xff] %vm635, %v3137
  %3186 = vst.msk [vmem:[%s5 + $0x60] sm:$0xff] %vm635, %v3138
  %3187 = vst.msk [vmem:[%s5 + $0x68] sm:$0xff] %vm635, %v3139
  %3188 = vst.msk [vmem:[%s5 + $0x70] sm:$0xff] %vm635, %v3140
  %3189 = vst.msk [vmem:[%s5 + $0x78] sm:$0xff] %vm635, %v3141
  %3190 = vst.msk [vmem:[%s5 + $0x80] sm:$0xff] %vm635, %v3142
  %3191 = vst.msk [vmem:[%s5 + $0x88] sm:$0xff] %vm635, %v3143
  %3192 = vst.msk [vmem:[%s5 + $0x90] sm:$0xff] %vm635, %v3144
  %3193 = vst.msk [vmem:[%s5 + $0x98] sm:$0xff] %vm635, %v3145
  %3194 = vst.msk [vmem:[%s5 + $0xa0] sm:$0xff] %vm635, %v3146
  %3195 = vst.msk [vmem:[%s5 + $0xa8] sm:$0xff] %vm635, %v3147
  %3196 = vst.msk [vmem:[%s5 + $0xb0] sm:$0xff] %vm635, %v3148
  %3197 = vst.msk [vmem:[%s5 + $0xb8] sm:$0xff] %vm635, %v3149
  %3198 = vst.msk [vmem:[%s5 + $0xc0] sm:$0xff] %vm635, %v3150
  %3199 = vst.msk [vmem:[%s5 + $0xc8] sm:$0xff] %vm635, %v3151
  %3200 = vst.msk [vmem:[%s5 + $0xd0] sm:$0xff] %vm635, %v3152
  %3201 = vst.msk [vmem:[%s5 + $0xd8] sm:$0xff] %vm635, %v3153
  %3202 = vst.msk [vmem:[%s5 + $0xe0] sm:$0xff] %vm635, %v3154
  %3203 = vst.msk [vmem:[%s5 + $0xe8] sm:$0xff] %vm635, %v3155
  %3204 = vst.msk [vmem:[%s5 + $0xf0] sm:$0xff] %vm635, %v3156
  %3205 = vst.msk [vmem:[%s5 + $0xf8] sm:$0xff] %vm635, %v3157
  %3206 = vst.msk [vmem:[%s5 + $0x100] sm:$0xff] %vm635, %v3158
  %3207 = vst.msk [vmem:[%s5 + $0x108] sm:$0xff] %vm635, %v3159
  %3208 = vst.msk [vmem:[%s5 + $0x110] sm:$0xff] %vm635, %v3160
  %3209 = vst.msk [vmem:[%s5 + $0x118] sm:$0xff] %vm635, %v3161
  %3210 = vst.msk [vmem:[%s5 + $0x120] sm:$0xff] %vm635, %v3162
  %3211 = vst.msk [vmem:[%s5 + $0x128] sm:$0xff] %vm635, %v3163
  %3212 = vst.msk [vmem:[%s5 + $0x130] sm:$0xff] %vm635, %v3164
  %3213 = vst.msk [vmem:[%s5 + $0x138] sm:$0xff] %vm635, %v3165
  %3214 = vst.msk [vmem:[%s5 + $0x140] sm:$0xff] %vm635, %v3166
  %3215 = vst.msk [vmem:[%s5 + $0x148] sm:$0xff] %vm635, %v3167
  %3216 = vst.msk [vmem:[%s5 + $0x150] sm:$0xff] %vm635, %v3168
  %3217 = vst.msk [vmem:[%s5 + $0x158] sm:$0xff] %vm635, %v3169
  %3218 = vst.msk [vmem:[%s5 + $0x160] sm:$0xff] %vm635, %v3170
  %3219 = vst.msk [vmem:[%s5 + $0x168] sm:$0xff] %vm635, %v3171
  %3220 = vst.msk [vmem:[%s5 + $0x170] sm:$0xff] %vm635, %v3172
  %3221 = vst.msk [vmem:[%s5 + $0x178] sm:$0xff] %vm635, %v3173
  // Predicated region
  $region22: #{generator_forward.5} parent=0 // pred_check
    _
  $region23: #{generator_forward.5} parent=0 // pred_check_branch
    %3223 = sbr.rel (0) target = $region25
  $region24: #{generator_forward.5} parent=0 // pred_region
    _
  $region25: #{generator_forward.5} parent=0 // pred_fallthru
    _
  // Predicated region
  $region26: #{generator_forward.5} parent=0 // pred_check
    _
  $region27: #{generator_forward.5} parent=0 // pred_check_branch
    %3225 = sbr.rel (0) target = $region29
  $region28: #{generator_forward.5} parent=0 // pred_region
    _
  $region29: #{generator_forward.5} parent=0 // pred_fallthru
    _

// kernel: generator_forward.6
$region0: #{generator_forward.6}
  #allocation0 [shape = 'u32[]', space=smem, size = 0x4, offset = 0x4, fixed_abs, tag = 'smem constant byte address 0x4 - core index']
  #allocation1 [shape = 'u32[144,128]{1,0:T(1,128)}', space=vmem, size = 0x12000, scoped, tag = 'internal scratch']
  %s0 = inlined_call_operand.vmem [shape: f32[4,48,384], index: 0, kind: input, shape index: {}]
  %s1 = inlined_call_operand.vmem [shape: f32[4,384,128], index: 1, kind: input, shape index: {}]
  %s2 = inlined_call_operand.vmem [shape: f32[48,1], index: 2, kind: input, shape index: {}]
  %s3 = inlined_call_operand.vmem [shape: f32[48,1], index: 3, kind: input, shape index: {}]
  %s4 = inlined_call_operand.vmem [shape: f32[48,1], index: 4, kind: input, shape index: {}]
  %s5 = inlined_call_operand.vmem [shape: f32[4,48,128], index: 5, kind: output, shape index: {}]
  %s6 = sld [smem:[#allocation0]]
  $region30: #{generator_forward.6} parent=0
    _
  %s8 = ssub.s32 1, %s6
  %s9 = scalar_select 0, %s8, %s6
  // Predicated region
  $region2: #{generator_forward.6} parent=0 // pred_check
    _
  $region3: #{generator_forward.6} parent=0 // pred_check_branch
    %11 = sbr.rel (0) target = $region5
  $region4: #{generator_forward.6} parent=0 // pred_region
    _
  $region5: #{generator_forward.6} parent=0 // pred_fallthru
    _
  // Predicated region
  $region6: #{generator_forward.6} parent=0 // pred_check
    _
  $region7: #{generator_forward.6} parent=0 // pred_check_branch
    %13 = sbr.rel (0) target = $region9
  $region8: #{generator_forward.6} parent=0 // pred_region
    _
  $region9: #{generator_forward.6} parent=0 // pred_fallthru
    _
  // Predicated region
  $region10: #{generator_forward.6} parent=0 // pred_check
    _
  $region11: #{generator_forward.6} parent=0 // pred_check_branch
    %15 = sbr.rel (0) target = $region13
  $region12: #{generator_forward.6} parent=0 // pred_region
    _
  $region13: #{generator_forward.6} parent=0 // pred_fallthru
    _
  // Predicated region
  $region14: #{generator_forward.6} parent=0 // pred_check
    _
  $region15: #{generator_forward.6} parent=0 // pred_check_branch
    %17 = sbr.rel (0) target = $region17
  $region16: #{generator_forward.6} parent=0 // pred_region
    _
  $region17: #{generator_forward.6} parent=0 // pred_fallthru
    _
  // Predicated region
  $region18: #{generator_forward.6} parent=0 // pred_check
    _
  $region19: #{generator_forward.6} parent=0 // pred_check_branch
    %19 = sbr.rel (0) target = $region21
  $region20: #{generator_forward.6} parent=0 // pred_region
    _
  $region21: #{generator_forward.6} parent=0 // pred_fallthru
    _
  %v20 = vld [vmem:[%s2] sm:$0xff]
  %v21 = vld [vmem:[%s2 + $0x8] sm:$0xff]
  %v22 = vld [vmem:[%s2 + $0x10] sm:$0xff]
  %v23 = vld [vmem:[%s2 + $0x18] sm:$0xff]
  %v24 = vld [vmem:[%s2 + $0x20] sm:$0xff]
  %v25 = vld [vmem:[%s2 + $0x28] sm:$0xff]
  %v26 = vld [vmem:[%s0] sm:$0xff]
  %v27 = vld [vmem:[%s0 + $0x8] sm:$0xff]
  %v28 = vld [vmem:[%s0 + $0x10] sm:$0xff]
  %v29 = vld [vmem:[%s0 + $0x18] sm:$0xff]
  %v30 = vld [vmem:[%s0 + $0x20] sm:$0xff]
  %v31 = vld [vmem:[%s0 + $0x28] sm:$0xff]
  %v32 = vld [vmem:[%s0 + $0x30] sm:$0xff]
  %v33 = vld [vmem:[%s0 + $0x38] sm:$0xff]
  %v34 = vld [vmem:[%s0 + $0x40] sm:$0xff]
  %v35 = vld [vmem:[%s0 + $0x48] sm:$0xff]
  %v36 = vld [vmem:[%s0 + $0x50] sm:$0xff]
  %v37 = vld [vmem:[%s0 + $0x58] sm:$0xff]
  %v38 = vld [vmem:[%s0 + $0x60] sm:$0xff]
  %v39 = vld [vmem:[%s0 + $0x68] sm:$0xff]
  %v40 = vld [vmem:[%s0 + $0x70] sm:$0xff]
  %v41 = vld [vmem:[%s0 + $0x78] sm:$0xff]
  %v42 = vld [vmem:[%s0 + $0x80] sm:$0xff]
  %v43 = vld [vmem:[%s0 + $0x88] sm:$0xff]
  %v44 = vld [vmem:[%s1] sm:$0xff]
  %v45 = vld [vmem:[%s1 + $0x8] sm:$0xff]
  %v46 = vld [vmem:[%s1 + $0x10] sm:$0xff]
  %v47 = vld [vmem:[%s1 + $0x18] sm:$0xff]
  %v48 = vld [vmem:[%s1 + $0x20] sm:$0xff]
  %v49 = vld [vmem:[%s1 + $0x28] sm:$0xff]
  %v50 = vld [vmem:[%s1 + $0x30] sm:$0xff]
  %v51 = vld [vmem:[%s1 + $0x38] sm:$0xff]
  %v52 = vld [vmem:[%s1 + $0x40] sm:$0xff]
  %v53 = vld [vmem:[%s1 + $0x48] sm:$0xff]
  %v54 = vld [vmem:[%s1 + $0x50] sm:$0xff]
  %v55 = vld [vmem:[%s1 + $0x58] sm:$0xff]
  %v56 = vld [vmem:[%s1 + $0x60] sm:$0xff]
  %v57 = vld [vmem:[%s1 + $0x68] sm:$0xff]
  %v58 = vld [vmem:[%s1 + $0x70] sm:$0xff]
  %v59 = vld [vmem:[%s1 + $0x78] sm:$0xff]
  %v60 = vld [vmem:[%s1 + $0x80] sm:$0xff]
  %v61 = vld [vmem:[%s1 + $0x88] sm:$0xff]
  %v62 = vld [vmem:[%s1 + $0x90] sm:$0xff]
  %v63 = vld [vmem:[%s1 + $0x98] sm:$0xff]
  %v64 = vld [vmem:[%s1 + $0xa0] sm:$0xff]
  %v65 = vld [vmem:[%s1 + $0xa8] sm:$0xff]
  %v66 = vld [vmem:[%s1 + $0xb0] sm:$0xff]
  %v67 = vld [vmem:[%s1 + $0xb8] sm:$0xff]
  %v68 = vld [vmem:[%s1 + $0xc0] sm:$0xff]
  %v69 = vld [vmem:[%s1 + $0xc8] sm:$0xff]
  %v70 = vld [vmem:[%s1 + $0xd0] sm:$0xff]
  %v71 = vld [vmem:[%s1 + $0xd8] sm:$0xff]
  %v72 = vld [vmem:[%s1 + $0xe0] sm:$0xff]
  %v73 = vld [vmem:[%s1 + $0xe8] sm:$0xff]
  %v74 = vld [vmem:[%s1 + $0xf0] sm:$0xff]
  %v75 = vld [vmem:[%s1 + $0xf8] sm:$0xff]
  %v76 = vld [vmem:[%s1 + $0x100] sm:$0xff]
  %v77 = vld [vmem:[%s1 + $0x108] sm:$0xff]
  %v78 = vld [vmem:[%s1 + $0x110] sm:$0xff]
  %v79 = vld [vmem:[%s1 + $0x118] sm:$0xff]
  %v80 = vld [vmem:[%s1 + $0x120] sm:$0xff]
  %v81 = vld [vmem:[%s1 + $0x128] sm:$0xff]
  %v82 = vld [vmem:[%s1 + $0x130] sm:$0xff]
  %v83 = vld [vmem:[%s1 + $0x138] sm:$0xff]
  %v84 = vld [vmem:[%s1 + $0x140] sm:$0xff]
  %v85 = vld [vmem:[%s1 + $0x148] sm:$0xff]
  %v86 = vld [vmem:[%s1 + $0x150] sm:$0xff]
  %v87 = vld [vmem:[%s1 + $0x158] sm:$0xff]
  %v88 = vld [vmem:[%s1 + $0x160] sm:$0xff]
  %v89 = vld [vmem:[%s1 + $0x168] sm:$0xff]
  %v90 = vld [vmem:[%s1 + $0x170] sm:$0xff]
  %v91 = vld [vmem:[%s1 + $0x178] sm:$0xff]
  %93 = vset.pattern.permute.xlu0 0
  %94 = vperm.xlu0 %93, %v20
  %v95 = vpop.permute.xlu0 %94
  %98 = vset.pattern.permute.xlu0 0
  %99 = vperm.xlu0 %98, %v21
  %v100 = vpop.permute.xlu0 %99
  %103 = vset.pattern.permute.xlu0 0
  %104 = vperm.xlu0 %103, %v22
  %v105 = vpop.permute.xlu0 %104
  %108 = vset.pattern.permute.xlu0 0
  %109 = vperm.xlu0 %108, %v23
  %v110 = vpop.permute.xlu0 %109
  %113 = vset.pattern.permute.xlu0 0
  %114 = vperm.xlu0 %113, %v24
  %v115 = vpop.permute.xlu0 %114
  %118 = vset.pattern.permute.xlu0 0
  %119 = vperm.xlu0 %118, %v25
  %v120 = vpop.permute.xlu0 %119
  %122 = vmatprep.subr.mxu0 0.0
  %123 = vmatpush1.msra.mxu0 %v44
  %124 = vmatprep.subr.mxu0 0.0
  %125 = vmatpush1.msra.mxu0 %v45
  %126 = vmatprep.subr.mxu0 0.0
  %127 = vmatpush1.msra.mxu0 %v46
  %128 = vmatprep.subr.mxu0 0.0
  %129 = vmatpush1.msra.mxu0 %v47
  %130 = vmatprep.subr.mxu0 0.0
  %131 = vmatpush1.msra.mxu0 %v48
  %132 = vmatprep.subr.mxu0 0.0
  %133 = vmatpush1.msra.mxu0 %v49
  %134 = vmatprep.subr.mxu0 0.0
  %135 = vmatpush1.msra.mxu0 %v50
  %136 = vmatprep.subr.mxu0 0.0
  %137 = vmatpush1.msra.mxu0 %v51
  %138 = vmatprep.subr.mxu0 0.0
  %139 = vmatpush1.msra.mxu0 %v52
  %140 = vmatprep.subr.mxu0 0.0
  %141 = vmatpush1.msra.mxu0 %v53
  %142 = vmatprep.subr.mxu0 0.0
  %143 = vmatpush1.msra.mxu0 %v54
  %144 = vmatprep.subr.mxu0 0.0
  %145 = vmatpush1.msra.mxu0 %v55
  %146 = vmatprep.subr.mxu0 0.0
  %147 = vmatpush1.msra.mxu0 %v56
  %148 = vmatprep.subr.mxu0 0.0
  %149 = vmatpush1.msra.mxu0 %v57
  %150 = vmatprep.subr.mxu0 0.0
  %151 = vmatpush1.msra.mxu0 %v58
  %152 = vmatprep.subr.mxu0 0.0
  %153 = vmatpush1.msra.mxu0 %v59
  %154 = vmatprep.subr.mxu0 0.0
  %155 = vmatpush1.msra.mxu0 %v60
  %156 = vmatprep.subr.mxu0 0.0
  %157 = vmatpush1.msra.mxu0 %v61
  %158 = vmatprep.subr.mxu0 0.0
  %159 = vmatpush1.msra.mxu0 %v62
  %160 = vmatprep.subr.mxu0 0.0
  %161 = vmatpush1.msra.mxu0 %v63
  %162 = vmatprep.subr.mxu0 0.0
  %163 = vmatpush1.msra.mxu0 %v64
  %164 = vmatprep.subr.mxu0 0.0
  %165 = vmatpush1.msra.mxu0 %v65
  %166 = vmatprep.subr.mxu0 0.0
  %167 = vmatpush1.msra.mxu0 %v66
  %168 = vmatprep.subr.mxu0 0.0
  %169 = vmatpush1.msra.mxu0 %v67
  %170 = vmatprep.subr.mxu0 0.0
  %171 = vmatpush1.msra.mxu0 %v68
  %172 = vmatprep.subr.mxu0 0.0
  %173 = vmatpush1.msra.mxu0 %v69
  %174 = vmatprep.subr.mxu0 0.0
  %175 = vmatpush1.msra.mxu0 %v70
  %176 = vmatprep.subr.mxu0 0.0
  %177 = vmatpush1.msra.mxu0 %v71
  %178 = vmatprep.subr.mxu0 0.0
  %179 = vmatpush1.msra.mxu0 %v72
  %180 = vmatprep.subr.mxu0 0.0
  %181 = vmatpush1.msra.mxu0 %v73
  %182 = vmatprep.subr.mxu0 0.0
  %183 = vmatpush1.msra.mxu0 %v74
  %184 = vmatprep.subr.mxu0 0.0
  %185 = vmatpush1.msra.mxu0 %v75
  %186 = vmatprep.mubr.f32.mxu0 %v27
  %187 = vmatmul.mubr.f32.gmra.mrb[0].mxu0 %v26
  %v188 = vpop.f32.mrb[0].mxu0
  %v189 = vadd.f32 %v95, %v188
  %v190 = vpop.f32.mrb[0].mxu0
  %191 = vmatprep.mubr.f32.mxu0 %v30
  %192 = vmatmul.mubr.f32.gmra.mrb[0].mxu0 %v29
  %v193 = vpop.f32.mrb[0].mxu0
  %v194 = vadd.f32 %v100, %v193
  %v195 = vpop.f32.mrb[0].mxu0
  %196 = vmatprep.mubr.f32.mxu0 %v33
  %197 = vmatmul.mubr.f32.gmra.mrb[0].mxu0 %v32
  %v198 = vpop.f32.mrb[0].mxu0
  %v199 = vadd.f32 %v105, %v198
  %v200 = vpop.f32.mrb[0].mxu0
  %201 = vmatprep.mubr.f32.mxu0 %v36
  %202 = vmatmul.mubr.f32.gmra.mrb[0].mxu0 %v35
  %v203 = vpop.f32.mrb[0].mxu0
  %v204 = vadd.f32 %v110, %v203
  %v205 = vpop.f32.mrb[0].mxu0
  %206 = vmatprep.mubr.f32.mxu0 %v39
  %207 = vmatmul.mubr.f32.gmra.mrb[0].mxu0 %v38
  %v208 = vpop.f32.mrb[0].mxu0
  %v209 = vadd.f32 %v115, %v208
  %v210 = vpop.f32.mrb[0].mxu0
  %211 = vmatprep.mubr.f32.mxu0 %v42
  %212 = vmatmul.mubr.f32.gmra.mrb[0].mxu0 %v41
  %v213 = vpop.f32.mrb[0].mxu0
  %v214 = vadd.f32 %v120, %v213
  %v215 = vpop.f32.mrb[0].mxu0
  %216 = vdwg.mxu0
  %217 = vmatprep.subr.mxu0 0.0
  %218 = vmatpush1.msra.mxu0 %v76
  %219 = vmatprep.subr.mxu0 0.0
  %220 = vmatpush1.msra.mxu0 %v77
  %221 = vmatprep.subr.mxu0 0.0
  %222 = vmatpush1.msra.mxu0 %v78
  %223 = vmatprep.subr.mxu0 0.0
  %224 = vmatpush1.msra.mxu0 %v79
  %225 = vmatprep.subr.mxu0 0.0
  %226 = vmatpush1.msra.mxu0 %v80
  %227 = vmatprep.subr.mxu0 0.0
  %228 = vmatpush1.msra.mxu0 %v81
  %229 = vmatprep.subr.mxu0 0.0
  %230 = vmatpush1.msra.mxu0 %v82
  %231 = vmatprep.subr.mxu0 0.0
  %232 = vmatpush1.msra.mxu0 %v83
  %233 = vmatprep.subr.mxu0 0.0
  %234 = vmatpush1.msra.mxu0 %v84
  %235 = vmatprep.subr.mxu0 0.0
  %236 = vmatpush1.msra.mxu0 %v85
  %237 = vmatprep.subr.mxu0 0.0
  %238 = vmatpush1.msra.mxu0 %v86
  %239 = vmatprep.subr.mxu0 0.0
  %240 = vmatpush1.msra.mxu0 %v87
  %241 = vmatprep.subr.mxu0 0.0
  %242 = vmatpush1.msra.mxu0 %v88
  %243 = vmatprep.subr.mxu0 0.0
  %244 = vmatpush1.msra.mxu0 %v89
  %245 = vmatprep.subr.mxu0 0.0
  %246 = vmatpush1.msra.mxu0 %v90
  %247 = vmatprep.subr.mxu0 0.0
  %248 = vmatpush1.msra.mxu0 %v91
  %249 = vmatprep.subr.mxu0 0.0
  %250 = vmatpush1.msra.mxu0 0.0
  %251 = vmatprep.subr.mxu0 0.0
  %252 = vmatpush1.msra.mxu0 0.0
  %253 = vmatprep.subr.mxu0 0.0
  %254 = vmatpush1.msra.mxu0 0.0
  %255 = vmatprep.subr.mxu0 0.0
  %256 = vmatpush1.msra.mxu0 0.0
  %257 = vmatprep.subr.mxu0 0.0
  %258 = vmatpush1.msra.mxu0 0.0
  %259 = vmatprep.subr.mxu0 0.0
  %260 = vmatpush1.msra.mxu0 0.0
  %261 = vmatprep.subr.mxu0 0.0
  %262 = vmatpush1.msra.mxu0 0.0
  %263 = vmatprep.subr.mxu0 0.0
  %264 = vmatpush1.msra.mxu0 0.0
  %265 = vmatprep.subr.mxu0 0.0
  %266 = vmatpush1.msra.mxu0 0.0
  %267 = vmatprep.subr.mxu0 0.0
  %268 = vmatpush1.msra.mxu0 0.0
  %269 = vmatprep.subr.mxu0 0.0
  %270 = vmatpush1.msra.mxu0 0.0
  %271 = vmatprep.subr.mxu0 0.0
  %272 = vmatpush1.msra.mxu0 0.0
  %273 = vmatprep.subr.mxu0 0.0
  %274 = vmatpush1.msra.mxu0 0.0
  %275 = vmatprep.subr.mxu0 0.0
  %276 = vmatpush1.msra.mxu0 0.0
  %277 = vmatprep.subr.mxu0 0.0
  %278 = vmatpush1.msra.mxu0 0.0
  %279 = vmatprep.subr.mxu0 0.0
  %280 = vmatpush1.msra.mxu0 0.0
  %281 = vmatprep.mubr.f32.mxu0 0.0
  %282 = vmatmul.mubr.f32.gmra.mrb[0].mxu0 %v28
  %v283 = vpop.f32.mrb[0].mxu0
  %v284 = vadd.f32 %v189, %v283
  %v285 = vpop.f32.mrb[0].mxu0
  %286 = vmatprep.mubr.f32.mxu0 0.0
  %287 = vmatmul.mubr.f32.gmra.mrb[0].mxu0 %v31
  %v288 = vpop.f32.mrb[0].mxu0
  %v289 = vadd.f32 %v194, %v288
  %v290 = vpop.f32.mrb[0].mxu0
  %291 = vmatprep.mubr.f32.mxu0 0.0
  %292 = vmatmul.mubr.f32.gmra.mrb[0].mxu0 %v34
  %v293 = vpop.f32.mrb[0].mxu0
  %v294 = vadd.f32 %v199, %v293
  %v295 = vpop.f32.mrb[0].mxu0
  %296 = vmatprep.mubr.f32.mxu0 0.0
  %297 = vmatmul.mubr.f32.gmra.mrb[0].mxu0 %v37
  %v298 = vpop.f32.mrb[0].mxu0
  %v299 = vadd.f32 %v204, %v298
  %v300 = vpop.f32.mrb[0].mxu0
  %301 = vmatprep.mubr.f32.mxu0 0.0
  %302 = vmatmul.mubr.f32.gmra.mrb[0].mxu0 %v40
  %v303 = vpop.f32.mrb[0].mxu0
  %v304 = vadd.f32 %v209, %v303
  %v305 = vpop.f32.mrb[0].mxu0
  %306 = vmatprep.mubr.f32.mxu0 0.0
  %307 = vmatmul.mubr.f32.gmra.mrb[0].mxu0 %v43
  %v308 = vpop.f32.mrb[0].mxu0
  %v309 = vadd.f32 %v214, %v308
  %v310 = vpop.f32.mrb[0].mxu0
  %311 = vdwg.mxu0
  %312 = vst [vmem:[%s5] sm:$0xff] %v284
  %313 = vst [vmem:[%s5 + $0x8] sm:$0xff] %v289
  %314 = vst [vmem:[%s5 + $0x10] sm:$0xff] %v294
  %315 = vst [vmem:[%s5 + $0x18] sm:$0xff] %v299
  %316 = vst [vmem:[%s5 + $0x20] sm:$0xff] %v304
  %317 = vst [vmem:[%s5 + $0x28] sm:$0xff] %v309
  %s318 = scalar_lea.vmem %s0, 144
  %v319 = vld [vmem:[%s318] sm:$0xff]
  %v320 = vld [vmem:[%s318 + $0x8] sm:$0xff]
  %v321 = vld [vmem:[%s318 + $0x10] sm:$0xff]
  %v322 = vld [vmem:[%s318 + $0x18] sm:$0xff]
  %v323 = vld [vmem:[%s318 + $0x20] sm:$0xff]
  %v324 = vld [vmem:[%s318 + $0x28] sm:$0xff]
  %v325 = vld [vmem:[%s318 + $0x30] sm:$0xff]
  %v326 = vld [vmem:[%s318 + $0x38] sm:$0xff]
  %v327 = vld [vmem:[%s318 + $0x40] sm:$0xff]
  %v328 = vld [vmem:[%s318 + $0x48] sm:$0xff]
  %v329 = vld [vmem:[%s318 + $0x50] sm:$0xff]
  %v330 = vld [vmem:[%s318 + $0x58] sm:$0xff]
  %v331 = vld [vmem:[%s318 + $0x60] sm:$0xff]
  %v332 = vld [vmem:[%s318 + $0x68] sm:$0xff]
  %v333 = vld [vmem:[%s318 + $0x70] sm:$0xff]
  %v334 = vld [vmem:[%s318 + $0x78] sm:$0xff]
  %v335 = vld [vmem:[%s318 + $0x80] sm:$0xff]
  %v336 = vld [vmem:[%s318 + $0x88] sm:$0xff]
  %s337 = scalar_lea.vmem %s1, 384
  %v338 = vld [vmem:[%s337] sm:$0xff]
  %v339 = vld [vmem:[%s337 + $0x8] sm:$0xff]
  %v340 = vld [vmem:[%s337 + $0x10] sm:$0xff]
  %v341 = vld [vmem:[%s337 + $0x18] sm:$0xff]
  %v342 = vld [vmem:[%s337 + $0x20] sm:$0xff]
  %v343 = vld [vmem:[%s337 + $0x28] sm:$0xff]
  %v344 = vld [vmem:[%s337 + $0x30] sm:$0xff]
  %v345 = vld [vmem:[%s337 + $0x38] sm:$0xff]
  %v346 = vld [vmem:[%s337 + $0x40] sm:$0xff]
  %v347 = vld [vmem:[%s337 + $0x48] sm:$0xff]
  %v348 = vld [vmem:[%s337 + $0x50] sm:$0xff]
  %v349 = vld [vmem:[%s337 + $0x58] sm:$0xff]
  %v350 = vld [vmem:[%s337 + $0x60] sm:$0xff]
  %v351 = vld [vmem:[%s337 + $0x68] sm:$0xff]
  %v352 = vld [vmem:[%s337 + $0x70] sm:$0xff]
  %v353 = vld [vmem:[%s337 + $0x78] sm:$0xff]
  %v354 = vld [vmem:[%s337 + $0x80] sm:$0xff]
  %v355 = vld [vmem:[%s337 + $0x88] sm:$0xff]
  %v356 = vld [vmem:[%s337 + $0x90] sm:$0xff]
  %v357 = vld [vmem:[%s337 + $0x98] sm:$0xff]
  %v358 = vld [vmem:[%s337 + $0xa0] sm:$0xff]
  %v359 = vld [vmem:[%s337 + $0xa8] sm:$0xff]
  %v360 = vld [vmem:[%s337 + $0xb0] sm:$0xff]
  %v361 = vld [vmem:[%s337 + $0xb8] sm:$0xff]
  %v362 = vld [vmem:[%s337 + $0xc0] sm:$0xff]
  %v363 = vld [vmem:[%s337 + $0xc8] sm:$0xff]
  %v364 = vld [vmem:[%s337 + $0xd0] sm:$0xff]
  %v365 = vld [vmem:[%s337 + $0xd8] sm:$0xff]
  %v366 = vld [vmem:[%s337 + $0xe0] sm:$0xff]
  %v367 = vld [vmem:[%s337 + $0xe8] sm:$0xff]
  %v368 = vld [vmem:[%s337 + $0xf0] sm:$0xff]
  %v369 = vld [vmem:[%s337 + $0xf8] sm:$0xff]
  %v370 = vld [vmem:[%s337 + $0x100] sm:$0xff]
  %v371 = vld [vmem:[%s337 + $0x108] sm:$0xff]
  %v372 = vld [vmem:[%s337 + $0x110] sm:$0xff]
  %v373 = vld [vmem:[%s337 + $0x118] sm:$0xff]
  %v374 = vld [vmem:[%s337 + $0x120] sm:$0xff]
  %v375 = vld [vmem:[%s337 + $0x128] sm:$0xff]
  %v376 = vld [vmem:[%s337 + $0x130] sm:$0xff]
  %v377 = vld [vmem:[%s337 + $0x138] sm:$0xff]
  %v378 = vld [vmem:[%s337 + $0x140] sm:$0xff]
  %v379 = vld [vmem:[%s337 + $0x148] sm:$0xff]
  %v380 = vld [vmem:[%s337 + $0x150] sm:$0xff]
  %v381 = vld [vmem:[%s337 + $0x158] sm:$0xff]
  %v382 = vld [vmem:[%s337 + $0x160] sm:$0xff]
  %v383 = vld [vmem:[%s337 + $0x168] sm:$0xff]
  %v384 = vld [vmem:[%s337 + $0x170] sm:$0xff]
  %v385 = vld [vmem:[%s337 + $0x178] sm:$0xff]
  %386 = vmatprep.subr.mxu0 0.0
  %387 = vmatpush1.msra.mxu0 %v338
  %388 = vmatprep.subr.mxu0 0.0
  %389 = vmatpush1.msra.mxu0 %v339
  %390 = vmatprep.subr.mxu0 0.0
  %391 = vmatpush1.msra.mxu0 %v340
  %392 = vmatprep.subr.mxu0 0.0
  %393 = vmatpush1.msra.mxu0 %v341
  %394 = vmatprep.subr.mxu0 0.0
  %395 = vmatpush1.msra.mxu0 %v342
  %396 = vmatprep.subr.mxu0 0.0
  %397 = vmatpush1.msra.mxu0 %v343
  %398 = vmatprep.subr.mxu0 0.0
  %399 = vmatpush1.msra.mxu0 %v344
  %400 = vmatprep.subr.mxu0 0.0
  %401 = vmatpush1.msra.mxu0 %v345
  %402 = vmatprep.subr.mxu0 0.0
  %403 = vmatpush1.msra.mxu0 %v346
  %404 = vmatprep.subr.mxu0 0.0
  %405 = vmatpush1.msra.mxu0 %v347
  %406 = vmatprep.subr.mxu0 0.0
  %407 = vmatpush1.msra.mxu0 %v348
  %408 = vmatprep.subr.mxu0 0.0
  %409 = vmatpush1.msra.mxu0 %v349
  %410 = vmatprep.subr.mxu0 0.0
  %411 = vmatpush1.msra.mxu0 %v350
  %412 = vmatprep.subr.mxu0 0.0
  %413 = vmatpush1.msra.mxu0 %v351
  %414 = vmatprep.subr.mxu0 0.0
  %415 = vmatpush1.msra.mxu0 %v352
  %416 = vmatprep.subr.mxu0 0.0
  %417 = vmatpush1.msra.mxu0 %v353
  %418 = vmatprep.subr.mxu0 0.0
  %419 = vmatpush1.msra.mxu0 %v354
  %420 = vmatprep.subr.mxu0 0.0
  %421 = vmatpush1.msra.mxu0 %v355
  %422 = vmatprep.subr.mxu0 0.0
  %423 = vmatpush1.msra.mxu0 %v356
  %424 = vmatprep.subr.mxu0 0.0
  %425 = vmatpush1.msra.mxu0 %v357
  %426 = vmatprep.subr.mxu0 0.0
  %427 = vmatpush1.msra.mxu0 %v358
  %428 = vmatprep.subr.mxu0 0.0
  %429 = vmatpush1.msra.mxu0 %v359
  %430 = vmatprep.subr.mxu0 0.0
  %431 = vmatpush1.msra.mxu0 %v360
  %432 = vmatprep.subr.mxu0 0.0
  %433 = vmatpush1.msra.mxu0 %v361
  %434 = vmatprep.subr.mxu0 0.0
  %435 = vmatpush1.msra.mxu0 %v362
  %436 = vmatprep.subr.mxu0 0.0
  %437 = vmatpush1.msra.mxu0 %v363
  %438 = vmatprep.subr.mxu0 0.0
  %439 = vmatpush1.msra.mxu0 %v364
  %440 = vmatprep.subr.mxu0 0.0
  %441 = vmatpush1.msra.mxu0 %v365
  %442 = vmatprep.subr.mxu0 0.0
  %443 = vmatpush1.msra.mxu0 %v366
  %444 = vmatprep.subr.mxu0 0.0
  %445 = vmatpush1.msra.mxu0 %v367
  %446 = vmatprep.subr.mxu0 0.0
  %447 = vmatpush1.msra.mxu0 %v368
  %448 = vmatprep.subr.mxu0 0.0
  %449 = vmatpush1.msra.mxu0 %v369
  %450 = vmatprep.mubr.f32.mxu0 %v320
  %451 = vmatmul.mubr.f32.gmra.mrb[0].mxu0 %v319
  %v452 = vpop.f32.mrb[0].mxu0
  %v453 = vadd.f32 %v95, %v452
  %v454 = vpop.f32.mrb[0].mxu0
  %455 = vmatprep.mubr.f32.mxu0 %v323
  %456 = vmatmul.mubr.f32.gmra.mrb[0].mxu0 %v322
  %v457 = vpop.f32.mrb[0].mxu0
  %v458 = vadd.f32 %v100, %v457
  %v459 = vpop.f32.mrb[0].mxu0
  %460 = vmatprep.mubr.f32.mxu0 %v326
  %461 = vmatmul.mubr.f32.gmra.mrb[0].mxu0 %v325
  %v462 = vpop.f32.mrb[0].mxu0
  %v463 = vadd.f32 %v105, %v462
  %v464 = vpop.f32.mrb[0].mxu0
  %465 = vmatprep.mubr.f32.mxu0 %v329
  %466 = vmatmul.mubr.f32.gmra.mrb[0].mxu0 %v328
  %v467 = vpop.f32.mrb[0].mxu0
  %v468 = vadd.f32 %v110, %v467
  %v469 = vpop.f32.mrb[0].mxu0
  %470 = vmatprep.mubr.f32.mxu0 %v332
  %471 = vmatmul.mubr.f32.gmra.mrb[0].mxu0 %v331
  %v472 = vpop.f32.mrb[0].mxu0
  %v473 = vadd.f32 %v115, %v472
  %v474 = vpop.f32.mrb[0].mxu0
  %475 = vmatprep.mubr.f32.mxu0 %v335
  %476 = vmatmul.mubr.f32.gmra.mrb[0].mxu0 %v334
  %v477 = vpop.f32.mrb[0].mxu0
  %v478 = vadd.f32 %v120, %v477
  %v479 = vpop.f32.mrb[0].mxu0
  %480 = vdwg.mxu0
  %481 = vmatprep.subr.mxu0 0.0
  %482 = vmatpush1.msra.mxu0 %v370
  %483 = vmatprep.subr.mxu0 0.0
  %484 = vmatpush1.msra.mxu0 %v371
  %485 = vmatprep.subr.mxu0 0.0
  %486 = vmatpush1.msra.mxu0 %v372
  %487 = vmatprep.subr.mxu0 0.0
  %488 = vmatpush1.msra.mxu0 %v373
  %489 = vmatprep.subr.mxu0 0.0
  %490 = vmatpush1.msra.mxu0 %v374
  %491 = vmatprep.subr.mxu0 0.0
  %492 = vmatpush1.msra.mxu0 %v375
  %493 = vmatprep.subr.mxu0 0.0
  %494 = vmatpush1.msra.mxu0 %v376
  %495 = vmatprep.subr.mxu0 0.0
  %496 = vmatpush1.msra.mxu0 %v377
  %497 = vmatprep.subr.mxu0 0.0
  %498 = vmatpush1.msra.mxu0 %v378
  %499 = vmatprep.subr.mxu0 0.0
  %500 = vmatpush1.msra.mxu0 %v379
  %501 = vmatprep.subr.mxu0 0.0
  %502 = vmatpush1.msra.mxu0 %v380
  %503 = vmatprep.subr.mxu0 0.0
  %504 = vmatpush1.msra.mxu0 %v381
  %505 = vmatprep.subr.mxu0 0.0
  %506 = vmatpush1.msra.mxu0 %v382
  %507 = vmatprep.subr.mxu0 0.0
  %508 = vmatpush1.msra.mxu0 %v383
  %509 = vmatprep.subr.mxu0 0.0
  %510 = vmatpush1.msra.mxu0 %v384
  %511 = vmatprep.subr.mxu0 0.0
  %512 = vmatpush1.msra.mxu0 %v385
  %513 = vmatprep.subr.mxu0 0.0
  %514 = vmatpush1.msra.mxu0 0.0
  %515 = vmatprep.subr.mxu0 0.0
  %516 = vmatpush1.msra.mxu0 0.0
  %517 = vmatprep.subr.mxu0 0.0
  %518 = vmatpush1.msra.mxu0 0.0
  %519 = vmatprep.subr.mxu0 0.0
  %520 = vmatpush1.msra.mxu0 0.0
  %521 = vmatprep.subr.mxu0 0.0
  %522 = vmatpush1.msra.mxu0 0.0
  %523 = vmatprep.subr.mxu0 0.0
  %524 = vmatpush1.msra.mxu0 0.0
  %525 = vmatprep.subr.mxu0 0.0
  %526 = vmatpush1.msra.mxu0 0.0
  %527 = vmatprep.subr.mxu0 0.0
  %528 = vmatpush1.msra.mxu0 0.0
  %529 = vmatprep.subr.mxu0 0.0
  %530 = vmatpush1.msra.mxu0 0.0
  %531 = vmatprep.subr.mxu0 0.0
  %532 = vmatpush1.msra.mxu0 0.0
  %533 = vmatprep.subr.mxu0 0.0
  %534 = vmatpush1.msra.mxu0 0.0
  %535 = vmatprep.subr.mxu0 0.0
  %536 = vmatpush1.msra.mxu0 0.0
  %537 = vmatprep.subr.mxu0 0.0
  %538 = vmatpush1.msra.mxu0 0.0
  %539 = vmatprep.subr.mxu0 0.0
  %540 = vmatpush1.msra.mxu0 0.0
  %541 = vmatprep.subr.mxu0 0.0
  %542 = vmatpush1.msra.mxu0 0.0
  %543 = vmatprep.subr.mxu0 0.0
  %544 = vmatpush1.msra.mxu0 0.0
  %545 = vmatprep.mubr.f32.mxu0 0.0
  %546 = vmatmul.mubr.f32.gmra.mrb[0].mxu0 %v321
  %v547 = vpop.f32.mrb[0].mxu0
  %v548 = vadd.f32 %v453, %v547
  %v549 = vpop.f32.mrb[0].mxu0
  %550 = vmatprep.mubr.f32.mxu0 0.0
  %551 = vmatmul.mubr.f32.gmra.mrb[0].mxu0 %v324
  %v552 = vpop.f32.mrb[0].mxu0
  %v553 = vadd.f32 %v458, %v552
  %v554 = vpop.f32.mrb[0].mxu0
  %555 = vmatprep.mubr.f32.mxu0 0.0
  %556 = vmatmul.mubr.f32.gmra.mrb[0].mxu0 %v327
  %v557 = vpop.f32.mrb[0].mxu0
  %v558 = vadd.f32 %v463, %v557
  %v559 = vpop.f32.mrb[0].mxu0
  %560 = vmatprep.mubr.f32.mxu0 0.0
  %561 = vmatmul.mubr.f32.gmra.mrb[0].mxu0 %v330
  %v562 = vpop.f32.mrb[0].mxu0
  %v563 = vadd.f32 %v468, %v562
  %v564 = vpop.f32.mrb[0].mxu0
  %565 = vmatprep.mubr.f32.mxu0 0.0
  %566 = vmatmul.mubr.f32.gmra.mrb[0].mxu0 %v333
  %v567 = vpop.f32.mrb[0].mxu0
  %v568 = vadd.f32 %v473, %v567
  %v569 = vpop.f32.mrb[0].mxu0
  %570 = vmatprep.mubr.f32.mxu0 0.0
  %571 = vmatmul.mubr.f32.gmra.mrb[0].mxu0 %v336
  %v572 = vpop.f32.mrb[0].mxu0
  %v573 = vadd.f32 %v478, %v572
  %v574 = vpop.f32.mrb[0].mxu0
  %575 = vdwg.mxu0
  %s576 = scalar_lea.vmem %s5, 48
  %577 = vst [vmem:[%s576] sm:$0xff] %v548
  %578 = vst [vmem:[%s576 + $0x8] sm:$0xff] %v553
  %579 = vst [vmem:[%s576 + $0x10] sm:$0xff] %v558
  %580 = vst [vmem:[%s576 + $0x18] sm:$0xff] %v563
  %581 = vst [vmem:[%s576 + $0x20] sm:$0xff] %v568
  %582 = vst [vmem:[%s576 + $0x28] sm:$0xff] %v573
  %s583 = scalar_lea.vmem %s0, 288
  %v584 = vld [vmem:[%s583] sm:$0xff]
  %v585 = vld [vmem:[%s583 + $0x8] sm:$0xff]
  %v586 = vld [vmem:[%s583 + $0x10] sm:$0xff]
  %v587 = vld [vmem:[%s583 + $0x18] sm:$0xff]
  %v588 = vld [vmem:[%s583 + $0x20] sm:$0xff]
  %v589 = vld [vmem:[%s583 + $0x28] sm:$0xff]
  %v590 = vld [vmem:[%s583 + $0x30] sm:$0xff]
  %v591 = vld [vmem:[%s583 + $0x38] sm:$0xff]
  %v592 = vld [vmem:[%s583 + $0x40] sm:$0xff]
  %v593 = vld [vmem:[%s583 + $0x48] sm:$0xff]
  %v594 = vld [vmem:[%s583 + $0x50] sm:$0xff]
  %v595 = vld [vmem:[%s583 + $0x58] sm:$0xff]
  %v596 = vld [vmem:[%s583 + $0x60] sm:$0xff]
  %v597 = vld [vmem:[%s583 + $0x68] sm:$0xff]
  %v598 = vld [vmem:[%s583 + $0x70] sm:$0xff]
  %v599 = vld [vmem:[%s583 + $0x78] sm:$0xff]
  %v600 = vld [vmem:[%s583 + $0x80] sm:$0xff]
  %v601 = vld [vmem:[%s583 + $0x88] sm:$0xff]
  %s602 = scalar_lea.vmem %s1, 768
  %v603 = vld [vmem:[%s602] sm:$0xff]
  %v604 = vld [vmem:[%s602 + $0x8] sm:$0xff]
  %v605 = vld [vmem:[%s602 + $0x10] sm:$0xff]
  %v606 = vld [vmem:[%s602 + $0x18] sm:$0xff]
  %v607 = vld [vmem:[%s602 + $0x20] sm:$0xff]
  %v608 = vld [vmem:[%s602 + $0x28] sm:$0xff]
  %v609 = vld [vmem:[%s602 + $0x30] sm:$0xff]
  %v610 = vld [vmem:[%s602 + $0x38] sm:$0xff]
  %v611 = vld [vmem:[%s602 + $0x40] sm:$0xff]
  %v612 = vld [vmem:[%s602 + $0x48] sm:$0xff]
  %v613 = vld [vmem:[%s602 + $0x50] sm:$0xff]
  %v614 = vld [vmem:[%s602 + $0x58] sm:$0xff]
  %v615 = vld [vmem:[%s602 + $0x60] sm:$0xff]
  %v616 = vld [vmem:[%s602 + $0x68] sm:$0xff]
  %v617 = vld [vmem:[%s602 + $0x70] sm:$0xff]
  %v618 = vld [vmem:[%s602 + $0x78] sm:$0xff]
  %v619 = vld [vmem:[%s602 + $0x80] sm:$0xff]
  %v620 = vld [vmem:[%s602 + $0x88] sm:$0xff]
  %v621 = vld [vmem:[%s602 + $0x90] sm:$0xff]
  %v622 = vld [vmem:[%s602 + $0x98] sm:$0xff]
  %v623 = vld [vmem:[%s602 + $0xa0] sm:$0xff]
  %v624 = vld [vmem:[%s602 + $0xa8] sm:$0xff]
  %v625 = vld [vmem:[%s602 + $0xb0] sm:$0xff]
  %v626 = vld [vmem:[%s602 + $0xb8] sm:$0xff]
  %v627 = vld [vmem:[%s602 + $0xc0] sm:$0xff]
  %v628 = vld [vmem:[%s602 + $0xc8] sm:$0xff]
  %v629 = vld [vmem:[%s602 + $0xd0] sm:$0xff]
  %v630 = vld [vmem:[%s602 + $0xd8] sm:$0xff]
  %v631 = vld [vmem:[%s602 + $0xe0] sm:$0xff]
  %v632 = vld [vmem:[%s602 + $0xe8] sm:$0xff]
  %v633 = vld [vmem:[%s602 + $0xf0] sm:$0xff]
  %v634 = vld [vmem:[%s602 + $0xf8] sm:$0xff]
  %v635 = vld [vmem:[%s602 + $0x100] sm:$0xff]
  %v636 = vld [vmem:[%s602 + $0x108] sm:$0xff]
  %v637 = vld [vmem:[%s602 + $0x110] sm:$0xff]
  %v638 = vld [vmem:[%s602 + $0x118] sm:$0xff]
  %v639 = vld [vmem:[%s602 + $0x120] sm:$0xff]
  %v640 = vld [vmem:[%s602 + $0x128] sm:$0xff]
  %v641 = vld [vmem:[%s602 + $0x130] sm:$0xff]
  %v642 = vld [vmem:[%s602 + $0x138] sm:$0xff]
  %v643 = vld [vmem:[%s602 + $0x140] sm:$0xff]
  %v644 = vld [vmem:[%s602 + $0x148] sm:$0xff]
  %v645 = vld [vmem:[%s602 + $0x150] sm:$0xff]
  %v646 = vld [vmem:[%s602 + $0x158] sm:$0xff]
  %v647 = vld [vmem:[%s602 + $0x160] sm:$0xff]
  %v648 = vld [vmem:[%s602 + $0x168] sm:$0xff]
  %v649 = vld [vmem:[%s602 + $0x170] sm:$0xff]
  %v650 = vld [vmem:[%s602 + $0x178] sm:$0xff]
  %651 = vmatprep.subr.mxu0 0.0
  %652 = vmatpush1.msra.mxu0 %v603
  %653 = vmatprep.subr.mxu0 0.0
  %654 = vmatpush1.msra.mxu0 %v604
  %655 = vmatprep.subr.mxu0 0.0
  %656 = vmatpush1.msra.mxu0 %v605
  %657 = vmatprep.subr.mxu0 0.0
  %658 = vmatpush1.msra.mxu0 %v606
  %659 = vmatprep.subr.mxu0 0.0
  %660 = vmatpush1.msra.mxu0 %v607
  %661 = vmatprep.subr.mxu0 0.0
  %662 = vmatpush1.msra.mxu0 %v608
  %663 = vmatprep.subr.mxu0 0.0
  %664 = vmatpush1.msra.mxu0 %v609
  %665 = vmatprep.subr.mxu0 0.0
  %666 = vmatpush1.msra.mxu0 %v610
  %667 = vmatprep.subr.mxu0 0.0
  %668 = vmatpush1.msra.mxu0 %v611
  %669 = vmatprep.subr.mxu0 0.0
  %670 = vmatpush1.msra.mxu0 %v612
  %671 = vmatprep.subr.mxu0 0.0
  %672 = vmatpush1.msra.mxu0 %v613
  %673 = vmatprep.subr.mxu0 0.0
  %674 = vmatpush1.msra.mxu0 %v614
  %675 = vmatprep.subr.mxu0 0.0
  %676 = vmatpush1.msra.mxu0 %v615
  %677 = vmatprep.subr.mxu0 0.0
  %678 = vmatpush1.msra.mxu0 %v616
  %679 = vmatprep.subr.mxu0 0.0
  %680 = vmatpush1.msra.mxu0 %v617
  %681 = vmatprep.subr.mxu0 0.0
  %682 = vmatpush1.msra.mxu0 %v618
  %683 = vmatprep.subr.mxu0 0.0
  %684 = vmatpush1.msra.mxu0 %v619
  %685 = vmatprep.subr.mxu0 0.0
  %686 = vmatpush1.msra.mxu0 %v620
  %687 = vmatprep.subr.mxu0 0.0
  %688 = vmatpush1.msra.mxu0 %v621
  %689 = vmatprep.subr.mxu0 0.0
  %690 = vmatpush1.msra.mxu0 %v622
  %691 = vmatprep.subr.mxu0 0.0
  %692 = vmatpush1.msra.mxu0 %v623
  %693 = vmatprep.subr.mxu0 0.0
  %694 = vmatpush1.msra.mxu0 %v624
  %695 = vmatprep.subr.mxu0 0.0
  %696 = vmatpush1.msra.mxu0 %v625
  %697 = vmatprep.subr.mxu0 0.0
  %698 = vmatpush1.msra.mxu0 %v626
  %699 = vmatprep.subr.mxu0 0.0
  %700 = vmatpush1.msra.mxu0 %v627
  %701 = vmatprep.subr.mxu0 0.0
  %702 = vmatpush1.msra.mxu0 %v628
  %703 = vmatprep.subr.mxu0 0.0
  %704 = vmatpush1.msra.mxu0 %v629
  %705 = vmatprep.subr.mxu0 0.0
  %706 = vmatpush1.msra.mxu0 %v630
  %707 = vmatprep.subr.mxu0 0.0
  %708 = vmatpush1.msra.mxu0 %v631
  %709 = vmatprep.subr.mxu0 0.0
  %710 = vmatpush1.msra.mxu0 %v632
  %711 = vmatprep.subr.mxu0 0.0
  %712 = vmatpush1.msra.mxu0 %v633
  %713 = vmatprep.subr.mxu0 0.0
  %714 = vmatpush1.msra.mxu0 %v634
  %715 = vmatprep.mubr.f32.mxu0 %v585
  %716 = vmatmul.mubr.f32.gmra.mrb[0].mxu0 %v584
  %v717 = vpop.f32.mrb[0].mxu0
  %v718 = vadd.f32 %v95, %v717
  %v719 = vpop.f32.mrb[0].mxu0
  %720 = vmatprep.mubr.f32.mxu0 %v588
  %721 = vmatmul.mubr.f32.gmra.mrb[0].mxu0 %v587
  %v722 = vpop.f32.mrb[0].mxu0
  %v723 = vadd.f32 %v100, %v722
  %v724 = vpop.f32.mrb[0].mxu0
  %725 = vmatprep.mubr.f32.mxu0 %v591
  %726 = vmatmul.mubr.f32.gmra.mrb[0].mxu0 %v590
  %v727 = vpop.f32.mrb[0].mxu0
  %v728 = vadd.f32 %v105, %v727
  %v729 = vpop.f32.mrb[0].mxu0
  %730 = vmatprep.mubr.f32.mxu0 %v594
  %731 = vmatmul.mubr.f32.gmra.mrb[0].mxu0 %v593
  %v732 = vpop.f32.mrb[0].mxu0
  %v733 = vadd.f32 %v110, %v732
  %v734 = vpop.f32.mrb[0].mxu0
  %735 = vmatprep.mubr.f32.mxu0 %v597
  %736 = vmatmul.mubr.f32.gmra.mrb[0].mxu0 %v596
  %v737 = vpop.f32.mrb[0].mxu0
  %v738 = vadd.f32 %v115, %v737
  %v739 = vpop.f32.mrb[0].mxu0
  %740 = vmatprep.mubr.f32.mxu0 %v600
  %741 = vmatmul.mubr.f32.gmra.mrb[0].mxu0 %v599
  %v742 = vpop.f32.mrb[0].mxu0
  %v743 = vadd.f32 %v120, %v742
  %v744 = vpop.f32.mrb[0].mxu0
  %745 = vdwg.mxu0
  %746 = vmatprep.subr.mxu0 0.0
  %747 = vmatpush1.msra.mxu0 %v635
  %748 = vmatprep.subr.mxu0 0.0
  %749 = vmatpush1.msra.mxu0 %v636
  %750 = vmatprep.subr.mxu0 0.0
  %751 = vmatpush1.msra.mxu0 %v637
  %752 = vmatprep.subr.mxu0 0.0
  %753 = vmatpush1.msra.mxu0 %v638
  %754 = vmatprep.subr.mxu0 0.0
  %755 = vmatpush1.msra.mxu0 %v639
  %756 = vmatprep.subr.mxu0 0.0
  %757 = vmatpush1.msra.mxu0 %v640
  %758 = vmatprep.subr.mxu0 0.0
  %759 = vmatpush1.msra.mxu0 %v641
  %760 = vmatprep.subr.mxu0 0.0
  %761 = vmatpush1.msra.mxu0 %v642
  %762 = vmatprep.subr.mxu0 0.0
  %763 = vmatpush1.msra.mxu0 %v643
  %764 = vmatprep.subr.mxu0 0.0
  %765 = vmatpush1.msra.mxu0 %v644
  %766 = vmatprep.subr.mxu0 0.0
  %767 = vmatpush1.msra.mxu0 %v645
  %768 = vmatprep.subr.mxu0 0.0
  %769 = vmatpush1.msra.mxu0 %v646
  %770 = vmatprep.subr.mxu0 0.0
  %771 = vmatpush1.msra.mxu0 %v647
  %772 = vmatprep.subr.mxu0 0.0
  %773 = vmatpush1.msra.mxu0 %v648
  %774 = vmatprep.subr.mxu0 0.0
  %775 = vmatpush1.msra.mxu0 %v649
  %776 = vmatprep.subr.mxu0 0.0
  %777 = vmatpush1.msra.mxu0 %v650
  %778 = vmatprep.subr.mxu0 0.0
  %779 = vmatpush1.msra.mxu0 0.0
  %780 = vmatprep.subr.mxu0 0.0
  %781 = vmatpush1.msra.mxu0 0.0
  %782 = vmatprep.subr.mxu0 0.0
  %783 = vmatpush1.msra.mxu0 0.0
  %784 = vmatprep.subr.mxu0 0.0
  %785 = vmatpush1.msra.mxu0 0.0
  %786 = vmatprep.subr.mxu0 0.0
  %787 = vmatpush1.msra.mxu0 0.0
  %788 = vmatprep.subr.mxu0 0.0
  %789 = vmatpush1.msra.mxu0 0.0
  %790 = vmatprep.subr.mxu0 0.0
  %791 = vmatpush1.msra.mxu0 0.0
  %792 = vmatprep.subr.mxu0 0.0
  %793 = vmatpush1.msra.mxu0 0.0
  %794 = vmatprep.subr.mxu0 0.0
  %795 = vmatpush1.msra.mxu0 0.0
  %796 = vmatprep.subr.mxu0 0.0
  %797 = vmatpush1.msra.mxu0 0.0
  %798 = vmatprep.subr.mxu0 0.0
  %799 = vmatpush1.msra.mxu0 0.0
  %800 = vmatprep.subr.mxu0 0.0
  %801 = vmatpush1.msra.mxu0 0.0
  %802 = vmatprep.subr.mxu0 0.0
  %803 = vmatpush1.msra.mxu0 0.0
  %804 = vmatprep.subr.mxu0 0.0
  %805 = vmatpush1.msra.mxu0 0.0
  %806 = vmatprep.subr.mxu0 0.0
  %807 = vmatpush1.msra.mxu0 0.0
  %808 = vmatprep.subr.mxu0 0.0
  %809 = vmatpush1.msra.mxu0 0.0
  %810 = vmatprep.mubr.f32.mxu0 0.0
  %811 = vmatmul.mubr.f32.gmra.mrb[0].mxu0 %v586
  %v812 = vpop.f32.mrb[0].mxu0
  %v813 = vadd.f32 %v718, %v812
  %v814 = vpop.f32.mrb[0].mxu0
  %815 = vmatprep.mubr.f32.mxu0 0.0
  %816 = vmatmul.mubr.f32.gmra.mrb[0].mxu0 %v589
  %v817 = vpop.f32.mrb[0].mxu0
  %v818 = vadd.f32 %v723, %v817
  %v819 = vpop.f32.mrb[0].mxu0
  %820 = vmatprep.mubr.f32.mxu0 0.0
  %821 = vmatmul.mubr.f32.gmra.mrb[0].mxu0 %v592
  %v822 = vpop.f32.mrb[0].mxu0
  %v823 = vadd.f32 %v728, %v822
  %v824 = vpop.f32.mrb[0].mxu0
  %825 = vmatprep.mubr.f32.mxu0 0.0
  %826 = vmatmul.mubr.f32.gmra.mrb[0].mxu0 %v595
  %v827 = vpop.f32.mrb[0].mxu0
  %v828 = vadd.f32 %v733, %v827
  %v829 = vpop.f32.mrb[0].mxu0
  %830 = vmatprep.mubr.f32.mxu0 0.0
  %831 = vmatmul.mubr.f32.gmra.mrb[0].mxu0 %v598
  %v832 = vpop.f32.mrb[0].mxu0
  %v833 = vadd.f32 %v738, %v832
  %v834 = vpop.f32.mrb[0].mxu0
  %835 = vmatprep.mubr.f32.mxu0 0.0
  %836 = vmatmul.mubr.f32.gmra.mrb[0].mxu0 %v601
  %v837 = vpop.f32.mrb[0].mxu0
  %v838 = vadd.f32 %v743, %v837
  %v839 = vpop.f32.mrb[0].mxu0
  %840 = vdwg.mxu0
  %s841 = scalar_lea.vmem %s5, 96
  %842 = vst [vmem:[%s841] sm:$0xff] %v813
  %843 = vst [vmem:[%s841 + $0x8] sm:$0xff] %v818
  %844 = vst [vmem:[%s841 + $0x10] sm:$0xff] %v823
  %845 = vst [vmem:[%s841 + $0x18] sm:$0xff] %v828
  %846 = vst [vmem:[%s841 + $0x20] sm:$0xff] %v833
  %847 = vst [vmem:[%s841 + $0x28] sm:$0xff] %v838
  %s848 = scalar_lea.vmem %s0, 432
  %v849 = vld [vmem:[%s848] sm:$0xff]
  %v850 = vld [vmem:[%s848 + $0x8] sm:$0xff]
  %v851 = vld [vmem:[%s848 + $0x10] sm:$0xff]
  %v852 = vld [vmem:[%s848 + $0x18] sm:$0xff]
  %v853 = vld [vmem:[%s848 + $0x20] sm:$0xff]
  %v854 = vld [vmem:[%s848 + $0x28] sm:$0xff]
  %v855 = vld [vmem:[%s848 + $0x30] sm:$0xff]
  %v856 = vld [vmem:[%s848 + $0x38] sm:$0xff]
  %v857 = vld [vmem:[%s848 + $0x40] sm:$0xff]
  %v858 = vld [vmem:[%s848 + $0x48] sm:$0xff]
  %v859 = vld [vmem:[%s848 + $0x50] sm:$0xff]
  %v860 = vld [vmem:[%s848 + $0x58] sm:$0xff]
  %v861 = vld [vmem:[%s848 + $0x60] sm:$0xff]
  %v862 = vld [vmem:[%s848 + $0x68] sm:$0xff]
  %v863 = vld [vmem:[%s848 + $0x70] sm:$0xff]
  %v864 = vld [vmem:[%s848 + $0x78] sm:$0xff]
  %v865 = vld [vmem:[%s848 + $0x80] sm:$0xff]
  %v866 = vld [vmem:[%s848 + $0x88] sm:$0xff]
  %s867 = scalar_lea.vmem %s1, 1152
  %v868 = vld [vmem:[%s867] sm:$0xff]
  %v869 = vld [vmem:[%s867 + $0x8] sm:$0xff]
  %v870 = vld [vmem:[%s867 + $0x10] sm:$0xff]
  %v871 = vld [vmem:[%s867 + $0x18] sm:$0xff]
  %v872 = vld [vmem:[%s867 + $0x20] sm:$0xff]
  %v873 = vld [vmem:[%s867 + $0x28] sm:$0xff]
  %v874 = vld [vmem:[%s867 + $0x30] sm:$0xff]
  %v875 = vld [vmem:[%s867 + $0x38] sm:$0xff]
  %v876 = vld [vmem:[%s867 + $0x40] sm:$0xff]
  %v877 = vld [vmem:[%s867 + $0x48] sm:$0xff]
  %v878 = vld [vmem:[%s867 + $0x50] sm:$0xff]
  %v879 = vld [vmem:[%s867 + $0x58] sm:$0xff]
  %v880 = vld [vmem:[%s867 + $0x60] sm:$0xff]
  %v881 = vld [vmem:[%s867 + $0x68] sm:$0xff]
  %v882 = vld [vmem:[%s867 + $0x70] sm:$0xff]
  %v883 = vld [vmem:[%s867 + $0x78] sm:$0xff]
  %v884 = vld [vmem:[%s867 + $0x80] sm:$0xff]
  %v885 = vld [vmem:[%s867 + $0x88] sm:$0xff]
  %v886 = vld [vmem:[%s867 + $0x90] sm:$0xff]
  %v887 = vld [vmem:[%s867 + $0x98] sm:$0xff]
  %v888 = vld [vmem:[%s867 + $0xa0] sm:$0xff]
  %v889 = vld [vmem:[%s867 + $0xa8] sm:$0xff]
  %v890 = vld [vmem:[%s867 + $0xb0] sm:$0xff]
  %v891 = vld [vmem:[%s867 + $0xb8] sm:$0xff]
  %v892 = vld [vmem:[%s867 + $0xc0] sm:$0xff]
  %v893 = vld [vmem:[%s867 + $0xc8] sm:$0xff]
  %v894 = vld [vmem:[%s867 + $0xd0] sm:$0xff]
  %v895 = vld [vmem:[%s867 + $0xd8] sm:$0xff]
  %v896 = vld [vmem:[%s867 + $0xe0] sm:$0xff]
  %v897 = vld [vmem:[%s867 + $0xe8] sm:$0xff]
  %v898 = vld [vmem:[%s867 + $0xf0] sm:$0xff]
  %v899 = vld [vmem:[%s867 + $0xf8] sm:$0xff]
  %v900 = vld [vmem:[%s867 + $0x100] sm:$0xff]
  %v901 = vld [vmem:[%s867 + $0x108] sm:$0xff]
  %v902 = vld [vmem:[%s867 + $0x110] sm:$0xff]
  %v903 = vld [vmem:[%s867 + $0x118] sm:$0xff]
  %v904 = vld [vmem:[%s867 + $0x120] sm:$0xff]
  %v905 = vld [vmem:[%s867 + $0x128] sm:$0xff]
  %v906 = vld [vmem:[%s867 + $0x130] sm:$0xff]
  %v907 = vld [vmem:[%s867 + $0x138] sm:$0xff]
  %v908 = vld [vmem:[%s867 + $0x140] sm:$0xff]
  %v909 = vld [vmem:[%s867 + $0x148] sm:$0xff]
  %v910 = vld [vmem:[%s867 + $0x150] sm:$0xff]
  %v911 = vld [vmem:[%s867 + $0x158] sm:$0xff]
  %v912 = vld [vmem:[%s867 + $0x160] sm:$0xff]
  %v913 = vld [vmem:[%s867 + $0x168] sm:$0xff]
  %v914 = vld [vmem:[%s867 + $0x170] sm:$0xff]
  %v915 = vld [vmem:[%s867 + $0x178] sm:$0xff]
  %916 = vmatprep.subr.mxu0 0.0
  %917 = vmatpush1.msra.mxu0 %v868
  %918 = vmatprep.subr.mxu0 0.0
  %919 = vmatpush1.msra.mxu0 %v869
  %920 = vmatprep.subr.mxu0 0.0
  %921 = vmatpush1.msra.mxu0 %v870
  %922 = vmatprep.subr.mxu0 0.0
  %923 = vmatpush1.msra.mxu0 %v871
  %924 = vmatprep.subr.mxu0 0.0
  %925 = vmatpush1.msra.mxu0 %v872
  %926 = vmatprep.subr.mxu0 0.0
  %927 = vmatpush1.msra.mxu0 %v873
  %928 = vmatprep.subr.mxu0 0.0
  %929 = vmatpush1.msra.mxu0 %v874
  %930 = vmatprep.subr.mxu0 0.0
  %931 = vmatpush1.msra.mxu0 %v875
  %932 = vmatprep.subr.mxu0 0.0
  %933 = vmatpush1.msra.mxu0 %v876
  %934 = vmatprep.subr.mxu0 0.0
  %935 = vmatpush1.msra.mxu0 %v877
  %936 = vmatprep.subr.mxu0 0.0
  %937 = vmatpush1.msra.mxu0 %v878
  %938 = vmatprep.subr.mxu0 0.0
  %939 = vmatpush1.msra.mxu0 %v879
  %940 = vmatprep.subr.mxu0 0.0
  %941 = vmatpush1.msra.mxu0 %v880
  %942 = vmatprep.subr.mxu0 0.0
  %943 = vmatpush1.msra.mxu0 %v881
  %944 = vmatprep.subr.mxu0 0.0
  %945 = vmatpush1.msra.mxu0 %v882
  %946 = vmatprep.subr.mxu0 0.0
  %947 = vmatpush1.msra.mxu0 %v883
  %948 = vmatprep.subr.mxu0 0.0
  %949 = vmatpush1.msra.mxu0 %v884
  %950 = vmatprep.subr.mxu0 0.0
  %951 = vmatpush1.msra.mxu0 %v885
  %952 = vmatprep.subr.mxu0 0.0
  %953 = vmatpush1.msra.mxu0 %v886
  %954 = vmatprep.subr.mxu0 0.0
  %955 = vmatpush1.msra.mxu0 %v887
  %956 = vmatprep.subr.mxu0 0.0
  %957 = vmatpush1.msra.mxu0 %v888
  %958 = vmatprep.subr.mxu0 0.0
  %959 = vmatpush1.msra.mxu0 %v889
  %960 = vmatprep.subr.mxu0 0.0
  %961 = vmatpush1.msra.mxu0 %v890
  %962 = vmatprep.subr.mxu0 0.0
  %963 = vmatpush1.msra.mxu0 %v891
  %964 = vmatprep.subr.mxu0 0.0
  %965 = vmatpush1.msra.mxu0 %v892
  %966 = vmatprep.subr.mxu0 0.0
  %967 = vmatpush1.msra.mxu0 %v893
  %968 = vmatprep.subr.mxu0 0.0
  %969 = vmatpush1.msra.mxu0 %v894
  %970 = vmatprep.subr.mxu0 0.0
  %971 = vmatpush1.msra.mxu0 %v895
  %972 = vmatprep.subr.mxu0 0.0
  %973 = vmatpush1.msra.mxu0 %v896
  %974 = vmatprep.subr.mxu0 0.0
  %975 = vmatpush1.msra.mxu0 %v897
  %976 = vmatprep.subr.mxu0 0.0
  %977 = vmatpush1.msra.mxu0 %v898
  %978 = vmatprep.subr.mxu0 0.0
  %979 = vmatpush1.msra.mxu0 %v899
  %980 = vmatprep.mubr.f32.mxu0 %v850
  %981 = vmatmul.mubr.f32.gmra.mrb[0].mxu0 %v849
  %v982 = vpop.f32.mrb[0].mxu0
  %v983 = vadd.f32 %v95, %v982
  %v984 = vpop.f32.mrb[0].mxu0
  %985 = vmatprep.mubr.f32.mxu0 %v853
  %986 = vmatmul.mubr.f32.gmra.mrb[0].mxu0 %v852
  %v987 = vpop.f32.mrb[0].mxu0
  %v988 = vadd.f32 %v100, %v987
  %v989 = vpop.f32.mrb[0].mxu0
  %990 = vmatprep.mubr.f32.mxu0 %v856
  %991 = vmatmul.mubr.f32.gmra.mrb[0].mxu0 %v855
  %v992 = vpop.f32.mrb[0].mxu0
  %v993 = vadd.f32 %v105, %v992
  %v994 = vpop.f32.mrb[0].mxu0
  %995 = vmatprep.mubr.f32.mxu0 %v859
  %996 = vmatmul.mubr.f32.gmra.mrb[0].mxu0 %v858
  %v997 = vpop.f32.mrb[0].mxu0
  %v998 = vadd.f32 %v110, %v997
  %v999 = vpop.f32.mrb[0].mxu0
  %1000 = vmatprep.mubr.f32.mxu0 %v862
  %1001 = vmatmul.mubr.f32.gmra.mrb[0].mxu0 %v861
  %v1002 = vpop.f32.mrb[0].mxu0
  %v1003 = vadd.f32 %v115, %v1002
  %v1004 = vpop.f32.mrb[0].mxu0
  %1005 = vmatprep.mubr.f32.mxu0 %v865
  %1006 = vmatmul.mubr.f32.gmra.mrb[0].mxu0 %v864
  %v1007 = vpop.f32.mrb[0].mxu0
  %v1008 = vadd.f32 %v120, %v1007
  %v1009 = vpop.f32.mrb[0].mxu0
  %1010 = vdwg.mxu0
  %1011 = vmatprep.subr.mxu0 0.0
  %1012 = vmatpush1.msra.mxu0 %v900
  %1013 = vmatprep.subr.mxu0 0.0
  %1014 = vmatpush1.msra.mxu0 %v901
  %1015 = vmatprep.subr.mxu0 0.0
  %1016 = vmatpush1.msra.mxu0 %v902
  %1017 = vmatprep.subr.mxu0 0.0
  %1018 = vmatpush1.msra.mxu0 %v903
  %1019 = vmatprep.subr.mxu0 0.0
  %1020 = vmatpush1.msra.mxu0 %v904
  %1021 = vmatprep.subr.mxu0 0.0
  %1022 = vmatpush1.msra.mxu0 %v905
  %1023 = vmatprep.subr.mxu0 0.0
  %1024 = vmatpush1.msra.mxu0 %v906
  %1025 = vmatprep.subr.mxu0 0.0
  %1026 = vmatpush1.msra.mxu0 %v907
  %1027 = vmatprep.subr.mxu0 0.0
  %1028 = vmatpush1.msra.mxu0 %v908
  %1029 = vmatprep.subr.mxu0 0.0
  %1030 = vmatpush1.msra.mxu0 %v909
  %1031 = vmatprep.subr.mxu0 0.0
  %1032 = vmatpush1.msra.mxu0 %v910
  %1033 = vmatprep.subr.mxu0 0.0
  %1034 = vmatpush1.msra.mxu0 %v911
  %1035 = vmatprep.subr.mxu0 0.0
  %1036 = vmatpush1.msra.mxu0 %v912
  %1037 = vmatprep.subr.mxu0 0.0
  %1038 = vmatpush1.msra.mxu0 %v913
  %1039 = vmatprep.subr.mxu0 0.0
  %1040 = vmatpush1.msra.mxu0 %v914
  %1041 = vmatprep.subr.mxu0 0.0
  %1042 = vmatpush1.msra.mxu0 %v915
  %1043 = vmatprep.subr.mxu0 0.0
  %1044 = vmatpush1.msra.mxu0 0.0
  %1045 = vmatprep.subr.mxu0 0.0
  %1046 = vmatpush1.msra.mxu0 0.0
  %1047 = vmatprep.subr.mxu0 0.0
  %1048 = vmatpush1.msra.mxu0 0.0
  %1049 = vmatprep.subr.mxu0 0.0
  %1050 = vmatpush1.msra.mxu0 0.0
  %1051 = vmatprep.subr.mxu0 0.0
  %1052 = vmatpush1.msra.mxu0 0.0
  %1053 = vmatprep.subr.mxu0 0.0
  %1054 = vmatpush1.msra.mxu0 0.0
  %1055 = vmatprep.subr.mxu0 0.0
  %1056 = vmatpush1.msra.mxu0 0.0
  %1057 = vmatprep.subr.mxu0 0.0
  %1058 = vmatpush1.msra.mxu0 0.0
  %1059 = vmatprep.subr.mxu0 0.0
  %1060 = vmatpush1.msra.mxu0 0.0
  %1061 = vmatprep.subr.mxu0 0.0
  %1062 = vmatpush1.msra.mxu0 0.0
  %1063 = vmatprep.subr.mxu0 0.0
  %1064 = vmatpush1.msra.mxu0 0.0
  %1065 = vmatprep.subr.mxu0 0.0
  %1066 = vmatpush1.msra.mxu0 0.0
  %1067 = vmatprep.subr.mxu0 0.0
  %1068 = vmatpush1.msra.mxu0 0.0
  %1069 = vmatprep.subr.mxu0 0.0
  %1070 = vmatpush1.msra.mxu0 0.0
  %1071 = vmatprep.subr.mxu0 0.0
  %1072 = vmatpush1.msra.mxu0 0.0
  %1073 = vmatprep.subr.mxu0 0.0
  %1074 = vmatpush1.msra.mxu0 0.0
  %1075 = vmatprep.mubr.f32.mxu0 0.0
  %1076 = vmatmul.mubr.f32.gmra.mrb[0].mxu0 %v851
  %v1077 = vpop.f32.mrb[0].mxu0
  %v1078 = vadd.f32 %v983, %v1077
  %v1079 = vpop.f32.mrb[0].mxu0
  %1080 = vmatprep.mubr.f32.mxu0 0.0
  %1081 = vmatmul.mubr.f32.gmra.mrb[0].mxu0 %v854
  %v1082 = vpop.f32.mrb[0].mxu0
  %v1083 = vadd.f32 %v988, %v1082
  %v1084 = vpop.f32.mrb[0].mxu0
  %1085 = vmatprep.mubr.f32.mxu0 0.0
  %1086 = vmatmul.mubr.f32.gmra.mrb[0].mxu0 %v857
  %v1087 = vpop.f32.mrb[0].mxu0
  %v1088 = vadd.f32 %v993, %v1087
  %v1089 = vpop.f32.mrb[0].mxu0
  %1090 = vmatprep.mubr.f32.mxu0 0.0
  %1091 = vmatmul.mubr.f32.gmra.mrb[0].mxu0 %v860
  %v1092 = vpop.f32.mrb[0].mxu0
  %v1093 = vadd.f32 %v998, %v1092
  %v1094 = vpop.f32.mrb[0].mxu0
  %1095 = vmatprep.mubr.f32.mxu0 0.0
  %1096 = vmatmul.mubr.f32.gmra.mrb[0].mxu0 %v863
  %v1097 = vpop.f32.mrb[0].mxu0
  %v1098 = vadd.f32 %v1003, %v1097
  %v1099 = vpop.f32.mrb[0].mxu0
  %1100 = vmatprep.mubr.f32.mxu0 0.0
  %1101 = vmatmul.mubr.f32.gmra.mrb[0].mxu0 %v866
  %v1102 = vpop.f32.mrb[0].mxu0
  %v1103 = vadd.f32 %v1008, %v1102
  %v1104 = vpop.f32.mrb[0].mxu0
  %1105 = vdwg.mxu0
  %s1106 = scalar_lea.vmem %s5, 144
  %1107 = vst [vmem:[%s1106] sm:$0xff] %v1078
  %1108 = vst [vmem:[%s1106 + $0x8] sm:$0xff] %v1083
  %1109 = vst [vmem:[%s1106 + $0x10] sm:$0xff] %v1088
  %1110 = vst [vmem:[%s1106 + $0x18] sm:$0xff] %v1093
  %1111 = vst [vmem:[%s1106 + $0x20] sm:$0xff] %v1098
  %1112 = vst [vmem:[%s1106 + $0x28] sm:$0xff] %v1103
  %v1113 = vld [vmem:[%s5] sm:$0xff]
  %v1114 = vld [vmem:[%s5 + $0x8] sm:$0xff]
  %v1115 = vld [vmem:[%s5 + $0x10] sm:$0xff]
  %v1116 = vld [vmem:[%s5 + $0x18] sm:$0xff]
  %v1117 = vld [vmem:[%s5 + $0x20] sm:$0xff]
  %v1118 = vld [vmem:[%s5 + $0x28] sm:$0xff]
  %v1119 = vld [vmem:[%s5 + $0x30] sm:$0xff]
  %v1120 = vld [vmem:[%s5 + $0x38] sm:$0xff]
  %v1121 = vld [vmem:[%s5 + $0x40] sm:$0xff]
  %v1122 = vld [vmem:[%s5 + $0x48] sm:$0xff]
  %v1123 = vld [vmem:[%s5 + $0x50] sm:$0xff]
  %v1124 = vld [vmem:[%s5 + $0x58] sm:$0xff]
  %v1125 = vld [vmem:[%s5 + $0x60] sm:$0xff]
  %v1126 = vld [vmem:[%s5 + $0x68] sm:$0xff]
  %v1127 = vld [vmem:[%s5 + $0x70] sm:$0xff]
  %v1128 = vld [vmem:[%s5 + $0x78] sm:$0xff]
  %v1129 = vld [vmem:[%s5 + $0x80] sm:$0xff]
  %v1130 = vld [vmem:[%s5 + $0x88] sm:$0xff]
  %v1131 = vld [vmem:[%s5 + $0x90] sm:$0xff]
  %v1132 = vld [vmem:[%s5 + $0x98] sm:$0xff]
  %v1133 = vld [vmem:[%s5 + $0xa0] sm:$0xff]
  %v1134 = vld [vmem:[%s5 + $0xa8] sm:$0xff]
  %v1135 = vld [vmem:[%s5 + $0xb0] sm:$0xff]
  %v1136 = vld [vmem:[%s5 + $0xb8] sm:$0xff]
  %1137 = vadd.xlane.f32.xlu0 %v1113
  %v1138 = vpop.xlane.xlu0 %1137
  %1139 = vadd.xlane.f32.xlu0 %v1114
  %v1140 = vpop.xlane.xlu0 %1139
  %1141 = vadd.xlane.f32.xlu0 %v1115
  %v1142 = vpop.xlane.xlu0 %1141
  %1143 = vadd.xlane.f32.xlu0 %v1116
  %v1144 = vpop.xlane.xlu0 %1143
  %1145 = vadd.xlane.f32.xlu0 %v1117
  %v1146 = vpop.xlane.xlu0 %1145
  %1147 = vadd.xlane.f32.xlu0 %v1118
  %v1148 = vpop.xlane.xlu0 %1147
  %1149 = vadd.xlane.f32.xlu0 %v1119
  %v1150 = vpop.xlane.xlu0 %1149
  %1151 = vadd.xlane.f32.xlu0 %v1120
  %v1152 = vpop.xlane.xlu0 %1151
  %1153 = vadd.xlane.f32.xlu0 %v1121
  %v1154 = vpop.xlane.xlu0 %1153
  %1155 = vadd.xlane.f32.xlu0 %v1122
  %v1156 = vpop.xlane.xlu0 %1155
  %1157 = vadd.xlane.f32.xlu0 %v1123
  %v1158 = vpop.xlane.xlu0 %1157
  %1159 = vadd.xlane.f32.xlu0 %v1124
  %v1160 = vpop.xlane.xlu0 %1159
  %1161 = vadd.xlane.f32.xlu0 %v1125
  %v1162 = vpop.xlane.xlu0 %1161
  %1163 = vadd.xlane.f32.xlu0 %v1126
  %v1164 = vpop.xlane.xlu0 %1163
  %1165 = vadd.xlane.f32.xlu0 %v1127
  %v1166 = vpop.xlane.xlu0 %1165
  %1167 = vadd.xlane.f32.xlu0 %v1128
  %v1168 = vpop.xlane.xlu0 %1167
  %1169 = vadd.xlane.f32.xlu0 %v1129
  %v1170 = vpop.xlane.xlu0 %1169
  %1171 = vadd.xlane.f32.xlu0 %v1130
  %v1172 = vpop.xlane.xlu0 %1171
  %1173 = vadd.xlane.f32.xlu0 %v1131
  %v1174 = vpop.xlane.xlu0 %1173
  %1175 = vadd.xlane.f32.xlu0 %v1132
  %v1176 = vpop.xlane.xlu0 %1175
  %1177 = vadd.xlane.f32.xlu0 %v1133
  %v1178 = vpop.xlane.xlu0 %1177
  %1179 = vadd.xlane.f32.xlu0 %v1134
  %v1180 = vpop.xlane.xlu0 %1179
  %1181 = vadd.xlane.f32.xlu0 %v1135
  %v1182 = vpop.xlane.xlu0 %1181
  %1183 = vadd.xlane.f32.xlu0 %v1136
  %v1184 = vpop.xlane.xlu0 %1183
  %v1185 = vadd.f32 %v1138, %v1150
  %v1186 = vadd.f32 %v1185, %v1162
  %v1187 = vadd.f32 %v1186, %v1174
  %v1188 = vadd.f32 %v1140, %v1152
  %v1189 = vadd.f32 %v1188, %v1164
  %v1190 = vadd.f32 %v1189, %v1176
  %v1191 = vadd.f32 %v1142, %v1154
  %v1192 = vadd.f32 %v1191, %v1166
  %v1193 = vadd.f32 %v1192, %v1178
  %v1194 = vadd.f32 %v1144, %v1156
  %v1195 = vadd.f32 %v1194, %v1168
  %v1196 = vadd.f32 %v1195, %v1180
  %v1197 = vadd.f32 %v1146, %v1158
  %v1198 = vadd.f32 %v1197, %v1170
  %v1199 = vadd.f32 %v1198, %v1182
  %v1200 = vadd.f32 %v1148, %v1160
  %v1201 = vadd.f32 %v1200, %v1172
  %v1202 = vadd.f32 %v1201, %v1184
  %v1203 = vmul.f32 %v1187, 0.001953125
  %v1204 = vmul.f32 %v1190, 0.001953125
  %v1205 = vmul.f32 %v1193, 0.001953125
  %v1206 = vmul.f32 %v1196, 0.001953125
  %v1207 = vmul.f32 %v1199, 0.001953125
  %v1208 = vmul.f32 %v1202, 0.001953125
  %v1209 = vsub.f32 %v1113, %v1203
  %v1210 = vsub.f32 %v1114, %v1204
  %v1211 = vsub.f32 %v1115, %v1205
  %v1212 = vsub.f32 %v1116, %v1206
  %v1213 = vsub.f32 %v1117, %v1207
  %v1214 = vsub.f32 %v1118, %v1208
  %v1215 = vsub.f32 %v1119, %v1203
  %v1216 = vsub.f32 %v1120, %v1204
  %v1217 = vsub.f32 %v1121, %v1205
  %v1218 = vsub.f32 %v1122, %v1206
  %v1219 = vsub.f32 %v1123, %v1207
  %v1220 = vsub.f32 %v1124, %v1208
  %v1221 = vsub.f32 %v1125, %v1203
  %v1222 = vsub.f32 %v1126, %v1204
  %v1223 = vsub.f32 %v1127, %v1205
  %v1224 = vsub.f32 %v1128, %v1206
  %v1225 = vsub.f32 %v1129, %v1207
  %v1226 = vsub.f32 %v1130, %v1208
  %v1227 = vsub.f32 %v1131, %v1203
  %v1228 = vsub.f32 %v1132, %v1204
  %v1229 = vsub.f32 %v1133, %v1205
  %v1230 = vsub.f32 %v1134, %v1206
  %v1231 = vsub.f32 %v1135, %v1207
  %v1232 = vsub.f32 %v1136, %v1208
  %v1233 = vmul.f32 %v1209, %v1209
  %v1234 = vmul.f32 %v1210, %v1210
  %v1235 = vmul.f32 %v1211, %v1211
  %v1236 = vmul.f32 %v1212, %v1212
  %v1237 = vmul.f32 %v1213, %v1213
  %v1238 = vmul.f32 %v1214, %v1214
  %v1239 = vmul.f32 %v1215, %v1215
  %v1240 = vmul.f32 %v1216, %v1216
  %v1241 = vmul.f32 %v1217, %v1217
  %v1242 = vmul.f32 %v1218, %v1218
  %v1243 = vmul.f32 %v1219, %v1219
  %v1244 = vmul.f32 %v1220, %v1220
  %v1245 = vmul.f32 %v1221, %v1221
  %v1246 = vmul.f32 %v1222, %v1222
  %v1247 = vmul.f32 %v1223, %v1223
  %v1248 = vmul.f32 %v1224, %v1224
  %v1249 = vmul.f32 %v1225, %v1225
  %v1250 = vmul.f32 %v1226, %v1226
  %v1251 = vmul.f32 %v1227, %v1227
  %v1252 = vmul.f32 %v1228, %v1228
  %v1253 = vmul.f32 %v1229, %v1229
  %v1254 = vmul.f32 %v1230, %v1230
  %v1255 = vmul.f32 %v1231, %v1231
  %v1256 = vmul.f32 %v1232, %v1232
  %1257 = vadd.xlane.f32.xlu0 %v1233
  %v1258 = vpop.xlane.xlu0 %1257
  %1259 = vadd.xlane.f32.xlu0 %v1234
  %v1260 = vpop.xlane.xlu0 %1259
  %1261 = vadd.xlane.f32.xlu0 %v1235
  %v1262 = vpop.xlane.xlu0 %1261
  %1263 = vadd.xlane.f32.xlu0 %v1236
  %v1264 = vpop.xlane.xlu0 %1263
  %1265 = vadd.xlane.f32.xlu0 %v1237
  %v1266 = vpop.xlane.xlu0 %1265
  %1267 = vadd.xlane.f32.xlu0 %v1238
  %v1268 = vpop.xlane.xlu0 %1267
  %1269 = vadd.xlane.f32.xlu0 %v1239
  %v1270 = vpop.xlane.xlu0 %1269
  %1271 = vadd.xlane.f32.xlu0 %v1240
  %v1272 = vpop.xlane.xlu0 %1271
  %1273 = vadd.xlane.f32.xlu0 %v1241
  %v1274 = vpop.xlane.xlu0 %1273
  %1275 = vadd.xlane.f32.xlu0 %v1242
  %v1276 = vpop.xlane.xlu0 %1275
  %1277 = vadd.xlane.f32.xlu0 %v1243
  %v1278 = vpop.xlane.xlu0 %1277
  %1279 = vadd.xlane.f32.xlu0 %v1244
  %v1280 = vpop.xlane.xlu0 %1279
  %1281 = vadd.xlane.f32.xlu0 %v1245
  %v1282 = vpop.xlane.xlu0 %1281
  %1283 = vadd.xlane.f32.xlu0 %v1246
  %v1284 = vpop.xlane.xlu0 %1283
  %1285 = vadd.xlane.f32.xlu0 %v1247
  %v1286 = vpop.xlane.xlu0 %1285
  %1287 = vadd.xlane.f32.xlu0 %v1248
  %v1288 = vpop.xlane.xlu0 %1287
  %1289 = vadd.xlane.f32.xlu0 %v1249
  %v1290 = vpop.xlane.xlu0 %1289
  %1291 = vadd.xlane.f32.xlu0 %v1250
  %v1292 = vpop.xlane.xlu0 %1291
  %1293 = vadd.xlane.f32.xlu0 %v1251
  %v1294 = vpop.xlane.xlu0 %1293
  %1295 = vadd.xlane.f32.xlu0 %v1252
  %v1296 = vpop.xlane.xlu0 %1295
  %1297 = vadd.xlane.f32.xlu0 %v1253
  %v1298 = vpop.xlane.xlu0 %1297
  %1299 = vadd.xlane.f32.xlu0 %v1254
  %v1300 = vpop.xlane.xlu0 %1299
  %1301 = vadd.xlane.f32.xlu0 %v1255
  %v1302 = vpop.xlane.xlu0 %1301
  %1303 = vadd.xlane.f32.xlu0 %v1256
  %v1304 = vpop.xlane.xlu0 %1303
  %v1305 = vadd.f32 %v1258, %v1270
  %v1306 = vadd.f32 %v1305, %v1282
  %v1307 = vadd.f32 %v1306, %v1294
  %v1308 = vadd.f32 %v1260, %v1272
  %v1309 = vadd.f32 %v1308, %v1284
  %v1310 = vadd.f32 %v1309, %v1296
  %v1311 = vadd.f32 %v1262, %v1274
  %v1312 = vadd.f32 %v1311, %v1286
  %v1313 = vadd.f32 %v1312, %v1298
  %v1314 = vadd.f32 %v1264, %v1276
  %v1315 = vadd.f32 %v1314, %v1288
  %v1316 = vadd.f32 %v1315, %v1300
  %v1317 = vadd.f32 %v1266, %v1278
  %v1318 = vadd.f32 %v1317, %v1290
  %v1319 = vadd.f32 %v1318, %v1302
  %v1320 = vadd.f32 %v1268, %v1280
  %v1321 = vadd.f32 %v1320, %v1292
  %v1322 = vadd.f32 %v1321, %v1304
  %v1323 = vmul.f32 %v1307, 0.001953125
  %v1324 = vmul.f32 %v1310, 0.001953125
  %v1325 = vmul.f32 %v1313, 0.001953125
  %v1326 = vmul.f32 %v1316, 0.001953125
  %v1327 = vmul.f32 %v1319, 0.001953125
  %v1328 = vmul.f32 %v1322, 0.001953125
  %v1329 = vld [vmem:[%s3] sm:$0xff]
  %v1330 = vld [vmem:[%s3 + $0x8] sm:$0xff]
  %v1331 = vld [vmem:[%s3 + $0x10] sm:$0xff]
  %v1332 = vld [vmem:[%s3 + $0x18] sm:$0xff]
  %v1333 = vld [vmem:[%s3 + $0x20] sm:$0xff]
  %v1334 = vld [vmem:[%s3 + $0x28] sm:$0xff]
  %v1335 = vadd.f32 %v1323, 1e-05
  %v1336 = vadd.f32 %v1324, 1e-05
  %v1337 = vadd.f32 %v1325, 1e-05
  %v1338 = vadd.f32 %v1326, 1e-05
  %v1339 = vadd.f32 %v1327, 1e-05
  %v1340 = vadd.f32 %v1328, 1e-05
  %v1341 = vrsqrt.pop %v1335
  %v1342 = vrsqrt.pop %v1336
  %v1343 = vrsqrt.pop %v1337
  %v1344 = vrsqrt.pop %v1338
  %v1345 = vrsqrt.pop %v1339
  %v1346 = vrsqrt.pop %v1340
  %v1347 = vmul.f32 %v1329, %v1341
  %v1348 = vmul.f32 %v1330, %v1342
  %v1349 = vmul.f32 %v1331, %v1343
  %v1350 = vmul.f32 %v1332, %v1344
  %v1351 = vmul.f32 %v1333, %v1345
  %v1352 = vmul.f32 %v1334, %v1346
  %1354 = vset.pattern.permute.xlu0 0
  %1355 = vperm.xlu0 %1354, %v1347
  %v1356 = vpop.permute.xlu0 %1355
  %1359 = vset.pattern.permute.xlu0 0
  %1360 = vperm.xlu0 %1359, %v1348
  %v1361 = vpop.permute.xlu0 %1360
  %1364 = vset.pattern.permute.xlu0 0
  %1365 = vperm.xlu0 %1364, %v1349
  %v1366 = vpop.permute.xlu0 %1365
  %1369 = vset.pattern.permute.xlu0 0
  %1370 = vperm.xlu0 %1369, %v1350
  %v1371 = vpop.permute.xlu0 %1370
  %1374 = vset.pattern.permute.xlu0 0
  %1375 = vperm.xlu0 %1374, %v1351
  %v1376 = vpop.permute.xlu0 %1375
  %1379 = vset.pattern.permute.xlu0 0
  %1380 = vperm.xlu0 %1379, %v1352
  %v1381 = vpop.permute.xlu0 %1380
  %v1383 = vmul.f32 %v1209, %v1356
  %v1384 = vmul.f32 %v1210, %v1361
  %v1385 = vmul.f32 %v1211, %v1366
  %v1386 = vmul.f32 %v1212, %v1371
  %v1387 = vmul.f32 %v1213, %v1376
  %v1388 = vmul.f32 %v1214, %v1381
  %v1389 = vmul.f32 %v1215, %v1356
  %v1390 = vmul.f32 %v1216, %v1361
  %v1391 = vmul.f32 %v1217, %v1366
  %v1392 = vmul.f32 %v1218, %v1371
  %v1393 = vmul.f32 %v1219, %v1376
  %v1394 = vmul.f32 %v1220, %v1381
  %v1395 = vmul.f32 %v1221, %v1356
  %v1396 = vmul.f32 %v1222, %v1361
  %v1397 = vmul.f32 %v1223, %v1366
  %v1398 = vmul.f32 %v1224, %v1371
  %v1399 = vmul.f32 %v1225, %v1376
  %v1400 = vmul.f32 %v1226, %v1381
  %v1401 = vmul.f32 %v1227, %v1356
  %v1402 = vmul.f32 %v1228, %v1361
  %v1403 = vmul.f32 %v1229, %v1366
  %v1404 = vmul.f32 %v1230, %v1371
  %v1405 = vmul.f32 %v1231, %v1376
  %v1406 = vmul.f32 %v1232, %v1381
  %v1407 = vld [vmem:[%s4] sm:$0xff]
  %v1408 = vld [vmem:[%s4 + $0x8] sm:$0xff]
  %v1409 = vld [vmem:[%s4 + $0x10] sm:$0xff]
  %v1410 = vld [vmem:[%s4 + $0x18] sm:$0xff]
  %v1411 = vld [vmem:[%s4 + $0x20] sm:$0xff]
  %v1412 = vld [vmem:[%s4 + $0x28] sm:$0xff]
  %1414 = vset.pattern.permute.xlu0 0
  %1415 = vperm.xlu0 %1414, %v1407
  %v1416 = vpop.permute.xlu0 %1415
  %1419 = vset.pattern.permute.xlu0 0
  %1420 = vperm.xlu0 %1419, %v1408
  %v1421 = vpop.permute.xlu0 %1420
  %1424 = vset.pattern.permute.xlu0 0
  %1425 = vperm.xlu0 %1424, %v1409
  %v1426 = vpop.permute.xlu0 %1425
  %1429 = vset.pattern.permute.xlu0 0
  %1430 = vperm.xlu0 %1429, %v1410
  %v1431 = vpop.permute.xlu0 %1430
  %1434 = vset.pattern.permute.xlu0 0
  %1435 = vperm.xlu0 %1434, %v1411
  %v1436 = vpop.permute.xlu0 %1435
  %1439 = vset.pattern.permute.xlu0 0
  %1440 = vperm.xlu0 %1439, %v1412
  %v1441 = vpop.permute.xlu0 %1440
  %v1443 = vadd.f32 %v1383, %v1416
  %v1444 = vadd.f32 %v1384, %v1421
  %v1445 = vadd.f32 %v1385, %v1426
  %v1446 = vadd.f32 %v1386, %v1431
  %v1447 = vadd.f32 %v1387, %v1436
  %v1448 = vadd.f32 %v1388, %v1441
  %v1449 = vadd.f32 %v1389, %v1416
  %v1450 = vadd.f32 %v1390, %v1421
  %v1451 = vadd.f32 %v1391, %v1426
  %v1452 = vadd.f32 %v1392, %v1431
  %v1453 = vadd.f32 %v1393, %v1436
  %v1454 = vadd.f32 %v1394, %v1441
  %v1455 = vadd.f32 %v1395, %v1416
  %v1456 = vadd.f32 %v1396, %v1421
  %v1457 = vadd.f32 %v1397, %v1426
  %v1458 = vadd.f32 %v1398, %v1431
  %v1459 = vadd.f32 %v1399, %v1436
  %v1460 = vadd.f32 %v1400, %v1441
  %v1461 = vadd.f32 %v1401, %v1416
  %v1462 = vadd.f32 %v1402, %v1421
  %v1463 = vadd.f32 %v1403, %v1426
  %v1464 = vadd.f32 %v1404, %v1431
  %v1465 = vadd.f32 %v1405, %v1436
  %v1466 = vadd.f32 %v1406, %v1441
  %v1467 = vmax.f32 %v1443, 0.0
  %v1468 = vmax.f32 %v1444, 0.0
  %v1469 = vmax.f32 %v1445, 0.0
  %v1470 = vmax.f32 %v1446, 0.0
  %v1471 = vmax.f32 %v1447, 0.0
  %v1472 = vmax.f32 %v1448, 0.0
  %v1473 = vmax.f32 %v1449, 0.0
  %v1474 = vmax.f32 %v1450, 0.0
  %v1475 = vmax.f32 %v1451, 0.0
  %v1476 = vmax.f32 %v1452, 0.0
  %v1477 = vmax.f32 %v1453, 0.0
  %v1478 = vmax.f32 %v1454, 0.0
  %v1479 = vmax.f32 %v1455, 0.0
  %v1480 = vmax.f32 %v1456, 0.0
  %v1481 = vmax.f32 %v1457, 0.0
  %v1482 = vmax.f32 %v1458, 0.0
  %v1483 = vmax.f32 %v1459, 0.0
  %v1484 = vmax.f32 %v1460, 0.0
  %v1485 = vmax.f32 %v1461, 0.0
  %v1486 = vmax.f32 %v1462, 0.0
  %v1487 = vmax.f32 %v1463, 0.0
  %v1488 = vmax.f32 %v1464, 0.0
  %v1489 = vmax.f32 %v1465, 0.0
  %v1490 = vmax.f32 %v1466, 0.0
  %1491 = vst [vmem:[%s5] sm:$0xff] %v1467
  %1492 = vst [vmem:[%s5 + $0x8] sm:$0xff] %v1468
  %1493 = vst [vmem:[%s5 + $0x10] sm:$0xff] %v1469
  %1494 = vst [vmem:[%s5 + $0x18] sm:$0xff] %v1470
  %1495 = vst [vmem:[%s5 + $0x20] sm:$0xff] %v1471
  %1496 = vst [vmem:[%s5 + $0x28] sm:$0xff] %v1472
  %1497 = vst [vmem:[%s5 + $0x30] sm:$0xff] %v1473
  %1498 = vst [vmem:[%s5 + $0x38] sm:$0xff] %v1474
  %1499 = vst [vmem:[%s5 + $0x40] sm:$0xff] %v1475
  %1500 = vst [vmem:[%s5 + $0x48] sm:$0xff] %v1476
  %1501 = vst [vmem:[%s5 + $0x50] sm:$0xff] %v1477
  %1502 = vst [vmem:[%s5 + $0x58] sm:$0xff] %v1478
  %1503 = vst [vmem:[%s5 + $0x60] sm:$0xff] %v1479
  %1504 = vst [vmem:[%s5 + $0x68] sm:$0xff] %v1480
  %1505 = vst [vmem:[%s5 + $0x70] sm:$0xff] %v1481
  %1506 = vst [vmem:[%s5 + $0x78] sm:$0xff] %v1482
  %1507 = vst [vmem:[%s5 + $0x80] sm:$0xff] %v1483
  %1508 = vst [vmem:[%s5 + $0x88] sm:$0xff] %v1484
  %1509 = vst [vmem:[%s5 + $0x90] sm:$0xff] %v1485
  %1510 = vst [vmem:[%s5 + $0x98] sm:$0xff] %v1486
  %1511 = vst [vmem:[%s5 + $0xa0] sm:$0xff] %v1487
  %1512 = vst [vmem:[%s5 + $0xa8] sm:$0xff] %v1488
  %1513 = vst [vmem:[%s5 + $0xb0] sm:$0xff] %v1489
  %1514 = vst [vmem:[%s5 + $0xb8] sm:$0xff] %v1490
  // Predicated region
  $region22: #{generator_forward.6} parent=0 // pred_check
    _
  $region23: #{generator_forward.6} parent=0 // pred_check_branch
    %1516 = sbr.rel (0) target = $region25
  $region24: #{generator_forward.6} parent=0 // pred_region
    _
  $region25: #{generator_forward.6} parent=0 // pred_fallthru
    _
  // Predicated region
  $region26: #{generator_forward.6} parent=0 // pred_check
    _
  $region27: #{generator_forward.6} parent=0 // pred_check_branch
    %1518 = sbr.rel (0) target = $region29
  $region28: #{generator_forward.6} parent=0 // pred_region
    _
  $region29: #{generator_forward.6} parent=0 // pred_fallthru
    _

// kernel: generator_forward.7
$region0: #{generator_forward.7}
  #allocation0 [shape = 'u32[]', space=smem, size = 0x4, offset = 0x4, fixed_abs, tag = 'smem constant byte address 0x4 - core index']
  #allocation1 [shape = 'u32[144,128]{1,0:T(1,128)}', space=vmem, size = 0x12000, scoped, tag = 'internal scratch']
  %s0 = inlined_call_operand.vmem [shape: f32[4,3,192], index: 0, kind: input, shape index: {}]
  %s1 = inlined_call_operand.vmem [shape: f32[4,192,512], index: 1, kind: input, shape index: {}]
  %s2 = inlined_call_operand.vmem [shape: f32[3,1], index: 2, kind: input, shape index: {}]
  %s3 = inlined_call_operand.vmem [shape: f32[4,3,512], index: 3, kind: output, shape index: {}]
  %s4 = sld [smem:[#allocation0]]
  $region22: #{generator_forward.7} parent=0
    _
  %s6 = ssub.s32 1, %s4
  %s7 = scalar_select 0, %s6, %s4
  // Predicated region
  $region2: #{generator_forward.7} parent=0 // pred_check
    _
  $region3: #{generator_forward.7} parent=0 // pred_check_branch
    %9 = sbr.rel (0) target = $region5
  $region4: #{generator_forward.7} parent=0 // pred_region
    _
  $region5: #{generator_forward.7} parent=0 // pred_fallthru
    _
  // Predicated region
  $region6: #{generator_forward.7} parent=0 // pred_check
    _
  $region7: #{generator_forward.7} parent=0 // pred_check_branch
    %11 = sbr.rel (0) target = $region9
  $region8: #{generator_forward.7} parent=0 // pred_region
    _
  $region9: #{generator_forward.7} parent=0 // pred_fallthru
    _
  // Predicated region
  $region10: #{generator_forward.7} parent=0 // pred_check
    _
  $region11: #{generator_forward.7} parent=0 // pred_check_branch
    %13 = sbr.rel (0) target = $region13
  $region12: #{generator_forward.7} parent=0 // pred_region
    _
  $region13: #{generator_forward.7} parent=0 // pred_fallthru
    _
  %v14 = vld [vmem:[%s2] sm:$0x7]
  %v15 = vld [vmem:[%s0] sm:$0x77]
  %v16 = vld [vmem:[%s1] sm:$0xff]
  %v17 = vld [vmem:[%s1 + $0x8] sm:$0xff]
  %v18 = vld [vmem:[%s1 + $0x10] sm:$0xff]
  %v19 = vld [vmem:[%s1 + $0x18] sm:$0xff]
  %v20 = vld [vmem:[%s1 + $0x20] sm:$0xff]
  %v21 = vld [vmem:[%s1 + $0x28] sm:$0xff]
  %v22 = vld [vmem:[%s1 + $0x30] sm:$0xff]
  %v23 = vld [vmem:[%s1 + $0x38] sm:$0xff]
  %v24 = vld [vmem:[%s1 + $0x40] sm:$0xff]
  %v25 = vld [vmem:[%s1 + $0x48] sm:$0xff]
  %v26 = vld [vmem:[%s1 + $0x50] sm:$0xff]
  %v27 = vld [vmem:[%s1 + $0x58] sm:$0xff]
  %v28 = vld [vmem:[%s1 + $0x60] sm:$0xff]
  %v29 = vld [vmem:[%s1 + $0x68] sm:$0xff]
  %v30 = vld [vmem:[%s1 + $0x70] sm:$0xff]
  %v31 = vld [vmem:[%s1 + $0x78] sm:$0xff]
  %v32 = vld [vmem:[%s1 + $0x80] sm:$0xff]
  %v33 = vld [vmem:[%s1 + $0x88] sm:$0xff]
  %v34 = vld [vmem:[%s1 + $0x90] sm:$0xff]
  %v35 = vld [vmem:[%s1 + $0x98] sm:$0xff]
  %v36 = vld [vmem:[%s1 + $0xa0] sm:$0xff]
  %v37 = vld [vmem:[%s1 + $0xa8] sm:$0xff]
  %v38 = vld [vmem:[%s1 + $0xb0] sm:$0xff]
  %v39 = vld [vmem:[%s1 + $0xb8] sm:$0xff]
  %v40 = vld [vmem:[%s1 + $0xc0] sm:$0xff]
  %v41 = vld [vmem:[%s1 + $0xc8] sm:$0xff]
  %v42 = vld [vmem:[%s1 + $0xd0] sm:$0xff]
  %v43 = vld [vmem:[%s1 + $0xd8] sm:$0xff]
  %v44 = vld [vmem:[%s1 + $0xe0] sm:$0xff]
  %v45 = vld [vmem:[%s1 + $0xe8] sm:$0xff]
  %v46 = vld [vmem:[%s1 + $0xf0] sm:$0xff]
  %v47 = vld [vmem:[%s1 + $0xf8] sm:$0xff]
  %v48 = vld [vmem:[%s1 + $0x100] sm:$0xff]
  %v49 = vld [vmem:[%s1 + $0x108] sm:$0xff]
  %v50 = vld [vmem:[%s1 + $0x110] sm:$0xff]
  %v51 = vld [vmem:[%s1 + $0x118] sm:$0xff]
  %v52 = vld [vmem:[%s1 + $0x120] sm:$0xff]
  %v53 = vld [vmem:[%s1 + $0x128] sm:$0xff]
  %v54 = vld [vmem:[%s1 + $0x130] sm:$0xff]
  %v55 = vld [vmem:[%s1 + $0x138] sm:$0xff]
  %v56 = vld [vmem:[%s1 + $0x140] sm:$0xff]
  %v57 = vld [vmem:[%s1 + $0x148] sm:$0xff]
  %v58 = vld [vmem:[%s1 + $0x150] sm:$0xff]
  %v59 = vld [vmem:[%s1 + $0x158] sm:$0xff]
  %v60 = vld [vmem:[%s1 + $0x160] sm:$0xff]
  %v61 = vld [vmem:[%s1 + $0x168] sm:$0xff]
  %v62 = vld [vmem:[%s1 + $0x170] sm:$0xff]
  %v63 = vld [vmem:[%s1 + $0x178] sm:$0xff]
  %v64 = vld [vmem:[%s1 + $0x180] sm:$0xff]
  %v65 = vld [vmem:[%s1 + $0x188] sm:$0xff]
  %v66 = vld [vmem:[%s1 + $0x190] sm:$0xff]
  %v67 = vld [vmem:[%s1 + $0x198] sm:$0xff]
  %v68 = vld [vmem:[%s1 + $0x1a0] sm:$0xff]
  %v69 = vld [vmem:[%s1 + $0x1a8] sm:$0xff]
  %v70 = vld [vmem:[%s1 + $0x1b0] sm:$0xff]
  %v71 = vld [vmem:[%s1 + $0x1b8] sm:$0xff]
  %v72 = vld [vmem:[%s1 + $0x1c0] sm:$0xff]
  %v73 = vld [vmem:[%s1 + $0x1c8] sm:$0xff]
  %v74 = vld [vmem:[%s1 + $0x1d0] sm:$0xff]
  %v75 = vld [vmem:[%s1 + $0x1d8] sm:$0xff]
  %v76 = vld [vmem:[%s1 + $0x1e0] sm:$0xff]
  %v77 = vld [vmem:[%s1 + $0x1e8] sm:$0xff]
  %v78 = vld [vmem:[%s1 + $0x1f0] sm:$0xff]
  %v79 = vld [vmem:[%s1 + $0x1f8] sm:$0xff]
  %v80 = vld [vmem:[%s1 + $0x200] sm:$0xff]
  %v81 = vld [vmem:[%s1 + $0x208] sm:$0xff]
  %v82 = vld [vmem:[%s1 + $0x210] sm:$0xff]
  %v83 = vld [vmem:[%s1 + $0x218] sm:$0xff]
  %v84 = vld [vmem:[%s1 + $0x220] sm:$0xff]
  %v85 = vld [vmem:[%s1 + $0x228] sm:$0xff]
  %v86 = vld [vmem:[%s1 + $0x230] sm:$0xff]
  %v87 = vld [vmem:[%s1 + $0x238] sm:$0xff]
  %v88 = vld [vmem:[%s1 + $0x240] sm:$0xff]
  %v89 = vld [vmem:[%s1 + $0x248] sm:$0xff]
  %v90 = vld [vmem:[%s1 + $0x250] sm:$0xff]
  %v91 = vld [vmem:[%s1 + $0x258] sm:$0xff]
  %v92 = vld [vmem:[%s1 + $0x260] sm:$0xff]
  %v93 = vld [vmem:[%s1 + $0x268] sm:$0xff]
  %v94 = vld [vmem:[%s1 + $0x270] sm:$0xff]
  %v95 = vld [vmem:[%s1 + $0x278] sm:$0xff]
  %v96 = vld [vmem:[%s1 + $0x280] sm:$0xff]
  %v97 = vld [vmem:[%s1 + $0x288] sm:$0xff]
  %v98 = vld [vmem:[%s1 + $0x290] sm:$0xff]
  %v99 = vld [vmem:[%s1 + $0x298] sm:$0xff]
  %v100 = vld [vmem:[%s1 + $0x2a0] sm:$0xff]
  %v101 = vld [vmem:[%s1 + $0x2a8] sm:$0xff]
  %v102 = vld [vmem:[%s1 + $0x2b0] sm:$0xff]
  %v103 = vld [vmem:[%s1 + $0x2b8] sm:$0xff]
  %v104 = vld [vmem:[%s1 + $0x2c0] sm:$0xff]
  %v105 = vld [vmem:[%s1 + $0x2c8] sm:$0xff]
  %v106 = vld [vmem:[%s1 + $0x2d0] sm:$0xff]
  %v107 = vld [vmem:[%s1 + $0x2d8] sm:$0xff]
  %v108 = vld [vmem:[%s1 + $0x2e0] sm:$0xff]
  %v109 = vld [vmem:[%s1 + $0x2e8] sm:$0xff]
  %v110 = vld [vmem:[%s1 + $0x2f0] sm:$0xff]
  %v111 = vld [vmem:[%s1 + $0x2f8] sm:$0xff]
  %113 = vset.pattern.permute.xlu0 0
  %114 = vperm.xlu0 %113, %v14
  %v115 = vpop.permute.xlu0 %114
  %v118 = vcombine.high %v15, %v15
  %vm119 = vcmask 523264
  %v120 = vsel %vm119, %v118, 0
  %122 = vmatprep.subr.mxu0 %v17
  %123 = vmatpush1.msra.mxu0 %v16
  %124 = vmatprep.subr.mxu0 %v21
  %125 = vmatpush1.msra.mxu0 %v20
  %126 = vmatprep.subr.mxu0 %v25
  %127 = vmatpush1.msra.mxu0 %v24
  %128 = vmatprep.subr.mxu0 %v29
  %129 = vmatpush1.msra.mxu0 %v28
  %130 = vmatprep.subr.mxu0 %v33
  %131 = vmatpush1.msra.mxu0 %v32
  %132 = vmatprep.subr.mxu0 %v37
  %133 = vmatpush1.msra.mxu0 %v36
  %134 = vmatprep.subr.mxu0 %v41
  %135 = vmatpush1.msra.mxu0 %v40
  %136 = vmatprep.subr.mxu0 %v45
  %137 = vmatpush1.msra.mxu0 %v44
  %138 = vmatprep.subr.mxu0 %v49
  %139 = vmatpush1.msra.mxu0 %v48
  %140 = vmatprep.subr.mxu0 %v53
  %141 = vmatpush1.msra.mxu0 %v52
  %142 = vmatprep.subr.mxu0 %v57
  %143 = vmatpush1.msra.mxu0 %v56
  %144 = vmatprep.subr.mxu0 %v61
  %145 = vmatpush1.msra.mxu0 %v60
  %146 = vmatprep.subr.mxu0 %v65
  %147 = vmatpush1.msra.mxu0 %v64
  %148 = vmatprep.subr.mxu0 %v69
  %149 = vmatpush1.msra.mxu0 %v68
  %150 = vmatprep.subr.mxu0 %v73
  %151 = vmatpush1.msra.mxu0 %v72
  %152 = vmatprep.subr.mxu0 %v77
  %153 = vmatpush1.msra.mxu0 %v76
  %154 = vmatprep.subr.mxu0 %v81
  %155 = vmatpush1.msra.mxu0 %v80
  %156 = vmatprep.subr.mxu0 %v85
  %157 = vmatpush1.msra.mxu0 %v84
  %158 = vmatprep.subr.mxu0 %v89
  %159 = vmatpush1.msra.mxu0 %v88
  %160 = vmatprep.subr.mxu0 %v93
  %161 = vmatpush1.msra.mxu0 %v92
  %162 = vmatprep.subr.mxu0 %v97
  %163 = vmatpush1.msra.mxu0 %v96
  %164 = vmatprep.subr.mxu0 %v101
  %165 = vmatpush1.msra.mxu0 %v100
  %166 = vmatprep.subr.mxu0 %v105
  %167 = vmatpush1.msra.mxu0 %v104
  %168 = vmatprep.subr.mxu0 %v109
  %169 = vmatpush1.msra.mxu0 %v108
  %170 = vmatprep.subr.mxu0 0.0
  %171 = vmatpush1.msra.mxu0 0.0
  %172 = vmatprep.subr.mxu0 0.0
  %173 = vmatpush1.msra.mxu0 0.0
  %174 = vmatprep.subr.mxu0 0.0
  %175 = vmatpush1.msra.mxu0 0.0
  %176 = vmatprep.subr.mxu0 0.0
  %177 = vmatpush1.msra.mxu0 0.0
  %178 = vmatprep.subr.mxu0 0.0
  %179 = vmatpush1.msra.mxu0 0.0
  %180 = vmatprep.subr.mxu0 0.0
  %181 = vmatpush1.msra.mxu0 0.0
  %182 = vmatprep.subr.mxu0 0.0
  %183 = vmatpush1.msra.mxu0 0.0
  %184 = vmatprep.subr.mxu0 0.0
  %185 = vmatpush1.msra.mxu0 0.0
  %186 = vmatprep.mubr.f32.mxu0 %v120
  %187 = vmatmul.mubr.f32.gmra.mrb[0].mxu0 %v15
  %v188 = vpop.f32.mrb[0].mxu0
  %v189 = vadd.f32 %v115, %v188
  %v190 = vpop.f32.mrb[0].mxu0
  %v191 = vadd.f32 %v115, %v190
  %192 = vdwg.mxu0
  %193 = vmatprep.subr.mxu0 %v19
  %194 = vmatpush1.msra.mxu0 %v18
  %195 = vmatprep.subr.mxu0 %v23
  %196 = vmatpush1.msra.mxu0 %v22
  %197 = vmatprep.subr.mxu0 %v27
  %198 = vmatpush1.msra.mxu0 %v26
  %199 = vmatprep.subr.mxu0 %v31
  %200 = vmatpush1.msra.mxu0 %v30
  %201 = vmatprep.subr.mxu0 %v35
  %202 = vmatpush1.msra.mxu0 %v34
  %203 = vmatprep.subr.mxu0 %v39
  %204 = vmatpush1.msra.mxu0 %v38
  %205 = vmatprep.subr.mxu0 %v43
  %206 = vmatpush1.msra.mxu0 %v42
  %207 = vmatprep.subr.mxu0 %v47
  %208 = vmatpush1.msra.mxu0 %v46
  %209 = vmatprep.subr.mxu0 %v51
  %210 = vmatpush1.msra.mxu0 %v50
  %211 = vmatprep.subr.mxu0 %v55
  %212 = vmatpush1.msra.mxu0 %v54
  %213 = vmatprep.subr.mxu0 %v59
  %214 = vmatpush1.msra.mxu0 %v58
  %215 = vmatprep.subr.mxu0 %v63
  %216 = vmatpush1.msra.mxu0 %v62
  %217 = vmatprep.subr.mxu0 %v67
  %218 = vmatpush1.msra.mxu0 %v66
  %219 = vmatprep.subr.mxu0 %v71
  %220 = vmatpush1.msra.mxu0 %v70
  %221 = vmatprep.subr.mxu0 %v75
  %222 = vmatpush1.msra.mxu0 %v74
  %223 = vmatprep.subr.mxu0 %v79
  %224 = vmatpush1.msra.mxu0 %v78
  %225 = vmatprep.subr.mxu0 %v83
  %226 = vmatpush1.msra.mxu0 %v82
  %227 = vmatprep.subr.mxu0 %v87
  %228 = vmatpush1.msra.mxu0 %v86
  %229 = vmatprep.subr.mxu0 %v91
  %230 = vmatpush1.msra.mxu0 %v90
  %231 = vmatprep.subr.mxu0 %v95
  %232 = vmatpush1.msra.mxu0 %v94
  %233 = vmatprep.subr.mxu0 %v99
  %234 = vmatpush1.msra.mxu0 %v98
  %235 = vmatprep.subr.mxu0 %v103
  %236 = vmatpush1.msra.mxu0 %v102
  %237 = vmatprep.subr.mxu0 %v107
  %238 = vmatpush1.msra.mxu0 %v106
  %239 = vmatprep.subr.mxu0 %v111
  %240 = vmatpush1.msra.mxu0 %v110
  %241 = vmatprep.subr.mxu0 0.0
  %242 = vmatpush1.msra.mxu0 0.0
  %243 = vmatprep.subr.mxu0 0.0
  %244 = vmatpush1.msra.mxu0 0.0
  %245 = vmatprep.subr.mxu0 0.0
  %246 = vmatpush1.msra.mxu0 0.0
  %247 = vmatprep.subr.mxu0 0.0
  %248 = vmatpush1.msra.mxu0 0.0
  %249 = vmatprep.subr.mxu0 0.0
  %250 = vmatpush1.msra.mxu0 0.0
  %251 = vmatprep.subr.mxu0 0.0
  %252 = vmatpush1.msra.mxu0 0.0
  %253 = vmatprep.subr.mxu0 0.0
  %254 = vmatpush1.msra.mxu0 0.0
  %255 = vmatprep.subr.mxu0 0.0
  %256 = vmatpush1.msra.mxu0 0.0
  %257 = vmatprep.mubr.f32.mxu0 %v120
  %258 = vmatmul.mubr.f32.gmra.mrb[0].mxu0 %v15
  %v259 = vpop.f32.mrb[0].mxu0
  %v260 = vadd.f32 %v115, %v259
  %v261 = vpop.f32.mrb[0].mxu0
  %v262 = vadd.f32 %v115, %v261
  %263 = vdwg.mxu0
  %v264 = vtanh.pop %v189
  %v265 = vtanh.pop %v191
  %v266 = vtanh.pop %v260
  %v267 = vtanh.pop %v262
  %v272 = vcombine.low %v264, %v265
  %v273 = vcombine.low %v266, %v267
  %276 = vst [vmem:[%s3] sm:$0x77] %v272
  %277 = vst [vmem:[%s3 + $0x8] sm:$0x77] %v273
  %s278 = scalar_lea.vmem %s0, 8
  %v279 = vld [vmem:[%s278] sm:$0x77]
  %s280 = scalar_lea.vmem %s1, 768
  %v281 = vld [vmem:[%s280] sm:$0xff]
  %v282 = vld [vmem:[%s280 + $0x8] sm:$0xff]
  %v283 = vld [vmem:[%s280 + $0x10] sm:$0xff]
  %v284 = vld [vmem:[%s280 + $0x18] sm:$0xff]
  %v285 = vld [vmem:[%s280 + $0x20] sm:$0xff]
  %v286 = vld [vmem:[%s280 + $0x28] sm:$0xff]
  %v287 = vld [vmem:[%s280 + $0x30] sm:$0xff]
  %v288 = vld [vmem:[%s280 + $0x38] sm:$0xff]
  %v289 = vld [vmem:[%s280 + $0x40] sm:$0xff]
  %v290 = vld [vmem:[%s280 + $0x48] sm:$0xff]
  %v291 = vld [vmem:[%s280 + $0x50] sm:$0xff]
  %v292 = vld [vmem:[%s280 + $0x58] sm:$0xff]
  %v293 = vld [vmem:[%s280 + $0x60] sm:$0xff]
  %v294 = vld [vmem:[%s280 + $0x68] sm:$0xff]
  %v295 = vld [vmem:[%s280 + $0x70] sm:$0xff]
  %v296 = vld [vmem:[%s280 + $0x78] sm:$0xff]
  %v297 = vld [vmem:[%s280 + $0x80] sm:$0xff]
  %v298 = vld [vmem:[%s280 + $0x88] sm:$0xff]
  %v299 = vld [vmem:[%s280 + $0x90] sm:$0xff]
  %v300 = vld [vmem:[%s280 + $0x98] sm:$0xff]
  %v301 = vld [vmem:[%s280 + $0xa0] sm:$0xff]
  %v302 = vld [vmem:[%s280 + $0xa8] sm:$0xff]
  %v303 = vld [vmem:[%s280 + $0xb0] sm:$0xff]
  %v304 = vld [vmem:[%s280 + $0xb8] sm:$0xff]
  %v305 = vld [vmem:[%s280 + $0xc0] sm:$0xff]
  %v306 = vld [vmem:[%s280 + $0xc8] sm:$0xff]
  %v307 = vld [vmem:[%s280 + $0xd0] sm:$0xff]
  %v308 = vld [vmem:[%s280 + $0xd8] sm:$0xff]
  %v309 = vld [vmem:[%s280 + $0xe0] sm:$0xff]
  %v310 = vld [vmem:[%s280 + $0xe8] sm:$0xff]
  %v311 = vld [vmem:[%s280 + $0xf0] sm:$0xff]
  %v312 = vld [vmem:[%s280 + $0xf8] sm:$0xff]
  %v313 = vld [vmem:[%s280 + $0x100] sm:$0xff]
  %v314 = vld [vmem:[%s280 + $0x108] sm:$0xff]
  %v315 = vld [vmem:[%s280 + $0x110] sm:$0xff]
  %v316 = vld [vmem:[%s280 + $0x118] sm:$0xff]
  %v317 = vld [vmem:[%s280 + $0x120] sm:$0xff]
  %v318 = vld [vmem:[%s280 + $0x128] sm:$0xff]
  %v319 = vld [vmem:[%s280 + $0x130] sm:$0xff]
  %v320 = vld [vmem:[%s280 + $0x138] sm:$0xff]
  %v321 = vld [vmem:[%s280 + $0x140] sm:$0xff]
  %v322 = vld [vmem:[%s280 + $0x148] sm:$0xff]
  %v323 = vld [vmem:[%s280 + $0x150] sm:$0xff]
  %v324 = vld [vmem:[%s280 + $0x158] sm:$0xff]
  %v325 = vld [vmem:[%s280 + $0x160] sm:$0xff]
  %v326 = vld [vmem:[%s280 + $0x168] sm:$0xff]
  %v327 = vld [vmem:[%s280 + $0x170] sm:$0xff]
  %v328 = vld [vmem:[%s280 + $0x178] sm:$0xff]
  %v329 = vld [vmem:[%s280 + $0x180] sm:$0xff]
  %v330 = vld [vmem:[%s280 + $0x188] sm:$0xff]
  %v331 = vld [vmem:[%s280 + $0x190] sm:$0xff]
  %v332 = vld [vmem:[%s280 + $0x198] sm:$0xff]
  %v333 = vld [vmem:[%s280 + $0x1a0] sm:$0xff]
  %v334 = vld [vmem:[%s280 + $0x1a8] sm:$0xff]
  %v335 = vld [vmem:[%s280 + $0x1b0] sm:$0xff]
  %v336 = vld [vmem:[%s280 + $0x1b8] sm:$0xff]
  %v337 = vld [vmem:[%s280 + $0x1c0] sm:$0xff]
  %v338 = vld [vmem:[%s280 + $0x1c8] sm:$0xff]
  %v339 = vld [vmem:[%s280 + $0x1d0] sm:$0xff]
  %v340 = vld [vmem:[%s280 + $0x1d8] sm:$0xff]
  %v341 = vld [vmem:[%s280 + $0x1e0] sm:$0xff]
  %v342 = vld [vmem:[%s280 + $0x1e8] sm:$0xff]
  %v343 = vld [vmem:[%s280 + $0x1f0] sm:$0xff]
  %v344 = vld [vmem:[%s280 + $0x1f8] sm:$0xff]
  %v345 = vld [vmem:[%s280 + $0x200] sm:$0xff]
  %v346 = vld [vmem:[%s280 + $0x208] sm:$0xff]
  %v347 = vld [vmem:[%s280 + $0x210] sm:$0xff]
  %v348 = vld [vmem:[%s280 + $0x218] sm:$0xff]
  %v349 = vld [vmem:[%s280 + $0x220] sm:$0xff]
  %v350 = vld [vmem:[%s280 + $0x228] sm:$0xff]
  %v351 = vld [vmem:[%s280 + $0x230] sm:$0xff]
  %v352 = vld [vmem:[%s280 + $0x238] sm:$0xff]
  %v353 = vld [vmem:[%s280 + $0x240] sm:$0xff]
  %v354 = vld [vmem:[%s280 + $0x248] sm:$0xff]
  %v355 = vld [vmem:[%s280 + $0x250] sm:$0xff]
  %v356 = vld [vmem:[%s280 + $0x258] sm:$0xff]
  %v357 = vld [vmem:[%s280 + $0x260] sm:$0xff]
  %v358 = vld [vmem:[%s280 + $0x268] sm:$0xff]
  %v359 = vld [vmem:[%s280 + $0x270] sm:$0xff]
  %v360 = vld [vmem:[%s280 + $0x278] sm:$0xff]
  %v361 = vld [vmem:[%s280 + $0x280] sm:$0xff]
  %v362 = vld [vmem:[%s280 + $0x288] sm:$0xff]
  %v363 = vld [vmem:[%s280 + $0x290] sm:$0xff]
  %v364 = vld [vmem:[%s280 + $0x298] sm:$0xff]
  %v365 = vld [vmem:[%s280 + $0x2a0] sm:$0xff]
  %v366 = vld [vmem:[%s280 + $0x2a8] sm:$0xff]
  %v367 = vld [vmem:[%s280 + $0x2b0] sm:$0xff]
  %v368 = vld [vmem:[%s280 + $0x2b8] sm:$0xff]
  %v369 = vld [vmem:[%s280 + $0x2c0] sm:$0xff]
  %v370 = vld [vmem:[%s280 + $0x2c8] sm:$0xff]
  %v371 = vld [vmem:[%s280 + $0x2d0] sm:$0xff]
  %v372 = vld [vmem:[%s280 + $0x2d8] sm:$0xff]
  %v373 = vld [vmem:[%s280 + $0x2e0] sm:$0xff]
  %v374 = vld [vmem:[%s280 + $0x2e8] sm:$0xff]
  %v375 = vld [vmem:[%s280 + $0x2f0] sm:$0xff]
  %v376 = vld [vmem:[%s280 + $0x2f8] sm:$0xff]
  %v378 = vcombine.high %v279, %v279
  %v379 = vsel %vm119, %v378, 0
  %381 = vmatprep.subr.mxu0 %v282
  %382 = vmatpush1.msra.mxu0 %v281
  %383 = vmatprep.subr.mxu0 %v286
  %384 = vmatpush1.msra.mxu0 %v285
  %385 = vmatprep.subr.mxu0 %v290
  %386 = vmatpush1.msra.mxu0 %v289
  %387 = vmatprep.subr.mxu0 %v294
  %388 = vmatpush1.msra.mxu0 %v293
  %389 = vmatprep.subr.mxu0 %v298
  %390 = vmatpush1.msra.mxu0 %v297
  %391 = vmatprep.subr.mxu0 %v302
  %392 = vmatpush1.msra.mxu0 %v301
  %393 = vmatprep.subr.mxu0 %v306
  %394 = vmatpush1.msra.mxu0 %v305
  %395 = vmatprep.subr.mxu0 %v310
  %396 = vmatpush1.msra.mxu0 %v309
  %397 = vmatprep.subr.mxu0 %v314
  %398 = vmatpush1.msra.mxu0 %v313
  %399 = vmatprep.subr.mxu0 %v318
  %400 = vmatpush1.msra.mxu0 %v317
  %401 = vmatprep.subr.mxu0 %v322
  %402 = vmatpush1.msra.mxu0 %v321
  %403 = vmatprep.subr.mxu0 %v326
  %404 = vmatpush1.msra.mxu0 %v325
  %405 = vmatprep.subr.mxu0 %v330
  %406 = vmatpush1.msra.mxu0 %v329
  %407 = vmatprep.subr.mxu0 %v334
  %408 = vmatpush1.msra.mxu0 %v333
  %409 = vmatprep.subr.mxu0 %v338
  %410 = vmatpush1.msra.mxu0 %v337
  %411 = vmatprep.subr.mxu0 %v342
  %412 = vmatpush1.msra.mxu0 %v341
  %413 = vmatprep.subr.mxu0 %v346
  %414 = vmatpush1.msra.mxu0 %v345
  %415 = vmatprep.subr.mxu0 %v350
  %416 = vmatpush1.msra.mxu0 %v349
  %417 = vmatprep.subr.mxu0 %v354
  %418 = vmatpush1.msra.mxu0 %v353
  %419 = vmatprep.subr.mxu0 %v358
  %420 = vmatpush1.msra.mxu0 %v357
  %421 = vmatprep.subr.mxu0 %v362
  %422 = vmatpush1.msra.mxu0 %v361
  %423 = vmatprep.subr.mxu0 %v366
  %424 = vmatpush1.msra.mxu0 %v365
  %425 = vmatprep.subr.mxu0 %v370
  %426 = vmatpush1.msra.mxu0 %v369
  %427 = vmatprep.subr.mxu0 %v374
  %428 = vmatpush1.msra.mxu0 %v373
  %429 = vmatprep.subr.mxu0 0.0
  %430 = vmatpush1.msra.mxu0 0.0
  %431 = vmatprep.subr.mxu0 0.0
  %432 = vmatpush1.msra.mxu0 0.0
  %433 = vmatprep.subr.mxu0 0.0
  %434 = vmatpush1.msra.mxu0 0.0
  %435 = vmatprep.subr.mxu0 0.0
  %436 = vmatpush1.msra.mxu0 0.0
  %437 = vmatprep.subr.mxu0 0.0
  %438 = vmatpush1.msra.mxu0 0.0
  %439 = vmatprep.subr.mxu0 0.0
  %440 = vmatpush1.msra.mxu0 0.0
  %441 = vmatprep.subr.mxu0 0.0
  %442 = vmatpush1.msra.mxu0 0.0
  %443 = vmatprep.subr.mxu0 0.0
  %444 = vmatpush1.msra.mxu0 0.0
  %445 = vmatprep.mubr.f32.mxu0 %v379
  %446 = vmatmul.mubr.f32.gmra.mrb[0].mxu0 %v279
  %v447 = vpop.f32.mrb[0].mxu0
  %v448 = vadd.f32 %v115, %v447
  %v449 = vpop.f32.mrb[0].mxu0
  %v450 = vadd.f32 %v115, %v449
  %451 = vdwg.mxu0
  %452 = vmatprep.subr.mxu0 %v284
  %453 = vmatpush1.msra.mxu0 %v283
  %454 = vmatprep.subr.mxu0 %v288
  %455 = vmatpush1.msra.mxu0 %v287
  %456 = vmatprep.subr.mxu0 %v292
  %457 = vmatpush1.msra.mxu0 %v291
  %458 = vmatprep.subr.mxu0 %v296
  %459 = vmatpush1.msra.mxu0 %v295
  %460 = vmatprep.subr.mxu0 %v300
  %461 = vmatpush1.msra.mxu0 %v299
  %462 = vmatprep.subr.mxu0 %v304
  %463 = vmatpush1.msra.mxu0 %v303
  %464 = vmatprep.subr.mxu0 %v308
  %465 = vmatpush1.msra.mxu0 %v307
  %466 = vmatprep.subr.mxu0 %v312
  %467 = vmatpush1.msra.mxu0 %v311
  %468 = vmatprep.subr.mxu0 %v316
  %469 = vmatpush1.msra.mxu0 %v315
  %470 = vmatprep.subr.mxu0 %v320
  %471 = vmatpush1.msra.mxu0 %v319
  %472 = vmatprep.subr.mxu0 %v324
  %473 = vmatpush1.msra.mxu0 %v323
  %474 = vmatprep.subr.mxu0 %v328
  %475 = vmatpush1.msra.mxu0 %v327
  %476 = vmatprep.subr.mxu0 %v332
  %477 = vmatpush1.msra.mxu0 %v331
  %478 = vmatprep.subr.mxu0 %v336
  %479 = vmatpush1.msra.mxu0 %v335
  %480 = vmatprep.subr.mxu0 %v340
  %481 = vmatpush1.msra.mxu0 %v339
  %482 = vmatprep.subr.mxu0 %v344
  %483 = vmatpush1.msra.mxu0 %v343
  %484 = vmatprep.subr.mxu0 %v348
  %485 = vmatpush1.msra.mxu0 %v347
  %486 = vmatprep.subr.mxu0 %v352
  %487 = vmatpush1.msra.mxu0 %v351
  %488 = vmatprep.subr.mxu0 %v356
  %489 = vmatpush1.msra.mxu0 %v355
  %490 = vmatprep.subr.mxu0 %v360
  %491 = vmatpush1.msra.mxu0 %v359
  %492 = vmatprep.subr.mxu0 %v364
  %493 = vmatpush1.msra.mxu0 %v363
  %494 = vmatprep.subr.mxu0 %v368
  %495 = vmatpush1.msra.mxu0 %v367
  %496 = vmatprep.subr.mxu0 %v372
  %497 = vmatpush1.msra.mxu0 %v371
  %498 = vmatprep.subr.mxu0 %v376
  %499 = vmatpush1.msra.mxu0 %v375
  %500 = vmatprep.subr.mxu0 0.0
  %501 = vmatpush1.msra.mxu0 0.0
  %502 = vmatprep.subr.mxu0 0.0
  %503 = vmatpush1.msra.mxu0 0.0
  %504 = vmatprep.subr.mxu0 0.0
  %505 = vmatpush1.msra.mxu0 0.0
  %506 = vmatprep.subr.mxu0 0.0
  %507 = vmatpush1.msra.mxu0 0.0
  %508 = vmatprep.subr.mxu0 0.0
  %509 = vmatpush1.msra.mxu0 0.0
  %510 = vmatprep.subr.mxu0 0.0
  %511 = vmatpush1.msra.mxu0 0.0
  %512 = vmatprep.subr.mxu0 0.0
  %513 = vmatpush1.msra.mxu0 0.0
  %514 = vmatprep.subr.mxu0 0.0
  %515 = vmatpush1.msra.mxu0 0.0
  %516 = vmatprep.mubr.f32.mxu0 %v379
  %517 = vmatmul.mubr.f32.gmra.mrb[0].mxu0 %v279
  %v518 = vpop.f32.mrb[0].mxu0
  %v519 = vadd.f32 %v115, %v518
  %v520 = vpop.f32.mrb[0].mxu0
  %v521 = vadd.f32 %v115, %v520
  %522 = vdwg.mxu0
  %v523 = vtanh.pop %v448
  %v524 = vtanh.pop %v450
  %v525 = vtanh.pop %v519
  %v526 = vtanh.pop %v521
  %v531 = vcombine.low %v523, %v524
  %v532 = vcombine.low %v525, %v526
  %s535 = scalar_lea.vmem %s3, 16
  %536 = vst [vmem:[%s535] sm:$0x77] %v531
  %537 = vst [vmem:[%s535 + $0x8] sm:$0x77] %v532
  %s538 = scalar_lea.vmem %s0, 16
  %v539 = vld [vmem:[%s538] sm:$0x77]
  %s540 = scalar_lea.vmem %s1, 1536
  %v541 = vld [vmem:[%s540] sm:$0xff]
  %v542 = vld [vmem:[%s540 + $0x8] sm:$0xff]
  %v543 = vld [vmem:[%s540 + $0x10] sm:$0xff]
  %v544 = vld [vmem:[%s540 + $0x18] sm:$0xff]
  %v545 = vld [vmem:[%s540 + $0x20] sm:$0xff]
  %v546 = vld [vmem:[%s540 + $0x28] sm:$0xff]
  %v547 = vld [vmem:[%s540 + $0x30] sm:$0xff]
  %v548 = vld [vmem:[%s540 + $0x38] sm:$0xff]
  %v549 = vld [vmem:[%s540 + $0x40] sm:$0xff]
  %v550 = vld [vmem:[%s540 + $0x48] sm:$0xff]
  %v551 = vld [vmem:[%s540 + $0x50] sm:$0xff]
  %v552 = vld [vmem:[%s540 + $0x58] sm:$0xff]
  %v553 = vld [vmem:[%s540 + $0x60] sm:$0xff]
  %v554 = vld [vmem:[%s540 + $0x68] sm:$0xff]
  %v555 = vld [vmem:[%s540 + $0x70] sm:$0xff]
  %v556 = vld [vmem:[%s540 + $0x78] sm:$0xff]
  %v557 = vld [vmem:[%s540 + $0x80] sm:$0xff]
  %v558 = vld [vmem:[%s540 + $0x88] sm:$0xff]
  %v559 = vld [vmem:[%s540 + $0x90] sm:$0xff]
  %v560 = vld [vmem:[%s540 + $0x98] sm:$0xff]
  %v561 = vld [vmem:[%s540 + $0xa0] sm:$0xff]
  %v562 = vld [vmem:[%s540 + $0xa8] sm:$0xff]
  %v563 = vld [vmem:[%s540 + $0xb0] sm:$0xff]
  %v564 = vld [vmem:[%s540 + $0xb8] sm:$0xff]
  %v565 = vld [vmem:[%s540 + $0xc0] sm:$0xff]
  %v566 = vld [vmem:[%s540 + $0xc8] sm:$0xff]
  %v567 = vld [vmem:[%s540 + $0xd0] sm:$0xff]
  %v568 = vld [vmem:[%s540 + $0xd8] sm:$0xff]
  %v569 = vld [vmem:[%s540 + $0xe0] sm:$0xff]
  %v570 = vld [vmem:[%s540 + $0xe8] sm:$0xff]
  %v571 = vld [vmem:[%s540 + $0xf0] sm:$0xff]
  %v572 = vld [vmem:[%s540 + $0xf8] sm:$0xff]
  %v573 = vld [vmem:[%s540 + $0x100] sm:$0xff]
  %v574 = vld [vmem:[%s540 + $0x108] sm:$0xff]
  %v575 = vld [vmem:[%s540 + $0x110] sm:$0xff]
  %v576 = vld [vmem:[%s540 + $0x118] sm:$0xff]
  %v577 = vld [vmem:[%s540 + $0x120] sm:$0xff]
  %v578 = vld [vmem:[%s540 + $0x128] sm:$0xff]
  %v579 = vld [vmem:[%s540 + $0x130] sm:$0xff]
  %v580 = vld [vmem:[%s540 + $0x138] sm:$0xff]
  %v581 = vld [vmem:[%s540 + $0x140] sm:$0xff]
  %v582 = vld [vmem:[%s540 + $0x148] sm:$0xff]
  %v583 = vld [vmem:[%s540 + $0x150] sm:$0xff]
  %v584 = vld [vmem:[%s540 + $0x158] sm:$0xff]
  %v585 = vld [vmem:[%s540 + $0x160] sm:$0xff]
  %v586 = vld [vmem:[%s540 + $0x168] sm:$0xff]
  %v587 = vld [vmem:[%s540 + $0x170] sm:$0xff]
  %v588 = vld [vmem:[%s540 + $0x178] sm:$0xff]
  %v589 = vld [vmem:[%s540 + $0x180] sm:$0xff]
  %v590 = vld [vmem:[%s540 + $0x188] sm:$0xff]
  %v591 = vld [vmem:[%s540 + $0x190] sm:$0xff]
  %v592 = vld [vmem:[%s540 + $0x198] sm:$0xff]
  %v593 = vld [vmem:[%s540 + $0x1a0] sm:$0xff]
  %v594 = vld [vmem:[%s540 + $0x1a8] sm:$0xff]
  %v595 = vld [vmem:[%s540 + $0x1b0] sm:$0xff]
  %v596 = vld [vmem:[%s540 + $0x1b8] sm:$0xff]
  %v597 = vld [vmem:[%s540 + $0x1c0] sm:$0xff]
  %v598 = vld [vmem:[%s540 + $0x1c8] sm:$0xff]
  %v599 = vld [vmem:[%s540 + $0x1d0] sm:$0xff]
  %v600 = vld [vmem:[%s540 + $0x1d8] sm:$0xff]
  %v601 = vld [vmem:[%s540 + $0x1e0] sm:$0xff]
  %v602 = vld [vmem:[%s540 + $0x1e8] sm:$0xff]
  %v603 = vld [vmem:[%s540 + $0x1f0] sm:$0xff]
  %v604 = vld [vmem:[%s540 + $0x1f8] sm:$0xff]
  %v605 = vld [vmem:[%s540 + $0x200] sm:$0xff]
  %v606 = vld [vmem:[%s540 + $0x208] sm:$0xff]
  %v607 = vld [vmem:[%s540 + $0x210] sm:$0xff]
  %v608 = vld [vmem:[%s540 + $0x218] sm:$0xff]
  %v609 = vld [vmem:[%s540 + $0x220] sm:$0xff]
  %v610 = vld [vmem:[%s540 + $0x228] sm:$0xff]
  %v611 = vld [vmem:[%s540 + $0x230] sm:$0xff]
  %v612 = vld [vmem:[%s540 + $0x238] sm:$0xff]
  %v613 = vld [vmem:[%s540 + $0x240] sm:$0xff]
  %v614 = vld [vmem:[%s540 + $0x248] sm:$0xff]
  %v615 = vld [vmem:[%s540 + $0x250] sm:$0xff]
  %v616 = vld [vmem:[%s540 + $0x258] sm:$0xff]
  %v617 = vld [vmem:[%s540 + $0x260] sm:$0xff]
  %v618 = vld [vmem:[%s540 + $0x268] sm:$0xff]
  %v619 = vld [vmem:[%s540 + $0x270] sm:$0xff]
  %v620 = vld [vmem:[%s540 + $0x278] sm:$0xff]
  %v621 = vld [vmem:[%s540 + $0x280] sm:$0xff]
  %v622 = vld [vmem:[%s540 + $0x288] sm:$0xff]
  %v623 = vld [vmem:[%s540 + $0x290] sm:$0xff]
  %v624 = vld [vmem:[%s540 + $0x298] sm:$0xff]
  %v625 = vld [vmem:[%s540 + $0x2a0] sm:$0xff]
  %v626 = vld [vmem:[%s540 + $0x2a8] sm:$0xff]
  %v627 = vld [vmem:[%s540 + $0x2b0] sm:$0xff]
  %v628 = vld [vmem:[%s540 + $0x2b8] sm:$0xff]
  %v629 = vld [vmem:[%s540 + $0x2c0] sm:$0xff]
  %v630 = vld [vmem:[%s540 + $0x2c8] sm:$0xff]
  %v631 = vld [vmem:[%s540 + $0x2d0] sm:$0xff]
  %v632 = vld [vmem:[%s540 + $0x2d8] sm:$0xff]
  %v633 = vld [vmem:[%s540 + $0x2e0] sm:$0xff]
  %v634 = vld [vmem:[%s540 + $0x2e8] sm:$0xff]
  %v635 = vld [vmem:[%s540 + $0x2f0] sm:$0xff]
  %v636 = vld [vmem:[%s540 + $0x2f8] sm:$0xff]
  %v638 = vcombine.high %v539, %v539
  %v639 = vsel %vm119, %v638, 0
  %641 = vmatprep.subr.mxu0 %v542
  %642 = vmatpush1.msra.mxu0 %v541
  %643 = vmatprep.subr.mxu0 %v546
  %644 = vmatpush1.msra.mxu0 %v545
  %645 = vmatprep.subr.mxu0 %v550
  %646 = vmatpush1.msra.mxu0 %v549
  %647 = vmatprep.subr.mxu0 %v554
  %648 = vmatpush1.msra.mxu0 %v553
  %649 = vmatprep.subr.mxu0 %v558
  %650 = vmatpush1.msra.mxu0 %v557
  %651 = vmatprep.subr.mxu0 %v562
  %652 = vmatpush1.msra.mxu0 %v561
  %653 = vmatprep.subr.mxu0 %v566
  %654 = vmatpush1.msra.mxu0 %v565
  %655 = vmatprep.subr.mxu0 %v570
  %656 = vmatpush1.msra.mxu0 %v569
  %657 = vmatprep.subr.mxu0 %v574
  %658 = vmatpush1.msra.mxu0 %v573
  %659 = vmatprep.subr.mxu0 %v578
  %660 = vmatpush1.msra.mxu0 %v577
  %661 = vmatprep.subr.mxu0 %v582
  %662 = vmatpush1.msra.mxu0 %v581
  %663 = vmatprep.subr.mxu0 %v586
  %664 = vmatpush1.msra.mxu0 %v585
  %665 = vmatprep.subr.mxu0 %v590
  %666 = vmatpush1.msra.mxu0 %v589
  %667 = vmatprep.subr.mxu0 %v594
  %668 = vmatpush1.msra.mxu0 %v593
  %669 = vmatprep.subr.mxu0 %v598
  %670 = vmatpush1.msra.mxu0 %v597
  %671 = vmatprep.subr.mxu0 %v602
  %672 = vmatpush1.msra.mxu0 %v601
  %673 = vmatprep.subr.mxu0 %v606
  %674 = vmatpush1.msra.mxu0 %v605
  %675 = vmatprep.subr.mxu0 %v610
  %676 = vmatpush1.msra.mxu0 %v609
  %677 = vmatprep.subr.mxu0 %v614
  %678 = vmatpush1.msra.mxu0 %v613
  %679 = vmatprep.subr.mxu0 %v618
  %680 = vmatpush1.msra.mxu0 %v617
  %681 = vmatprep.subr.mxu0 %v622
  %682 = vmatpush1.msra.mxu0 %v621
  %683 = vmatprep.subr.mxu0 %v626
  %684 = vmatpush1.msra.mxu0 %v625
  %685 = vmatprep.subr.mxu0 %v630
  %686 = vmatpush1.msra.mxu0 %v629
  %687 = vmatprep.subr.mxu0 %v634
  %688 = vmatpush1.msra.mxu0 %v633
  %689 = vmatprep.subr.mxu0 0.0
  %690 = vmatpush1.msra.mxu0 0.0
  %691 = vmatprep.subr.mxu0 0.0
  %692 = vmatpush1.msra.mxu0 0.0
  %693 = vmatprep.subr.mxu0 0.0
  %694 = vmatpush1.msra.mxu0 0.0
  %695 = vmatprep.subr.mxu0 0.0
  %696 = vmatpush1.msra.mxu0 0.0
  %697 = vmatprep.subr.mxu0 0.0
  %698 = vmatpush1.msra.mxu0 0.0
  %699 = vmatprep.subr.mxu0 0.0
  %700 = vmatpush1.msra.mxu0 0.0
  %701 = vmatprep.subr.mxu0 0.0
  %702 = vmatpush1.msra.mxu0 0.0
  %703 = vmatprep.subr.mxu0 0.0
  %704 = vmatpush1.msra.mxu0 0.0
  %705 = vmatprep.mubr.f32.mxu0 %v639
  %706 = vmatmul.mubr.f32.gmra.mrb[0].mxu0 %v539
  %v707 = vpop.f32.mrb[0].mxu0
  %v708 = vadd.f32 %v115, %v707
  %v709 = vpop.f32.mrb[0].mxu0
  %v710 = vadd.f32 %v115, %v709
  %711 = vdwg.mxu0
  %712 = vmatprep.subr.mxu0 %v544
  %713 = vmatpush1.msra.mxu0 %v543
  %714 = vmatprep.subr.mxu0 %v548
  %715 = vmatpush1.msra.mxu0 %v547
  %716 = vmatprep.subr.mxu0 %v552
  %717 = vmatpush1.msra.mxu0 %v551
  %718 = vmatprep.subr.mxu0 %v556
  %719 = vmatpush1.msra.mxu0 %v555
  %720 = vmatprep.subr.mxu0 %v560
  %721 = vmatpush1.msra.mxu0 %v559
  %722 = vmatprep.subr.mxu0 %v564
  %723 = vmatpush1.msra.mxu0 %v563
  %724 = vmatprep.subr.mxu0 %v568
  %725 = vmatpush1.msra.mxu0 %v567
  %726 = vmatprep.subr.mxu0 %v572
  %727 = vmatpush1.msra.mxu0 %v571
  %728 = vmatprep.subr.mxu0 %v576
  %729 = vmatpush1.msra.mxu0 %v575
  %730 = vmatprep.subr.mxu0 %v580
  %731 = vmatpush1.msra.mxu0 %v579
  %732 = vmatprep.subr.mxu0 %v584
  %733 = vmatpush1.msra.mxu0 %v583
  %734 = vmatprep.subr.mxu0 %v588
  %735 = vmatpush1.msra.mxu0 %v587
  %736 = vmatprep.subr.mxu0 %v592
  %737 = vmatpush1.msra.mxu0 %v591
  %738 = vmatprep.subr.mxu0 %v596
  %739 = vmatpush1.msra.mxu0 %v595
  %740 = vmatprep.subr.mxu0 %v600
  %741 = vmatpush1.msra.mxu0 %v599
  %742 = vmatprep.subr.mxu0 %v604
  %743 = vmatpush1.msra.mxu0 %v603
  %744 = vmatprep.subr.mxu0 %v608
  %745 = vmatpush1.msra.mxu0 %v607
  %746 = vmatprep.subr.mxu0 %v612
  %747 = vmatpush1.msra.mxu0 %v611
  %748 = vmatprep.subr.mxu0 %v616
  %749 = vmatpush1.msra.mxu0 %v615
  %750 = vmatprep.subr.mxu0 %v620
  %751 = vmatpush1.msra.mxu0 %v619
  %752 = vmatprep.subr.mxu0 %v624
  %753 = vmatpush1.msra.mxu0 %v623
  %754 = vmatprep.subr.mxu0 %v628
  %755 = vmatpush1.msra.mxu0 %v627
  %756 = vmatprep.subr.mxu0 %v632
  %757 = vmatpush1.msra.mxu0 %v631
  %758 = vmatprep.subr.mxu0 %v636
  %759 = vmatpush1.msra.mxu0 %v635
  %760 = vmatprep.subr.mxu0 0.0
  %761 = vmatpush1.msra.mxu0 0.0
  %762 = vmatprep.subr.mxu0 0.0
  %763 = vmatpush1.msra.mxu0 0.0
  %764 = vmatprep.subr.mxu0 0.0
  %765 = vmatpush1.msra.mxu0 0.0
  %766 = vmatprep.subr.mxu0 0.0
  %767 = vmatpush1.msra.mxu0 0.0
  %768 = vmatprep.subr.mxu0 0.0
  %769 = vmatpush1.msra.mxu0 0.0
  %770 = vmatprep.subr.mxu0 0.0
  %771 = vmatpush1.msra.mxu0 0.0
  %772 = vmatprep.subr.mxu0 0.0
  %773 = vmatpush1.msra.mxu0 0.0
  %774 = vmatprep.subr.mxu0 0.0
  %775 = vmatpush1.msra.mxu0 0.0
  %776 = vmatprep.mubr.f32.mxu0 %v639
  %777 = vmatmul.mubr.f32.gmra.mrb[0].mxu0 %v539
  %v778 = vpop.f32.mrb[0].mxu0
  %v779 = vadd.f32 %v115, %v778
  %v780 = vpop.f32.mrb[0].mxu0
  %v781 = vadd.f32 %v115, %v780
  %782 = vdwg.mxu0
  %v783 = vtanh.pop %v708
  %v784 = vtanh.pop %v710
  %v785 = vtanh.pop %v779
  %v786 = vtanh.pop %v781
  %v791 = vcombine.low %v783, %v784
  %v792 = vcombine.low %v785, %v786
  %s795 = scalar_lea.vmem %s3, 32
  %796 = vst [vmem:[%s795] sm:$0x77] %v791
  %797 = vst [vmem:[%s795 + $0x8] sm:$0x77] %v792
  %s798 = scalar_lea.vmem %s0, 24
  %v799 = vld [vmem:[%s798] sm:$0x77]
  %s800 = scalar_lea.vmem %s1, 2304
  %v801 = vld [vmem:[%s800] sm:$0xff]
  %v802 = vld [vmem:[%s800 + $0x8] sm:$0xff]
  %v803 = vld [vmem:[%s800 + $0x10] sm:$0xff]
  %v804 = vld [vmem:[%s800 + $0x18] sm:$0xff]
  %v805 = vld [vmem:[%s800 + $0x20] sm:$0xff]
  %v806 = vld [vmem:[%s800 + $0x28] sm:$0xff]
  %v807 = vld [vmem:[%s800 + $0x30] sm:$0xff]
  %v808 = vld [vmem:[%s800 + $0x38] sm:$0xff]
  %v809 = vld [vmem:[%s800 + $0x40] sm:$0xff]
  %v810 = vld [vmem:[%s800 + $0x48] sm:$0xff]
  %v811 = vld [vmem:[%s800 + $0x50] sm:$0xff]
  %v812 = vld [vmem:[%s800 + $0x58] sm:$0xff]
  %v813 = vld [vmem:[%s800 + $0x60] sm:$0xff]
  %v814 = vld [vmem:[%s800 + $0x68] sm:$0xff]
  %v815 = vld [vmem:[%s800 + $0x70] sm:$0xff]
  %v816 = vld [vmem:[%s800 + $0x78] sm:$0xff]
  %v817 = vld [vmem:[%s800 + $0x80] sm:$0xff]
  %v818 = vld [vmem:[%s800 + $0x88] sm:$0xff]
  %v819 = vld [vmem:[%s800 + $0x90] sm:$0xff]
  %v820 = vld [vmem:[%s800 + $0x98] sm:$0xff]
  %v821 = vld [vmem:[%s800 + $0xa0] sm:$0xff]
  %v822 = vld [vmem:[%s800 + $0xa8] sm:$0xff]
  %v823 = vld [vmem:[%s800 + $0xb0] sm:$0xff]
  %v824 = vld [vmem:[%s800 + $0xb8] sm:$0xff]
  %v825 = vld [vmem:[%s800 + $0xc0] sm:$0xff]
  %v826 = vld [vmem:[%s800 + $0xc8] sm:$0xff]
  %v827 = vld [vmem:[%s800 + $0xd0] sm:$0xff]
  %v828 = vld [vmem:[%s800 + $0xd8] sm:$0xff]
  %v829 = vld [vmem:[%s800 + $0xe0] sm:$0xff]
  %v830 = vld [vmem:[%s800 + $0xe8] sm:$0xff]
  %v831 = vld [vmem:[%s800 + $0xf0] sm:$0xff]
  %v832 = vld [vmem:[%s800 + $0xf8] sm:$0xff]
  %v833 = vld [vmem:[%s800 + $0x100] sm:$0xff]
  %v834 = vld [vmem:[%s800 + $0x108] sm:$0xff]
  %v835 = vld [vmem:[%s800 + $0x110] sm:$0xff]
  %v836 = vld [vmem:[%s800 + $0x118] sm:$0xff]
  %v837 = vld [vmem:[%s800 + $0x120] sm:$0xff]
  %v838 = vld [vmem:[%s800 + $0x128] sm:$0xff]
  %v839 = vld [vmem:[%s800 + $0x130] sm:$0xff]
  %v840 = vld [vmem:[%s800 + $0x138] sm:$0xff]
  %v841 = vld [vmem:[%s800 + $0x140] sm:$0xff]
  %v842 = vld [vmem:[%s800 + $0x148] sm:$0xff]
  %v843 = vld [vmem:[%s800 + $0x150] sm:$0xff]
  %v844 = vld [vmem:[%s800 + $0x158] sm:$0xff]
  %v845 = vld [vmem:[%s800 + $0x160] sm:$0xff]
  %v846 = vld [vmem:[%s800 + $0x168] sm:$0xff]
  %v847 = vld [vmem:[%s800 + $0x170] sm:$0xff]
  %v848 = vld [vmem:[%s800 + $0x178] sm:$0xff]
  %v849 = vld [vmem:[%s800 + $0x180] sm:$0xff]
  %v850 = vld [vmem:[%s800 + $0x188] sm:$0xff]
  %v851 = vld [vmem:[%s800 + $0x190] sm:$0xff]
  %v852 = vld [vmem:[%s800 + $0x198] sm:$0xff]
  %v853 = vld [vmem:[%s800 + $0x1a0] sm:$0xff]
  %v854 = vld [vmem:[%s800 + $0x1a8] sm:$0xff]
  %v855 = vld [vmem:[%s800 + $0x1b0] sm:$0xff]
  %v856 = vld [vmem:[%s800 + $0x1b8] sm:$0xff]
  %v857 = vld [vmem:[%s800 + $0x1c0] sm:$0xff]
  %v858 = vld [vmem:[%s800 + $0x1c8] sm:$0xff]
  %v859 = vld [vmem:[%s800 + $0x1d0] sm:$0xff]
  %v860 = vld [vmem:[%s800 + $0x1d8] sm:$0xff]
  %v861 = vld [vmem:[%s800 + $0x1e0] sm:$0xff]
  %v862 = vld [vmem:[%s800 + $0x1e8] sm:$0xff]
  %v863 = vld [vmem:[%s800 + $0x1f0] sm:$0xff]
  %v864 = vld [vmem:[%s800 + $0x1f8] sm:$0xff]
  %v865 = vld [vmem:[%s800 + $0x200] sm:$0xff]
  %v866 = vld [vmem:[%s800 + $0x208] sm:$0xff]
  %v867 = vld [vmem:[%s800 + $0x210] sm:$0xff]
  %v868 = vld [vmem:[%s800 + $0x218] sm:$0xff]
  %v869 = vld [vmem:[%s800 + $0x220] sm:$0xff]
  %v870 = vld [vmem:[%s800 + $0x228] sm:$0xff]
  %v871 = vld [vmem:[%s800 + $0x230] sm:$0xff]
  %v872 = vld [vmem:[%s800 + $0x238] sm:$0xff]
  %v873 = vld [vmem:[%s800 + $0x240] sm:$0xff]
  %v874 = vld [vmem:[%s800 + $0x248] sm:$0xff]
  %v875 = vld [vmem:[%s800 + $0x250] sm:$0xff]
  %v876 = vld [vmem:[%s800 + $0x258] sm:$0xff]
  %v877 = vld [vmem:[%s800 + $0x260] sm:$0xff]
  %v878 = vld [vmem:[%s800 + $0x268] sm:$0xff]
  %v879 = vld [vmem:[%s800 + $0x270] sm:$0xff]
  %v880 = vld [vmem:[%s800 + $0x278] sm:$0xff]
  %v881 = vld [vmem:[%s800 + $0x280] sm:$0xff]
  %v882 = vld [vmem:[%s800 + $0x288] sm:$0xff]
  %v883 = vld [vmem:[%s800 + $0x290] sm:$0xff]
  %v884 = vld [vmem:[%s800 + $0x298] sm:$0xff]
  %v885 = vld [vmem:[%s800 + $0x2a0] sm:$0xff]
  %v886 = vld [vmem:[%s800 + $0x2a8] sm:$0xff]
  %v887 = vld [vmem:[%s800 + $0x2b0] sm:$0xff]
  %v888 = vld [vmem:[%s800 + $0x2b8] sm:$0xff]
  %v889 = vld [vmem:[%s800 + $0x2c0] sm:$0xff]
  %v890 = vld [vmem:[%s800 + $0x2c8] sm:$0xff]
  %v891 = vld [vmem:[%s800 + $0x2d0] sm:$0xff]
  %v892 = vld [vmem:[%s800 + $0x2d8] sm:$0xff]
  %v893 = vld [vmem:[%s800 + $0x2e0] sm:$0xff]
  %v894 = vld [vmem:[%s800 + $0x2e8] sm:$0xff]
  %v895 = vld [vmem:[%s800 + $0x2f0] sm:$0xff]
  %v896 = vld [vmem:[%s800 + $0x2f8] sm:$0xff]
  %v898 = vcombine.high %v799, %v799
  %v899 = vsel %vm119, %v898, 0
  %901 = vmatprep.subr.mxu0 %v802
  %902 = vmatpush1.msra.mxu0 %v801
  %903 = vmatprep.subr.mxu0 %v806
  %904 = vmatpush1.msra.mxu0 %v805
  %905 = vmatprep.subr.mxu0 %v810
  %906 = vmatpush1.msra.mxu0 %v809
  %907 = vmatprep.subr.mxu0 %v814
  %908 = vmatpush1.msra.mxu0 %v813
  %909 = vmatprep.subr.mxu0 %v818
  %910 = vmatpush1.msra.mxu0 %v817
  %911 = vmatprep.subr.mxu0 %v822
  %912 = vmatpush1.msra.mxu0 %v821
  %913 = vmatprep.subr.mxu0 %v826
  %914 = vmatpush1.msra.mxu0 %v825
  %915 = vmatprep.subr.mxu0 %v830
  %916 = vmatpush1.msra.mxu0 %v829
  %917 = vmatprep.subr.mxu0 %v834
  %918 = vmatpush1.msra.mxu0 %v833
  %919 = vmatprep.subr.mxu0 %v838
  %920 = vmatpush1.msra.mxu0 %v837
  %921 = vmatprep.subr.mxu0 %v842
  %922 = vmatpush1.msra.mxu0 %v841
  %923 = vmatprep.subr.mxu0 %v846
  %924 = vmatpush1.msra.mxu0 %v845
  %925 = vmatprep.subr.mxu0 %v850
  %926 = vmatpush1.msra.mxu0 %v849
  %927 = vmatprep.subr.mxu0 %v854
  %928 = vmatpush1.msra.mxu0 %v853
  %929 = vmatprep.subr.mxu0 %v858
  %930 = vmatpush1.msra.mxu0 %v857
  %931 = vmatprep.subr.mxu0 %v862
  %932 = vmatpush1.msra.mxu0 %v861
  %933 = vmatprep.subr.mxu0 %v866
  %934 = vmatpush1.msra.mxu0 %v865
  %935 = vmatprep.subr.mxu0 %v870
  %936 = vmatpush1.msra.mxu0 %v869
  %937 = vmatprep.subr.mxu0 %v874
  %938 = vmatpush1.msra.mxu0 %v873
  %939 = vmatprep.subr.mxu0 %v878
  %940 = vmatpush1.msra.mxu0 %v877
  %941 = vmatprep.subr.mxu0 %v882
  %942 = vmatpush1.msra.mxu0 %v881
  %943 = vmatprep.subr.mxu0 %v886
  %944 = vmatpush1.msra.mxu0 %v885
  %945 = vmatprep.subr.mxu0 %v890
  %946 = vmatpush1.msra.mxu0 %v889
  %947 = vmatprep.subr.mxu0 %v894
  %948 = vmatpush1.msra.mxu0 %v893
  %949 = vmatprep.subr.mxu0 0.0
  %950 = vmatpush1.msra.mxu0 0.0
  %951 = vmatprep.subr.mxu0 0.0
  %952 = vmatpush1.msra.mxu0 0.0
  %953 = vmatprep.subr.mxu0 0.0
  %954 = vmatpush1.msra.mxu0 0.0
  %955 = vmatprep.subr.mxu0 0.0
  %956 = vmatpush1.msra.mxu0 0.0
  %957 = vmatprep.subr.mxu0 0.0
  %958 = vmatpush1.msra.mxu0 0.0
  %959 = vmatprep.subr.mxu0 0.0
  %960 = vmatpush1.msra.mxu0 0.0
  %961 = vmatprep.subr.mxu0 0.0
  %962 = vmatpush1.msra.mxu0 0.0
  %963 = vmatprep.subr.mxu0 0.0
  %964 = vmatpush1.msra.mxu0 0.0
  %965 = vmatprep.mubr.f32.mxu0 %v899
  %966 = vmatmul.mubr.f32.gmra.mrb[0].mxu0 %v799
  %v967 = vpop.f32.mrb[0].mxu0
  %v968 = vadd.f32 %v115, %v967
  %v969 = vpop.f32.mrb[0].mxu0
  %v970 = vadd.f32 %v115, %v969
  %971 = vdwg.mxu0
  %972 = vmatprep.subr.mxu0 %v804
  %973 = vmatpush1.msra.mxu0 %v803
  %974 = vmatprep.subr.mxu0 %v808
  %975 = vmatpush1.msra.mxu0 %v807
  %976 = vmatprep.subr.mxu0 %v812
  %977 = vmatpush1.msra.mxu0 %v811
  %978 = vmatprep.subr.mxu0 %v816
  %979 = vmatpush1.msra.mxu0 %v815
  %980 = vmatprep.subr.mxu0 %v820
  %981 = vmatpush1.msra.mxu0 %v819
  %982 = vmatprep.subr.mxu0 %v824
  %983 = vmatpush1.msra.mxu0 %v823
  %984 = vmatprep.subr.mxu0 %v828
  %985 = vmatpush1.msra.mxu0 %v827
  %986 = vmatprep.subr.mxu0 %v832
  %987 = vmatpush1.msra.mxu0 %v831
  %988 = vmatprep.subr.mxu0 %v836
  %989 = vmatpush1.msra.mxu0 %v835
  %990 = vmatprep.subr.mxu0 %v840
  %991 = vmatpush1.msra.mxu0 %v839
  %992 = vmatprep.subr.mxu0 %v844
  %993 = vmatpush1.msra.mxu0 %v843
  %994 = vmatprep.subr.mxu0 %v848
  %995 = vmatpush1.msra.mxu0 %v847
  %996 = vmatprep.subr.mxu0 %v852
  %997 = vmatpush1.msra.mxu0 %v851
  %998 = vmatprep.subr.mxu0 %v856
  %999 = vmatpush1.msra.mxu0 %v855
  %1000 = vmatprep.subr.mxu0 %v860
  %1001 = vmatpush1.msra.mxu0 %v859
  %1002 = vmatprep.subr.mxu0 %v864
  %1003 = vmatpush1.msra.mxu0 %v863
  %1004 = vmatprep.subr.mxu0 %v868
  %1005 = vmatpush1.msra.mxu0 %v867
  %1006 = vmatprep.subr.mxu0 %v872
  %1007 = vmatpush1.msra.mxu0 %v871
  %1008 = vmatprep.subr.mxu0 %v876
  %1009 = vmatpush1.msra.mxu0 %v875
  %1010 = vmatprep.subr.mxu0 %v880
  %1011 = vmatpush1.msra.mxu0 %v879
  %1012 = vmatprep.subr.mxu0 %v884
  %1013 = vmatpush1.msra.mxu0 %v883
  %1014 = vmatprep.subr.mxu0 %v888
  %1015 = vmatpush1.msra.mxu0 %v887
  %1016 = vmatprep.subr.mxu0 %v892
  %1017 = vmatpush1.msra.mxu0 %v891
  %1018 = vmatprep.subr.mxu0 %v896
  %1019 = vmatpush1.msra.mxu0 %v895
  %1020 = vmatprep.subr.mxu0 0.0
  %1021 = vmatpush1.msra.mxu0 0.0
  %1022 = vmatprep.subr.mxu0 0.0
  %1023 = vmatpush1.msra.mxu0 0.0
  %1024 = vmatprep.subr.mxu0 0.0
  %1025 = vmatpush1.msra.mxu0 0.0
  %1026 = vmatprep.subr.mxu0 0.0
  %1027 = vmatpush1.msra.mxu0 0.0
  %1028 = vmatprep.subr.mxu0 0.0
  %1029 = vmatpush1.msra.mxu0 0.0
  %1030 = vmatprep.subr.mxu0 0.0
  %1031 = vmatpush1.msra.mxu0 0.0
  %1032 = vmatprep.subr.mxu0 0.0
  %1033 = vmatpush1.msra.mxu0 0.0
  %1034 = vmatprep.subr.mxu0 0.0
  %1035 = vmatpush1.msra.mxu0 0.0
  %1036 = vmatprep.mubr.f32.mxu0 %v899
  %1037 = vmatmul.mubr.f32.gmra.mrb[0].mxu0 %v799
  %v1038 = vpop.f32.mrb[0].mxu0
  %v1039 = vadd.f32 %v115, %v1038
  %v1040 = vpop.f32.mrb[0].mxu0
  %v1041 = vadd.f32 %v115, %v1040
  %1042 = vdwg.mxu0
  %v1043 = vtanh.pop %v968
  %v1044 = vtanh.pop %v970
  %v1045 = vtanh.pop %v1039
  %v1046 = vtanh.pop %v1041
  %v1051 = vcombine.low %v1043, %v1044
  %v1052 = vcombine.low %v1045, %v1046
  %s1055 = scalar_lea.vmem %s3, 48
  %1056 = vst [vmem:[%s1055] sm:$0x77] %v1051
  %1057 = vst [vmem:[%s1055 + $0x8] sm:$0x77] %v1052
  // Predicated region
  $region14: #{generator_forward.7} parent=0 // pred_check
    _
  $region15: #{generator_forward.7} parent=0 // pred_check_branch
    %1059 = sbr.rel (0) target = $region17
  $region16: #{generator_forward.7} parent=0 // pred_region
    _
  $region17: #{generator_forward.7} parent=0 // pred_fallthru
    _
  // Predicated region
  $region18: #{generator_forward.7} parent=0 // pred_check
    _
  $region19: #{generator_forward.7} parent=0 // pred_check_branch
    %1061 = sbr.rel (0) target = $region21
  $region20: #{generator_forward.7} parent=0 // pred_region
    _
  $region21: #{generator_forward.7} parent=0 // pred_fallthru
    _

</llo_original>
